<compile_context>
chip_gen: v7x
topology: tpu7x:2x2x1
jax: 0.10.0
libtpu: 0.0.40
codegen_flags: <defaults>
</compile_context>

<pallas_src>
import math

import jax
import jax.numpy as jnp
from jax import lax
from jax.experimental import pallas as pl
from jax.experimental.pallas import tpu as pltpu

D_MODEL = 32
N_HEADS = 4
D_K = D_MODEL // N_HEADS
D_FF = 64
EPS = 1e-6
NEG_BIG = 1e9

# Packed-weight buffer row offsets (lane width 96).
_W_SELF_QKV = 0      # (32, 96)
_W_SRC_QKV = 32      # (32, 96)
_W_SELF_O = 64       # (32, 32) in cols 0:32
_W_SRC_O = 96        # (32, 32) in cols 0:32
_W_FF1 = 128         # (32, 64) in cols 0:64
_W_FF2 = 160         # (64, 32) in cols 0:32
_W_ROWS = 224
_P_ROWS = 12         # biases + LN params buffer rows


# ------------------------------ kernel-side math ------------------------------

def _ln_kernel(v, a, b):
    """LayerNorm: a*(v-mean)/(std+eps)+b, unbiased std, reciprocal via EUP."""
    mean = jnp.mean(v, axis=-1, keepdims=True)
    c = v - mean
    var = jnp.sum(c * c, axis=-1, keepdims=True) / (v.shape[-1] - 1)  # ddof=1
    std = jnp.sqrt(var)
    inv = pl.reciprocal(std + EPS, approx=False)   # exact; keeps 1e-4 tolerance
    return a * c * inv + b


def _mha_kernel(q_rows, kv_rows, bias, wqkv, bqkv, wo, bo, bb, tq, tk):
    """Multi-head attention on folded row slabs.

    q_rows : (bb*tq, D)   kv_rows : (bb*tk, D)
    bias   : (bb, 1 or tq, tk) additive mask bias (0 keep / -1e9 masked)
    wqkv   : (D, 3D) packed [Wq*scale | Wk | Wv];  bqkv: (1, 3D) packed biases
    wo     : (D, D) output projection;             bo:   (1, D)
    """
    # Fused projections: one dot for Q, one fused dot for K|V.
    q = jnp.dot(q_rows, wqkv[:, 0:D_MODEL],
                preferred_element_type=jnp.float32) + bqkv[:, 0:D_MODEL]
    kv = jnp.dot(kv_rows, wqkv[:, D_MODEL:3 * D_MODEL],
                 preferred_element_type=jnp.float32) + bqkv[:, D_MODEL:3 * D_MODEL]
    k = kv[:, 0:D_MODEL]
    v = kv[:, D_MODEL:2 * D_MODEL]

    q3 = q.reshape(bb, tq, D_MODEL)
    k3 = k.reshape(bb, tk, D_MODEL)
    v3 = v.reshape(bb, tk, D_MODEL)

    heads = []
    for h in range(N_HEADS):                              # static unroll, static slices
        sl = slice(h * D_K, (h + 1) * D_K)
        qh, kh, vh = q3[:, :, sl], k3[:, :, sl], v3[:, :, sl]
        # (bb, tq, tk): contract last dims, batch dim 0 -> no explicit transpose.
        # 1/sqrt(d_k) already folded into Wq/bq at pack time.
        s = lax.dot_general(qh, kh, (((2,), (2,)), ((0,), (0,))),
                            preferred_element_type=jnp.float32)
        s = s + bias                                      # additive mask
        s_max = jnp.max(s, axis=-1, keepdims=True)
        p = jnp.exp(s - s_max)
        p = p * pl.reciprocal(jnp.sum(p, axis=-1, keepdims=True), approx=False)
        oh = lax.dot_general(p, vh, (((2,), (1,)), ((0,), (0,))),
                             preferred_element_type=jnp.float32)      # (bb, tq, Dk)
        heads.append(oh)

    # Lane-concat the heads (XLU slot) and do ONE K=32 output projection.
    o = jnp.concatenate(heads, axis=-1).reshape(bb * tq, D_MODEL)
    return jnp.dot(o, wo, preferred_element_type=jnp.float32) + bo


# ---------------------------------- kernel ----------------------------------

def decoder_layer_kernel(x_ref, mem_ref, sbias_ref, tbias_ref, w_ref, p_ref, out_ref):
    bb, t, d = x_ref.shape
    s_len = mem_ref.shape[1]

    x = x_ref[...].reshape(bb * t, d)          # folded row slab (bb*t, D)
    m = mem_ref[...].reshape(bb * s_len, d)    # folded memory rows (bb*S, D)
    tgt_bias = tbias_ref[...]                  # (bb, t, t) additive bias
    src_bias = sbias_ref[...]                  # (bb, 1, S) additive bias

    w = w_ref[...]                             # (224, 96) packed weights
    p = p_ref[...]                             # (12, 96) packed biases + LN params

    ln_a = p[6:9, 0:D_MODEL]                   # (3, D)
    ln_b = p[9:12, 0:D_MODEL]                  # (3, D)

    # 1) masked self-attention sublayer (pre-LN residual)
    y = _ln_kernel(x, ln_a[0:1], ln_b[0:1])
    x = x + _mha_kernel(y, y, tgt_bias,
                        w[_W_SELF_QKV:_W_SELF_QKV + D_MODEL, :], p[0:1, :],
                        w[_W_SELF_O:_W_SELF_O + D_MODEL, 0:D_MODEL], p[2:3, 0:D_MODEL],
                        bb, t, t)

    # 2) source-attention sublayer
    y = _ln_kernel(x, ln_a[1:2], ln_b[1:2])
    x = x + _mha_kernel(y, m, src_bias,
                        w[_W_SRC_QKV:_W_SRC_QKV + D_MODEL, :], p[1:2, :],
                        w[_W_SRC_O:_W_SRC_O + D_MODEL, 0:D_MODEL], p[3:4, 0:D_MODEL],
                        bb, t, s_len)

    # 3) feed-forward sublayer
    y = _ln_kernel(x, ln_a[2:3], ln_b[2:3])
    h1 = jnp.maximum(
        jnp.dot(y, w[_W_FF1:_W_FF1 + D_MODEL, 0:D_FF],
                preferred_element_type=jnp.float32) + p[4:5, 0:D_FF], 0.0)
    x = x + jnp.dot(h1, w[_W_FF2:_W_FF2 + D_FF, 0:D_MODEL],
                    preferred_element_type=jnp.float32) + p[5:6, 0:D_MODEL]

    out_ref[...] = x.reshape(bb, t, d)


# ------------------------------ wrapper / packing ------------------------------

def _pad_lanes(a, width):
    return jnp.pad(a, ((0, 0), (0, width - a.shape[1])))


def pack_params(params):
    """Pack the 10 module parameters into 2 flat f32 buffers.

    Returns (wbuf (224, 96), pbuf (12, 96)).  The 1/sqrt(d_k) attention scale
    is folded into Wq / bq here (one-time op on reused parameters).
    """
    (ln_a, ln_b, self_w, self_b, src_w, src_b, w1, b1, w2, b2) = params
    scale = 1.0 / math.sqrt(D_K)
    lanes = 3 * D_MODEL  # 96

    def qkv_w(w):
        return jnp.concatenate([w[0] * scale, w[1], w[2]], axis=1)      # (D, 3D)

    def qkv_b(b):
        return jnp.concatenate([b[0] * scale, b[1], b[2]], axis=0)[None, :]  # (1, 3D)

    wbuf = jnp.concatenate([
        qkv_w(self_w),                       # rows   0: 32
        qkv_w(src_w),                        # rows  32: 64
        _pad_lanes(self_w[3], lanes),        # rows  64: 96
        _pad_lanes(src_w[3], lanes),         # rows  96:128
        _pad_lanes(w1, lanes),               # rows 128:160
        _pad_lanes(w2, lanes),               # rows 160:224
    ], axis=0).astype(jnp.float32)

    pbuf = jnp.concatenate([
        qkv_b(self_b),                       # row 0
        qkv_b(src_b),                        # row 1
        _pad_lanes(self_b[3][None, :], lanes),   # row 2
        _pad_lanes(src_b[3][None, :], lanes),    # row 3
        _pad_lanes(b1, lanes),               # row 4
        _pad_lanes(b2, lanes),               # row 5
        _pad_lanes(ln_a, lanes),             # rows 6:9
        _pad_lanes(ln_b, lanes),             # rows 9:12
    ], axis=0).astype(jnp.float32)

    assert wbuf.shape == (_W_ROWS, lanes) and pbuf.shape == (_P_ROWS, lanes)
    return wbuf, pbuf


def decoder_layer(x, memory, src_mask, tgt_mask, params, *, b_blk=None):
    B, T, D = x.shape
    S = memory.shape[1]

    # grid of 1 by default: on single-TC v5e/v6e a multi-step grid is pure
    # per-step overhead and halves matmul M.  Pass b_blk=B//2 to split across
    # the two v7x TensorCores when B*T is large enough to pay off.
    if b_blk is None:
        b_blk = B
    assert B % b_blk == 0, "batch must divide evenly into batch blocks"
    n_blocks = B // b_blk

    # Additive attention biases: 0.0 where attended, -1e9 where mask == 0.
    tgt_bias = ((tgt_mask - 1.0) * NEG_BIG).astype(jnp.float32)
    src_bias = ((src_mask - 1.0) * NEG_BIG).astype(jnp.float32)

    wbuf, pbuf = pack_params(params)

    in_specs = [
        pl.BlockSpec((b_blk, T, D), lambda g: (g, 0, 0)),   # x
        pl.BlockSpec((b_blk, S, D), lambda g: (g, 0, 0)),   # memory
        pl.BlockSpec((b_blk, 1, S), lambda g: (g, 0, 0)),   # src additive bias
        pl.BlockSpec((b_blk, T, T), lambda g: (g, 0, 0)),   # tgt additive bias
        pl.BlockSpec(wbuf.shape, lambda g: (0, 0)),         # packed weights
        pl.BlockSpec(pbuf.shape, lambda g: (0, 0)),         # packed biases/LN
    ]

    return pl.pallas_call(
        decoder_layer_kernel,
        out_shape=jax.ShapeDtypeStruct((B, T, D), jnp.float32),
        grid_spec=pltpu.PrefetchScalarGridSpec(
            num_scalar_prefetch=0,
            grid=(n_blocks,),
            in_specs=in_specs,
            out_specs=pl.BlockSpec((b_blk, T, D), lambda g: (g, 0, 0)),
        ),
        compiler_params=pltpu.CompilerParams(
            dimension_semantics=("parallel",)),
    )(x, memory, src_bias, tgt_bias, wbuf, pbuf)


# ------------------------- reference (pure JAX, spec-faithful) -------------------------

def decoder_layer_reference(x, memory, src_mask, tgt_mask, params):
    (ln_a, ln_b, self_w, self_b, src_w, src_b, w1, b1, w2, b2) = params

    def layer_norm(v, a, b):
        mean = jnp.mean(v, axis=-1, keepdims=True)
        c = v - mean
        var = jnp.sum(c * c, axis=-1, keepdims=True) / (v.shape[-1] - 1)
        std = jnp.sqrt(var)
        return a * c / (std + EPS) + b

    def mha(q_in, kv_in, mask, w, b):
        q = q_in @ w[0] + b[0]
        k = kv_in @ w[1] + b[1]
        v = kv_in @ w[2] + b[2]
        heads = []
        for h in range(N_HEADS):
            sl = slice(h * D_K, (h + 1) * D_K)
            s = (q[:, sl] @ k[:, sl].T) / math.sqrt(D_K)
            s = jnp.where(mask == 0.0, -NEG_BIG, s)
            p = jax.nn.softmax(s, axis=-1)
            heads.append(p @ v[:, sl])
        o = jnp.concatenate(heads, axis=-1)
        return o @ w[3] + b[3]

    def per_batch(xb, mb, smb, tmb):
        y = layer_norm(xb, ln_a[0], ln_b[0])
        xb = xb + mha(y, y, tmb, self_w, self_b)
        y = layer_norm(xb, ln_a[1], ln_b[1])
        xb = xb + mha(y, mb, smb, src_w, src_b)
        y = layer_norm(xb, ln_a[2], ln_b[2])
        h1 = jnp.maximum(y @ w1 + b1[0], 0.0)
        return xb + h1 @ w2 + b2[0]

    return jax.vmap(per_batch)(x, memory, src_mask, tgt_mask)


# ----------------------------------- main -----------------------------------

if __name__ == "__main__":
    B, T, S, D = 4, 8, 8, D_MODEL
    key = jax.random.PRNGKey(0)
    ks = jax.random.split(key, 12)
    scale = 0.1

    # Parameters (deterministic synthetic init, matching module __init__ shapes).
    ln_a = jnp.ones((3, D), jnp.float32)           # LayerNorm a_2 (ones)
    ln_b = jnp.zeros((3, D), jnp.float32)          # LayerNorm b_2 (zeros)
    self_w = (jax.random.normal(ks[0], (4, D, D)) * scale).astype(jnp.float32)
    self_b = (jax.random.normal(ks[1], (4, D)) * scale).astype(jnp.float32)
    src_w = (jax.random.normal(ks[2], (4, D, D)) * scale).astype(jnp.float32)
    src_b = (jax.random.normal(ks[3], (4, D)) * scale).astype(jnp.float32)
    w1 = (jax.random.normal(ks[4], (D, D_FF)) * scale).astype(jnp.float32)
    b1 = (jax.random.normal(ks[5], (1, D_FF)) * scale).astype(jnp.float32)
    w2 = (jax.random.normal(ks[6], (D_FF, D)) * scale).astype(jnp.float32)
    b2 = (jax.random.normal(ks[7], (1, D)) * scale).astype(jnp.float32)
    params = (ln_a, ln_b, self_w, self_b, src_w, src_b, w1, b1, w2, b2)

    # Inputs.
    x = jax.random.normal(ks[8], (B, T, D)).astype(jnp.float32)
    memory = jax.random.normal(ks[9], (B, S, D)).astype(jnp.float32)
    # Causal target mask, full source mask (1.0 = attend, 0.0 = masked).
    tgt_mask = jnp.broadcast_to(
        jnp.tril(jnp.ones((T, T), jnp.float32))[None], (B, T, T))
    src_mask = jnp.ones((B, 1, S), jnp.float32)

    out = decoder_layer(x, memory, src_mask, tgt_mask, params)
    out = jax.block_until_ready(out)

    ref = decoder_layer_reference(x, memory, src_mask, tgt_mask, params)
    assert out.shape == (B, T, D)
    assert jnp.allclose(out, ref, atol=1e-4, rtol=1e-4), "mismatch vs JAX reference"
    print("KERNEL_OK")
</pallas_src>

<mosaic_0001>
module attributes {stable_mosaic.version = 11 : i64} {
  func.func @decoder_layer_kernel(%arg0: i32, %arg1: memref<4x8x32xf32, #tpu.memory_space<vmem>>, %arg2: memref<4x8x32xf32, #tpu.memory_space<vmem>>, %arg3: memref<4x1x8xf32, #tpu.memory_space<vmem>>, %arg4: memref<4x8x8xf32, #tpu.memory_space<vmem>>, %arg5: memref<224x96xf32, #tpu.memory_space<vmem>>, %arg6: memref<12x96xf32, #tpu.memory_space<vmem>>, %arg7: memref<4x8x32xf32, #tpu.memory_space<vmem>>) attributes {dimension_semantics = [#tpu.dimension_semantics<parallel>], iteration_bounds = array<i64: 1>, scalar_prefetch = 0 : i64, scratch_operands = 0 : i64, tpu.core_type = #tpu.core_type<tc>, window_params = [{transform_indices = @transform_0, window_bounds = array<i64: 4, 8, 32>}, {transform_indices = @transform_1, window_bounds = array<i64: 4, 8, 32>}, {transform_indices = @transform_2, window_bounds = array<i64: 4, 1, 8>}, {transform_indices = @transform_3, window_bounds = array<i64: 4, 8, 8>}, {pipeline_mode = #tpu.pipeline_mode<synchronous>, transform_indices = @transform_4, window_bounds = array<i64: 224, 96>}, {pipeline_mode = #tpu.pipeline_mode<synchronous>, transform_indices = @transform_5, window_bounds = array<i64: 12, 96>}, {transform_indices = @transform_6, window_bounds = array<i64: 4, 8, 32>}]} {
    %c0 = arith.constant 0 : index
    %c0_0 = arith.constant 0 : index
    %c0_1 = arith.constant 0 : index
    %0 = vector.load %arg1[%c0, %c0_0, %c0_1] : memref<4x8x32xf32, #tpu.memory_space<vmem>>, vector<4x8x32xf32>
    %1 = vector.shape_cast %0 : vector<4x8x32xf32> to vector<32x32xf32>
    %c0_2 = arith.constant 0 : index
    %c0_3 = arith.constant 0 : index
    %c0_4 = arith.constant 0 : index
    %2 = vector.load %arg2[%c0_2, %c0_3, %c0_4] : memref<4x8x32xf32, #tpu.memory_space<vmem>>, vector<4x8x32xf32>
    %3 = vector.shape_cast %2 : vector<4x8x32xf32> to vector<32x32xf32>
    %c0_5 = arith.constant 0 : index
    %c0_6 = arith.constant 0 : index
    %c0_7 = arith.constant 0 : index
    %4 = vector.load %arg4[%c0_5, %c0_6, %c0_7] : memref<4x8x8xf32, #tpu.memory_space<vmem>>, vector<4x8x8xf32>
    %c0_8 = arith.constant 0 : index
    %c0_9 = arith.constant 0 : index
    %c0_10 = arith.constant 0 : index
    %5 = vector.load %arg3[%c0_8, %c0_9, %c0_10] : memref<4x1x8xf32, #tpu.memory_space<vmem>>, vector<4x1x8xf32>
    %c0_11 = arith.constant 0 : index
    %c0_12 = arith.constant 0 : index
    %6 = vector.load %arg5[%c0_11, %c0_12] : memref<224x96xf32, #tpu.memory_space<vmem>>, vector<224x96xf32>
    %c0_13 = arith.constant 0 : index
    %c0_14 = arith.constant 0 : index
    %7 = vector.load %arg6[%c0_13, %c0_14] : memref<12x96xf32, #tpu.memory_space<vmem>>, vector<12x96xf32>
    %8 = vector.extract_strided_slice %7 {offsets = [6, 0], sizes = [3, 32], strides = [1, 1]} : vector<12x96xf32> to vector<3x32xf32>
    %9 = vector.extract_strided_slice %7 {offsets = [9, 0], sizes = [3, 32], strides = [1, 1]} : vector<12x96xf32> to vector<3x32xf32>
    %10 = vector.extract_strided_slice %8 {offsets = [0, 0], sizes = [1, 32], strides = [1, 1]} : vector<3x32xf32> to vector<1x32xf32>
    %11 = vector.extract_strided_slice %9 {offsets = [0, 0], sizes = [1, 32], strides = [1, 1]} : vector<3x32xf32> to vector<1x32xf32>
    %cst = arith.constant dense<0.000000e+00> : vector<32xf32>
    %12 = vector.multi_reduction <add>, %1, %cst [1] : vector<32x32xf32> to vector<32xf32>
    %13 = vector.shape_cast %12 : vector<32xf32> to vector<32x1xf32>
    %cst_15 = arith.constant 3.200000e+01 : f32
    %14 = vector.broadcast %cst_15 : f32 to vector<32x1xf32>
    %15 = arith.divf %13, %14 : vector<32x1xf32>
    %16 = vector.broadcast %15 : vector<32x1xf32> to vector<32x32xf32>
    %17 = arith.subf %1, %16 : vector<32x32xf32>
    %18 = arith.mulf %17, %17 : vector<32x32xf32>
    %cst_16 = arith.constant dense<0.000000e+00> : vector<32xf32>
    %19 = vector.multi_reduction <add>, %18, %cst_16 [1] : vector<32x32xf32> to vector<32xf32>
    %20 = vector.shape_cast %19 : vector<32xf32> to vector<32x1xf32>
    %cst_17 = arith.constant 3.100000e+01 : f32
    %21 = vector.broadcast %cst_17 : f32 to vector<32x1xf32>
    %22 = arith.divf %20, %21 : vector<32x1xf32>
    %23 = math.sqrt %22 : vector<32x1xf32>
    %cst_18 = arith.constant 9.99999997E-7 : f32
    %24 = vector.broadcast %cst_18 : f32 to vector<32x1xf32>
    %25 = arith.addf %23, %24 : vector<32x1xf32>
    %26 = tpu.reciprocal %25 : vector<32x1xf32> -> vector<32x1xf32>
    %27 = vector.broadcast %10 : vector<1x32xf32> to vector<32x32xf32>
    %28 = arith.mulf %27, %17 : vector<32x32xf32>
    %29 = vector.broadcast %26 : vector<32x1xf32> to vector<32x32xf32>
    %30 = arith.mulf %28, %29 : vector<32x32xf32>
    %31 = vector.broadcast %11 : vector<1x32xf32> to vector<32x32xf32>
    %32 = arith.addf %30, %31 : vector<32x32xf32>
    %33 = vector.extract_strided_slice %6 {offsets = [0, 0], sizes = [32, 96], strides = [1, 1]} : vector<224x96xf32> to vector<32x96xf32>
    %34 = vector.extract_strided_slice %7 {offsets = [0, 0], sizes = [1, 96], strides = [1, 1]} : vector<12x96xf32> to vector<1x96xf32>
    %35 = vector.extract_strided_slice %6 {offsets = [64, 0], sizes = [32, 32], strides = [1, 1]} : vector<224x96xf32> to vector<32x32xf32>
    %36 = vector.extract_strided_slice %7 {offsets = [2, 0], sizes = [1, 32], strides = [1, 1]} : vector<12x96xf32> to vector<1x32xf32>
    %37 = vector.extract_strided_slice %33 {offsets = [0, 0], sizes = [32, 32], strides = [1, 1]} : vector<32x96xf32> to vector<32x32xf32>
    %cst_19 = arith.constant dense<0.000000e+00> : vector<32x32xf32>
    %38 = tpu.matmul %32, %37, %cst_19 {dimension_numbers = #tpu.dot_dimension_numbers<[1], [0], [0], [1], [0, 0, 1, 1], [], []>} : vector<32x32xf32>, vector<32x32xf32>, vector<32x32xf32> -> vector<32x32xf32>
    %39 = vector.extract_strided_slice %34 {offsets = [0, 0], sizes = [1, 32], strides = [1, 1]} : vector<1x96xf32> to vector<1x32xf32>
    %40 = vector.broadcast %39 : vector<1x32xf32> to vector<32x32xf32>
    %41 = arith.addf %38, %40 : vector<32x32xf32>
    %42 = vector.extract_strided_slice %33 {offsets = [0, 32], sizes = [32, 64], strides = [1, 1]} : vector<32x96xf32> to vector<32x64xf32>
    %cst_20 = arith.constant dense<0.000000e+00> : vector<32x64xf32>
    %43 = tpu.matmul %32, %42, %cst_20 {dimension_numbers = #tpu.dot_dimension_numbers<[1], [0], [0], [1], [0, 0, 1, 1], [], []>} : vector<32x32xf32>, vector<32x64xf32>, vector<32x64xf32> -> vector<32x64xf32>
    %44 = vector.extract_strided_slice %34 {offsets = [0, 32], sizes = [1, 64], strides = [1, 1]} : vector<1x96xf32> to vector<1x64xf32>
    %45 = vector.broadcast %44 : vector<1x64xf32> to vector<32x64xf32>
    %46 = arith.addf %43, %45 : vector<32x64xf32>
    %47 = vector.extract_strided_slice %46 {offsets = [0, 0], sizes = [32, 32], strides = [1, 1]} : vector<32x64xf32> to vector<32x32xf32>
    %48 = vector.extract_strided_slice %46 {offsets = [0, 32], sizes = [32, 32], strides = [1, 1]} : vector<32x64xf32> to vector<32x32xf32>
    %49 = vector.shape_cast %41 : vector<32x32xf32> to vector<4x8x32xf32>
    %50 = vector.shape_cast %47 : vector<32x32xf32> to vector<4x8x32xf32>
    %51 = vector.shape_cast %48 : vector<32x32xf32> to vector<4x8x32xf32>
    %52 = vector.extract_strided_slice %49 {offsets = [0, 0, 0], sizes = [4, 8, 8], strides = [1, 1, 1]} : vector<4x8x32xf32> to vector<4x8x8xf32>
    %53 = vector.extract_strided_slice %50 {offsets = [0, 0, 0], sizes = [4, 8, 8], strides = [1, 1, 1]} : vector<4x8x32xf32> to vector<4x8x8xf32>
    %54 = vector.extract_strided_slice %51 {offsets = [0, 0, 0], sizes = [4, 8, 8], strides = [1, 1, 1]} : vector<4x8x32xf32> to vector<4x8x8xf32>
    %cst_21 = arith.constant dense<0.000000e+00> : vector<4x8x8xf32>
    %55 = tpu.matmul %52, %53, %cst_21 {dimension_numbers = #tpu.dot_dimension_numbers<[2], [2], [1], [1], [0, 0, 0, 1, 1, 1], [0], [0]>} : vector<4x8x8xf32>, vector<4x8x8xf32>, vector<4x8x8xf32> -> vector<4x8x8xf32>
    %56 = arith.addf %55, %4 : vector<4x8x8xf32>
    %cst_22 = arith.constant dense<0xFF800000> : vector<4x8xf32>
    %57 = vector.multi_reduction <maximumf>, %56, %cst_22 [2] : vector<4x8x8xf32> to vector<4x8xf32>
    %58 = vector.shape_cast %57 : vector<4x8xf32> to vector<4x8x1xf32>
    %59 = vector.broadcast %58 : vector<4x8x1xf32> to vector<4x8x8xf32>
    %60 = arith.subf %56, %59 : vector<4x8x8xf32>
    %61 = math.exp %60 : vector<4x8x8xf32>
    %cst_23 = arith.constant dense<0.000000e+00> : vector<4x8xf32>
    %62 = vector.multi_reduction <add>, %61, %cst_23 [2] : vector<4x8x8xf32> to vector<4x8xf32>
    %63 = vector.shape_cast %62 : vector<4x8xf32> to vector<4x8x1xf32>
    %64 = tpu.reciprocal %63 : vector<4x8x1xf32> -> vector<4x8x1xf32>
    %65 = vector.broadcast %64 : vector<4x8x1xf32> to vector<4x8x8xf32>
    %66 = arith.mulf %61, %65 : vector<4x8x8xf32>
    %cst_24 = arith.constant dense<0.000000e+00> : vector<4x8x8xf32>
    %67 = tpu.matmul %66, %54, %cst_24 {dimension_numbers = #tpu.dot_dimension_numbers<[2], [1], [1], [2], [0, 0, 0, 1, 1, 2], [0], [0]>} : vector<4x8x8xf32>, vector<4x8x8xf32>, vector<4x8x8xf32> -> vector<4x8x8xf32>
    %68 = vector.extract_strided_slice %49 {offsets = [0, 0, 8], sizes = [4, 8, 8], strides = [1, 1, 1]} : vector<4x8x32xf32> to vector<4x8x8xf32>
    %69 = vector.extract_strided_slice %50 {offsets = [0, 0, 8], sizes = [4, 8, 8], strides = [1, 1, 1]} : vector<4x8x32xf32> to vector<4x8x8xf32>
    %70 = vector.extract_strided_slice %51 {offsets = [0, 0, 8], sizes = [4, 8, 8], strides = [1, 1, 1]} : vector<4x8x32xf32> to vector<4x8x8xf32>
    %cst_25 = arith.constant dense<0.000000e+00> : vector<4x8x8xf32>
    %71 = tpu.matmul %68, %69, %cst_25 {dimension_numbers = #tpu.dot_dimension_numbers<[2], [2], [1], [1], [0, 0, 0, 1, 1, 1], [0], [0]>} : vector<4x8x8xf32>, vector<4x8x8xf32>, vector<4x8x8xf32> -> vector<4x8x8xf32>
    %72 = arith.addf %71, %4 : vector<4x8x8xf32>
    %cst_26 = arith.constant dense<0xFF800000> : vector<4x8xf32>
    %73 = vector.multi_reduction <maximumf>, %72, %cst_26 [2] : vector<4x8x8xf32> to vector<4x8xf32>
    %74 = vector.shape_cast %73 : vector<4x8xf32> to vector<4x8x1xf32>
    %75 = vector.broadcast %74 : vector<4x8x1xf32> to vector<4x8x8xf32>
    %76 = arith.subf %72, %75 : vector<4x8x8xf32>
    %77 = math.exp %76 : vector<4x8x8xf32>
    %cst_27 = arith.constant dense<0.000000e+00> : vector<4x8xf32>
    %78 = vector.multi_reduction <add>, %77, %cst_27 [2] : vector<4x8x8xf32> to vector<4x8xf32>
    %79 = vector.shape_cast %78 : vector<4x8xf32> to vector<4x8x1xf32>
    %80 = tpu.reciprocal %79 : vector<4x8x1xf32> -> vector<4x8x1xf32>
    %81 = vector.broadcast %80 : vector<4x8x1xf32> to vector<4x8x8xf32>
    %82 = arith.mulf %77, %81 : vector<4x8x8xf32>
    %cst_28 = arith.constant dense<0.000000e+00> : vector<4x8x8xf32>
    %83 = tpu.matmul %82, %70, %cst_28 {dimension_numbers = #tpu.dot_dimension_numbers<[2], [1], [1], [2], [0, 0, 0, 1, 1, 2], [0], [0]>} : vector<4x8x8xf32>, vector<4x8x8xf32>, vector<4x8x8xf32> -> vector<4x8x8xf32>
    %84 = vector.extract_strided_slice %49 {offsets = [0, 0, 16], sizes = [4, 8, 8], strides = [1, 1, 1]} : vector<4x8x32xf32> to vector<4x8x8xf32>
    %85 = vector.extract_strided_slice %50 {offsets = [0, 0, 16], sizes = [4, 8, 8], strides = [1, 1, 1]} : vector<4x8x32xf32> to vector<4x8x8xf32>
    %86 = vector.extract_strided_slice %51 {offsets = [0, 0, 16], sizes = [4, 8, 8], strides = [1, 1, 1]} : vector<4x8x32xf32> to vector<4x8x8xf32>
    %cst_29 = arith.constant dense<0.000000e+00> : vector<4x8x8xf32>
    %87 = tpu.matmul %84, %85, %cst_29 {dimension_numbers = #tpu.dot_dimension_numbers<[2], [2], [1], [1], [0, 0, 0, 1, 1, 1], [0], [0]>} : vector<4x8x8xf32>, vector<4x8x8xf32>, vector<4x8x8xf32> -> vector<4x8x8xf32>
    %88 = arith.addf %87, %4 : vector<4x8x8xf32>
    %cst_30 = arith.constant dense<0xFF800000> : vector<4x8xf32>
    %89 = vector.multi_reduction <maximumf>, %88, %cst_30 [2] : vector<4x8x8xf32> to vector<4x8xf32>
    %90 = vector.shape_cast %89 : vector<4x8xf32> to vector<4x8x1xf32>
    %91 = vector.broadcast %90 : vector<4x8x1xf32> to vector<4x8x8xf32>
    %92 = arith.subf %88, %91 : vector<4x8x8xf32>
    %93 = math.exp %92 : vector<4x8x8xf32>
    %cst_31 = arith.constant dense<0.000000e+00> : vector<4x8xf32>
    %94 = vector.multi_reduction <add>, %93, %cst_31 [2] : vector<4x8x8xf32> to vector<4x8xf32>
    %95 = vector.shape_cast %94 : vector<4x8xf32> to vector<4x8x1xf32>
    %96 = tpu.reciprocal %95 : vector<4x8x1xf32> -> vector<4x8x1xf32>
    %97 = vector.broadcast %96 : vector<4x8x1xf32> to vector<4x8x8xf32>
    %98 = arith.mulf %93, %97 : vector<4x8x8xf32>
    %cst_32 = arith.constant dense<0.000000e+00> : vector<4x8x8xf32>
    %99 = tpu.matmul %98, %86, %cst_32 {dimension_numbers = #tpu.dot_dimension_numbers<[2], [1], [1], [2], [0, 0, 0, 1, 1, 2], [0], [0]>} : vector<4x8x8xf32>, vector<4x8x8xf32>, vector<4x8x8xf32> -> vector<4x8x8xf32>
    %100 = vector.extract_strided_slice %49 {offsets = [0, 0, 24], sizes = [4, 8, 8], strides = [1, 1, 1]} : vector<4x8x32xf32> to vector<4x8x8xf32>
    %101 = vector.extract_strided_slice %50 {offsets = [0, 0, 24], sizes = [4, 8, 8], strides = [1, 1, 1]} : vector<4x8x32xf32> to vector<4x8x8xf32>
    %102 = vector.extract_strided_slice %51 {offsets = [0, 0, 24], sizes = [4, 8, 8], strides = [1, 1, 1]} : vector<4x8x32xf32> to vector<4x8x8xf32>
    %cst_33 = arith.constant dense<0.000000e+00> : vector<4x8x8xf32>
    %103 = tpu.matmul %100, %101, %cst_33 {dimension_numbers = #tpu.dot_dimension_numbers<[2], [2], [1], [1], [0, 0, 0, 1, 1, 1], [0], [0]>} : vector<4x8x8xf32>, vector<4x8x8xf32>, vector<4x8x8xf32> -> vector<4x8x8xf32>
    %104 = arith.addf %103, %4 : vector<4x8x8xf32>
    %cst_34 = arith.constant dense<0xFF800000> : vector<4x8xf32>
    %105 = vector.multi_reduction <maximumf>, %104, %cst_34 [2] : vector<4x8x8xf32> to vector<4x8xf32>
    %106 = vector.shape_cast %105 : vector<4x8xf32> to vector<4x8x1xf32>
    %107 = vector.broadcast %106 : vector<4x8x1xf32> to vector<4x8x8xf32>
    %108 = arith.subf %104, %107 : vector<4x8x8xf32>
    %109 = math.exp %108 : vector<4x8x8xf32>
    %cst_35 = arith.constant dense<0.000000e+00> : vector<4x8xf32>
    %110 = vector.multi_reduction <add>, %109, %cst_35 [2] : vector<4x8x8xf32> to vector<4x8xf32>
    %111 = vector.shape_cast %110 : vector<4x8xf32> to vector<4x8x1xf32>
    %112 = tpu.reciprocal %111 : vector<4x8x1xf32> -> vector<4x8x1xf32>
    %113 = vector.broadcast %112 : vector<4x8x1xf32> to vector<4x8x8xf32>
    %114 = arith.mulf %109, %113 : vector<4x8x8xf32>
    %cst_36 = arith.constant dense<0.000000e+00> : vector<4x8x8xf32>
    %115 = tpu.matmul %114, %102, %cst_36 {dimension_numbers = #tpu.dot_dimension_numbers<[2], [1], [1], [2], [0, 0, 0, 1, 1, 2], [0], [0]>} : vector<4x8x8xf32>, vector<4x8x8xf32>, vector<4x8x8xf32> -> vector<4x8x8xf32>
    %116 = tpu.concatenate %67, %83, %99, %115 in 2 : vector<4x8x8xf32>, vector<4x8x8xf32>, vector<4x8x8xf32>, vector<4x8x8xf32> -> vector<4x8x32xf32>
    %117 = vector.shape_cast %116 : vector<4x8x32xf32> to vector<32x32xf32>
    %cst_37 = arith.constant dense<0.000000e+00> : vector<32x32xf32>
    %118 = tpu.matmul %117, %35, %cst_37 {dimension_numbers = #tpu.dot_dimension_numbers<[1], [0], [0], [1], [0, 0, 1, 1], [], []>} : vector<32x32xf32>, vector<32x32xf32>, vector<32x32xf32> -> vector<32x32xf32>
    %119 = vector.broadcast %36 : vector<1x32xf32> to vector<32x32xf32>
    %120 = arith.addf %118, %119 : vector<32x32xf32>
    %121 = arith.addf %1, %120 : vector<32x32xf32>
    %122 = vector.extract_strided_slice %8 {offsets = [1, 0], sizes = [1, 32], strides = [1, 1]} : vector<3x32xf32> to vector<1x32xf32>
    %123 = vector.extract_strided_slice %9 {offsets = [1, 0], sizes = [1, 32], strides = [1, 1]} : vector<3x32xf32> to vector<1x32xf32>
    %cst_38 = arith.constant dense<0.000000e+00> : vector<32xf32>
    %124 = vector.multi_reduction <add>, %121, %cst_38 [1] : vector<32x32xf32> to vector<32xf32>
    %125 = vector.shape_cast %124 : vector<32xf32> to vector<32x1xf32>
    %cst_39 = arith.constant 3.200000e+01 : f32
    %126 = vector.broadcast %cst_39 : f32 to vector<32x1xf32>
    %127 = arith.divf %125, %126 : vector<32x1xf32>
    %128 = vector.broadcast %127 : vector<32x1xf32> to vector<32x32xf32>
    %129 = arith.subf %121, %128 : vector<32x32xf32>
    %130 = arith.mulf %129, %129 : vector<32x32xf32>
    %cst_40 = arith.constant dense<0.000000e+00> : vector<32xf32>
    %131 = vector.multi_reduction <add>, %130, %cst_40 [1] : vector<32x32xf32> to vector<32xf32>
    %132 = vector.shape_cast %131 : vector<32xf32> to vector<32x1xf32>
    %cst_41 = arith.constant 3.100000e+01 : f32
    %133 = vector.broadcast %cst_41 : f32 to vector<32x1xf32>
    %134 = arith.divf %132, %133 : vector<32x1xf32>
    %135 = math.sqrt %134 : vector<32x1xf32>
    %cst_42 = arith.constant 9.99999997E-7 : f32
    %136 = vector.broadcast %cst_42 : f32 to vector<32x1xf32>
    %137 = arith.addf %135, %136 : vector<32x1xf32>
    %138 = tpu.reciprocal %137 : vector<32x1xf32> -> vector<32x1xf32>
    %139 = vector.broadcast %122 : vector<1x32xf32> to vector<32x32xf32>
    %140 = arith.mulf %139, %129 : vector<32x32xf32>
    %141 = vector.broadcast %138 : vector<32x1xf32> to vector<32x32xf32>
    %142 = arith.mulf %140, %141 : vector<32x32xf32>
    %143 = vector.broadcast %123 : vector<1x32xf32> to vector<32x32xf32>
    %144 = arith.addf %142, %143 : vector<32x32xf32>
    %145 = vector.extract_strided_slice %6 {offsets = [32, 0], sizes = [32, 96], strides = [1, 1]} : vector<224x96xf32> to vector<32x96xf32>
    %146 = vector.extract_strided_slice %7 {offsets = [1, 0], sizes = [1, 96], strides = [1, 1]} : vector<12x96xf32> to vector<1x96xf32>
    %147 = vector.extract_strided_slice %6 {offsets = [96, 0], sizes = [32, 32], strides = [1, 1]} : vector<224x96xf32> to vector<32x32xf32>
    %148 = vector.extract_strided_slice %7 {offsets = [3, 0], sizes = [1, 32], strides = [1, 1]} : vector<12x96xf32> to vector<1x32xf32>
    %149 = vector.extract_strided_slice %145 {offsets = [0, 0], sizes = [32, 32], strides = [1, 1]} : vector<32x96xf32> to vector<32x32xf32>
    %cst_43 = arith.constant dense<0.000000e+00> : vector<32x32xf32>
    %150 = tpu.matmul %144, %149, %cst_43 {dimension_numbers = #tpu.dot_dimension_numbers<[1], [0], [0], [1], [0, 0, 1, 1], [], []>} : vector<32x32xf32>, vector<32x32xf32>, vector<32x32xf32> -> vector<32x32xf32>
    %151 = vector.extract_strided_slice %146 {offsets = [0, 0], sizes = [1, 32], strides = [1, 1]} : vector<1x96xf32> to vector<1x32xf32>
    %152 = vector.broadcast %151 : vector<1x32xf32> to vector<32x32xf32>
    %153 = arith.addf %150, %152 : vector<32x32xf32>
    %154 = vector.extract_strided_slice %145 {offsets = [0, 32], sizes = [32, 64], strides = [1, 1]} : vector<32x96xf32> to vector<32x64xf32>
    %cst_44 = arith.constant dense<0.000000e+00> : vector<32x64xf32>
    %155 = tpu.matmul %3, %154, %cst_44 {dimension_numbers = #tpu.dot_dimension_numbers<[1], [0], [0], [1], [0, 0, 1, 1], [], []>} : vector<32x32xf32>, vector<32x64xf32>, vector<32x64xf32> -> vector<32x64xf32>
    %156 = vector.extract_strided_slice %146 {offsets = [0, 32], sizes = [1, 64], strides = [1, 1]} : vector<1x96xf32> to vector<1x64xf32>
    %157 = vector.broadcast %156 : vector<1x64xf32> to vector<32x64xf32>
    %158 = arith.addf %155, %157 : vector<32x64xf32>
    %159 = vector.extract_strided_slice %158 {offsets = [0, 0], sizes = [32, 32], strides = [1, 1]} : vector<32x64xf32> to vector<32x32xf32>
    %160 = vector.extract_strided_slice %158 {offsets = [0, 32], sizes = [32, 32], strides = [1, 1]} : vector<32x64xf32> to vector<32x32xf32>
    %161 = vector.shape_cast %153 : vector<32x32xf32> to vector<4x8x32xf32>
    %162 = vector.shape_cast %159 : vector<32x32xf32> to vector<4x8x32xf32>
    %163 = vector.shape_cast %160 : vector<32x32xf32> to vector<4x8x32xf32>
    %164 = vector.extract_strided_slice %161 {offsets = [0, 0, 0], sizes = [4, 8, 8], strides = [1, 1, 1]} : vector<4x8x32xf32> to vector<4x8x8xf32>
    %165 = vector.extract_strided_slice %162 {offsets = [0, 0, 0], sizes = [4, 8, 8], strides = [1, 1, 1]} : vector<4x8x32xf32> to vector<4x8x8xf32>
    %166 = vector.extract_strided_slice %163 {offsets = [0, 0, 0], sizes = [4, 8, 8], strides = [1, 1, 1]} : vector<4x8x32xf32> to vector<4x8x8xf32>
    %cst_45 = arith.constant dense<0.000000e+00> : vector<4x8x8xf32>
    %167 = tpu.matmul %164, %165, %cst_45 {dimension_numbers = #tpu.dot_dimension_numbers<[2], [2], [1], [1], [0, 0, 0, 1, 1, 1], [0], [0]>} : vector<4x8x8xf32>, vector<4x8x8xf32>, vector<4x8x8xf32> -> vector<4x8x8xf32>
    %168 = vector.broadcast %5 : vector<4x1x8xf32> to vector<4x8x8xf32>
    %169 = arith.addf %167, %168 : vector<4x8x8xf32>
    %cst_46 = arith.constant dense<0xFF800000> : vector<4x8xf32>
    %170 = vector.multi_reduction <maximumf>, %169, %cst_46 [2] : vector<4x8x8xf32> to vector<4x8xf32>
    %171 = vector.shape_cast %170 : vector<4x8xf32> to vector<4x8x1xf32>
    %172 = vector.broadcast %171 : vector<4x8x1xf32> to vector<4x8x8xf32>
    %173 = arith.subf %169, %172 : vector<4x8x8xf32>
    %174 = math.exp %173 : vector<4x8x8xf32>
    %cst_47 = arith.constant dense<0.000000e+00> : vector<4x8xf32>
    %175 = vector.multi_reduction <add>, %174, %cst_47 [2] : vector<4x8x8xf32> to vector<4x8xf32>
    %176 = vector.shape_cast %175 : vector<4x8xf32> to vector<4x8x1xf32>
    %177 = tpu.reciprocal %176 : vector<4x8x1xf32> -> vector<4x8x1xf32>
    %178 = vector.broadcast %177 : vector<4x8x1xf32> to vector<4x8x8xf32>
    %179 = arith.mulf %174, %178 : vector<4x8x8xf32>
    %cst_48 = arith.constant dense<0.000000e+00> : vector<4x8x8xf32>
    %180 = tpu.matmul %179, %166, %cst_48 {dimension_numbers = #tpu.dot_dimension_numbers<[2], [1], [1], [2], [0, 0, 0, 1, 1, 2], [0], [0]>} : vector<4x8x8xf32>, vector<4x8x8xf32>, vector<4x8x8xf32> -> vector<4x8x8xf32>
    %181 = vector.extract_strided_slice %161 {offsets = [0, 0, 8], sizes = [4, 8, 8], strides = [1, 1, 1]} : vector<4x8x32xf32> to vector<4x8x8xf32>
    %182 = vector.extract_strided_slice %162 {offsets = [0, 0, 8], sizes = [4, 8, 8], strides = [1, 1, 1]} : vector<4x8x32xf32> to vector<4x8x8xf32>
    %183 = vector.extract_strided_slice %163 {offsets = [0, 0, 8], sizes = [4, 8, 8], strides = [1, 1, 1]} : vector<4x8x32xf32> to vector<4x8x8xf32>
    %cst_49 = arith.constant dense<0.000000e+00> : vector<4x8x8xf32>
    %184 = tpu.matmul %181, %182, %cst_49 {dimension_numbers = #tpu.dot_dimension_numbers<[2], [2], [1], [1], [0, 0, 0, 1, 1, 1], [0], [0]>} : vector<4x8x8xf32>, vector<4x8x8xf32>, vector<4x8x8xf32> -> vector<4x8x8xf32>
    %185 = vector.broadcast %5 : vector<4x1x8xf32> to vector<4x8x8xf32>
    %186 = arith.addf %184, %185 : vector<4x8x8xf32>
    %cst_50 = arith.constant dense<0xFF800000> : vector<4x8xf32>
    %187 = vector.multi_reduction <maximumf>, %186, %cst_50 [2] : vector<4x8x8xf32> to vector<4x8xf32>
    %188 = vector.shape_cast %187 : vector<4x8xf32> to vector<4x8x1xf32>
    %189 = vector.broadcast %188 : vector<4x8x1xf32> to vector<4x8x8xf32>
    %190 = arith.subf %186, %189 : vector<4x8x8xf32>
    %191 = math.exp %190 : vector<4x8x8xf32>
    %cst_51 = arith.constant dense<0.000000e+00> : vector<4x8xf32>
    %192 = vector.multi_reduction <add>, %191, %cst_51 [2] : vector<4x8x8xf32> to vector<4x8xf32>
    %193 = vector.shape_cast %192 : vector<4x8xf32> to vector<4x8x1xf32>
    %194 = tpu.reciprocal %193 : vector<4x8x1xf32> -> vector<4x8x1xf32>
    %195 = vector.broadcast %194 : vector<4x8x1xf32> to vector<4x8x8xf32>
    %196 = arith.mulf %191, %195 : vector<4x8x8xf32>
    %cst_52 = arith.constant dense<0.000000e+00> : vector<4x8x8xf32>
    %197 = tpu.matmul %196, %183, %cst_52 {dimension_numbers = #tpu.dot_dimension_numbers<[2], [1], [1], [2], [0, 0, 0, 1, 1, 2], [0], [0]>} : vector<4x8x8xf32>, vector<4x8x8xf32>, vector<4x8x8xf32> -> vector<4x8x8xf32>
    %198 = vector.extract_strided_slice %161 {offsets = [0, 0, 16], sizes = [4, 8, 8], strides = [1, 1, 1]} : vector<4x8x32xf32> to vector<4x8x8xf32>
    %199 = vector.extract_strided_slice %162 {offsets = [0, 0, 16], sizes = [4, 8, 8], strides = [1, 1, 1]} : vector<4x8x32xf32> to vector<4x8x8xf32>
    %200 = vector.extract_strided_slice %163 {offsets = [0, 0, 16], sizes = [4, 8, 8], strides = [1, 1, 1]} : vector<4x8x32xf32> to vector<4x8x8xf32>
    %cst_53 = arith.constant dense<0.000000e+00> : vector<4x8x8xf32>
    %201 = tpu.matmul %198, %199, %cst_53 {dimension_numbers = #tpu.dot_dimension_numbers<[2], [2], [1], [1], [0, 0, 0, 1, 1, 1], [0], [0]>} : vector<4x8x8xf32>, vector<4x8x8xf32>, vector<4x8x8xf32> -> vector<4x8x8xf32>
    %202 = vector.broadcast %5 : vector<4x1x8xf32> to vector<4x8x8xf32>
    %203 = arith.addf %201, %202 : vector<4x8x8xf32>
    %cst_54 = arith.constant dense<0xFF800000> : vector<4x8xf32>
    %204 = vector.multi_reduction <maximumf>, %203, %cst_54 [2] : vector<4x8x8xf32> to vector<4x8xf32>
    %205 = vector.shape_cast %204 : vector<4x8xf32> to vector<4x8x1xf32>
    %206 = vector.broadcast %205 : vector<4x8x1xf32> to vector<4x8x8xf32>
    %207 = arith.subf %203, %206 : vector<4x8x8xf32>
    %208 = math.exp %207 : vector<4x8x8xf32>
    %cst_55 = arith.constant dense<0.000000e+00> : vector<4x8xf32>
    %209 = vector.multi_reduction <add>, %208, %cst_55 [2] : vector<4x8x8xf32> to vector<4x8xf32>
    %210 = vector.shape_cast %209 : vector<4x8xf32> to vector<4x8x1xf32>
    %211 = tpu.reciprocal %210 : vector<4x8x1xf32> -> vector<4x8x1xf32>
    %212 = vector.broadcast %211 : vector<4x8x1xf32> to vector<4x8x8xf32>
    %213 = arith.mulf %208, %212 : vector<4x8x8xf32>
    %cst_56 = arith.constant dense<0.000000e+00> : vector<4x8x8xf32>
    %214 = tpu.matmul %213, %200, %cst_56 {dimension_numbers = #tpu.dot_dimension_numbers<[2], [1], [1], [2], [0, 0, 0, 1, 1, 2], [0], [0]>} : vector<4x8x8xf32>, vector<4x8x8xf32>, vector<4x8x8xf32> -> vector<4x8x8xf32>
    %215 = vector.extract_strided_slice %161 {offsets = [0, 0, 24], sizes = [4, 8, 8], strides = [1, 1, 1]} : vector<4x8x32xf32> to vector<4x8x8xf32>
    %216 = vector.extract_strided_slice %162 {offsets = [0, 0, 24], sizes = [4, 8, 8], strides = [1, 1, 1]} : vector<4x8x32xf32> to vector<4x8x8xf32>
    %217 = vector.extract_strided_slice %163 {offsets = [0, 0, 24], sizes = [4, 8, 8], strides = [1, 1, 1]} : vector<4x8x32xf32> to vector<4x8x8xf32>
    %cst_57 = arith.constant dense<0.000000e+00> : vector<4x8x8xf32>
    %218 = tpu.matmul %215, %216, %cst_57 {dimension_numbers = #tpu.dot_dimension_numbers<[2], [2], [1], [1], [0, 0, 0, 1, 1, 1], [0], [0]>} : vector<4x8x8xf32>, vector<4x8x8xf32>, vector<4x8x8xf32> -> vector<4x8x8xf32>
    %219 = vector.broadcast %5 : vector<4x1x8xf32> to vector<4x8x8xf32>
    %220 = arith.addf %218, %219 : vector<4x8x8xf32>
    %cst_58 = arith.constant dense<0xFF800000> : vector<4x8xf32>
    %221 = vector.multi_reduction <maximumf>, %220, %cst_58 [2] : vector<4x8x8xf32> to vector<4x8xf32>
    %222 = vector.shape_cast %221 : vector<4x8xf32> to vector<4x8x1xf32>
    %223 = vector.broadcast %222 : vector<4x8x1xf32> to vector<4x8x8xf32>
    %224 = arith.subf %220, %223 : vector<4x8x8xf32>
    %225 = math.exp %224 : vector<4x8x8xf32>
    %cst_59 = arith.constant dense<0.000000e+00> : vector<4x8xf32>
    %226 = vector.multi_reduction <add>, %225, %cst_59 [2] : vector<4x8x8xf32> to vector<4x8xf32>
    %227 = vector.shape_cast %226 : vector<4x8xf32> to vector<4x8x1xf32>
    %228 = tpu.reciprocal %227 : vector<4x8x1xf32> -> vector<4x8x1xf32>
    %229 = vector.broadcast %228 : vector<4x8x1xf32> to vector<4x8x8xf32>
    %230 = arith.mulf %225, %229 : vector<4x8x8xf32>
    %cst_60 = arith.constant dense<0.000000e+00> : vector<4x8x8xf32>
    %231 = tpu.matmul %230, %217, %cst_60 {dimension_numbers = #tpu.dot_dimension_numbers<[2], [1], [1], [2], [0, 0, 0, 1, 1, 2], [0], [0]>} : vector<4x8x8xf32>, vector<4x8x8xf32>, vector<4x8x8xf32> -> vector<4x8x8xf32>
    %232 = tpu.concatenate %180, %197, %214, %231 in 2 : vector<4x8x8xf32>, vector<4x8x8xf32>, vector<4x8x8xf32>, vector<4x8x8xf32> -> vector<4x8x32xf32>
    %233 = vector.shape_cast %232 : vector<4x8x32xf32> to vector<32x32xf32>
    %cst_61 = arith.constant dense<0.000000e+00> : vector<32x32xf32>
    %234 = tpu.matmul %233, %147, %cst_61 {dimension_numbers = #tpu.dot_dimension_numbers<[1], [0], [0], [1], [0, 0, 1, 1], [], []>} : vector<32x32xf32>, vector<32x32xf32>, vector<32x32xf32> -> vector<32x32xf32>
    %235 = vector.broadcast %148 : vector<1x32xf32> to vector<32x32xf32>
    %236 = arith.addf %234, %235 : vector<32x32xf32>
    %237 = arith.addf %121, %236 : vector<32x32xf32>
    %238 = vector.extract_strided_slice %8 {offsets = [2, 0], sizes = [1, 32], strides = [1, 1]} : vector<3x32xf32> to vector<1x32xf32>
    %239 = vector.extract_strided_slice %9 {offsets = [2, 0], sizes = [1, 32], strides = [1, 1]} : vector<3x32xf32> to vector<1x32xf32>
    %cst_62 = arith.constant dense<0.000000e+00> : vector<32xf32>
    %240 = vector.multi_reduction <add>, %237, %cst_62 [1] : vector<32x32xf32> to vector<32xf32>
    %241 = vector.shape_cast %240 : vector<32xf32> to vector<32x1xf32>
    %cst_63 = arith.constant 3.200000e+01 : f32
    %242 = vector.broadcast %cst_63 : f32 to vector<32x1xf32>
    %243 = arith.divf %241, %242 : vector<32x1xf32>
    %244 = vector.broadcast %243 : vector<32x1xf32> to vector<32x32xf32>
    %245 = arith.subf %237, %244 : vector<32x32xf32>
    %246 = arith.mulf %245, %245 : vector<32x32xf32>
    %cst_64 = arith.constant dense<0.000000e+00> : vector<32xf32>
    %247 = vector.multi_reduction <add>, %246, %cst_64 [1] : vector<32x32xf32> to vector<32xf32>
    %248 = vector.shape_cast %247 : vector<32xf32> to vector<32x1xf32>
    %cst_65 = arith.constant 3.100000e+01 : f32
    %249 = vector.broadcast %cst_65 : f32 to vector<32x1xf32>
    %250 = arith.divf %248, %249 : vector<32x1xf32>
    %251 = math.sqrt %250 : vector<32x1xf32>
    %cst_66 = arith.constant 9.99999997E-7 : f32
    %252 = vector.broadcast %cst_66 : f32 to vector<32x1xf32>
    %253 = arith.addf %251, %252 : vector<32x1xf32>
    %254 = tpu.reciprocal %253 : vector<32x1xf32> -> vector<32x1xf32>
    %255 = vector.broadcast %238 : vector<1x32xf32> to vector<32x32xf32>
    %256 = arith.mulf %255, %245 : vector<32x32xf32>
    %257 = vector.broadcast %254 : vector<32x1xf32> to vector<32x32xf32>
    %258 = arith.mulf %256, %257 : vector<32x32xf32>
    %259 = vector.broadcast %239 : vector<1x32xf32> to vector<32x32xf32>
    %260 = arith.addf %258, %259 : vector<32x32xf32>
    %261 = vector.extract_strided_slice %6 {offsets = [128, 0], sizes = [32, 64], strides = [1, 1]} : vector<224x96xf32> to vector<32x64xf32>
    %cst_67 = arith.constant dense<0.000000e+00> : vector<32x64xf32>
    %262 = tpu.matmul %260, %261, %cst_67 {dimension_numbers = #tpu.dot_dimension_numbers<[1], [0], [0], [1], [0, 0, 1, 1], [], []>} : vector<32x32xf32>, vector<32x64xf32>, vector<32x64xf32> -> vector<32x64xf32>
    %263 = vector.extract_strided_slice %7 {offsets = [4, 0], sizes = [1, 64], strides = [1, 1]} : vector<12x96xf32> to vector<1x64xf32>
    %264 = vector.broadcast %263 : vector<1x64xf32> to vector<32x64xf32>
    %265 = arith.addf %262, %264 : vector<32x64xf32>
    %cst_68 = arith.constant 0.000000e+00 : f32
    %266 = vector.broadcast %cst_68 : f32 to vector<32x64xf32>
    %267 = arith.maximumf %265, %266 : vector<32x64xf32>
    %268 = vector.extract_strided_slice %6 {offsets = [160, 0], sizes = [64, 32], strides = [1, 1]} : vector<224x96xf32> to vector<64x32xf32>
    %cst_69 = arith.constant dense<0.000000e+00> : vector<32x32xf32>
    %269 = tpu.matmul %267, %268, %cst_69 {dimension_numbers = #tpu.dot_dimension_numbers<[1], [0], [0], [1], [0, 0, 1, 1], [], []>} : vector<32x64xf32>, vector<64x32xf32>, vector<32x32xf32> -> vector<32x32xf32>
    %270 = arith.addf %237, %269 : vector<32x32xf32>
    %271 = vector.extract_strided_slice %7 {offsets = [5, 0], sizes = [1, 32], strides = [1, 1]} : vector<12x96xf32> to vector<1x32xf32>
    %272 = vector.broadcast %271 : vector<1x32xf32> to vector<32x32xf32>
    %273 = arith.addf %270, %272 : vector<32x32xf32>
    %274 = vector.shape_cast %273 : vector<32x32xf32> to vector<4x8x32xf32>
    %c0_70 = arith.constant 0 : index
    %c0_71 = arith.constant 0 : index
    %c0_72 = arith.constant 0 : index
    %275 = vector.load %arg7[%c0_70, %c0_71, %c0_72] : memref<4x8x32xf32, #tpu.memory_space<vmem>>, vector<4x8x32xf32>
    tpu.vector_store %arg7[%c0_70, %c0_71, %c0_72], %274 {strides = array<i32>} : memref<4x8x32xf32, #tpu.memory_space<vmem>>, vector<4x8x32xf32>,
    return
  }
  func.func @transform_0(%arg0: i32) -> (i32, i32, i32) {
    %c0_i32 = arith.constant 0 : i32
    %c0_i32_0 = arith.constant 0 : i32
    %c0_i32_1 = arith.constant 0 : i32
    return %arg0, %c0_i32, %c0_i32_0 : i32, i32, i32
  }
  func.func @transform_1(%arg0: i32) -> (i32, i32, i32) {
    %c0_i32 = arith.constant 0 : i32
    %c0_i32_0 = arith.constant 0 : i32
    %c0_i32_1 = arith.constant 0 : i32
    return %arg0, %c0_i32, %c0_i32_0 : i32, i32, i32
  }
  func.func @transform_2(%arg0: i32) -> (i32, i32, i32) {
    %c0_i32 = arith.constant 0 : i32
    %c0_i32_0 = arith.constant 0 : i32
    %c0_i32_1 = arith.constant 0 : i32
    return %arg0, %c0_i32, %c0_i32_0 : i32, i32, i32
  }
  func.func @transform_3(%arg0: i32) -> (i32, i32, i32) {
    %c0_i32 = arith.constant 0 : i32
    %c0_i32_0 = arith.constant 0 : i32
    %c0_i32_1 = arith.constant 0 : i32
    return %arg0, %c0_i32, %c0_i32_0 : i32, i32, i32
  }
  func.func @transform_4(%arg0: i32) -> (i32, i32) {
    %c0_i32 = arith.constant 0 : i32
    %c0_i32_0 = arith.constant 0 : i32
    %c0_i32_1 = arith.constant 0 : i32
    return %c0_i32, %c0_i32_0 : i32, i32
  }
  func.func @transform_5(%arg0: i32) -> (i32, i32) {
    %c0_i32 = arith.constant 0 : i32
    %c0_i32_0 = arith.constant 0 : i32
    %c0_i32_1 = arith.constant 0 : i32
    return %c0_i32, %c0_i32_0 : i32, i32
  }
  func.func @transform_6(%arg0: i32) -> (i32, i32, i32) {
    %c0_i32 = arith.constant 0 : i32
    %c0_i32_0 = arith.constant 0 : i32
    %c0_i32_1 = arith.constant 0 : i32
    return %arg0, %c0_i32, %c0_i32_0 : i32, i32, i32
  }
}

</mosaic_0001>

<llo_original>
// kernel: tpu_custom_call.1
$region0: #{tpu_custom_call.1}
  #allocation0 [shape = 'u32[]', space=smem, size = 0x4, offset = 0x4, fixed_abs, tag = 'smem constant byte address 0x4 - core index']
  #allocation1 [shape = 'u32[144,128]{1,0:T(1,128)}', space=vmem, size = 0x12000, scoped, tag = 'internal scratch']
  %s0 = inlined_call_operand.vmem [shape: f32[4,8,32], index: 0, kind: input, shape index: {}]
  %s1 = inlined_call_operand.vmem [shape: f32[4,8,32], index: 1, kind: input, shape index: {}]
  %s2 = inlined_call_operand.vmem [shape: f32[4,1,8], index: 2, kind: input, shape index: {}]
  %s3 = inlined_call_operand.vmem [shape: f32[4,8,8], index: 3, kind: input, shape index: {}]
  %s4 = inlined_call_operand.vmem [shape: f32[224,96], index: 4, kind: input, shape index: {}]
  %s5 = inlined_call_operand.vmem [shape: f32[12,96], index: 5, kind: input, shape index: {}]
  %s6 = inlined_call_operand.hbm [shape: f32[4,8,32], index: 6, kind: output, shape index: {}]
  %s7 = sld [smem:[#allocation0]]
  $region34: #{tpu_custom_call.1} parent=0
    _
  %s9 = ssub.s32 1, %s7
  %s10 = scalar_select 0, %s9, %s7
  $region1: #{tpu_custom_call.1} parent=0
    #allocation2 [shape = 'u8[16384]{0}', space=vmem, size = 0x4000, scoped, tag = 'output window, operand 0, single buffered']
    #allocation3 [shape = 's32[1]{0}', space=sflag, size = 0x4, scoped, tag = 'scoped memory for tpu_custom_call.1']
    %11 = vsyncpa [#allocation3], 0
    // Predicated region
    $region2: #{tpu_custom_call.1} parent=1 // pred_check
      _
    $region3: #{tpu_custom_call.1} parent=1 // pred_check_branch
      %13 = sbr.rel (0) target = $region5
    $region4: #{tpu_custom_call.1} parent=1 // pred_region
      _
    $region5: #{tpu_custom_call.1} parent=1 // pred_fallthru
      _
    // Predicated region
    $region6: #{tpu_custom_call.1} parent=1 // pred_check
      _
    $region7: #{tpu_custom_call.1} parent=1 // pred_check_branch
      %15 = sbr.rel (0) target = $region9
    $region8: #{tpu_custom_call.1} parent=1 // pred_region
      _
    $region9: #{tpu_custom_call.1} parent=1 // pred_fallthru
      _
    // Predicated region
    $region10: #{tpu_custom_call.1} parent=1 // pred_check
      _
    $region11: #{tpu_custom_call.1} parent=1 // pred_check_branch
      %17 = sbr.rel (0) target = $region13
    $region12: #{tpu_custom_call.1} parent=1 // pred_region
      _
    $region13: #{tpu_custom_call.1} parent=1 // pred_fallthru
      _
    // Predicated region
    $region14: #{tpu_custom_call.1} parent=1 // pred_check
      _
    $region15: #{tpu_custom_call.1} parent=1 // pred_check_branch
      %19 = sbr.rel (0) target = $region17
    $region16: #{tpu_custom_call.1} parent=1 // pred_region
      _
    $region17: #{tpu_custom_call.1} parent=1 // pred_fallthru
      _
    // Predicated region
    $region18: #{tpu_custom_call.1} parent=1 // pred_check
      _
    $region19: #{tpu_custom_call.1} parent=1 // pred_check_branch
      %21 = sbr.rel (0) target = $region21
    $region20: #{tpu_custom_call.1} parent=1 // pred_region
      _
    $region21: #{tpu_custom_call.1} parent=1 // pred_fallthru
      _
    // Predicated region
    $region22: #{tpu_custom_call.1} parent=1 // pred_check
      _
    $region23: #{tpu_custom_call.1} parent=1 // pred_check_branch
      %23 = sbr.rel (0) target = $region25
    $region24: #{tpu_custom_call.1} parent=1 // pred_region
      _
    $region25: #{tpu_custom_call.1} parent=1 // pred_fallthru
      _
    %v24 = vld [vmem:[%s0] sm:$0xff]
    %v25 = vld [vmem:[%s0 + $0x8] sm:$0xff]
    %v26 = vld [vmem:[%s0 + $0x10] sm:$0xff]
    %v27 = vld [vmem:[%s0 + $0x18] sm:$0xff]
    %v28 = vld [vmem:[%s1] sm:$0xff]
    %v29 = vld [vmem:[%s1 + $0x8] sm:$0xff]
    %v30 = vld [vmem:[%s1 + $0x10] sm:$0xff]
    %v31 = vld [vmem:[%s1 + $0x18] sm:$0xff]
    %v32 = vld [vmem:[%s3] sm:$0xff]
    %v33 = vld [vmem:[%s3 + $0x8] sm:$0xff]
    %v34 = vld [vmem:[%s3 + $0x10] sm:$0xff]
    %v35 = vld [vmem:[%s3 + $0x18] sm:$0xff]
    %v36 = vld [vmem:[%s2] sm:$0x1]
    %v37 = vld [vmem:[%s2 + $0x1] sm:$0x1]
    %v38 = vld [vmem:[%s2 + $0x2] sm:$0x1]
    %v39 = vld [vmem:[%s2 + $0x3] sm:$0x1]
    %v40 = vld [vmem:[%s4] sm:$0xff]
    %v41 = vld [vmem:[%s4 + $0x8] sm:$0xff]
    %v42 = vld [vmem:[%s4 + $0x10] sm:$0xff]
    %v43 = vld [vmem:[%s4 + $0x18] sm:$0xff]
    %v44 = vld [vmem:[%s4 + $0x20] sm:$0xff]
    %v45 = vld [vmem:[%s4 + $0x28] sm:$0xff]
    %v46 = vld [vmem:[%s4 + $0x30] sm:$0xff]
    %v47 = vld [vmem:[%s4 + $0x38] sm:$0xff]
    %v48 = vld [vmem:[%s4 + $0x40] sm:$0xff]
    %v49 = vld [vmem:[%s4 + $0x48] sm:$0xff]
    %v50 = vld [vmem:[%s4 + $0x50] sm:$0xff]
    %v51 = vld [vmem:[%s4 + $0x58] sm:$0xff]
    %v52 = vld [vmem:[%s4 + $0x60] sm:$0xff]
    %v53 = vld [vmem:[%s4 + $0x68] sm:$0xff]
    %v54 = vld [vmem:[%s4 + $0x70] sm:$0xff]
    %v55 = vld [vmem:[%s4 + $0x78] sm:$0xff]
    %v56 = vld [vmem:[%s4 + $0x80] sm:$0xff]
    %v57 = vld [vmem:[%s4 + $0x88] sm:$0xff]
    %v58 = vld [vmem:[%s4 + $0x90] sm:$0xff]
    %v59 = vld [vmem:[%s4 + $0x98] sm:$0xff]
    %v60 = vld [vmem:[%s4 + $0xa0] sm:$0xff]
    %v61 = vld [vmem:[%s4 + $0xa8] sm:$0xff]
    %v62 = vld [vmem:[%s4 + $0xb0] sm:$0xff]
    %v63 = vld [vmem:[%s4 + $0xb8] sm:$0xff]
    %v64 = vld [vmem:[%s4 + $0xc0] sm:$0xff]
    %v65 = vld [vmem:[%s4 + $0xc8] sm:$0xff]
    %v66 = vld [vmem:[%s4 + $0xd0] sm:$0xff]
    %v67 = vld [vmem:[%s4 + $0xd8] sm:$0xff]
    %v68 = vld [vmem:[%s5] sm:$0xff]
    %v69 = vld [vmem:[%s5 + $0x8] sm:$0xf]
    %vm70 = vcmask 261120
    %v71 = vsel %vm70, %v24, 0.0
    %72 = vadd.xlane.f32.xlu0 %v71
    %v73 = vpop.xlane.xlu0 %72
    %v74 = vsel %vm70, %v25, 0.0
    %75 = vadd.xlane.f32.xlu0 %v74
    %v76 = vpop.xlane.xlu0 %75
    %v77 = vsel %vm70, %v26, 0.0
    %78 = vadd.xlane.f32.xlu0 %v77
    %v79 = vpop.xlane.xlu0 %78
    %v80 = vsel %vm70, %v27, 0.0
    %81 = vadd.xlane.f32.xlu0 %v80
    %v82 = vpop.xlane.xlu0 %81
    %v83 = vrcp.pop 32.0
    %v84 = vmul.f32 %v73, %v83
    %v85 = vmul.f32 %v76, %v83
    %v86 = vmul.f32 %v79, %v83
    %v87 = vmul.f32 %v82, %v83
    %v88 = vsub.f32 %v24, %v84
    %v89 = vsub.f32 %v25, %v85
    %v90 = vsub.f32 %v26, %v86
    %v91 = vsub.f32 %v27, %v87
    %v92 = vmul.f32 %v88, %v88
    %v93 = vmul.f32 %v89, %v89
    %v94 = vmul.f32 %v90, %v90
    %v95 = vmul.f32 %v91, %v91
    %v96 = vsel %vm70, %v92, 0.0
    %97 = vadd.xlane.f32.xlu0 %v96
    %v98 = vpop.xlane.xlu0 %97
    %v99 = vsel %vm70, %v93, 0.0
    %100 = vadd.xlane.f32.xlu0 %v99
    %v101 = vpop.xlane.xlu0 %100
    %v102 = vsel %vm70, %v94, 0.0
    %103 = vadd.xlane.f32.xlu0 %v102
    %v104 = vpop.xlane.xlu0 %103
    %v105 = vsel %vm70, %v95, 0.0
    %106 = vadd.xlane.f32.xlu0 %v105
    %v107 = vpop.xlane.xlu0 %106
    %v108 = vrcp.pop 31.0
    %v109 = vmul.f32 %v98, %v108
    %v110 = vmul.f32 %v101, %v108
    %v111 = vmul.f32 %v104, %v108
    %v112 = vmul.f32 %v107, %v108
    %v113 = vrsqrt.pop %v109
    %v114 = vmul.f32 %v109, %v113
    %vm115 = vcmp.eq.f32.partialorder %v109, inf
    %v116 = vsel %vm115, %v109, %v114
    %vm117 = vcmp.eq.f32.partialorder %v109, 0.0
    %v118 = vand.u32 %v109, 2147483648
    %v119 = vsel %vm117, %v118, %v116
    %v120 = vrsqrt.pop %v110
    %v121 = vmul.f32 %v110, %v120
    %vm122 = vcmp.eq.f32.partialorder %v110, inf
    %v123 = vsel %vm122, %v110, %v121
    %vm124 = vcmp.eq.f32.partialorder %v110, 0.0
    %v125 = vand.u32 %v110, 2147483648
    %v126 = vsel %vm124, %v125, %v123
    %v127 = vrsqrt.pop %v111
    %v128 = vmul.f32 %v111, %v127
    %vm129 = vcmp.eq.f32.partialorder %v111, inf
    %v130 = vsel %vm129, %v111, %v128
    %vm131 = vcmp.eq.f32.partialorder %v111, 0.0
    %v132 = vand.u32 %v111, 2147483648
    %v133 = vsel %vm131, %v132, %v130
    %v134 = vrsqrt.pop %v112
    %v135 = vmul.f32 %v112, %v134
    %vm136 = vcmp.eq.f32.partialorder %v112, inf
    %v137 = vsel %vm136, %v112, %v135
    %vm138 = vcmp.eq.f32.partialorder %v112, 0.0
    %v139 = vand.u32 %v112, 2147483648
    %v140 = vsel %vm138, %v139, %v137
    %v141 = vadd.f32 %v119, 1e-06
    %v142 = vadd.f32 %v126, 1e-06
    %v143 = vadd.f32 %v133, 1e-06
    %v144 = vadd.f32 %v140, 1e-06
    %v145 = vrcp.pop %v141
    %v146 = vrcp.pop %v142
    %v147 = vrcp.pop %v143
    %v148 = vrcp.pop %v144
    %v149 = vlaneseq
    %v150 = vshrl.u32 %v149, 7
    %v151 = vsub.s32 6, %v150
    %v152 = vrot.slane %v68, %v151
    %v153 = vmul.f32 %v152, %v88
    %v154 = vmul.f32 %v152, %v89
    %v155 = vmul.f32 %v152, %v90
    %v156 = vmul.f32 %v152, %v91
    %v157 = vmul.f32 %v153, %v145
    %v158 = vmul.f32 %v154, %v146
    %v159 = vmul.f32 %v155, %v147
    %v160 = vmul.f32 %v156, %v148
    %v161 = vlaneseq
    %v162 = vshrl.u32 %v161, 7
    %v163 = vsub.s32 1, %v162
    %v164 = vrot.slane %v69, %v163
    %v165 = vadd.f32 %v157, %v164
    %v166 = vadd.f32 %v158, %v164
    %v167 = vadd.f32 %v159, %v164
    %v168 = vadd.f32 %v160, %v164
    %v169 = vlaneseq
    %v170 = vshrl.u32 %v169, 7
    %v171 = vsub.s32 0, %v170
    %v172 = vrot.slane %v68, %v171
    %v174 = vsel %vm70, %v165, 0
    %v177 = vsel %vm70, %v166, 0
    %v180 = vsel %vm70, %v167, 0
    %v183 = vsel %vm70, %v168, 0
    %185 = vmatprep.subr.mxu0 0.0
    %186 = vmatpush1.msra.mxu0 %v40
    %187 = vmatprep.subr.mxu0 0.0
    %188 = vmatpush1.msra.mxu0 %v41
    %189 = vmatprep.subr.mxu0 0.0
    %190 = vmatpush1.msra.mxu0 %v42
    %191 = vmatprep.subr.mxu0 0.0
    %192 = vmatpush1.msra.mxu0 %v43
    %193 = vmatprep.subr.mxu0 0.0
    %194 = vmatpush1.msra.mxu0 0.0
    %195 = vmatprep.subr.mxu0 0.0
    %196 = vmatpush1.msra.mxu0 0.0
    %197 = vmatprep.subr.mxu0 0.0
    %198 = vmatpush1.msra.mxu0 0.0
    %199 = vmatprep.subr.mxu0 0.0
    %200 = vmatpush1.msra.mxu0 0.0
    %201 = vmatprep.subr.mxu0 0.0
    %202 = vmatpush1.msra.mxu0 0.0
    %203 = vmatprep.subr.mxu0 0.0
    %204 = vmatpush1.msra.mxu0 0.0
    %205 = vmatprep.subr.mxu0 0.0
    %206 = vmatpush1.msra.mxu0 0.0
    %207 = vmatprep.subr.mxu0 0.0
    %208 = vmatpush1.msra.mxu0 0.0
    %209 = vmatprep.subr.mxu0 0.0
    %210 = vmatpush1.msra.mxu0 0.0
    %211 = vmatprep.subr.mxu0 0.0
    %212 = vmatpush1.msra.mxu0 0.0
    %213 = vmatprep.subr.mxu0 0.0
    %214 = vmatpush1.msra.mxu0 0.0
    %215 = vmatprep.subr.mxu0 0.0
    %216 = vmatpush1.msra.mxu0 0.0
    %217 = vmatprep.subr.mxu0 0.0
    %218 = vmatpush1.msra.mxu0 0.0
    %219 = vmatprep.subr.mxu0 0.0
    %220 = vmatpush1.msra.mxu0 0.0
    %221 = vmatprep.subr.mxu0 0.0
    %222 = vmatpush1.msra.mxu0 0.0
    %223 = vmatprep.subr.mxu0 0.0
    %224 = vmatpush1.msra.mxu0 0.0
    %225 = vmatprep.subr.mxu0 0.0
    %226 = vmatpush1.msra.mxu0 0.0
    %227 = vmatprep.subr.mxu0 0.0
    %228 = vmatpush1.msra.mxu0 0.0
    %229 = vmatprep.subr.mxu0 0.0
    %230 = vmatpush1.msra.mxu0 0.0
    %231 = vmatprep.subr.mxu0 0.0
    %232 = vmatpush1.msra.mxu0 0.0
    %233 = vmatprep.subr.mxu0 0.0
    %234 = vmatpush1.msra.mxu0 0.0
    %235 = vmatprep.subr.mxu0 0.0
    %236 = vmatpush1.msra.mxu0 0.0
    %237 = vmatprep.subr.mxu0 0.0
    %238 = vmatpush1.msra.mxu0 0.0
    %239 = vmatprep.subr.mxu0 0.0
    %240 = vmatpush1.msra.mxu0 0.0
    %241 = vmatprep.subr.mxu0 0.0
    %242 = vmatpush1.msra.mxu0 0.0
    %243 = vmatprep.subr.mxu0 0.0
    %244 = vmatpush1.msra.mxu0 0.0
    %245 = vmatprep.subr.mxu0 0.0
    %246 = vmatpush1.msra.mxu0 0.0
    %247 = vmatprep.subr.mxu0 0.0
    %248 = vmatpush1.msra.mxu0 0.0
    %249 = vmatprep.mubr.f32.mxu0 0.0
    %250 = vmatmul.mubr.f32.gmra.mrb[0].mxu0 %v174
    %v251 = vpop.f32.mrb[0].mxu0
    %v252 = vadd.f32 %v172, %v251
    %v253 = vpop.f32.mrb[0].mxu0
    %254 = vmatprep.mubr.f32.mxu0 0.0
    %255 = vmatmul.mubr.f32.gmra.mrb[0].mxu0 %v177
    %v256 = vpop.f32.mrb[0].mxu0
    %v257 = vadd.f32 %v172, %v256
    %v258 = vpop.f32.mrb[0].mxu0
    %259 = vmatprep.mubr.f32.mxu0 0.0
    %260 = vmatmul.mubr.f32.gmra.mrb[0].mxu0 %v180
    %v261 = vpop.f32.mrb[0].mxu0
    %v262 = vadd.f32 %v172, %v261
    %v263 = vpop.f32.mrb[0].mxu0
    %264 = vmatprep.mubr.f32.mxu0 0.0
    %265 = vmatmul.mubr.f32.gmra.mrb[0].mxu0 %v183
    %v266 = vpop.f32.mrb[0].mxu0
    %v267 = vadd.f32 %v172, %v266
    %v268 = vpop.f32.mrb[0].mxu0
    %269 = vdwg.mxu0
    %274 = vrot.lane.b32.xlu0 %v40, 96
    %v275 = vpop.permute.xlu0 %274
    %276 = vrot.lane.b32.xlu0 %v41, 96
    %v277 = vpop.permute.xlu0 %276
    %278 = vrot.lane.b32.xlu0 %v42, 96
    %v279 = vpop.permute.xlu0 %278
    %280 = vrot.lane.b32.xlu0 %v43, 96
    %v281 = vpop.permute.xlu0 %280
    %287 = vrot.lane.b32.xlu0 %v172, 96
    %v288 = vpop.permute.xlu0 %287
    %290 = vmatprep.subr.mxu0 0.0
    %291 = vmatpush1.msra.mxu0 %v275
    %292 = vmatprep.subr.mxu0 0.0
    %293 = vmatpush1.msra.mxu0 %v277
    %294 = vmatprep.subr.mxu0 0.0
    %295 = vmatpush1.msra.mxu0 %v279
    %296 = vmatprep.subr.mxu0 0.0
    %297 = vmatpush1.msra.mxu0 %v281
    %298 = vmatprep.subr.mxu0 0.0
    %299 = vmatpush1.msra.mxu0 0.0
    %300 = vmatprep.subr.mxu0 0.0
    %301 = vmatpush1.msra.mxu0 0.0
    %302 = vmatprep.subr.mxu0 0.0
    %303 = vmatpush1.msra.mxu0 0.0
    %304 = vmatprep.subr.mxu0 0.0
    %305 = vmatpush1.msra.mxu0 0.0
    %306 = vmatprep.subr.mxu0 0.0
    %307 = vmatpush1.msra.mxu0 0.0
    %308 = vmatprep.subr.mxu0 0.0
    %309 = vmatpush1.msra.mxu0 0.0
    %310 = vmatprep.subr.mxu0 0.0
    %311 = vmatpush1.msra.mxu0 0.0
    %312 = vmatprep.subr.mxu0 0.0
    %313 = vmatpush1.msra.mxu0 0.0
    %314 = vmatprep.subr.mxu0 0.0
    %315 = vmatpush1.msra.mxu0 0.0
    %316 = vmatprep.subr.mxu0 0.0
    %317 = vmatpush1.msra.mxu0 0.0
    %318 = vmatprep.subr.mxu0 0.0
    %319 = vmatpush1.msra.mxu0 0.0
    %320 = vmatprep.subr.mxu0 0.0
    %321 = vmatpush1.msra.mxu0 0.0
    %322 = vmatprep.subr.mxu0 0.0
    %323 = vmatpush1.msra.mxu0 0.0
    %324 = vmatprep.subr.mxu0 0.0
    %325 = vmatpush1.msra.mxu0 0.0
    %326 = vmatprep.subr.mxu0 0.0
    %327 = vmatpush1.msra.mxu0 0.0
    %328 = vmatprep.subr.mxu0 0.0
    %329 = vmatpush1.msra.mxu0 0.0
    %330 = vmatprep.subr.mxu0 0.0
    %331 = vmatpush1.msra.mxu0 0.0
    %332 = vmatprep.subr.mxu0 0.0
    %333 = vmatpush1.msra.mxu0 0.0
    %334 = vmatprep.subr.mxu0 0.0
    %335 = vmatpush1.msra.mxu0 0.0
    %336 = vmatprep.subr.mxu0 0.0
    %337 = vmatpush1.msra.mxu0 0.0
    %338 = vmatprep.subr.mxu0 0.0
    %339 = vmatpush1.msra.mxu0 0.0
    %340 = vmatprep.subr.mxu0 0.0
    %341 = vmatpush1.msra.mxu0 0.0
    %342 = vmatprep.subr.mxu0 0.0
    %343 = vmatpush1.msra.mxu0 0.0
    %344 = vmatprep.subr.mxu0 0.0
    %345 = vmatpush1.msra.mxu0 0.0
    %346 = vmatprep.subr.mxu0 0.0
    %347 = vmatpush1.msra.mxu0 0.0
    %348 = vmatprep.subr.mxu0 0.0
    %349 = vmatpush1.msra.mxu0 0.0
    %350 = vmatprep.subr.mxu0 0.0
    %351 = vmatpush1.msra.mxu0 0.0
    %352 = vmatprep.subr.mxu0 0.0
    %353 = vmatpush1.msra.mxu0 0.0
    %354 = vmatprep.mubr.f32.mxu0 0.0
    %355 = vmatmul.mubr.f32.gmra.mrb[0].mxu0 %v174
    %v356 = vpop.f32.mrb[0].mxu0
    %v357 = vadd.f32 %v288, %v356
    %v358 = vpop.f32.mrb[0].mxu0
    %359 = vmatprep.mubr.f32.mxu0 0.0
    %360 = vmatmul.mubr.f32.gmra.mrb[0].mxu0 %v177
    %v361 = vpop.f32.mrb[0].mxu0
    %v362 = vadd.f32 %v288, %v361
    %v363 = vpop.f32.mrb[0].mxu0
    %364 = vmatprep.mubr.f32.mxu0 0.0
    %365 = vmatmul.mubr.f32.gmra.mrb[0].mxu0 %v180
    %v366 = vpop.f32.mrb[0].mxu0
    %v367 = vadd.f32 %v288, %v366
    %v368 = vpop.f32.mrb[0].mxu0
    %369 = vmatprep.mubr.f32.mxu0 0.0
    %370 = vmatmul.mubr.f32.gmra.mrb[0].mxu0 %v183
    %v371 = vpop.f32.mrb[0].mxu0
    %v372 = vadd.f32 %v288, %v371
    %v373 = vpop.f32.mrb[0].mxu0
    %374 = vdwg.mxu0
    %vm375 = vcmask 64512
    %v377 = vsel %vm375, %v252, 0
    %v380 = vsel %vm375, %v357, 0
    %382 = vmatprep.subr.mxu0 0.0
    %383 = vmatpush1.xpose.msra.mxu0 %v380
    %384 = vmatprep.subr.mxu0 0.0
    %385 = vmatpush1.xpose.msra.mxu0 0.0
    %386 = vmatprep.subr.mxu0 0.0
    %387 = vmatpush1.xpose.msra.mxu0 0.0
    %388 = vmatprep.subr.mxu0 0.0
    %389 = vmatpush1.xpose.msra.mxu0 0.0
    %390 = vmatprep.subr.mxu0 0.0
    %391 = vmatpush1.xpose.msra.mxu0 0.0
    %392 = vmatprep.subr.mxu0 0.0
    %393 = vmatpush1.xpose.msra.mxu0 0.0
    %394 = vmatprep.subr.mxu0 0.0
    %395 = vmatpush1.xpose.msra.mxu0 0.0
    %396 = vmatprep.subr.mxu0 0.0
    %397 = vmatpush1.xpose.msra.mxu0 0.0
    %398 = vmatprep.subr.mxu0 0.0
    %399 = vmatpush1.xpose.msra.mxu0 0.0
    %400 = vmatprep.subr.mxu0 0.0
    %401 = vmatpush1.xpose.msra.mxu0 0.0
    %402 = vmatprep.subr.mxu0 0.0
    %403 = vmatpush1.xpose.msra.mxu0 0.0
    %404 = vmatprep.subr.mxu0 0.0
    %405 = vmatpush1.xpose.msra.mxu0 0.0
    %406 = vmatprep.subr.mxu0 0.0
    %407 = vmatpush1.xpose.msra.mxu0 0.0
    %408 = vmatprep.subr.mxu0 0.0
    %409 = vmatpush1.xpose.msra.mxu0 0.0
    %410 = vmatprep.subr.mxu0 0.0
    %411 = vmatpush1.xpose.msra.mxu0 0.0
    %412 = vmatprep.subr.mxu0 0.0
    %413 = vmatpush1.xpose.msra.mxu0 0.0
    %414 = vmatprep.subr.mxu0 0.0
    %415 = vmatpush1.xpose.msra.mxu0 0.0
    %416 = vmatprep.subr.mxu0 0.0
    %417 = vmatpush1.xpose.msra.mxu0 0.0
    %418 = vmatprep.subr.mxu0 0.0
    %419 = vmatpush1.xpose.msra.mxu0 0.0
    %420 = vmatprep.subr.mxu0 0.0
    %421 = vmatpush1.xpose.msra.mxu0 0.0
    %422 = vmatprep.subr.mxu0 0.0
    %423 = vmatpush1.xpose.msra.mxu0 0.0
    %424 = vmatprep.subr.mxu0 0.0
    %425 = vmatpush1.xpose.msra.mxu0 0.0
    %426 = vmatprep.subr.mxu0 0.0
    %427 = vmatpush1.xpose.msra.mxu0 0.0
    %428 = vmatprep.subr.mxu0 0.0
    %429 = vmatpush1.xpose.msra.mxu0 0.0
    %430 = vmatprep.subr.mxu0 0.0
    %431 = vmatpush1.xpose.msra.mxu0 0.0
    %432 = vmatprep.subr.mxu0 0.0
    %433 = vmatpush1.xpose.msra.mxu0 0.0
    %434 = vmatprep.subr.mxu0 0.0
    %435 = vmatpush1.xpose.msra.mxu0 0.0
    %436 = vmatprep.subr.mxu0 0.0
    %437 = vmatpush1.xpose.msra.mxu0 0.0
    %438 = vmatprep.subr.mxu0 0.0
    %439 = vmatpush1.xpose.msra.mxu0 0.0
    %440 = vmatprep.subr.mxu0 0.0
    %441 = vmatpush1.xpose.msra.mxu0 0.0
    %442 = vmatprep.subr.mxu0 0.0
    %443 = vmatpush1.xpose.msra.mxu0 0.0
    %444 = vmatprep.subr.mxu0 0.0
    %445 = vmatpush1.xpose.msra.mxu0 0.0
    %446 = vmatprep.mubr.f32.mxu0 0.0
    %447 = vmatmul.mubr.f32.gmra.mrb[0].mxu0 %v377
    %v448 = vpop.f32.mrb[0].mxu0
    %v449 = vadd.f32 %v32, %v448
    %v450 = vpop.f32.mrb[0].mxu0
    %451 = vdwg.mxu0
    %v453 = vsel %vm375, %v257, 0
    %v456 = vsel %vm375, %v362, 0
    %458 = vmatprep.subr.mxu0 0.0
    %459 = vmatpush1.xpose.msra.mxu0 %v456
    %460 = vmatprep.subr.mxu0 0.0
    %461 = vmatpush1.xpose.msra.mxu0 0.0
    %462 = vmatprep.subr.mxu0 0.0
    %463 = vmatpush1.xpose.msra.mxu0 0.0
    %464 = vmatprep.subr.mxu0 0.0
    %465 = vmatpush1.xpose.msra.mxu0 0.0
    %466 = vmatprep.subr.mxu0 0.0
    %467 = vmatpush1.xpose.msra.mxu0 0.0
    %468 = vmatprep.subr.mxu0 0.0
    %469 = vmatpush1.xpose.msra.mxu0 0.0
    %470 = vmatprep.subr.mxu0 0.0
    %471 = vmatpush1.xpose.msra.mxu0 0.0
    %472 = vmatprep.subr.mxu0 0.0
    %473 = vmatpush1.xpose.msra.mxu0 0.0
    %474 = vmatprep.subr.mxu0 0.0
    %475 = vmatpush1.xpose.msra.mxu0 0.0
    %476 = vmatprep.subr.mxu0 0.0
    %477 = vmatpush1.xpose.msra.mxu0 0.0
    %478 = vmatprep.subr.mxu0 0.0
    %479 = vmatpush1.xpose.msra.mxu0 0.0
    %480 = vmatprep.subr.mxu0 0.0
    %481 = vmatpush1.xpose.msra.mxu0 0.0
    %482 = vmatprep.subr.mxu0 0.0
    %483 = vmatpush1.xpose.msra.mxu0 0.0
    %484 = vmatprep.subr.mxu0 0.0
    %485 = vmatpush1.xpose.msra.mxu0 0.0
    %486 = vmatprep.subr.mxu0 0.0
    %487 = vmatpush1.xpose.msra.mxu0 0.0
    %488 = vmatprep.subr.mxu0 0.0
    %489 = vmatpush1.xpose.msra.mxu0 0.0
    %490 = vmatprep.subr.mxu0 0.0
    %491 = vmatpush1.xpose.msra.mxu0 0.0
    %492 = vmatprep.subr.mxu0 0.0
    %493 = vmatpush1.xpose.msra.mxu0 0.0
    %494 = vmatprep.subr.mxu0 0.0
    %495 = vmatpush1.xpose.msra.mxu0 0.0
    %496 = vmatprep.subr.mxu0 0.0
    %497 = vmatpush1.xpose.msra.mxu0 0.0
    %498 = vmatprep.subr.mxu0 0.0
    %499 = vmatpush1.xpose.msra.mxu0 0.0
    %500 = vmatprep.subr.mxu0 0.0
    %501 = vmatpush1.xpose.msra.mxu0 0.0
    %502 = vmatprep.subr.mxu0 0.0
    %503 = vmatpush1.xpose.msra.mxu0 0.0
    %504 = vmatprep.subr.mxu0 0.0
    %505 = vmatpush1.xpose.msra.mxu0 0.0
    %506 = vmatprep.subr.mxu0 0.0
    %507 = vmatpush1.xpose.msra.mxu0 0.0
    %508 = vmatprep.subr.mxu0 0.0
    %509 = vmatpush1.xpose.msra.mxu0 0.0
    %510 = vmatprep.subr.mxu0 0.0
    %511 = vmatpush1.xpose.msra.mxu0 0.0
    %512 = vmatprep.subr.mxu0 0.0
    %513 = vmatpush1.xpose.msra.mxu0 0.0
    %514 = vmatprep.subr.mxu0 0.0
    %515 = vmatpush1.xpose.msra.mxu0 0.0
    %516 = vmatprep.subr.mxu0 0.0
    %517 = vmatpush1.xpose.msra.mxu0 0.0
    %518 = vmatprep.subr.mxu0 0.0
    %519 = vmatpush1.xpose.msra.mxu0 0.0
    %520 = vmatprep.subr.mxu0 0.0
    %521 = vmatpush1.xpose.msra.mxu0 0.0
    %522 = vmatprep.mubr.f32.mxu0 0.0
    %523 = vmatmul.mubr.f32.gmra.mrb[0].mxu0 %v453
    %v524 = vpop.f32.mrb[0].mxu0
    %v525 = vadd.f32 %v33, %v524
    %v526 = vpop.f32.mrb[0].mxu0
    %527 = vdwg.mxu0
    %v529 = vsel %vm375, %v262, 0
    %v532 = vsel %vm375, %v367, 0
    %534 = vmatprep.subr.mxu0 0.0
    %535 = vmatpush1.xpose.msra.mxu0 %v532
    %536 = vmatprep.subr.mxu0 0.0
    %537 = vmatpush1.xpose.msra.mxu0 0.0
    %538 = vmatprep.subr.mxu0 0.0
    %539 = vmatpush1.xpose.msra.mxu0 0.0
    %540 = vmatprep.subr.mxu0 0.0
    %541 = vmatpush1.xpose.msra.mxu0 0.0
    %542 = vmatprep.subr.mxu0 0.0
    %543 = vmatpush1.xpose.msra.mxu0 0.0
    %544 = vmatprep.subr.mxu0 0.0
    %545 = vmatpush1.xpose.msra.mxu0 0.0
    %546 = vmatprep.subr.mxu0 0.0
    %547 = vmatpush1.xpose.msra.mxu0 0.0
    %548 = vmatprep.subr.mxu0 0.0
    %549 = vmatpush1.xpose.msra.mxu0 0.0
    %550 = vmatprep.subr.mxu0 0.0
    %551 = vmatpush1.xpose.msra.mxu0 0.0
    %552 = vmatprep.subr.mxu0 0.0
    %553 = vmatpush1.xpose.msra.mxu0 0.0
    %554 = vmatprep.subr.mxu0 0.0
    %555 = vmatpush1.xpose.msra.mxu0 0.0
    %556 = vmatprep.subr.mxu0 0.0
    %557 = vmatpush1.xpose.msra.mxu0 0.0
    %558 = vmatprep.subr.mxu0 0.0
    %559 = vmatpush1.xpose.msra.mxu0 0.0
    %560 = vmatprep.subr.mxu0 0.0
    %561 = vmatpush1.xpose.msra.mxu0 0.0
    %562 = vmatprep.subr.mxu0 0.0
    %563 = vmatpush1.xpose.msra.mxu0 0.0
    %564 = vmatprep.subr.mxu0 0.0
    %565 = vmatpush1.xpose.msra.mxu0 0.0
    %566 = vmatprep.subr.mxu0 0.0
    %567 = vmatpush1.xpose.msra.mxu0 0.0
    %568 = vmatprep.subr.mxu0 0.0
    %569 = vmatpush1.xpose.msra.mxu0 0.0
    %570 = vmatprep.subr.mxu0 0.0
    %571 = vmatpush1.xpose.msra.mxu0 0.0
    %572 = vmatprep.subr.mxu0 0.0
    %573 = vmatpush1.xpose.msra.mxu0 0.0
    %574 = vmatprep.subr.mxu0 0.0
    %575 = vmatpush1.xpose.msra.mxu0 0.0
    %576 = vmatprep.subr.mxu0 0.0
    %577 = vmatpush1.xpose.msra.mxu0 0.0
    %578 = vmatprep.subr.mxu0 0.0
    %579 = vmatpush1.xpose.msra.mxu0 0.0
    %580 = vmatprep.subr.mxu0 0.0
    %581 = vmatpush1.xpose.msra.mxu0 0.0
    %582 = vmatprep.subr.mxu0 0.0
    %583 = vmatpush1.xpose.msra.mxu0 0.0
    %584 = vmatprep.subr.mxu0 0.0
    %585 = vmatpush1.xpose.msra.mxu0 0.0
    %586 = vmatprep.subr.mxu0 0.0
    %587 = vmatpush1.xpose.msra.mxu0 0.0
    %588 = vmatprep.subr.mxu0 0.0
    %589 = vmatpush1.xpose.msra.mxu0 0.0
    %590 = vmatprep.subr.mxu0 0.0
    %591 = vmatpush1.xpose.msra.mxu0 0.0
    %592 = vmatprep.subr.mxu0 0.0
    %593 = vmatpush1.xpose.msra.mxu0 0.0
    %594 = vmatprep.subr.mxu0 0.0
    %595 = vmatpush1.xpose.msra.mxu0 0.0
    %596 = vmatprep.subr.mxu0 0.0
    %597 = vmatpush1.xpose.msra.mxu0 0.0
    %598 = vmatprep.mubr.f32.mxu0 0.0
    %599 = vmatmul.mubr.f32.gmra.mrb[0].mxu0 %v529
    %v600 = vpop.f32.mrb[0].mxu0
    %v601 = vadd.f32 %v34, %v600
    %v602 = vpop.f32.mrb[0].mxu0
    %603 = vdwg.mxu0
    %v605 = vsel %vm375, %v267, 0
    %v608 = vsel %vm375, %v372, 0
    %610 = vmatprep.subr.mxu0 0.0
    %611 = vmatpush1.xpose.msra.mxu0 %v608
    %612 = vmatprep.subr.mxu0 0.0
    %613 = vmatpush1.xpose.msra.mxu0 0.0
    %614 = vmatprep.subr.mxu0 0.0
    %615 = vmatpush1.xpose.msra.mxu0 0.0
    %616 = vmatprep.subr.mxu0 0.0
    %617 = vmatpush1.xpose.msra.mxu0 0.0
    %618 = vmatprep.subr.mxu0 0.0
    %619 = vmatpush1.xpose.msra.mxu0 0.0
    %620 = vmatprep.subr.mxu0 0.0
    %621 = vmatpush1.xpose.msra.mxu0 0.0
    %622 = vmatprep.subr.mxu0 0.0
    %623 = vmatpush1.xpose.msra.mxu0 0.0
    %624 = vmatprep.subr.mxu0 0.0
    %625 = vmatpush1.xpose.msra.mxu0 0.0
    %626 = vmatprep.subr.mxu0 0.0
    %627 = vmatpush1.xpose.msra.mxu0 0.0
    %628 = vmatprep.subr.mxu0 0.0
    %629 = vmatpush1.xpose.msra.mxu0 0.0
    %630 = vmatprep.subr.mxu0 0.0
    %631 = vmatpush1.xpose.msra.mxu0 0.0
    %632 = vmatprep.subr.mxu0 0.0
    %633 = vmatpush1.xpose.msra.mxu0 0.0
    %634 = vmatprep.subr.mxu0 0.0
    %635 = vmatpush1.xpose.msra.mxu0 0.0
    %636 = vmatprep.subr.mxu0 0.0
    %637 = vmatpush1.xpose.msra.mxu0 0.0
    %638 = vmatprep.subr.mxu0 0.0
    %639 = vmatpush1.xpose.msra.mxu0 0.0
    %640 = vmatprep.subr.mxu0 0.0
    %641 = vmatpush1.xpose.msra.mxu0 0.0
    %642 = vmatprep.subr.mxu0 0.0
    %643 = vmatpush1.xpose.msra.mxu0 0.0
    %644 = vmatprep.subr.mxu0 0.0
    %645 = vmatpush1.xpose.msra.mxu0 0.0
    %646 = vmatprep.subr.mxu0 0.0
    %647 = vmatpush1.xpose.msra.mxu0 0.0
    %648 = vmatprep.subr.mxu0 0.0
    %649 = vmatpush1.xpose.msra.mxu0 0.0
    %650 = vmatprep.subr.mxu0 0.0
    %651 = vmatpush1.xpose.msra.mxu0 0.0
    %652 = vmatprep.subr.mxu0 0.0
    %653 = vmatpush1.xpose.msra.mxu0 0.0
    %654 = vmatprep.subr.mxu0 0.0
    %655 = vmatpush1.xpose.msra.mxu0 0.0
    %656 = vmatprep.subr.mxu0 0.0
    %657 = vmatpush1.xpose.msra.mxu0 0.0
    %658 = vmatprep.subr.mxu0 0.0
    %659 = vmatpush1.xpose.msra.mxu0 0.0
    %660 = vmatprep.subr.mxu0 0.0
    %661 = vmatpush1.xpose.msra.mxu0 0.0
    %662 = vmatprep.subr.mxu0 0.0
    %663 = vmatpush1.xpose.msra.mxu0 0.0
    %664 = vmatprep.subr.mxu0 0.0
    %665 = vmatpush1.xpose.msra.mxu0 0.0
    %666 = vmatprep.subr.mxu0 0.0
    %667 = vmatpush1.xpose.msra.mxu0 0.0
    %668 = vmatprep.subr.mxu0 0.0
    %669 = vmatpush1.xpose.msra.mxu0 0.0
    %670 = vmatprep.subr.mxu0 0.0
    %671 = vmatpush1.xpose.msra.mxu0 0.0
    %672 = vmatprep.subr.mxu0 0.0
    %673 = vmatpush1.xpose.msra.mxu0 0.0
    %674 = vmatprep.mubr.f32.mxu0 0.0
    %675 = vmatmul.mubr.f32.gmra.mrb[0].mxu0 %v605
    %v676 = vpop.f32.mrb[0].mxu0
    %v677 = vadd.f32 %v35, %v676
    %v678 = vpop.f32.mrb[0].mxu0
    %679 = vdwg.mxu0
    %v680 = vsel %vm375, %v449, -inf
    %681 = vmax.xlane.f32.xlu0 %v680
    %v682 = vpop.xlane.xlu0 %681
    %v683 = vsel %vm375, %v525, -inf
    %684 = vmax.xlane.f32.xlu0 %v683
    %v685 = vpop.xlane.xlu0 %684
    %v686 = vsel %vm375, %v601, -inf
    %687 = vmax.xlane.f32.xlu0 %v686
    %v688 = vpop.xlane.xlu0 %687
    %v689 = vsel %vm375, %v677, -inf
    %690 = vmax.xlane.f32.xlu0 %v689
    %v691 = vpop.xlane.xlu0 %690
    %v692 = vsub.f32 %v449, %v682
    %v693 = vsub.f32 %v525, %v685
    %v694 = vsub.f32 %v601, %v688
    %v695 = vsub.f32 %v677, %v691
    %v696 = vmul.f32 %v692, 1.442695
    %v697 = vpow.pop %v696
    %v698 = vmul.f32 %v693, 1.442695
    %v699 = vpow.pop %v698
    %v700 = vmul.f32 %v694, 1.442695
    %v701 = vpow.pop %v700
    %v702 = vmul.f32 %v695, 1.442695
    %v703 = vpow.pop %v702
    %v704 = vsel %vm375, %v697, 0.0
    %705 = vadd.xlane.f32.xlu0 %v704
    %v706 = vpop.xlane.xlu0 %705
    %v707 = vsel %vm375, %v699, 0.0
    %708 = vadd.xlane.f32.xlu0 %v707
    %v709 = vpop.xlane.xlu0 %708
    %v710 = vsel %vm375, %v701, 0.0
    %711 = vadd.xlane.f32.xlu0 %v710
    %v712 = vpop.xlane.xlu0 %711
    %v713 = vsel %vm375, %v703, 0.0
    %714 = vadd.xlane.f32.xlu0 %v713
    %v715 = vpop.xlane.xlu0 %714
    %v716 = vrcp.pop %v706
    %v717 = vrcp.pop %v709
    %v718 = vrcp.pop %v712
    %v719 = vrcp.pop %v715
    %v720 = vmul.f32 %v697, %v716
    %v721 = vmul.f32 %v699, %v717
    %v722 = vmul.f32 %v701, %v718
    %v723 = vmul.f32 %v703, %v719
    %724 = vrot.lane.b32.xlu0 %v357, 96
    %v725 = vpop.permute.xlu0 %724
    %v728 = vsel %vm375, %v720, 0
    %730 = vmatprep.subr.mxu0 0.0
    %731 = vmatpush1.msra.mxu0 %v725
    %732 = vmatprep.subr.mxu0 0.0
    %733 = vmatpush1.msra.mxu0 0.0
    %734 = vmatprep.subr.mxu0 0.0
    %735 = vmatpush1.msra.mxu0 0.0
    %736 = vmatprep.subr.mxu0 0.0
    %737 = vmatpush1.msra.mxu0 0.0
    %738 = vmatprep.subr.mxu0 0.0
    %739 = vmatpush1.msra.mxu0 0.0
    %740 = vmatprep.subr.mxu0 0.0
    %741 = vmatpush1.msra.mxu0 0.0
    %742 = vmatprep.subr.mxu0 0.0
    %743 = vmatpush1.msra.mxu0 0.0
    %744 = vmatprep.subr.mxu0 0.0
    %745 = vmatpush1.msra.mxu0 0.0
    %746 = vmatprep.subr.mxu0 0.0
    %747 = vmatpush1.msra.mxu0 0.0
    %748 = vmatprep.subr.mxu0 0.0
    %749 = vmatpush1.msra.mxu0 0.0
    %750 = vmatprep.subr.mxu0 0.0
    %751 = vmatpush1.msra.mxu0 0.0
    %752 = vmatprep.subr.mxu0 0.0
    %753 = vmatpush1.msra.mxu0 0.0
    %754 = vmatprep.subr.mxu0 0.0
    %755 = vmatpush1.msra.mxu0 0.0
    %756 = vmatprep.subr.mxu0 0.0
    %757 = vmatpush1.msra.mxu0 0.0
    %758 = vmatprep.subr.mxu0 0.0
    %759 = vmatpush1.msra.mxu0 0.0
    %760 = vmatprep.subr.mxu0 0.0
    %761 = vmatpush1.msra.mxu0 0.0
    %762 = vmatprep.subr.mxu0 0.0
    %763 = vmatpush1.msra.mxu0 0.0
    %764 = vmatprep.subr.mxu0 0.0
    %765 = vmatpush1.msra.mxu0 0.0
    %766 = vmatprep.subr.mxu0 0.0
    %767 = vmatpush1.msra.mxu0 0.0
    %768 = vmatprep.subr.mxu0 0.0
    %769 = vmatpush1.msra.mxu0 0.0
    %770 = vmatprep.subr.mxu0 0.0
    %771 = vmatpush1.msra.mxu0 0.0
    %772 = vmatprep.subr.mxu0 0.0
    %773 = vmatpush1.msra.mxu0 0.0
    %774 = vmatprep.subr.mxu0 0.0
    %775 = vmatpush1.msra.mxu0 0.0
    %776 = vmatprep.subr.mxu0 0.0
    %777 = vmatpush1.msra.mxu0 0.0
    %778 = vmatprep.subr.mxu0 0.0
    %779 = vmatpush1.msra.mxu0 0.0
    %780 = vmatprep.subr.mxu0 0.0
    %781 = vmatpush1.msra.mxu0 0.0
    %782 = vmatprep.subr.mxu0 0.0
    %783 = vmatpush1.msra.mxu0 0.0
    %784 = vmatprep.subr.mxu0 0.0
    %785 = vmatpush1.msra.mxu0 0.0
    %786 = vmatprep.subr.mxu0 0.0
    %787 = vmatpush1.msra.mxu0 0.0
    %788 = vmatprep.subr.mxu0 0.0
    %789 = vmatpush1.msra.mxu0 0.0
    %790 = vmatprep.subr.mxu0 0.0
    %791 = vmatpush1.msra.mxu0 0.0
    %792 = vmatprep.subr.mxu0 0.0
    %793 = vmatpush1.msra.mxu0 0.0
    %794 = vmatprep.mubr.f32.mxu0 0.0
    %795 = vmatmul.mubr.f32.gmra.mrb[0].mxu0 %v728
    %v796 = vpop.f32.mrb[0].mxu0
    %v797 = vadd.f32 0.0, %v796
    %v798 = vpop.f32.mrb[0].mxu0
    %799 = vdwg.mxu0
    %800 = vrot.lane.b32.xlu0 %v362, 96
    %v801 = vpop.permute.xlu0 %800
    %v804 = vsel %vm375, %v721, 0
    %806 = vmatprep.subr.mxu0 0.0
    %807 = vmatpush1.msra.mxu0 %v801
    %808 = vmatprep.subr.mxu0 0.0
    %809 = vmatpush1.msra.mxu0 0.0
    %810 = vmatprep.subr.mxu0 0.0
    %811 = vmatpush1.msra.mxu0 0.0
    %812 = vmatprep.subr.mxu0 0.0
    %813 = vmatpush1.msra.mxu0 0.0
    %814 = vmatprep.subr.mxu0 0.0
    %815 = vmatpush1.msra.mxu0 0.0
    %816 = vmatprep.subr.mxu0 0.0
    %817 = vmatpush1.msra.mxu0 0.0
    %818 = vmatprep.subr.mxu0 0.0
    %819 = vmatpush1.msra.mxu0 0.0
    %820 = vmatprep.subr.mxu0 0.0
    %821 = vmatpush1.msra.mxu0 0.0
    %822 = vmatprep.subr.mxu0 0.0
    %823 = vmatpush1.msra.mxu0 0.0
    %824 = vmatprep.subr.mxu0 0.0
    %825 = vmatpush1.msra.mxu0 0.0
    %826 = vmatprep.subr.mxu0 0.0
    %827 = vmatpush1.msra.mxu0 0.0
    %828 = vmatprep.subr.mxu0 0.0
    %829 = vmatpush1.msra.mxu0 0.0
    %830 = vmatprep.subr.mxu0 0.0
    %831 = vmatpush1.msra.mxu0 0.0
    %832 = vmatprep.subr.mxu0 0.0
    %833 = vmatpush1.msra.mxu0 0.0
    %834 = vmatprep.subr.mxu0 0.0
    %835 = vmatpush1.msra.mxu0 0.0
    %836 = vmatprep.subr.mxu0 0.0
    %837 = vmatpush1.msra.mxu0 0.0
    %838 = vmatprep.subr.mxu0 0.0
    %839 = vmatpush1.msra.mxu0 0.0
    %840 = vmatprep.subr.mxu0 0.0
    %841 = vmatpush1.msra.mxu0 0.0
    %842 = vmatprep.subr.mxu0 0.0
    %843 = vmatpush1.msra.mxu0 0.0
    %844 = vmatprep.subr.mxu0 0.0
    %845 = vmatpush1.msra.mxu0 0.0
    %846 = vmatprep.subr.mxu0 0.0
    %847 = vmatpush1.msra.mxu0 0.0
    %848 = vmatprep.subr.mxu0 0.0
    %849 = vmatpush1.msra.mxu0 0.0
    %850 = vmatprep.subr.mxu0 0.0
    %851 = vmatpush1.msra.mxu0 0.0
    %852 = vmatprep.subr.mxu0 0.0
    %853 = vmatpush1.msra.mxu0 0.0
    %854 = vmatprep.subr.mxu0 0.0
    %855 = vmatpush1.msra.mxu0 0.0
    %856 = vmatprep.subr.mxu0 0.0
    %857 = vmatpush1.msra.mxu0 0.0
    %858 = vmatprep.subr.mxu0 0.0
    %859 = vmatpush1.msra.mxu0 0.0
    %860 = vmatprep.subr.mxu0 0.0
    %861 = vmatpush1.msra.mxu0 0.0
    %862 = vmatprep.subr.mxu0 0.0
    %863 = vmatpush1.msra.mxu0 0.0
    %864 = vmatprep.subr.mxu0 0.0
    %865 = vmatpush1.msra.mxu0 0.0
    %866 = vmatprep.subr.mxu0 0.0
    %867 = vmatpush1.msra.mxu0 0.0
    %868 = vmatprep.subr.mxu0 0.0
    %869 = vmatpush1.msra.mxu0 0.0
    %870 = vmatprep.mubr.f32.mxu0 0.0
    %871 = vmatmul.mubr.f32.gmra.mrb[0].mxu0 %v804
    %v872 = vpop.f32.mrb[0].mxu0
    %v873 = vadd.f32 0.0, %v872
    %v874 = vpop.f32.mrb[0].mxu0
    %875 = vdwg.mxu0
    %876 = vrot.lane.b32.xlu0 %v367, 96
    %v877 = vpop.permute.xlu0 %876
    %v880 = vsel %vm375, %v722, 0
    %882 = vmatprep.subr.mxu0 0.0
    %883 = vmatpush1.msra.mxu0 %v877
    %884 = vmatprep.subr.mxu0 0.0
    %885 = vmatpush1.msra.mxu0 0.0
    %886 = vmatprep.subr.mxu0 0.0
    %887 = vmatpush1.msra.mxu0 0.0
    %888 = vmatprep.subr.mxu0 0.0
    %889 = vmatpush1.msra.mxu0 0.0
    %890 = vmatprep.subr.mxu0 0.0
    %891 = vmatpush1.msra.mxu0 0.0
    %892 = vmatprep.subr.mxu0 0.0
    %893 = vmatpush1.msra.mxu0 0.0
    %894 = vmatprep.subr.mxu0 0.0
    %895 = vmatpush1.msra.mxu0 0.0
    %896 = vmatprep.subr.mxu0 0.0
    %897 = vmatpush1.msra.mxu0 0.0
    %898 = vmatprep.subr.mxu0 0.0
    %899 = vmatpush1.msra.mxu0 0.0
    %900 = vmatprep.subr.mxu0 0.0
    %901 = vmatpush1.msra.mxu0 0.0
    %902 = vmatprep.subr.mxu0 0.0
    %903 = vmatpush1.msra.mxu0 0.0
    %904 = vmatprep.subr.mxu0 0.0
    %905 = vmatpush1.msra.mxu0 0.0
    %906 = vmatprep.subr.mxu0 0.0
    %907 = vmatpush1.msra.mxu0 0.0
    %908 = vmatprep.subr.mxu0 0.0
    %909 = vmatpush1.msra.mxu0 0.0
    %910 = vmatprep.subr.mxu0 0.0
    %911 = vmatpush1.msra.mxu0 0.0
    %912 = vmatprep.subr.mxu0 0.0
    %913 = vmatpush1.msra.mxu0 0.0
    %914 = vmatprep.subr.mxu0 0.0
    %915 = vmatpush1.msra.mxu0 0.0
    %916 = vmatprep.subr.mxu0 0.0
    %917 = vmatpush1.msra.mxu0 0.0
    %918 = vmatprep.subr.mxu0 0.0
    %919 = vmatpush1.msra.mxu0 0.0
    %920 = vmatprep.subr.mxu0 0.0
    %921 = vmatpush1.msra.mxu0 0.0
    %922 = vmatprep.subr.mxu0 0.0
    %923 = vmatpush1.msra.mxu0 0.0
    %924 = vmatprep.subr.mxu0 0.0
    %925 = vmatpush1.msra.mxu0 0.0
    %926 = vmatprep.subr.mxu0 0.0
    %927 = vmatpush1.msra.mxu0 0.0
    %928 = vmatprep.subr.mxu0 0.0
    %929 = vmatpush1.msra.mxu0 0.0
    %930 = vmatprep.subr.mxu0 0.0
    %931 = vmatpush1.msra.mxu0 0.0
    %932 = vmatprep.subr.mxu0 0.0
    %933 = vmatpush1.msra.mxu0 0.0
    %934 = vmatprep.subr.mxu0 0.0
    %935 = vmatpush1.msra.mxu0 0.0
    %936 = vmatprep.subr.mxu0 0.0
    %937 = vmatpush1.msra.mxu0 0.0
    %938 = vmatprep.subr.mxu0 0.0
    %939 = vmatpush1.msra.mxu0 0.0
    %940 = vmatprep.subr.mxu0 0.0
    %941 = vmatpush1.msra.mxu0 0.0
    %942 = vmatprep.subr.mxu0 0.0
    %943 = vmatpush1.msra.mxu0 0.0
    %944 = vmatprep.subr.mxu0 0.0
    %945 = vmatpush1.msra.mxu0 0.0
    %946 = vmatprep.mubr.f32.mxu0 0.0
    %947 = vmatmul.mubr.f32.gmra.mrb[0].mxu0 %v880
    %v948 = vpop.f32.mrb[0].mxu0
    %v949 = vadd.f32 0.0, %v948
    %v950 = vpop.f32.mrb[0].mxu0
    %951 = vdwg.mxu0
    %952 = vrot.lane.b32.xlu0 %v372, 96
    %v953 = vpop.permute.xlu0 %952
    %v956 = vsel %vm375, %v723, 0
    %958 = vmatprep.subr.mxu0 0.0
    %959 = vmatpush1.msra.mxu0 %v953
    %960 = vmatprep.subr.mxu0 0.0
    %961 = vmatpush1.msra.mxu0 0.0
    %962 = vmatprep.subr.mxu0 0.0
    %963 = vmatpush1.msra.mxu0 0.0
    %964 = vmatprep.subr.mxu0 0.0
    %965 = vmatpush1.msra.mxu0 0.0
    %966 = vmatprep.subr.mxu0 0.0
    %967 = vmatpush1.msra.mxu0 0.0
    %968 = vmatprep.subr.mxu0 0.0
    %969 = vmatpush1.msra.mxu0 0.0
    %970 = vmatprep.subr.mxu0 0.0
    %971 = vmatpush1.msra.mxu0 0.0
    %972 = vmatprep.subr.mxu0 0.0
    %973 = vmatpush1.msra.mxu0 0.0
    %974 = vmatprep.subr.mxu0 0.0
    %975 = vmatpush1.msra.mxu0 0.0
    %976 = vmatprep.subr.mxu0 0.0
    %977 = vmatpush1.msra.mxu0 0.0
    %978 = vmatprep.subr.mxu0 0.0
    %979 = vmatpush1.msra.mxu0 0.0
    %980 = vmatprep.subr.mxu0 0.0
    %981 = vmatpush1.msra.mxu0 0.0
    %982 = vmatprep.subr.mxu0 0.0
    %983 = vmatpush1.msra.mxu0 0.0
    %984 = vmatprep.subr.mxu0 0.0
    %985 = vmatpush1.msra.mxu0 0.0
    %986 = vmatprep.subr.mxu0 0.0
    %987 = vmatpush1.msra.mxu0 0.0
    %988 = vmatprep.subr.mxu0 0.0
    %989 = vmatpush1.msra.mxu0 0.0
    %990 = vmatprep.subr.mxu0 0.0
    %991 = vmatpush1.msra.mxu0 0.0
    %992 = vmatprep.subr.mxu0 0.0
    %993 = vmatpush1.msra.mxu0 0.0
    %994 = vmatprep.subr.mxu0 0.0
    %995 = vmatpush1.msra.mxu0 0.0
    %996 = vmatprep.subr.mxu0 0.0
    %997 = vmatpush1.msra.mxu0 0.0
    %998 = vmatprep.subr.mxu0 0.0
    %999 = vmatpush1.msra.mxu0 0.0
    %1000 = vmatprep.subr.mxu0 0.0
    %1001 = vmatpush1.msra.mxu0 0.0
    %1002 = vmatprep.subr.mxu0 0.0
    %1003 = vmatpush1.msra.mxu0 0.0
    %1004 = vmatprep.subr.mxu0 0.0
    %1005 = vmatpush1.msra.mxu0 0.0
    %1006 = vmatprep.subr.mxu0 0.0
    %1007 = vmatpush1.msra.mxu0 0.0
    %1008 = vmatprep.subr.mxu0 0.0
    %1009 = vmatpush1.msra.mxu0 0.0
    %1010 = vmatprep.subr.mxu0 0.0
    %1011 = vmatpush1.msra.mxu0 0.0
    %1012 = vmatprep.subr.mxu0 0.0
    %1013 = vmatpush1.msra.mxu0 0.0
    %1014 = vmatprep.subr.mxu0 0.0
    %1015 = vmatpush1.msra.mxu0 0.0
    %1016 = vmatprep.subr.mxu0 0.0
    %1017 = vmatpush1.msra.mxu0 0.0
    %1018 = vmatprep.subr.mxu0 0.0
    %1019 = vmatpush1.msra.mxu0 0.0
    %1020 = vmatprep.subr.mxu0 0.0
    %1021 = vmatpush1.msra.mxu0 0.0
    %1022 = vmatprep.mubr.f32.mxu0 0.0
    %1023 = vmatmul.mubr.f32.gmra.mrb[0].mxu0 %v956
    %v1024 = vpop.f32.mrb[0].mxu0
    %v1025 = vadd.f32 0.0, %v1024
    %v1026 = vpop.f32.mrb[0].mxu0
    %1027 = vdwg.mxu0
    %1028 = vrot.lane.b32.xlu0 %v252, 120
    %v1029 = vpop.permute.xlu0 %1028
    %1030 = vrot.lane.b32.xlu0 %v357, 120
    %v1031 = vpop.permute.xlu0 %1030
    %v1032 = vsel %vm375, %v1029, 0
    %v1034 = vsel %vm375, %v1031, 0
    %1036 = vmatprep.subr.mxu0 0.0
    %1037 = vmatpush1.xpose.msra.mxu0 %v1034
    %1038 = vmatprep.subr.mxu0 0.0
    %1039 = vmatpush1.xpose.msra.mxu0 0.0
    %1040 = vmatprep.subr.mxu0 0.0
    %1041 = vmatpush1.xpose.msra.mxu0 0.0
    %1042 = vmatprep.subr.mxu0 0.0
    %1043 = vmatpush1.xpose.msra.mxu0 0.0
    %1044 = vmatprep.subr.mxu0 0.0
    %1045 = vmatpush1.xpose.msra.mxu0 0.0
    %1046 = vmatprep.subr.mxu0 0.0
    %1047 = vmatpush1.xpose.msra.mxu0 0.0
    %1048 = vmatprep.subr.mxu0 0.0
    %1049 = vmatpush1.xpose.msra.mxu0 0.0
    %1050 = vmatprep.subr.mxu0 0.0
    %1051 = vmatpush1.xpose.msra.mxu0 0.0
    %1052 = vmatprep.subr.mxu0 0.0
    %1053 = vmatpush1.xpose.msra.mxu0 0.0
    %1054 = vmatprep.subr.mxu0 0.0
    %1055 = vmatpush1.xpose.msra.mxu0 0.0
    %1056 = vmatprep.subr.mxu0 0.0
    %1057 = vmatpush1.xpose.msra.mxu0 0.0
    %1058 = vmatprep.subr.mxu0 0.0
    %1059 = vmatpush1.xpose.msra.mxu0 0.0
    %1060 = vmatprep.subr.mxu0 0.0
    %1061 = vmatpush1.xpose.msra.mxu0 0.0
    %1062 = vmatprep.subr.mxu0 0.0
    %1063 = vmatpush1.xpose.msra.mxu0 0.0
    %1064 = vmatprep.subr.mxu0 0.0
    %1065 = vmatpush1.xpose.msra.mxu0 0.0
    %1066 = vmatprep.subr.mxu0 0.0
    %1067 = vmatpush1.xpose.msra.mxu0 0.0
    %1068 = vmatprep.subr.mxu0 0.0
    %1069 = vmatpush1.xpose.msra.mxu0 0.0
    %1070 = vmatprep.subr.mxu0 0.0
    %1071 = vmatpush1.xpose.msra.mxu0 0.0
    %1072 = vmatprep.subr.mxu0 0.0
    %1073 = vmatpush1.xpose.msra.mxu0 0.0
    %1074 = vmatprep.subr.mxu0 0.0
    %1075 = vmatpush1.xpose.msra.mxu0 0.0
    %1076 = vmatprep.subr.mxu0 0.0
    %1077 = vmatpush1.xpose.msra.mxu0 0.0
    %1078 = vmatprep.subr.mxu0 0.0
    %1079 = vmatpush1.xpose.msra.mxu0 0.0
    %1080 = vmatprep.subr.mxu0 0.0
    %1081 = vmatpush1.xpose.msra.mxu0 0.0
    %1082 = vmatprep.subr.mxu0 0.0
    %1083 = vmatpush1.xpose.msra.mxu0 0.0
    %1084 = vmatprep.subr.mxu0 0.0
    %1085 = vmatpush1.xpose.msra.mxu0 0.0
    %1086 = vmatprep.subr.mxu0 0.0
    %1087 = vmatpush1.xpose.msra.mxu0 0.0
    %1088 = vmatprep.subr.mxu0 0.0
    %1089 = vmatpush1.xpose.msra.mxu0 0.0
    %1090 = vmatprep.subr.mxu0 0.0
    %1091 = vmatpush1.xpose.msra.mxu0 0.0
    %1092 = vmatprep.subr.mxu0 0.0
    %1093 = vmatpush1.xpose.msra.mxu0 0.0
    %1094 = vmatprep.subr.mxu0 0.0
    %1095 = vmatpush1.xpose.msra.mxu0 0.0
    %1096 = vmatprep.subr.mxu0 0.0
    %1097 = vmatpush1.xpose.msra.mxu0 0.0
    %1098 = vmatprep.subr.mxu0 0.0
    %1099 = vmatpush1.xpose.msra.mxu0 0.0
    %1100 = vmatprep.mubr.f32.mxu0 0.0
    %1101 = vmatmul.mubr.f32.gmra.mrb[0].mxu0 %v1032
    %v1102 = vpop.f32.mrb[0].mxu0
    %v1103 = vadd.f32 %v32, %v1102
    %v1104 = vpop.f32.mrb[0].mxu0
    %1105 = vdwg.mxu0
    %1106 = vrot.lane.b32.xlu0 %v257, 120
    %v1107 = vpop.permute.xlu0 %1106
    %1108 = vrot.lane.b32.xlu0 %v362, 120
    %v1109 = vpop.permute.xlu0 %1108
    %v1110 = vsel %vm375, %v1107, 0
    %v1112 = vsel %vm375, %v1109, 0
    %1114 = vmatprep.subr.mxu0 0.0
    %1115 = vmatpush1.xpose.msra.mxu0 %v1112
    %1116 = vmatprep.subr.mxu0 0.0
    %1117 = vmatpush1.xpose.msra.mxu0 0.0
    %1118 = vmatprep.subr.mxu0 0.0
    %1119 = vmatpush1.xpose.msra.mxu0 0.0
    %1120 = vmatprep.subr.mxu0 0.0
    %1121 = vmatpush1.xpose.msra.mxu0 0.0
    %1122 = vmatprep.subr.mxu0 0.0
    %1123 = vmatpush1.xpose.msra.mxu0 0.0
    %1124 = vmatprep.subr.mxu0 0.0
    %1125 = vmatpush1.xpose.msra.mxu0 0.0
    %1126 = vmatprep.subr.mxu0 0.0
    %1127 = vmatpush1.xpose.msra.mxu0 0.0
    %1128 = vmatprep.subr.mxu0 0.0
    %1129 = vmatpush1.xpose.msra.mxu0 0.0
    %1130 = vmatprep.subr.mxu0 0.0
    %1131 = vmatpush1.xpose.msra.mxu0 0.0
    %1132 = vmatprep.subr.mxu0 0.0
    %1133 = vmatpush1.xpose.msra.mxu0 0.0
    %1134 = vmatprep.subr.mxu0 0.0
    %1135 = vmatpush1.xpose.msra.mxu0 0.0
    %1136 = vmatprep.subr.mxu0 0.0
    %1137 = vmatpush1.xpose.msra.mxu0 0.0
    %1138 = vmatprep.subr.mxu0 0.0
    %1139 = vmatpush1.xpose.msra.mxu0 0.0
    %1140 = vmatprep.subr.mxu0 0.0
    %1141 = vmatpush1.xpose.msra.mxu0 0.0
    %1142 = vmatprep.subr.mxu0 0.0
    %1143 = vmatpush1.xpose.msra.mxu0 0.0
    %1144 = vmatprep.subr.mxu0 0.0
    %1145 = vmatpush1.xpose.msra.mxu0 0.0
    %1146 = vmatprep.subr.mxu0 0.0
    %1147 = vmatpush1.xpose.msra.mxu0 0.0
    %1148 = vmatprep.subr.mxu0 0.0
    %1149 = vmatpush1.xpose.msra.mxu0 0.0
    %1150 = vmatprep.subr.mxu0 0.0
    %1151 = vmatpush1.xpose.msra.mxu0 0.0
    %1152 = vmatprep.subr.mxu0 0.0
    %1153 = vmatpush1.xpose.msra.mxu0 0.0
    %1154 = vmatprep.subr.mxu0 0.0
    %1155 = vmatpush1.xpose.msra.mxu0 0.0
    %1156 = vmatprep.subr.mxu0 0.0
    %1157 = vmatpush1.xpose.msra.mxu0 0.0
    %1158 = vmatprep.subr.mxu0 0.0
    %1159 = vmatpush1.xpose.msra.mxu0 0.0
    %1160 = vmatprep.subr.mxu0 0.0
    %1161 = vmatpush1.xpose.msra.mxu0 0.0
    %1162 = vmatprep.subr.mxu0 0.0
    %1163 = vmatpush1.xpose.msra.mxu0 0.0
    %1164 = vmatprep.subr.mxu0 0.0
    %1165 = vmatpush1.xpose.msra.mxu0 0.0
    %1166 = vmatprep.subr.mxu0 0.0
    %1167 = vmatpush1.xpose.msra.mxu0 0.0
    %1168 = vmatprep.subr.mxu0 0.0
    %1169 = vmatpush1.xpose.msra.mxu0 0.0
    %1170 = vmatprep.subr.mxu0 0.0
    %1171 = vmatpush1.xpose.msra.mxu0 0.0
    %1172 = vmatprep.subr.mxu0 0.0
    %1173 = vmatpush1.xpose.msra.mxu0 0.0
    %1174 = vmatprep.subr.mxu0 0.0
    %1175 = vmatpush1.xpose.msra.mxu0 0.0
    %1176 = vmatprep.subr.mxu0 0.0
    %1177 = vmatpush1.xpose.msra.mxu0 0.0
    %1178 = vmatprep.mubr.f32.mxu0 0.0
    %1179 = vmatmul.mubr.f32.gmra.mrb[0].mxu0 %v1110
    %v1180 = vpop.f32.mrb[0].mxu0
    %v1181 = vadd.f32 %v33, %v1180
    %v1182 = vpop.f32.mrb[0].mxu0
    %1183 = vdwg.mxu0
    %1184 = vrot.lane.b32.xlu0 %v262, 120
    %v1185 = vpop.permute.xlu0 %1184
    %1186 = vrot.lane.b32.xlu0 %v367, 120
    %v1187 = vpop.permute.xlu0 %1186
    %v1188 = vsel %vm375, %v1185, 0
    %v1190 = vsel %vm375, %v1187, 0
    %1192 = vmatprep.subr.mxu0 0.0
    %1193 = vmatpush1.xpose.msra.mxu0 %v1190
    %1194 = vmatprep.subr.mxu0 0.0
    %1195 = vmatpush1.xpose.msra.mxu0 0.0
    %1196 = vmatprep.subr.mxu0 0.0
    %1197 = vmatpush1.xpose.msra.mxu0 0.0
    %1198 = vmatprep.subr.mxu0 0.0
    %1199 = vmatpush1.xpose.msra.mxu0 0.0
    %1200 = vmatprep.subr.mxu0 0.0
    %1201 = vmatpush1.xpose.msra.mxu0 0.0
    %1202 = vmatprep.subr.mxu0 0.0
    %1203 = vmatpush1.xpose.msra.mxu0 0.0
    %1204 = vmatprep.subr.mxu0 0.0
    %1205 = vmatpush1.xpose.msra.mxu0 0.0
    %1206 = vmatprep.subr.mxu0 0.0
    %1207 = vmatpush1.xpose.msra.mxu0 0.0
    %1208 = vmatprep.subr.mxu0 0.0
    %1209 = vmatpush1.xpose.msra.mxu0 0.0
    %1210 = vmatprep.subr.mxu0 0.0
    %1211 = vmatpush1.xpose.msra.mxu0 0.0
    %1212 = vmatprep.subr.mxu0 0.0
    %1213 = vmatpush1.xpose.msra.mxu0 0.0
    %1214 = vmatprep.subr.mxu0 0.0
    %1215 = vmatpush1.xpose.msra.mxu0 0.0
    %1216 = vmatprep.subr.mxu0 0.0
    %1217 = vmatpush1.xpose.msra.mxu0 0.0
    %1218 = vmatprep.subr.mxu0 0.0
    %1219 = vmatpush1.xpose.msra.mxu0 0.0
    %1220 = vmatprep.subr.mxu0 0.0
    %1221 = vmatpush1.xpose.msra.mxu0 0.0
    %1222 = vmatprep.subr.mxu0 0.0
    %1223 = vmatpush1.xpose.msra.mxu0 0.0
    %1224 = vmatprep.subr.mxu0 0.0
    %1225 = vmatpush1.xpose.msra.mxu0 0.0
    %1226 = vmatprep.subr.mxu0 0.0
    %1227 = vmatpush1.xpose.msra.mxu0 0.0
    %1228 = vmatprep.subr.mxu0 0.0
    %1229 = vmatpush1.xpose.msra.mxu0 0.0
    %1230 = vmatprep.subr.mxu0 0.0
    %1231 = vmatpush1.xpose.msra.mxu0 0.0
    %1232 = vmatprep.subr.mxu0 0.0
    %1233 = vmatpush1.xpose.msra.mxu0 0.0
    %1234 = vmatprep.subr.mxu0 0.0
    %1235 = vmatpush1.xpose.msra.mxu0 0.0
    %1236 = vmatprep.subr.mxu0 0.0
    %1237 = vmatpush1.xpose.msra.mxu0 0.0
    %1238 = vmatprep.subr.mxu0 0.0
    %1239 = vmatpush1.xpose.msra.mxu0 0.0
    %1240 = vmatprep.subr.mxu0 0.0
    %1241 = vmatpush1.xpose.msra.mxu0 0.0
    %1242 = vmatprep.subr.mxu0 0.0
    %1243 = vmatpush1.xpose.msra.mxu0 0.0
    %1244 = vmatprep.subr.mxu0 0.0
    %1245 = vmatpush1.xpose.msra.mxu0 0.0
    %1246 = vmatprep.subr.mxu0 0.0
    %1247 = vmatpush1.xpose.msra.mxu0 0.0
    %1248 = vmatprep.subr.mxu0 0.0
    %1249 = vmatpush1.xpose.msra.mxu0 0.0
    %1250 = vmatprep.subr.mxu0 0.0
    %1251 = vmatpush1.xpose.msra.mxu0 0.0
    %1252 = vmatprep.subr.mxu0 0.0
    %1253 = vmatpush1.xpose.msra.mxu0 0.0
    %1254 = vmatprep.subr.mxu0 0.0
    %1255 = vmatpush1.xpose.msra.mxu0 0.0
    %1256 = vmatprep.mubr.f32.mxu0 0.0
    %1257 = vmatmul.mubr.f32.gmra.mrb[0].mxu0 %v1188
    %v1258 = vpop.f32.mrb[0].mxu0
    %v1259 = vadd.f32 %v34, %v1258
    %v1260 = vpop.f32.mrb[0].mxu0
    %1261 = vdwg.mxu0
    %1262 = vrot.lane.b32.xlu0 %v267, 120
    %v1263 = vpop.permute.xlu0 %1262
    %1264 = vrot.lane.b32.xlu0 %v372, 120
    %v1265 = vpop.permute.xlu0 %1264
    %v1266 = vsel %vm375, %v1263, 0
    %v1268 = vsel %vm375, %v1265, 0
    %1270 = vmatprep.subr.mxu0 0.0
    %1271 = vmatpush1.xpose.msra.mxu0 %v1268
    %1272 = vmatprep.subr.mxu0 0.0
    %1273 = vmatpush1.xpose.msra.mxu0 0.0
    %1274 = vmatprep.subr.mxu0 0.0
    %1275 = vmatpush1.xpose.msra.mxu0 0.0
    %1276 = vmatprep.subr.mxu0 0.0
    %1277 = vmatpush1.xpose.msra.mxu0 0.0
    %1278 = vmatprep.subr.mxu0 0.0
    %1279 = vmatpush1.xpose.msra.mxu0 0.0
    %1280 = vmatprep.subr.mxu0 0.0
    %1281 = vmatpush1.xpose.msra.mxu0 0.0
    %1282 = vmatprep.subr.mxu0 0.0
    %1283 = vmatpush1.xpose.msra.mxu0 0.0
    %1284 = vmatprep.subr.mxu0 0.0
    %1285 = vmatpush1.xpose.msra.mxu0 0.0
    %1286 = vmatprep.subr.mxu0 0.0
    %1287 = vmatpush1.xpose.msra.mxu0 0.0
    %1288 = vmatprep.subr.mxu0 0.0
    %1289 = vmatpush1.xpose.msra.mxu0 0.0
    %1290 = vmatprep.subr.mxu0 0.0
    %1291 = vmatpush1.xpose.msra.mxu0 0.0
    %1292 = vmatprep.subr.mxu0 0.0
    %1293 = vmatpush1.xpose.msra.mxu0 0.0
    %1294 = vmatprep.subr.mxu0 0.0
    %1295 = vmatpush1.xpose.msra.mxu0 0.0
    %1296 = vmatprep.subr.mxu0 0.0
    %1297 = vmatpush1.xpose.msra.mxu0 0.0
    %1298 = vmatprep.subr.mxu0 0.0
    %1299 = vmatpush1.xpose.msra.mxu0 0.0
    %1300 = vmatprep.subr.mxu0 0.0
    %1301 = vmatpush1.xpose.msra.mxu0 0.0
    %1302 = vmatprep.subr.mxu0 0.0
    %1303 = vmatpush1.xpose.msra.mxu0 0.0
    %1304 = vmatprep.subr.mxu0 0.0
    %1305 = vmatpush1.xpose.msra.mxu0 0.0
    %1306 = vmatprep.subr.mxu0 0.0
    %1307 = vmatpush1.xpose.msra.mxu0 0.0
    %1308 = vmatprep.subr.mxu0 0.0
    %1309 = vmatpush1.xpose.msra.mxu0 0.0
    %1310 = vmatprep.subr.mxu0 0.0
    %1311 = vmatpush1.xpose.msra.mxu0 0.0
    %1312 = vmatprep.subr.mxu0 0.0
    %1313 = vmatpush1.xpose.msra.mxu0 0.0
    %1314 = vmatprep.subr.mxu0 0.0
    %1315 = vmatpush1.xpose.msra.mxu0 0.0
    %1316 = vmatprep.subr.mxu0 0.0
    %1317 = vmatpush1.xpose.msra.mxu0 0.0
    %1318 = vmatprep.subr.mxu0 0.0
    %1319 = vmatpush1.xpose.msra.mxu0 0.0
    %1320 = vmatprep.subr.mxu0 0.0
    %1321 = vmatpush1.xpose.msra.mxu0 0.0
    %1322 = vmatprep.subr.mxu0 0.0
    %1323 = vmatpush1.xpose.msra.mxu0 0.0
    %1324 = vmatprep.subr.mxu0 0.0
    %1325 = vmatpush1.xpose.msra.mxu0 0.0
    %1326 = vmatprep.subr.mxu0 0.0
    %1327 = vmatpush1.xpose.msra.mxu0 0.0
    %1328 = vmatprep.subr.mxu0 0.0
    %1329 = vmatpush1.xpose.msra.mxu0 0.0
    %1330 = vmatprep.subr.mxu0 0.0
    %1331 = vmatpush1.xpose.msra.mxu0 0.0
    %1332 = vmatprep.subr.mxu0 0.0
    %1333 = vmatpush1.xpose.msra.mxu0 0.0
    %1334 = vmatprep.mubr.f32.mxu0 0.0
    %1335 = vmatmul.mubr.f32.gmra.mrb[0].mxu0 %v1266
    %v1336 = vpop.f32.mrb[0].mxu0
    %v1337 = vadd.f32 %v35, %v1336
    %v1338 = vpop.f32.mrb[0].mxu0
    %1339 = vdwg.mxu0
    %v1340 = vsel %vm375, %v1103, -inf
    %1341 = vmax.xlane.f32.xlu0 %v1340
    %v1342 = vpop.xlane.xlu0 %1341
    %v1343 = vsel %vm375, %v1181, -inf
    %1344 = vmax.xlane.f32.xlu0 %v1343
    %v1345 = vpop.xlane.xlu0 %1344
    %v1346 = vsel %vm375, %v1259, -inf
    %1347 = vmax.xlane.f32.xlu0 %v1346
    %v1348 = vpop.xlane.xlu0 %1347
    %v1349 = vsel %vm375, %v1337, -inf
    %1350 = vmax.xlane.f32.xlu0 %v1349
    %v1351 = vpop.xlane.xlu0 %1350
    %v1352 = vsub.f32 %v1103, %v1342
    %v1353 = vsub.f32 %v1181, %v1345
    %v1354 = vsub.f32 %v1259, %v1348
    %v1355 = vsub.f32 %v1337, %v1351
    %v1356 = vmul.f32 %v1352, 1.442695
    %v1357 = vpow.pop %v1356
    %v1358 = vmul.f32 %v1353, 1.442695
    %v1359 = vpow.pop %v1358
    %v1360 = vmul.f32 %v1354, 1.442695
    %v1361 = vpow.pop %v1360
    %v1362 = vmul.f32 %v1355, 1.442695
    %v1363 = vpow.pop %v1362
    %v1364 = vsel %vm375, %v1357, 0.0
    %1365 = vadd.xlane.f32.xlu0 %v1364
    %v1366 = vpop.xlane.xlu0 %1365
    %v1367 = vsel %vm375, %v1359, 0.0
    %1368 = vadd.xlane.f32.xlu0 %v1367
    %v1369 = vpop.xlane.xlu0 %1368
    %v1370 = vsel %vm375, %v1361, 0.0
    %1371 = vadd.xlane.f32.xlu0 %v1370
    %v1372 = vpop.xlane.xlu0 %1371
    %v1373 = vsel %vm375, %v1363, 0.0
    %1374 = vadd.xlane.f32.xlu0 %v1373
    %v1375 = vpop.xlane.xlu0 %1374
    %v1376 = vrcp.pop %v1366
    %v1377 = vrcp.pop %v1369
    %v1378 = vrcp.pop %v1372
    %v1379 = vrcp.pop %v1375
    %v1380 = vmul.f32 %v1357, %v1376
    %v1381 = vmul.f32 %v1359, %v1377
    %v1382 = vmul.f32 %v1361, %v1378
    %v1383 = vmul.f32 %v1363, %v1379
    %1384 = vrot.lane.b32.xlu0 %v357, 88
    %v1385 = vpop.permute.xlu0 %1384
    %v1388 = vsel %vm375, %v1380, 0
    %1390 = vmatprep.subr.mxu0 0.0
    %1391 = vmatpush1.msra.mxu0 %v1385
    %1392 = vmatprep.subr.mxu0 0.0
    %1393 = vmatpush1.msra.mxu0 0.0
    %1394 = vmatprep.subr.mxu0 0.0
    %1395 = vmatpush1.msra.mxu0 0.0
    %1396 = vmatprep.subr.mxu0 0.0
    %1397 = vmatpush1.msra.mxu0 0.0
    %1398 = vmatprep.subr.mxu0 0.0
    %1399 = vmatpush1.msra.mxu0 0.0
    %1400 = vmatprep.subr.mxu0 0.0
    %1401 = vmatpush1.msra.mxu0 0.0
    %1402 = vmatprep.subr.mxu0 0.0
    %1403 = vmatpush1.msra.mxu0 0.0
    %1404 = vmatprep.subr.mxu0 0.0
    %1405 = vmatpush1.msra.mxu0 0.0
    %1406 = vmatprep.subr.mxu0 0.0
    %1407 = vmatpush1.msra.mxu0 0.0
    %1408 = vmatprep.subr.mxu0 0.0
    %1409 = vmatpush1.msra.mxu0 0.0
    %1410 = vmatprep.subr.mxu0 0.0
    %1411 = vmatpush1.msra.mxu0 0.0
    %1412 = vmatprep.subr.mxu0 0.0
    %1413 = vmatpush1.msra.mxu0 0.0
    %1414 = vmatprep.subr.mxu0 0.0
    %1415 = vmatpush1.msra.mxu0 0.0
    %1416 = vmatprep.subr.mxu0 0.0
    %1417 = vmatpush1.msra.mxu0 0.0
    %1418 = vmatprep.subr.mxu0 0.0
    %1419 = vmatpush1.msra.mxu0 0.0
    %1420 = vmatprep.subr.mxu0 0.0
    %1421 = vmatpush1.msra.mxu0 0.0
    %1422 = vmatprep.subr.mxu0 0.0
    %1423 = vmatpush1.msra.mxu0 0.0
    %1424 = vmatprep.subr.mxu0 0.0
    %1425 = vmatpush1.msra.mxu0 0.0
    %1426 = vmatprep.subr.mxu0 0.0
    %1427 = vmatpush1.msra.mxu0 0.0
    %1428 = vmatprep.subr.mxu0 0.0
    %1429 = vmatpush1.msra.mxu0 0.0
    %1430 = vmatprep.subr.mxu0 0.0
    %1431 = vmatpush1.msra.mxu0 0.0
    %1432 = vmatprep.subr.mxu0 0.0
    %1433 = vmatpush1.msra.mxu0 0.0
    %1434 = vmatprep.subr.mxu0 0.0
    %1435 = vmatpush1.msra.mxu0 0.0
    %1436 = vmatprep.subr.mxu0 0.0
    %1437 = vmatpush1.msra.mxu0 0.0
    %1438 = vmatprep.subr.mxu0 0.0
    %1439 = vmatpush1.msra.mxu0 0.0
    %1440 = vmatprep.subr.mxu0 0.0
    %1441 = vmatpush1.msra.mxu0 0.0
    %1442 = vmatprep.subr.mxu0 0.0
    %1443 = vmatpush1.msra.mxu0 0.0
    %1444 = vmatprep.subr.mxu0 0.0
    %1445 = vmatpush1.msra.mxu0 0.0
    %1446 = vmatprep.subr.mxu0 0.0
    %1447 = vmatpush1.msra.mxu0 0.0
    %1448 = vmatprep.subr.mxu0 0.0
    %1449 = vmatpush1.msra.mxu0 0.0
    %1450 = vmatprep.subr.mxu0 0.0
    %1451 = vmatpush1.msra.mxu0 0.0
    %1452 = vmatprep.subr.mxu0 0.0
    %1453 = vmatpush1.msra.mxu0 0.0
    %1454 = vmatprep.mubr.f32.mxu0 0.0
    %1455 = vmatmul.mubr.f32.gmra.mrb[0].mxu0 %v1388
    %v1456 = vpop.f32.mrb[0].mxu0
    %v1457 = vadd.f32 0.0, %v1456
    %v1458 = vpop.f32.mrb[0].mxu0
    %1459 = vdwg.mxu0
    %1460 = vrot.lane.b32.xlu0 %v362, 88
    %v1461 = vpop.permute.xlu0 %1460
    %v1464 = vsel %vm375, %v1381, 0
    %1466 = vmatprep.subr.mxu0 0.0
    %1467 = vmatpush1.msra.mxu0 %v1461
    %1468 = vmatprep.subr.mxu0 0.0
    %1469 = vmatpush1.msra.mxu0 0.0
    %1470 = vmatprep.subr.mxu0 0.0
    %1471 = vmatpush1.msra.mxu0 0.0
    %1472 = vmatprep.subr.mxu0 0.0
    %1473 = vmatpush1.msra.mxu0 0.0
    %1474 = vmatprep.subr.mxu0 0.0
    %1475 = vmatpush1.msra.mxu0 0.0
    %1476 = vmatprep.subr.mxu0 0.0
    %1477 = vmatpush1.msra.mxu0 0.0
    %1478 = vmatprep.subr.mxu0 0.0
    %1479 = vmatpush1.msra.mxu0 0.0
    %1480 = vmatprep.subr.mxu0 0.0
    %1481 = vmatpush1.msra.mxu0 0.0
    %1482 = vmatprep.subr.mxu0 0.0
    %1483 = vmatpush1.msra.mxu0 0.0
    %1484 = vmatprep.subr.mxu0 0.0
    %1485 = vmatpush1.msra.mxu0 0.0
    %1486 = vmatprep.subr.mxu0 0.0
    %1487 = vmatpush1.msra.mxu0 0.0
    %1488 = vmatprep.subr.mxu0 0.0
    %1489 = vmatpush1.msra.mxu0 0.0
    %1490 = vmatprep.subr.mxu0 0.0
    %1491 = vmatpush1.msra.mxu0 0.0
    %1492 = vmatprep.subr.mxu0 0.0
    %1493 = vmatpush1.msra.mxu0 0.0
    %1494 = vmatprep.subr.mxu0 0.0
    %1495 = vmatpush1.msra.mxu0 0.0
    %1496 = vmatprep.subr.mxu0 0.0
    %1497 = vmatpush1.msra.mxu0 0.0
    %1498 = vmatprep.subr.mxu0 0.0
    %1499 = vmatpush1.msra.mxu0 0.0
    %1500 = vmatprep.subr.mxu0 0.0
    %1501 = vmatpush1.msra.mxu0 0.0
    %1502 = vmatprep.subr.mxu0 0.0
    %1503 = vmatpush1.msra.mxu0 0.0
    %1504 = vmatprep.subr.mxu0 0.0
    %1505 = vmatpush1.msra.mxu0 0.0
    %1506 = vmatprep.subr.mxu0 0.0
    %1507 = vmatpush1.msra.mxu0 0.0
    %1508 = vmatprep.subr.mxu0 0.0
    %1509 = vmatpush1.msra.mxu0 0.0
    %1510 = vmatprep.subr.mxu0 0.0
    %1511 = vmatpush1.msra.mxu0 0.0
    %1512 = vmatprep.subr.mxu0 0.0
    %1513 = vmatpush1.msra.mxu0 0.0
    %1514 = vmatprep.subr.mxu0 0.0
    %1515 = vmatpush1.msra.mxu0 0.0
    %1516 = vmatprep.subr.mxu0 0.0
    %1517 = vmatpush1.msra.mxu0 0.0
    %1518 = vmatprep.subr.mxu0 0.0
    %1519 = vmatpush1.msra.mxu0 0.0
    %1520 = vmatprep.subr.mxu0 0.0
    %1521 = vmatpush1.msra.mxu0 0.0
    %1522 = vmatprep.subr.mxu0 0.0
    %1523 = vmatpush1.msra.mxu0 0.0
    %1524 = vmatprep.subr.mxu0 0.0
    %1525 = vmatpush1.msra.mxu0 0.0
    %1526 = vmatprep.subr.mxu0 0.0
    %1527 = vmatpush1.msra.mxu0 0.0
    %1528 = vmatprep.subr.mxu0 0.0
    %1529 = vmatpush1.msra.mxu0 0.0
    %1530 = vmatprep.mubr.f32.mxu0 0.0
    %1531 = vmatmul.mubr.f32.gmra.mrb[0].mxu0 %v1464
    %v1532 = vpop.f32.mrb[0].mxu0
    %v1533 = vadd.f32 0.0, %v1532
    %v1534 = vpop.f32.mrb[0].mxu0
    %1535 = vdwg.mxu0
    %1536 = vrot.lane.b32.xlu0 %v367, 88
    %v1537 = vpop.permute.xlu0 %1536
    %v1540 = vsel %vm375, %v1382, 0
    %1542 = vmatprep.subr.mxu0 0.0
    %1543 = vmatpush1.msra.mxu0 %v1537
    %1544 = vmatprep.subr.mxu0 0.0
    %1545 = vmatpush1.msra.mxu0 0.0
    %1546 = vmatprep.subr.mxu0 0.0
    %1547 = vmatpush1.msra.mxu0 0.0
    %1548 = vmatprep.subr.mxu0 0.0
    %1549 = vmatpush1.msra.mxu0 0.0
    %1550 = vmatprep.subr.mxu0 0.0
    %1551 = vmatpush1.msra.mxu0 0.0
    %1552 = vmatprep.subr.mxu0 0.0
    %1553 = vmatpush1.msra.mxu0 0.0
    %1554 = vmatprep.subr.mxu0 0.0
    %1555 = vmatpush1.msra.mxu0 0.0
    %1556 = vmatprep.subr.mxu0 0.0
    %1557 = vmatpush1.msra.mxu0 0.0
    %1558 = vmatprep.subr.mxu0 0.0
    %1559 = vmatpush1.msra.mxu0 0.0
    %1560 = vmatprep.subr.mxu0 0.0
    %1561 = vmatpush1.msra.mxu0 0.0
    %1562 = vmatprep.subr.mxu0 0.0
    %1563 = vmatpush1.msra.mxu0 0.0
    %1564 = vmatprep.subr.mxu0 0.0
    %1565 = vmatpush1.msra.mxu0 0.0
    %1566 = vmatprep.subr.mxu0 0.0
    %1567 = vmatpush1.msra.mxu0 0.0
    %1568 = vmatprep.subr.mxu0 0.0
    %1569 = vmatpush1.msra.mxu0 0.0
    %1570 = vmatprep.subr.mxu0 0.0
    %1571 = vmatpush1.msra.mxu0 0.0
    %1572 = vmatprep.subr.mxu0 0.0
    %1573 = vmatpush1.msra.mxu0 0.0
    %1574 = vmatprep.subr.mxu0 0.0
    %1575 = vmatpush1.msra.mxu0 0.0
    %1576 = vmatprep.subr.mxu0 0.0
    %1577 = vmatpush1.msra.mxu0 0.0
    %1578 = vmatprep.subr.mxu0 0.0
    %1579 = vmatpush1.msra.mxu0 0.0
    %1580 = vmatprep.subr.mxu0 0.0
    %1581 = vmatpush1.msra.mxu0 0.0
    %1582 = vmatprep.subr.mxu0 0.0
    %1583 = vmatpush1.msra.mxu0 0.0
    %1584 = vmatprep.subr.mxu0 0.0
    %1585 = vmatpush1.msra.mxu0 0.0
    %1586 = vmatprep.subr.mxu0 0.0
    %1587 = vmatpush1.msra.mxu0 0.0
    %1588 = vmatprep.subr.mxu0 0.0
    %1589 = vmatpush1.msra.mxu0 0.0
    %1590 = vmatprep.subr.mxu0 0.0
    %1591 = vmatpush1.msra.mxu0 0.0
    %1592 = vmatprep.subr.mxu0 0.0
    %1593 = vmatpush1.msra.mxu0 0.0
    %1594 = vmatprep.subr.mxu0 0.0
    %1595 = vmatpush1.msra.mxu0 0.0
    %1596 = vmatprep.subr.mxu0 0.0
    %1597 = vmatpush1.msra.mxu0 0.0
    %1598 = vmatprep.subr.mxu0 0.0
    %1599 = vmatpush1.msra.mxu0 0.0
    %1600 = vmatprep.subr.mxu0 0.0
    %1601 = vmatpush1.msra.mxu0 0.0
    %1602 = vmatprep.subr.mxu0 0.0
    %1603 = vmatpush1.msra.mxu0 0.0
    %1604 = vmatprep.subr.mxu0 0.0
    %1605 = vmatpush1.msra.mxu0 0.0
    %1606 = vmatprep.mubr.f32.mxu0 0.0
    %1607 = vmatmul.mubr.f32.gmra.mrb[0].mxu0 %v1540
    %v1608 = vpop.f32.mrb[0].mxu0
    %v1609 = vadd.f32 0.0, %v1608
    %v1610 = vpop.f32.mrb[0].mxu0
    %1611 = vdwg.mxu0
    %1612 = vrot.lane.b32.xlu0 %v372, 88
    %v1613 = vpop.permute.xlu0 %1612
    %v1616 = vsel %vm375, %v1383, 0
    %1618 = vmatprep.subr.mxu0 0.0
    %1619 = vmatpush1.msra.mxu0 %v1613
    %1620 = vmatprep.subr.mxu0 0.0
    %1621 = vmatpush1.msra.mxu0 0.0
    %1622 = vmatprep.subr.mxu0 0.0
    %1623 = vmatpush1.msra.mxu0 0.0
    %1624 = vmatprep.subr.mxu0 0.0
    %1625 = vmatpush1.msra.mxu0 0.0
    %1626 = vmatprep.subr.mxu0 0.0
    %1627 = vmatpush1.msra.mxu0 0.0
    %1628 = vmatprep.subr.mxu0 0.0
    %1629 = vmatpush1.msra.mxu0 0.0
    %1630 = vmatprep.subr.mxu0 0.0
    %1631 = vmatpush1.msra.mxu0 0.0
    %1632 = vmatprep.subr.mxu0 0.0
    %1633 = vmatpush1.msra.mxu0 0.0
    %1634 = vmatprep.subr.mxu0 0.0
    %1635 = vmatpush1.msra.mxu0 0.0
    %1636 = vmatprep.subr.mxu0 0.0
    %1637 = vmatpush1.msra.mxu0 0.0
    %1638 = vmatprep.subr.mxu0 0.0
    %1639 = vmatpush1.msra.mxu0 0.0
    %1640 = vmatprep.subr.mxu0 0.0
    %1641 = vmatpush1.msra.mxu0 0.0
    %1642 = vmatprep.subr.mxu0 0.0
    %1643 = vmatpush1.msra.mxu0 0.0
    %1644 = vmatprep.subr.mxu0 0.0
    %1645 = vmatpush1.msra.mxu0 0.0
    %1646 = vmatprep.subr.mxu0 0.0
    %1647 = vmatpush1.msra.mxu0 0.0
    %1648 = vmatprep.subr.mxu0 0.0
    %1649 = vmatpush1.msra.mxu0 0.0
    %1650 = vmatprep.subr.mxu0 0.0
    %1651 = vmatpush1.msra.mxu0 0.0
    %1652 = vmatprep.subr.mxu0 0.0
    %1653 = vmatpush1.msra.mxu0 0.0
    %1654 = vmatprep.subr.mxu0 0.0
    %1655 = vmatpush1.msra.mxu0 0.0
    %1656 = vmatprep.subr.mxu0 0.0
    %1657 = vmatpush1.msra.mxu0 0.0
    %1658 = vmatprep.subr.mxu0 0.0
    %1659 = vmatpush1.msra.mxu0 0.0
    %1660 = vmatprep.subr.mxu0 0.0
    %1661 = vmatpush1.msra.mxu0 0.0
    %1662 = vmatprep.subr.mxu0 0.0
    %1663 = vmatpush1.msra.mxu0 0.0
    %1664 = vmatprep.subr.mxu0 0.0
    %1665 = vmatpush1.msra.mxu0 0.0
    %1666 = vmatprep.subr.mxu0 0.0
    %1667 = vmatpush1.msra.mxu0 0.0
    %1668 = vmatprep.subr.mxu0 0.0
    %1669 = vmatpush1.msra.mxu0 0.0
    %1670 = vmatprep.subr.mxu0 0.0
    %1671 = vmatpush1.msra.mxu0 0.0
    %1672 = vmatprep.subr.mxu0 0.0
    %1673 = vmatpush1.msra.mxu0 0.0
    %1674 = vmatprep.subr.mxu0 0.0
    %1675 = vmatpush1.msra.mxu0 0.0
    %1676 = vmatprep.subr.mxu0 0.0
    %1677 = vmatpush1.msra.mxu0 0.0
    %1678 = vmatprep.subr.mxu0 0.0
    %1679 = vmatpush1.msra.mxu0 0.0
    %1680 = vmatprep.subr.mxu0 0.0
    %1681 = vmatpush1.msra.mxu0 0.0
    %1682 = vmatprep.mubr.f32.mxu0 0.0
    %1683 = vmatmul.mubr.f32.gmra.mrb[0].mxu0 %v1616
    %v1684 = vpop.f32.mrb[0].mxu0
    %v1685 = vadd.f32 0.0, %v1684
    %v1686 = vpop.f32.mrb[0].mxu0
    %1687 = vdwg.mxu0
    %1688 = vrot.lane.b32.xlu0 %v252, 112
    %v1689 = vpop.permute.xlu0 %1688
    %1690 = vrot.lane.b32.xlu0 %v357, 112
    %v1691 = vpop.permute.xlu0 %1690
    %v1692 = vsel %vm375, %v1689, 0
    %v1694 = vsel %vm375, %v1691, 0
    %1696 = vmatprep.subr.mxu0 0.0
    %1697 = vmatpush1.xpose.msra.mxu0 %v1694
    %1698 = vmatprep.subr.mxu0 0.0
    %1699 = vmatpush1.xpose.msra.mxu0 0.0
    %1700 = vmatprep.subr.mxu0 0.0
    %1701 = vmatpush1.xpose.msra.mxu0 0.0
    %1702 = vmatprep.subr.mxu0 0.0
    %1703 = vmatpush1.xpose.msra.mxu0 0.0
    %1704 = vmatprep.subr.mxu0 0.0
    %1705 = vmatpush1.xpose.msra.mxu0 0.0
    %1706 = vmatprep.subr.mxu0 0.0
    %1707 = vmatpush1.xpose.msra.mxu0 0.0
    %1708 = vmatprep.subr.mxu0 0.0
    %1709 = vmatpush1.xpose.msra.mxu0 0.0
    %1710 = vmatprep.subr.mxu0 0.0
    %1711 = vmatpush1.xpose.msra.mxu0 0.0
    %1712 = vmatprep.subr.mxu0 0.0
    %1713 = vmatpush1.xpose.msra.mxu0 0.0
    %1714 = vmatprep.subr.mxu0 0.0
    %1715 = vmatpush1.xpose.msra.mxu0 0.0
    %1716 = vmatprep.subr.mxu0 0.0
    %1717 = vmatpush1.xpose.msra.mxu0 0.0
    %1718 = vmatprep.subr.mxu0 0.0
    %1719 = vmatpush1.xpose.msra.mxu0 0.0
    %1720 = vmatprep.subr.mxu0 0.0
    %1721 = vmatpush1.xpose.msra.mxu0 0.0
    %1722 = vmatprep.subr.mxu0 0.0
    %1723 = vmatpush1.xpose.msra.mxu0 0.0
    %1724 = vmatprep.subr.mxu0 0.0
    %1725 = vmatpush1.xpose.msra.mxu0 0.0
    %1726 = vmatprep.subr.mxu0 0.0
    %1727 = vmatpush1.xpose.msra.mxu0 0.0
    %1728 = vmatprep.subr.mxu0 0.0
    %1729 = vmatpush1.xpose.msra.mxu0 0.0
    %1730 = vmatprep.subr.mxu0 0.0
    %1731 = vmatpush1.xpose.msra.mxu0 0.0
    %1732 = vmatprep.subr.mxu0 0.0
    %1733 = vmatpush1.xpose.msra.mxu0 0.0
    %1734 = vmatprep.subr.mxu0 0.0
    %1735 = vmatpush1.xpose.msra.mxu0 0.0
    %1736 = vmatprep.subr.mxu0 0.0
    %1737 = vmatpush1.xpose.msra.mxu0 0.0
    %1738 = vmatprep.subr.mxu0 0.0
    %1739 = vmatpush1.xpose.msra.mxu0 0.0
    %1740 = vmatprep.subr.mxu0 0.0
    %1741 = vmatpush1.xpose.msra.mxu0 0.0
    %1742 = vmatprep.subr.mxu0 0.0
    %1743 = vmatpush1.xpose.msra.mxu0 0.0
    %1744 = vmatprep.subr.mxu0 0.0
    %1745 = vmatpush1.xpose.msra.mxu0 0.0
    %1746 = vmatprep.subr.mxu0 0.0
    %1747 = vmatpush1.xpose.msra.mxu0 0.0
    %1748 = vmatprep.subr.mxu0 0.0
    %1749 = vmatpush1.xpose.msra.mxu0 0.0
    %1750 = vmatprep.subr.mxu0 0.0
    %1751 = vmatpush1.xpose.msra.mxu0 0.0
    %1752 = vmatprep.subr.mxu0 0.0
    %1753 = vmatpush1.xpose.msra.mxu0 0.0
    %1754 = vmatprep.subr.mxu0 0.0
    %1755 = vmatpush1.xpose.msra.mxu0 0.0
    %1756 = vmatprep.subr.mxu0 0.0
    %1757 = vmatpush1.xpose.msra.mxu0 0.0
    %1758 = vmatprep.subr.mxu0 0.0
    %1759 = vmatpush1.xpose.msra.mxu0 0.0
    %1760 = vmatprep.mubr.f32.mxu0 0.0
    %1761 = vmatmul.mubr.f32.gmra.mrb[0].mxu0 %v1692
    %v1762 = vpop.f32.mrb[0].mxu0
    %v1763 = vadd.f32 %v32, %v1762
    %v1764 = vpop.f32.mrb[0].mxu0
    %1765 = vdwg.mxu0
    %1766 = vrot.lane.b32.xlu0 %v257, 112
    %v1767 = vpop.permute.xlu0 %1766
    %1768 = vrot.lane.b32.xlu0 %v362, 112
    %v1769 = vpop.permute.xlu0 %1768
    %v1770 = vsel %vm375, %v1767, 0
    %v1772 = vsel %vm375, %v1769, 0
    %1774 = vmatprep.subr.mxu0 0.0
    %1775 = vmatpush1.xpose.msra.mxu0 %v1772
    %1776 = vmatprep.subr.mxu0 0.0
    %1777 = vmatpush1.xpose.msra.mxu0 0.0
    %1778 = vmatprep.subr.mxu0 0.0
    %1779 = vmatpush1.xpose.msra.mxu0 0.0
    %1780 = vmatprep.subr.mxu0 0.0
    %1781 = vmatpush1.xpose.msra.mxu0 0.0
    %1782 = vmatprep.subr.mxu0 0.0
    %1783 = vmatpush1.xpose.msra.mxu0 0.0
    %1784 = vmatprep.subr.mxu0 0.0
    %1785 = vmatpush1.xpose.msra.mxu0 0.0
    %1786 = vmatprep.subr.mxu0 0.0
    %1787 = vmatpush1.xpose.msra.mxu0 0.0
    %1788 = vmatprep.subr.mxu0 0.0
    %1789 = vmatpush1.xpose.msra.mxu0 0.0
    %1790 = vmatprep.subr.mxu0 0.0
    %1791 = vmatpush1.xpose.msra.mxu0 0.0
    %1792 = vmatprep.subr.mxu0 0.0
    %1793 = vmatpush1.xpose.msra.mxu0 0.0
    %1794 = vmatprep.subr.mxu0 0.0
    %1795 = vmatpush1.xpose.msra.mxu0 0.0
    %1796 = vmatprep.subr.mxu0 0.0
    %1797 = vmatpush1.xpose.msra.mxu0 0.0
    %1798 = vmatprep.subr.mxu0 0.0
    %1799 = vmatpush1.xpose.msra.mxu0 0.0
    %1800 = vmatprep.subr.mxu0 0.0
    %1801 = vmatpush1.xpose.msra.mxu0 0.0
    %1802 = vmatprep.subr.mxu0 0.0
    %1803 = vmatpush1.xpose.msra.mxu0 0.0
    %1804 = vmatprep.subr.mxu0 0.0
    %1805 = vmatpush1.xpose.msra.mxu0 0.0
    %1806 = vmatprep.subr.mxu0 0.0
    %1807 = vmatpush1.xpose.msra.mxu0 0.0
    %1808 = vmatprep.subr.mxu0 0.0
    %1809 = vmatpush1.xpose.msra.mxu0 0.0
    %1810 = vmatprep.subr.mxu0 0.0
    %1811 = vmatpush1.xpose.msra.mxu0 0.0
    %1812 = vmatprep.subr.mxu0 0.0
    %1813 = vmatpush1.xpose.msra.mxu0 0.0
    %1814 = vmatprep.subr.mxu0 0.0
    %1815 = vmatpush1.xpose.msra.mxu0 0.0
    %1816 = vmatprep.subr.mxu0 0.0
    %1817 = vmatpush1.xpose.msra.mxu0 0.0
    %1818 = vmatprep.subr.mxu0 0.0
    %1819 = vmatpush1.xpose.msra.mxu0 0.0
    %1820 = vmatprep.subr.mxu0 0.0
    %1821 = vmatpush1.xpose.msra.mxu0 0.0
    %1822 = vmatprep.subr.mxu0 0.0
    %1823 = vmatpush1.xpose.msra.mxu0 0.0
    %1824 = vmatprep.subr.mxu0 0.0
    %1825 = vmatpush1.xpose.msra.mxu0 0.0
    %1826 = vmatprep.subr.mxu0 0.0
    %1827 = vmatpush1.xpose.msra.mxu0 0.0
    %1828 = vmatprep.subr.mxu0 0.0
    %1829 = vmatpush1.xpose.msra.mxu0 0.0
    %1830 = vmatprep.subr.mxu0 0.0
    %1831 = vmatpush1.xpose.msra.mxu0 0.0
    %1832 = vmatprep.subr.mxu0 0.0
    %1833 = vmatpush1.xpose.msra.mxu0 0.0
    %1834 = vmatprep.subr.mxu0 0.0
    %1835 = vmatpush1.xpose.msra.mxu0 0.0
    %1836 = vmatprep.subr.mxu0 0.0
    %1837 = vmatpush1.xpose.msra.mxu0 0.0
    %1838 = vmatprep.mubr.f32.mxu0 0.0
    %1839 = vmatmul.mubr.f32.gmra.mrb[0].mxu0 %v1770
    %v1840 = vpop.f32.mrb[0].mxu0
    %v1841 = vadd.f32 %v33, %v1840
    %v1842 = vpop.f32.mrb[0].mxu0
    %1843 = vdwg.mxu0
    %1844 = vrot.lane.b32.xlu0 %v262, 112
    %v1845 = vpop.permute.xlu0 %1844
    %1846 = vrot.lane.b32.xlu0 %v367, 112
    %v1847 = vpop.permute.xlu0 %1846
    %v1848 = vsel %vm375, %v1845, 0
    %v1850 = vsel %vm375, %v1847, 0
    %1852 = vmatprep.subr.mxu0 0.0
    %1853 = vmatpush1.xpose.msra.mxu0 %v1850
    %1854 = vmatprep.subr.mxu0 0.0
    %1855 = vmatpush1.xpose.msra.mxu0 0.0
    %1856 = vmatprep.subr.mxu0 0.0
    %1857 = vmatpush1.xpose.msra.mxu0 0.0
    %1858 = vmatprep.subr.mxu0 0.0
    %1859 = vmatpush1.xpose.msra.mxu0 0.0
    %1860 = vmatprep.subr.mxu0 0.0
    %1861 = vmatpush1.xpose.msra.mxu0 0.0
    %1862 = vmatprep.subr.mxu0 0.0
    %1863 = vmatpush1.xpose.msra.mxu0 0.0
    %1864 = vmatprep.subr.mxu0 0.0
    %1865 = vmatpush1.xpose.msra.mxu0 0.0
    %1866 = vmatprep.subr.mxu0 0.0
    %1867 = vmatpush1.xpose.msra.mxu0 0.0
    %1868 = vmatprep.subr.mxu0 0.0
    %1869 = vmatpush1.xpose.msra.mxu0 0.0
    %1870 = vmatprep.subr.mxu0 0.0
    %1871 = vmatpush1.xpose.msra.mxu0 0.0
    %1872 = vmatprep.subr.mxu0 0.0
    %1873 = vmatpush1.xpose.msra.mxu0 0.0
    %1874 = vmatprep.subr.mxu0 0.0
    %1875 = vmatpush1.xpose.msra.mxu0 0.0
    %1876 = vmatprep.subr.mxu0 0.0
    %1877 = vmatpush1.xpose.msra.mxu0 0.0
    %1878 = vmatprep.subr.mxu0 0.0
    %1879 = vmatpush1.xpose.msra.mxu0 0.0
    %1880 = vmatprep.subr.mxu0 0.0
    %1881 = vmatpush1.xpose.msra.mxu0 0.0
    %1882 = vmatprep.subr.mxu0 0.0
    %1883 = vmatpush1.xpose.msra.mxu0 0.0
    %1884 = vmatprep.subr.mxu0 0.0
    %1885 = vmatpush1.xpose.msra.mxu0 0.0
    %1886 = vmatprep.subr.mxu0 0.0
    %1887 = vmatpush1.xpose.msra.mxu0 0.0
    %1888 = vmatprep.subr.mxu0 0.0
    %1889 = vmatpush1.xpose.msra.mxu0 0.0
    %1890 = vmatprep.subr.mxu0 0.0
    %1891 = vmatpush1.xpose.msra.mxu0 0.0
    %1892 = vmatprep.subr.mxu0 0.0
    %1893 = vmatpush1.xpose.msra.mxu0 0.0
    %1894 = vmatprep.subr.mxu0 0.0
    %1895 = vmatpush1.xpose.msra.mxu0 0.0
    %1896 = vmatprep.subr.mxu0 0.0
    %1897 = vmatpush1.xpose.msra.mxu0 0.0
    %1898 = vmatprep.subr.mxu0 0.0
    %1899 = vmatpush1.xpose.msra.mxu0 0.0
    %1900 = vmatprep.subr.mxu0 0.0
    %1901 = vmatpush1.xpose.msra.mxu0 0.0
    %1902 = vmatprep.subr.mxu0 0.0
    %1903 = vmatpush1.xpose.msra.mxu0 0.0
    %1904 = vmatprep.subr.mxu0 0.0
    %1905 = vmatpush1.xpose.msra.mxu0 0.0
    %1906 = vmatprep.subr.mxu0 0.0
    %1907 = vmatpush1.xpose.msra.mxu0 0.0
    %1908 = vmatprep.subr.mxu0 0.0
    %1909 = vmatpush1.xpose.msra.mxu0 0.0
    %1910 = vmatprep.subr.mxu0 0.0
    %1911 = vmatpush1.xpose.msra.mxu0 0.0
    %1912 = vmatprep.subr.mxu0 0.0
    %1913 = vmatpush1.xpose.msra.mxu0 0.0
    %1914 = vmatprep.subr.mxu0 0.0
    %1915 = vmatpush1.xpose.msra.mxu0 0.0
    %1916 = vmatprep.mubr.f32.mxu0 0.0
    %1917 = vmatmul.mubr.f32.gmra.mrb[0].mxu0 %v1848
    %v1918 = vpop.f32.mrb[0].mxu0
    %v1919 = vadd.f32 %v34, %v1918
    %v1920 = vpop.f32.mrb[0].mxu0
    %1921 = vdwg.mxu0
    %1922 = vrot.lane.b32.xlu0 %v267, 112
    %v1923 = vpop.permute.xlu0 %1922
    %1924 = vrot.lane.b32.xlu0 %v372, 112
    %v1925 = vpop.permute.xlu0 %1924
    %v1926 = vsel %vm375, %v1923, 0
    %v1928 = vsel %vm375, %v1925, 0
    %1930 = vmatprep.subr.mxu0 0.0
    %1931 = vmatpush1.xpose.msra.mxu0 %v1928
    %1932 = vmatprep.subr.mxu0 0.0
    %1933 = vmatpush1.xpose.msra.mxu0 0.0
    %1934 = vmatprep.subr.mxu0 0.0
    %1935 = vmatpush1.xpose.msra.mxu0 0.0
    %1936 = vmatprep.subr.mxu0 0.0
    %1937 = vmatpush1.xpose.msra.mxu0 0.0
    %1938 = vmatprep.subr.mxu0 0.0
    %1939 = vmatpush1.xpose.msra.mxu0 0.0
    %1940 = vmatprep.subr.mxu0 0.0
    %1941 = vmatpush1.xpose.msra.mxu0 0.0
    %1942 = vmatprep.subr.mxu0 0.0
    %1943 = vmatpush1.xpose.msra.mxu0 0.0
    %1944 = vmatprep.subr.mxu0 0.0
    %1945 = vmatpush1.xpose.msra.mxu0 0.0
    %1946 = vmatprep.subr.mxu0 0.0
    %1947 = vmatpush1.xpose.msra.mxu0 0.0
    %1948 = vmatprep.subr.mxu0 0.0
    %1949 = vmatpush1.xpose.msra.mxu0 0.0
    %1950 = vmatprep.subr.mxu0 0.0
    %1951 = vmatpush1.xpose.msra.mxu0 0.0
    %1952 = vmatprep.subr.mxu0 0.0
    %1953 = vmatpush1.xpose.msra.mxu0 0.0
    %1954 = vmatprep.subr.mxu0 0.0
    %1955 = vmatpush1.xpose.msra.mxu0 0.0
    %1956 = vmatprep.subr.mxu0 0.0
    %1957 = vmatpush1.xpose.msra.mxu0 0.0
    %1958 = vmatprep.subr.mxu0 0.0
    %1959 = vmatpush1.xpose.msra.mxu0 0.0
    %1960 = vmatprep.subr.mxu0 0.0
    %1961 = vmatpush1.xpose.msra.mxu0 0.0
    %1962 = vmatprep.subr.mxu0 0.0
    %1963 = vmatpush1.xpose.msra.mxu0 0.0
    %1964 = vmatprep.subr.mxu0 0.0
    %1965 = vmatpush1.xpose.msra.mxu0 0.0
    %1966 = vmatprep.subr.mxu0 0.0
    %1967 = vmatpush1.xpose.msra.mxu0 0.0
    %1968 = vmatprep.subr.mxu0 0.0
    %1969 = vmatpush1.xpose.msra.mxu0 0.0
    %1970 = vmatprep.subr.mxu0 0.0
    %1971 = vmatpush1.xpose.msra.mxu0 0.0
    %1972 = vmatprep.subr.mxu0 0.0
    %1973 = vmatpush1.xpose.msra.mxu0 0.0
    %1974 = vmatprep.subr.mxu0 0.0
    %1975 = vmatpush1.xpose.msra.mxu0 0.0
    %1976 = vmatprep.subr.mxu0 0.0
    %1977 = vmatpush1.xpose.msra.mxu0 0.0
    %1978 = vmatprep.subr.mxu0 0.0
    %1979 = vmatpush1.xpose.msra.mxu0 0.0
    %1980 = vmatprep.subr.mxu0 0.0
    %1981 = vmatpush1.xpose.msra.mxu0 0.0
    %1982 = vmatprep.subr.mxu0 0.0
    %1983 = vmatpush1.xpose.msra.mxu0 0.0
    %1984 = vmatprep.subr.mxu0 0.0
    %1985 = vmatpush1.xpose.msra.mxu0 0.0
    %1986 = vmatprep.subr.mxu0 0.0
    %1987 = vmatpush1.xpose.msra.mxu0 0.0
    %1988 = vmatprep.subr.mxu0 0.0
    %1989 = vmatpush1.xpose.msra.mxu0 0.0
    %1990 = vmatprep.subr.mxu0 0.0
    %1991 = vmatpush1.xpose.msra.mxu0 0.0
    %1992 = vmatprep.subr.mxu0 0.0
    %1993 = vmatpush1.xpose.msra.mxu0 0.0
    %1994 = vmatprep.mubr.f32.mxu0 0.0
    %1995 = vmatmul.mubr.f32.gmra.mrb[0].mxu0 %v1926
    %v1996 = vpop.f32.mrb[0].mxu0
    %v1997 = vadd.f32 %v35, %v1996
    %v1998 = vpop.f32.mrb[0].mxu0
    %1999 = vdwg.mxu0
    %v2000 = vsel %vm375, %v1763, -inf
    %2001 = vmax.xlane.f32.xlu0 %v2000
    %v2002 = vpop.xlane.xlu0 %2001
    %v2003 = vsel %vm375, %v1841, -inf
    %2004 = vmax.xlane.f32.xlu0 %v2003
    %v2005 = vpop.xlane.xlu0 %2004
    %v2006 = vsel %vm375, %v1919, -inf
    %2007 = vmax.xlane.f32.xlu0 %v2006
    %v2008 = vpop.xlane.xlu0 %2007
    %v2009 = vsel %vm375, %v1997, -inf
    %2010 = vmax.xlane.f32.xlu0 %v2009
    %v2011 = vpop.xlane.xlu0 %2010
    %v2012 = vsub.f32 %v1763, %v2002
    %v2013 = vsub.f32 %v1841, %v2005
    %v2014 = vsub.f32 %v1919, %v2008
    %v2015 = vsub.f32 %v1997, %v2011
    %v2016 = vmul.f32 %v2012, 1.442695
    %v2017 = vpow.pop %v2016
    %v2018 = vmul.f32 %v2013, 1.442695
    %v2019 = vpow.pop %v2018
    %v2020 = vmul.f32 %v2014, 1.442695
    %v2021 = vpow.pop %v2020
    %v2022 = vmul.f32 %v2015, 1.442695
    %v2023 = vpow.pop %v2022
    %v2024 = vsel %vm375, %v2017, 0.0
    %2025 = vadd.xlane.f32.xlu0 %v2024
    %v2026 = vpop.xlane.xlu0 %2025
    %v2027 = vsel %vm375, %v2019, 0.0
    %2028 = vadd.xlane.f32.xlu0 %v2027
    %v2029 = vpop.xlane.xlu0 %2028
    %v2030 = vsel %vm375, %v2021, 0.0
    %2031 = vadd.xlane.f32.xlu0 %v2030
    %v2032 = vpop.xlane.xlu0 %2031
    %v2033 = vsel %vm375, %v2023, 0.0
    %2034 = vadd.xlane.f32.xlu0 %v2033
    %v2035 = vpop.xlane.xlu0 %2034
    %v2036 = vrcp.pop %v2026
    %v2037 = vrcp.pop %v2029
    %v2038 = vrcp.pop %v2032
    %v2039 = vrcp.pop %v2035
    %v2040 = vmul.f32 %v2017, %v2036
    %v2041 = vmul.f32 %v2019, %v2037
    %v2042 = vmul.f32 %v2021, %v2038
    %v2043 = vmul.f32 %v2023, %v2039
    %2044 = vrot.lane.b32.xlu0 %v357, 80
    %v2045 = vpop.permute.xlu0 %2044
    %v2048 = vsel %vm375, %v2040, 0
    %2050 = vmatprep.subr.mxu0 0.0
    %2051 = vmatpush1.msra.mxu0 %v2045
    %2052 = vmatprep.subr.mxu0 0.0
    %2053 = vmatpush1.msra.mxu0 0.0
    %2054 = vmatprep.subr.mxu0 0.0
    %2055 = vmatpush1.msra.mxu0 0.0
    %2056 = vmatprep.subr.mxu0 0.0
    %2057 = vmatpush1.msra.mxu0 0.0
    %2058 = vmatprep.subr.mxu0 0.0
    %2059 = vmatpush1.msra.mxu0 0.0
    %2060 = vmatprep.subr.mxu0 0.0
    %2061 = vmatpush1.msra.mxu0 0.0
    %2062 = vmatprep.subr.mxu0 0.0
    %2063 = vmatpush1.msra.mxu0 0.0
    %2064 = vmatprep.subr.mxu0 0.0
    %2065 = vmatpush1.msra.mxu0 0.0
    %2066 = vmatprep.subr.mxu0 0.0
    %2067 = vmatpush1.msra.mxu0 0.0
    %2068 = vmatprep.subr.mxu0 0.0
    %2069 = vmatpush1.msra.mxu0 0.0
    %2070 = vmatprep.subr.mxu0 0.0
    %2071 = vmatpush1.msra.mxu0 0.0
    %2072 = vmatprep.subr.mxu0 0.0
    %2073 = vmatpush1.msra.mxu0 0.0
    %2074 = vmatprep.subr.mxu0 0.0
    %2075 = vmatpush1.msra.mxu0 0.0
    %2076 = vmatprep.subr.mxu0 0.0
    %2077 = vmatpush1.msra.mxu0 0.0
    %2078 = vmatprep.subr.mxu0 0.0
    %2079 = vmatpush1.msra.mxu0 0.0
    %2080 = vmatprep.subr.mxu0 0.0
    %2081 = vmatpush1.msra.mxu0 0.0
    %2082 = vmatprep.subr.mxu0 0.0
    %2083 = vmatpush1.msra.mxu0 0.0
    %2084 = vmatprep.subr.mxu0 0.0
    %2085 = vmatpush1.msra.mxu0 0.0
    %2086 = vmatprep.subr.mxu0 0.0
    %2087 = vmatpush1.msra.mxu0 0.0
    %2088 = vmatprep.subr.mxu0 0.0
    %2089 = vmatpush1.msra.mxu0 0.0
    %2090 = vmatprep.subr.mxu0 0.0
    %2091 = vmatpush1.msra.mxu0 0.0
    %2092 = vmatprep.subr.mxu0 0.0
    %2093 = vmatpush1.msra.mxu0 0.0
    %2094 = vmatprep.subr.mxu0 0.0
    %2095 = vmatpush1.msra.mxu0 0.0
    %2096 = vmatprep.subr.mxu0 0.0
    %2097 = vmatpush1.msra.mxu0 0.0
    %2098 = vmatprep.subr.mxu0 0.0
    %2099 = vmatpush1.msra.mxu0 0.0
    %2100 = vmatprep.subr.mxu0 0.0
    %2101 = vmatpush1.msra.mxu0 0.0
    %2102 = vmatprep.subr.mxu0 0.0
    %2103 = vmatpush1.msra.mxu0 0.0
    %2104 = vmatprep.subr.mxu0 0.0
    %2105 = vmatpush1.msra.mxu0 0.0
    %2106 = vmatprep.subr.mxu0 0.0
    %2107 = vmatpush1.msra.mxu0 0.0
    %2108 = vmatprep.subr.mxu0 0.0
    %2109 = vmatpush1.msra.mxu0 0.0
    %2110 = vmatprep.subr.mxu0 0.0
    %2111 = vmatpush1.msra.mxu0 0.0
    %2112 = vmatprep.subr.mxu0 0.0
    %2113 = vmatpush1.msra.mxu0 0.0
    %2114 = vmatprep.mubr.f32.mxu0 0.0
    %2115 = vmatmul.mubr.f32.gmra.mrb[0].mxu0 %v2048
    %v2116 = vpop.f32.mrb[0].mxu0
    %v2117 = vadd.f32 0.0, %v2116
    %v2118 = vpop.f32.mrb[0].mxu0
    %2119 = vdwg.mxu0
    %2120 = vrot.lane.b32.xlu0 %v362, 80
    %v2121 = vpop.permute.xlu0 %2120
    %v2124 = vsel %vm375, %v2041, 0
    %2126 = vmatprep.subr.mxu0 0.0
    %2127 = vmatpush1.msra.mxu0 %v2121
    %2128 = vmatprep.subr.mxu0 0.0
    %2129 = vmatpush1.msra.mxu0 0.0
    %2130 = vmatprep.subr.mxu0 0.0
    %2131 = vmatpush1.msra.mxu0 0.0
    %2132 = vmatprep.subr.mxu0 0.0
    %2133 = vmatpush1.msra.mxu0 0.0
    %2134 = vmatprep.subr.mxu0 0.0
    %2135 = vmatpush1.msra.mxu0 0.0
    %2136 = vmatprep.subr.mxu0 0.0
    %2137 = vmatpush1.msra.mxu0 0.0
    %2138 = vmatprep.subr.mxu0 0.0
    %2139 = vmatpush1.msra.mxu0 0.0
    %2140 = vmatprep.subr.mxu0 0.0
    %2141 = vmatpush1.msra.mxu0 0.0
    %2142 = vmatprep.subr.mxu0 0.0
    %2143 = vmatpush1.msra.mxu0 0.0
    %2144 = vmatprep.subr.mxu0 0.0
    %2145 = vmatpush1.msra.mxu0 0.0
    %2146 = vmatprep.subr.mxu0 0.0
    %2147 = vmatpush1.msra.mxu0 0.0
    %2148 = vmatprep.subr.mxu0 0.0
    %2149 = vmatpush1.msra.mxu0 0.0
    %2150 = vmatprep.subr.mxu0 0.0
    %2151 = vmatpush1.msra.mxu0 0.0
    %2152 = vmatprep.subr.mxu0 0.0
    %2153 = vmatpush1.msra.mxu0 0.0
    %2154 = vmatprep.subr.mxu0 0.0
    %2155 = vmatpush1.msra.mxu0 0.0
    %2156 = vmatprep.subr.mxu0 0.0
    %2157 = vmatpush1.msra.mxu0 0.0
    %2158 = vmatprep.subr.mxu0 0.0
    %2159 = vmatpush1.msra.mxu0 0.0
    %2160 = vmatprep.subr.mxu0 0.0
    %2161 = vmatpush1.msra.mxu0 0.0
    %2162 = vmatprep.subr.mxu0 0.0
    %2163 = vmatpush1.msra.mxu0 0.0
    %2164 = vmatprep.subr.mxu0 0.0
    %2165 = vmatpush1.msra.mxu0 0.0
    %2166 = vmatprep.subr.mxu0 0.0
    %2167 = vmatpush1.msra.mxu0 0.0
    %2168 = vmatprep.subr.mxu0 0.0
    %2169 = vmatpush1.msra.mxu0 0.0
    %2170 = vmatprep.subr.mxu0 0.0
    %2171 = vmatpush1.msra.mxu0 0.0
    %2172 = vmatprep.subr.mxu0 0.0
    %2173 = vmatpush1.msra.mxu0 0.0
    %2174 = vmatprep.subr.mxu0 0.0
    %2175 = vmatpush1.msra.mxu0 0.0
    %2176 = vmatprep.subr.mxu0 0.0
    %2177 = vmatpush1.msra.mxu0 0.0
    %2178 = vmatprep.subr.mxu0 0.0
    %2179 = vmatpush1.msra.mxu0 0.0
    %2180 = vmatprep.subr.mxu0 0.0
    %2181 = vmatpush1.msra.mxu0 0.0
    %2182 = vmatprep.subr.mxu0 0.0
    %2183 = vmatpush1.msra.mxu0 0.0
    %2184 = vmatprep.subr.mxu0 0.0
    %2185 = vmatpush1.msra.mxu0 0.0
    %2186 = vmatprep.subr.mxu0 0.0
    %2187 = vmatpush1.msra.mxu0 0.0
    %2188 = vmatprep.subr.mxu0 0.0
    %2189 = vmatpush1.msra.mxu0 0.0
    %2190 = vmatprep.mubr.f32.mxu0 0.0
    %2191 = vmatmul.mubr.f32.gmra.mrb[0].mxu0 %v2124
    %v2192 = vpop.f32.mrb[0].mxu0
    %v2193 = vadd.f32 0.0, %v2192
    %v2194 = vpop.f32.mrb[0].mxu0
    %2195 = vdwg.mxu0
    %2196 = vrot.lane.b32.xlu0 %v367, 80
    %v2197 = vpop.permute.xlu0 %2196
    %v2200 = vsel %vm375, %v2042, 0
    %2202 = vmatprep.subr.mxu0 0.0
    %2203 = vmatpush1.msra.mxu0 %v2197
    %2204 = vmatprep.subr.mxu0 0.0
    %2205 = vmatpush1.msra.mxu0 0.0
    %2206 = vmatprep.subr.mxu0 0.0
    %2207 = vmatpush1.msra.mxu0 0.0
    %2208 = vmatprep.subr.mxu0 0.0
    %2209 = vmatpush1.msra.mxu0 0.0
    %2210 = vmatprep.subr.mxu0 0.0
    %2211 = vmatpush1.msra.mxu0 0.0
    %2212 = vmatprep.subr.mxu0 0.0
    %2213 = vmatpush1.msra.mxu0 0.0
    %2214 = vmatprep.subr.mxu0 0.0
    %2215 = vmatpush1.msra.mxu0 0.0
    %2216 = vmatprep.subr.mxu0 0.0
    %2217 = vmatpush1.msra.mxu0 0.0
    %2218 = vmatprep.subr.mxu0 0.0
    %2219 = vmatpush1.msra.mxu0 0.0
    %2220 = vmatprep.subr.mxu0 0.0
    %2221 = vmatpush1.msra.mxu0 0.0
    %2222 = vmatprep.subr.mxu0 0.0
    %2223 = vmatpush1.msra.mxu0 0.0
    %2224 = vmatprep.subr.mxu0 0.0
    %2225 = vmatpush1.msra.mxu0 0.0
    %2226 = vmatprep.subr.mxu0 0.0
    %2227 = vmatpush1.msra.mxu0 0.0
    %2228 = vmatprep.subr.mxu0 0.0
    %2229 = vmatpush1.msra.mxu0 0.0
    %2230 = vmatprep.subr.mxu0 0.0
    %2231 = vmatpush1.msra.mxu0 0.0
    %2232 = vmatprep.subr.mxu0 0.0
    %2233 = vmatpush1.msra.mxu0 0.0
    %2234 = vmatprep.subr.mxu0 0.0
    %2235 = vmatpush1.msra.mxu0 0.0
    %2236 = vmatprep.subr.mxu0 0.0
    %2237 = vmatpush1.msra.mxu0 0.0
    %2238 = vmatprep.subr.mxu0 0.0
    %2239 = vmatpush1.msra.mxu0 0.0
    %2240 = vmatprep.subr.mxu0 0.0
    %2241 = vmatpush1.msra.mxu0 0.0
    %2242 = vmatprep.subr.mxu0 0.0
    %2243 = vmatpush1.msra.mxu0 0.0
    %2244 = vmatprep.subr.mxu0 0.0
    %2245 = vmatpush1.msra.mxu0 0.0
    %2246 = vmatprep.subr.mxu0 0.0
    %2247 = vmatpush1.msra.mxu0 0.0
    %2248 = vmatprep.subr.mxu0 0.0
    %2249 = vmatpush1.msra.mxu0 0.0
    %2250 = vmatprep.subr.mxu0 0.0
    %2251 = vmatpush1.msra.mxu0 0.0
    %2252 = vmatprep.subr.mxu0 0.0
    %2253 = vmatpush1.msra.mxu0 0.0
    %2254 = vmatprep.subr.mxu0 0.0
    %2255 = vmatpush1.msra.mxu0 0.0
    %2256 = vmatprep.subr.mxu0 0.0
    %2257 = vmatpush1.msra.mxu0 0.0
    %2258 = vmatprep.subr.mxu0 0.0
    %2259 = vmatpush1.msra.mxu0 0.0
    %2260 = vmatprep.subr.mxu0 0.0
    %2261 = vmatpush1.msra.mxu0 0.0
    %2262 = vmatprep.subr.mxu0 0.0
    %2263 = vmatpush1.msra.mxu0 0.0
    %2264 = vmatprep.subr.mxu0 0.0
    %2265 = vmatpush1.msra.mxu0 0.0
    %2266 = vmatprep.mubr.f32.mxu0 0.0
    %2267 = vmatmul.mubr.f32.gmra.mrb[0].mxu0 %v2200
    %v2268 = vpop.f32.mrb[0].mxu0
    %v2269 = vadd.f32 0.0, %v2268
    %v2270 = vpop.f32.mrb[0].mxu0
    %2271 = vdwg.mxu0
    %2272 = vrot.lane.b32.xlu0 %v372, 80
    %v2273 = vpop.permute.xlu0 %2272
    %v2276 = vsel %vm375, %v2043, 0
    %2278 = vmatprep.subr.mxu0 0.0
    %2279 = vmatpush1.msra.mxu0 %v2273
    %2280 = vmatprep.subr.mxu0 0.0
    %2281 = vmatpush1.msra.mxu0 0.0
    %2282 = vmatprep.subr.mxu0 0.0
    %2283 = vmatpush1.msra.mxu0 0.0
    %2284 = vmatprep.subr.mxu0 0.0
    %2285 = vmatpush1.msra.mxu0 0.0
    %2286 = vmatprep.subr.mxu0 0.0
    %2287 = vmatpush1.msra.mxu0 0.0
    %2288 = vmatprep.subr.mxu0 0.0
    %2289 = vmatpush1.msra.mxu0 0.0
    %2290 = vmatprep.subr.mxu0 0.0
    %2291 = vmatpush1.msra.mxu0 0.0
    %2292 = vmatprep.subr.mxu0 0.0
    %2293 = vmatpush1.msra.mxu0 0.0
    %2294 = vmatprep.subr.mxu0 0.0
    %2295 = vmatpush1.msra.mxu0 0.0
    %2296 = vmatprep.subr.mxu0 0.0
    %2297 = vmatpush1.msra.mxu0 0.0
    %2298 = vmatprep.subr.mxu0 0.0
    %2299 = vmatpush1.msra.mxu0 0.0
    %2300 = vmatprep.subr.mxu0 0.0
    %2301 = vmatpush1.msra.mxu0 0.0
    %2302 = vmatprep.subr.mxu0 0.0
    %2303 = vmatpush1.msra.mxu0 0.0
    %2304 = vmatprep.subr.mxu0 0.0
    %2305 = vmatpush1.msra.mxu0 0.0
    %2306 = vmatprep.subr.mxu0 0.0
    %2307 = vmatpush1.msra.mxu0 0.0
    %2308 = vmatprep.subr.mxu0 0.0
    %2309 = vmatpush1.msra.mxu0 0.0
    %2310 = vmatprep.subr.mxu0 0.0
    %2311 = vmatpush1.msra.mxu0 0.0
    %2312 = vmatprep.subr.mxu0 0.0
    %2313 = vmatpush1.msra.mxu0 0.0
    %2314 = vmatprep.subr.mxu0 0.0
    %2315 = vmatpush1.msra.mxu0 0.0
    %2316 = vmatprep.subr.mxu0 0.0
    %2317 = vmatpush1.msra.mxu0 0.0
    %2318 = vmatprep.subr.mxu0 0.0
    %2319 = vmatpush1.msra.mxu0 0.0
    %2320 = vmatprep.subr.mxu0 0.0
    %2321 = vmatpush1.msra.mxu0 0.0
    %2322 = vmatprep.subr.mxu0 0.0
    %2323 = vmatpush1.msra.mxu0 0.0
    %2324 = vmatprep.subr.mxu0 0.0
    %2325 = vmatpush1.msra.mxu0 0.0
    %2326 = vmatprep.subr.mxu0 0.0
    %2327 = vmatpush1.msra.mxu0 0.0
    %2328 = vmatprep.subr.mxu0 0.0
    %2329 = vmatpush1.msra.mxu0 0.0
    %2330 = vmatprep.subr.mxu0 0.0
    %2331 = vmatpush1.msra.mxu0 0.0
    %2332 = vmatprep.subr.mxu0 0.0
    %2333 = vmatpush1.msra.mxu0 0.0
    %2334 = vmatprep.subr.mxu0 0.0
    %2335 = vmatpush1.msra.mxu0 0.0
    %2336 = vmatprep.subr.mxu0 0.0
    %2337 = vmatpush1.msra.mxu0 0.0
    %2338 = vmatprep.subr.mxu0 0.0
    %2339 = vmatpush1.msra.mxu0 0.0
    %2340 = vmatprep.subr.mxu0 0.0
    %2341 = vmatpush1.msra.mxu0 0.0
    %2342 = vmatprep.mubr.f32.mxu0 0.0
    %2343 = vmatmul.mubr.f32.gmra.mrb[0].mxu0 %v2276
    %v2344 = vpop.f32.mrb[0].mxu0
    %v2345 = vadd.f32 0.0, %v2344
    %v2346 = vpop.f32.mrb[0].mxu0
    %2347 = vdwg.mxu0
    %2348 = vrot.lane.b32.xlu0 %v252, 104
    %v2349 = vpop.permute.xlu0 %2348
    %2350 = vrot.lane.b32.xlu0 %v357, 104
    %v2351 = vpop.permute.xlu0 %2350
    %v2352 = vsel %vm375, %v2349, 0
    %v2354 = vsel %vm375, %v2351, 0
    %2356 = vmatprep.subr.mxu0 0.0
    %2357 = vmatpush1.xpose.msra.mxu0 %v2354
    %2358 = vmatprep.subr.mxu0 0.0
    %2359 = vmatpush1.xpose.msra.mxu0 0.0
    %2360 = vmatprep.subr.mxu0 0.0
    %2361 = vmatpush1.xpose.msra.mxu0 0.0
    %2362 = vmatprep.subr.mxu0 0.0
    %2363 = vmatpush1.xpose.msra.mxu0 0.0
    %2364 = vmatprep.subr.mxu0 0.0
    %2365 = vmatpush1.xpose.msra.mxu0 0.0
    %2366 = vmatprep.subr.mxu0 0.0
    %2367 = vmatpush1.xpose.msra.mxu0 0.0
    %2368 = vmatprep.subr.mxu0 0.0
    %2369 = vmatpush1.xpose.msra.mxu0 0.0
    %2370 = vmatprep.subr.mxu0 0.0
    %2371 = vmatpush1.xpose.msra.mxu0 0.0
    %2372 = vmatprep.subr.mxu0 0.0
    %2373 = vmatpush1.xpose.msra.mxu0 0.0
    %2374 = vmatprep.subr.mxu0 0.0
    %2375 = vmatpush1.xpose.msra.mxu0 0.0
    %2376 = vmatprep.subr.mxu0 0.0
    %2377 = vmatpush1.xpose.msra.mxu0 0.0
    %2378 = vmatprep.subr.mxu0 0.0
    %2379 = vmatpush1.xpose.msra.mxu0 0.0
    %2380 = vmatprep.subr.mxu0 0.0
    %2381 = vmatpush1.xpose.msra.mxu0 0.0
    %2382 = vmatprep.subr.mxu0 0.0
    %2383 = vmatpush1.xpose.msra.mxu0 0.0
    %2384 = vmatprep.subr.mxu0 0.0
    %2385 = vmatpush1.xpose.msra.mxu0 0.0
    %2386 = vmatprep.subr.mxu0 0.0
    %2387 = vmatpush1.xpose.msra.mxu0 0.0
    %2388 = vmatprep.subr.mxu0 0.0
    %2389 = vmatpush1.xpose.msra.mxu0 0.0
    %2390 = vmatprep.subr.mxu0 0.0
    %2391 = vmatpush1.xpose.msra.mxu0 0.0
    %2392 = vmatprep.subr.mxu0 0.0
    %2393 = vmatpush1.xpose.msra.mxu0 0.0
    %2394 = vmatprep.subr.mxu0 0.0
    %2395 = vmatpush1.xpose.msra.mxu0 0.0
    %2396 = vmatprep.subr.mxu0 0.0
    %2397 = vmatpush1.xpose.msra.mxu0 0.0
    %2398 = vmatprep.subr.mxu0 0.0
    %2399 = vmatpush1.xpose.msra.mxu0 0.0
    %2400 = vmatprep.subr.mxu0 0.0
    %2401 = vmatpush1.xpose.msra.mxu0 0.0
    %2402 = vmatprep.subr.mxu0 0.0
    %2403 = vmatpush1.xpose.msra.mxu0 0.0
    %2404 = vmatprep.subr.mxu0 0.0
    %2405 = vmatpush1.xpose.msra.mxu0 0.0
    %2406 = vmatprep.subr.mxu0 0.0
    %2407 = vmatpush1.xpose.msra.mxu0 0.0
    %2408 = vmatprep.subr.mxu0 0.0
    %2409 = vmatpush1.xpose.msra.mxu0 0.0
    %2410 = vmatprep.subr.mxu0 0.0
    %2411 = vmatpush1.xpose.msra.mxu0 0.0
    %2412 = vmatprep.subr.mxu0 0.0
    %2413 = vmatpush1.xpose.msra.mxu0 0.0
    %2414 = vmatprep.subr.mxu0 0.0
    %2415 = vmatpush1.xpose.msra.mxu0 0.0
    %2416 = vmatprep.subr.mxu0 0.0
    %2417 = vmatpush1.xpose.msra.mxu0 0.0
    %2418 = vmatprep.subr.mxu0 0.0
    %2419 = vmatpush1.xpose.msra.mxu0 0.0
    %2420 = vmatprep.mubr.f32.mxu0 0.0
    %2421 = vmatmul.mubr.f32.gmra.mrb[0].mxu0 %v2352
    %v2422 = vpop.f32.mrb[0].mxu0
    %v2423 = vadd.f32 %v32, %v2422
    %v2424 = vpop.f32.mrb[0].mxu0
    %2425 = vdwg.mxu0
    %2426 = vrot.lane.b32.xlu0 %v257, 104
    %v2427 = vpop.permute.xlu0 %2426
    %2428 = vrot.lane.b32.xlu0 %v362, 104
    %v2429 = vpop.permute.xlu0 %2428
    %v2430 = vsel %vm375, %v2427, 0
    %v2432 = vsel %vm375, %v2429, 0
    %2434 = vmatprep.subr.mxu0 0.0
    %2435 = vmatpush1.xpose.msra.mxu0 %v2432
    %2436 = vmatprep.subr.mxu0 0.0
    %2437 = vmatpush1.xpose.msra.mxu0 0.0
    %2438 = vmatprep.subr.mxu0 0.0
    %2439 = vmatpush1.xpose.msra.mxu0 0.0
    %2440 = vmatprep.subr.mxu0 0.0
    %2441 = vmatpush1.xpose.msra.mxu0 0.0
    %2442 = vmatprep.subr.mxu0 0.0
    %2443 = vmatpush1.xpose.msra.mxu0 0.0
    %2444 = vmatprep.subr.mxu0 0.0
    %2445 = vmatpush1.xpose.msra.mxu0 0.0
    %2446 = vmatprep.subr.mxu0 0.0
    %2447 = vmatpush1.xpose.msra.mxu0 0.0
    %2448 = vmatprep.subr.mxu0 0.0
    %2449 = vmatpush1.xpose.msra.mxu0 0.0
    %2450 = vmatprep.subr.mxu0 0.0
    %2451 = vmatpush1.xpose.msra.mxu0 0.0
    %2452 = vmatprep.subr.mxu0 0.0
    %2453 = vmatpush1.xpose.msra.mxu0 0.0
    %2454 = vmatprep.subr.mxu0 0.0
    %2455 = vmatpush1.xpose.msra.mxu0 0.0
    %2456 = vmatprep.subr.mxu0 0.0
    %2457 = vmatpush1.xpose.msra.mxu0 0.0
    %2458 = vmatprep.subr.mxu0 0.0
    %2459 = vmatpush1.xpose.msra.mxu0 0.0
    %2460 = vmatprep.subr.mxu0 0.0
    %2461 = vmatpush1.xpose.msra.mxu0 0.0
    %2462 = vmatprep.subr.mxu0 0.0
    %2463 = vmatpush1.xpose.msra.mxu0 0.0
    %2464 = vmatprep.subr.mxu0 0.0
    %2465 = vmatpush1.xpose.msra.mxu0 0.0
    %2466 = vmatprep.subr.mxu0 0.0
    %2467 = vmatpush1.xpose.msra.mxu0 0.0
    %2468 = vmatprep.subr.mxu0 0.0
    %2469 = vmatpush1.xpose.msra.mxu0 0.0
    %2470 = vmatprep.subr.mxu0 0.0
    %2471 = vmatpush1.xpose.msra.mxu0 0.0
    %2472 = vmatprep.subr.mxu0 0.0
    %2473 = vmatpush1.xpose.msra.mxu0 0.0
    %2474 = vmatprep.subr.mxu0 0.0
    %2475 = vmatpush1.xpose.msra.mxu0 0.0
    %2476 = vmatprep.subr.mxu0 0.0
    %2477 = vmatpush1.xpose.msra.mxu0 0.0
    %2478 = vmatprep.subr.mxu0 0.0
    %2479 = vmatpush1.xpose.msra.mxu0 0.0
    %2480 = vmatprep.subr.mxu0 0.0
    %2481 = vmatpush1.xpose.msra.mxu0 0.0
    %2482 = vmatprep.subr.mxu0 0.0
    %2483 = vmatpush1.xpose.msra.mxu0 0.0
    %2484 = vmatprep.subr.mxu0 0.0
    %2485 = vmatpush1.xpose.msra.mxu0 0.0
    %2486 = vmatprep.subr.mxu0 0.0
    %2487 = vmatpush1.xpose.msra.mxu0 0.0
    %2488 = vmatprep.subr.mxu0 0.0
    %2489 = vmatpush1.xpose.msra.mxu0 0.0
    %2490 = vmatprep.subr.mxu0 0.0
    %2491 = vmatpush1.xpose.msra.mxu0 0.0
    %2492 = vmatprep.subr.mxu0 0.0
    %2493 = vmatpush1.xpose.msra.mxu0 0.0
    %2494 = vmatprep.subr.mxu0 0.0
    %2495 = vmatpush1.xpose.msra.mxu0 0.0
    %2496 = vmatprep.subr.mxu0 0.0
    %2497 = vmatpush1.xpose.msra.mxu0 0.0
    %2498 = vmatprep.mubr.f32.mxu0 0.0
    %2499 = vmatmul.mubr.f32.gmra.mrb[0].mxu0 %v2430
    %v2500 = vpop.f32.mrb[0].mxu0
    %v2501 = vadd.f32 %v33, %v2500
    %v2502 = vpop.f32.mrb[0].mxu0
    %2503 = vdwg.mxu0
    %2504 = vrot.lane.b32.xlu0 %v262, 104
    %v2505 = vpop.permute.xlu0 %2504
    %2506 = vrot.lane.b32.xlu0 %v367, 104
    %v2507 = vpop.permute.xlu0 %2506
    %v2508 = vsel %vm375, %v2505, 0
    %v2510 = vsel %vm375, %v2507, 0
    %2512 = vmatprep.subr.mxu0 0.0
    %2513 = vmatpush1.xpose.msra.mxu0 %v2510
    %2514 = vmatprep.subr.mxu0 0.0
    %2515 = vmatpush1.xpose.msra.mxu0 0.0
    %2516 = vmatprep.subr.mxu0 0.0
    %2517 = vmatpush1.xpose.msra.mxu0 0.0
    %2518 = vmatprep.subr.mxu0 0.0
    %2519 = vmatpush1.xpose.msra.mxu0 0.0
    %2520 = vmatprep.subr.mxu0 0.0
    %2521 = vmatpush1.xpose.msra.mxu0 0.0
    %2522 = vmatprep.subr.mxu0 0.0
    %2523 = vmatpush1.xpose.msra.mxu0 0.0
    %2524 = vmatprep.subr.mxu0 0.0
    %2525 = vmatpush1.xpose.msra.mxu0 0.0
    %2526 = vmatprep.subr.mxu0 0.0
    %2527 = vmatpush1.xpose.msra.mxu0 0.0
    %2528 = vmatprep.subr.mxu0 0.0
    %2529 = vmatpush1.xpose.msra.mxu0 0.0
    %2530 = vmatprep.subr.mxu0 0.0
    %2531 = vmatpush1.xpose.msra.mxu0 0.0
    %2532 = vmatprep.subr.mxu0 0.0
    %2533 = vmatpush1.xpose.msra.mxu0 0.0
    %2534 = vmatprep.subr.mxu0 0.0
    %2535 = vmatpush1.xpose.msra.mxu0 0.0
    %2536 = vmatprep.subr.mxu0 0.0
    %2537 = vmatpush1.xpose.msra.mxu0 0.0
    %2538 = vmatprep.subr.mxu0 0.0
    %2539 = vmatpush1.xpose.msra.mxu0 0.0
    %2540 = vmatprep.subr.mxu0 0.0
    %2541 = vmatpush1.xpose.msra.mxu0 0.0
    %2542 = vmatprep.subr.mxu0 0.0
    %2543 = vmatpush1.xpose.msra.mxu0 0.0
    %2544 = vmatprep.subr.mxu0 0.0
    %2545 = vmatpush1.xpose.msra.mxu0 0.0
    %2546 = vmatprep.subr.mxu0 0.0
    %2547 = vmatpush1.xpose.msra.mxu0 0.0
    %2548 = vmatprep.subr.mxu0 0.0
    %2549 = vmatpush1.xpose.msra.mxu0 0.0
    %2550 = vmatprep.subr.mxu0 0.0
    %2551 = vmatpush1.xpose.msra.mxu0 0.0
    %2552 = vmatprep.subr.mxu0 0.0
    %2553 = vmatpush1.xpose.msra.mxu0 0.0
    %2554 = vmatprep.subr.mxu0 0.0
    %2555 = vmatpush1.xpose.msra.mxu0 0.0
    %2556 = vmatprep.subr.mxu0 0.0
    %2557 = vmatpush1.xpose.msra.mxu0 0.0
    %2558 = vmatprep.subr.mxu0 0.0
    %2559 = vmatpush1.xpose.msra.mxu0 0.0
    %2560 = vmatprep.subr.mxu0 0.0
    %2561 = vmatpush1.xpose.msra.mxu0 0.0
    %2562 = vmatprep.subr.mxu0 0.0
    %2563 = vmatpush1.xpose.msra.mxu0 0.0
    %2564 = vmatprep.subr.mxu0 0.0
    %2565 = vmatpush1.xpose.msra.mxu0 0.0
    %2566 = vmatprep.subr.mxu0 0.0
    %2567 = vmatpush1.xpose.msra.mxu0 0.0
    %2568 = vmatprep.subr.mxu0 0.0
    %2569 = vmatpush1.xpose.msra.mxu0 0.0
    %2570 = vmatprep.subr.mxu0 0.0
    %2571 = vmatpush1.xpose.msra.mxu0 0.0
    %2572 = vmatprep.subr.mxu0 0.0
    %2573 = vmatpush1.xpose.msra.mxu0 0.0
    %2574 = vmatprep.subr.mxu0 0.0
    %2575 = vmatpush1.xpose.msra.mxu0 0.0
    %2576 = vmatprep.mubr.f32.mxu0 0.0
    %2577 = vmatmul.mubr.f32.gmra.mrb[0].mxu0 %v2508
    %v2578 = vpop.f32.mrb[0].mxu0
    %v2579 = vadd.f32 %v34, %v2578
    %v2580 = vpop.f32.mrb[0].mxu0
    %2581 = vdwg.mxu0
    %2582 = vrot.lane.b32.xlu0 %v267, 104
    %v2583 = vpop.permute.xlu0 %2582
    %2584 = vrot.lane.b32.xlu0 %v372, 104
    %v2585 = vpop.permute.xlu0 %2584
    %v2586 = vsel %vm375, %v2583, 0
    %v2588 = vsel %vm375, %v2585, 0
    %2590 = vmatprep.subr.mxu0 0.0
    %2591 = vmatpush1.xpose.msra.mxu0 %v2588
    %2592 = vmatprep.subr.mxu0 0.0
    %2593 = vmatpush1.xpose.msra.mxu0 0.0
    %2594 = vmatprep.subr.mxu0 0.0
    %2595 = vmatpush1.xpose.msra.mxu0 0.0
    %2596 = vmatprep.subr.mxu0 0.0
    %2597 = vmatpush1.xpose.msra.mxu0 0.0
    %2598 = vmatprep.subr.mxu0 0.0
    %2599 = vmatpush1.xpose.msra.mxu0 0.0
    %2600 = vmatprep.subr.mxu0 0.0
    %2601 = vmatpush1.xpose.msra.mxu0 0.0
    %2602 = vmatprep.subr.mxu0 0.0
    %2603 = vmatpush1.xpose.msra.mxu0 0.0
    %2604 = vmatprep.subr.mxu0 0.0
    %2605 = vmatpush1.xpose.msra.mxu0 0.0
    %2606 = vmatprep.subr.mxu0 0.0
    %2607 = vmatpush1.xpose.msra.mxu0 0.0
    %2608 = vmatprep.subr.mxu0 0.0
    %2609 = vmatpush1.xpose.msra.mxu0 0.0
    %2610 = vmatprep.subr.mxu0 0.0
    %2611 = vmatpush1.xpose.msra.mxu0 0.0
    %2612 = vmatprep.subr.mxu0 0.0
    %2613 = vmatpush1.xpose.msra.mxu0 0.0
    %2614 = vmatprep.subr.mxu0 0.0
    %2615 = vmatpush1.xpose.msra.mxu0 0.0
    %2616 = vmatprep.subr.mxu0 0.0
    %2617 = vmatpush1.xpose.msra.mxu0 0.0
    %2618 = vmatprep.subr.mxu0 0.0
    %2619 = vmatpush1.xpose.msra.mxu0 0.0
    %2620 = vmatprep.subr.mxu0 0.0
    %2621 = vmatpush1.xpose.msra.mxu0 0.0
    %2622 = vmatprep.subr.mxu0 0.0
    %2623 = vmatpush1.xpose.msra.mxu0 0.0
    %2624 = vmatprep.subr.mxu0 0.0
    %2625 = vmatpush1.xpose.msra.mxu0 0.0
    %2626 = vmatprep.subr.mxu0 0.0
    %2627 = vmatpush1.xpose.msra.mxu0 0.0
    %2628 = vmatprep.subr.mxu0 0.0
    %2629 = vmatpush1.xpose.msra.mxu0 0.0
    %2630 = vmatprep.subr.mxu0 0.0
    %2631 = vmatpush1.xpose.msra.mxu0 0.0
    %2632 = vmatprep.subr.mxu0 0.0
    %2633 = vmatpush1.xpose.msra.mxu0 0.0
    %2634 = vmatprep.subr.mxu0 0.0
    %2635 = vmatpush1.xpose.msra.mxu0 0.0
    %2636 = vmatprep.subr.mxu0 0.0
    %2637 = vmatpush1.xpose.msra.mxu0 0.0
    %2638 = vmatprep.subr.mxu0 0.0
    %2639 = vmatpush1.xpose.msra.mxu0 0.0
    %2640 = vmatprep.subr.mxu0 0.0
    %2641 = vmatpush1.xpose.msra.mxu0 0.0
    %2642 = vmatprep.subr.mxu0 0.0
    %2643 = vmatpush1.xpose.msra.mxu0 0.0
    %2644 = vmatprep.subr.mxu0 0.0
    %2645 = vmatpush1.xpose.msra.mxu0 0.0
    %2646 = vmatprep.subr.mxu0 0.0
    %2647 = vmatpush1.xpose.msra.mxu0 0.0
    %2648 = vmatprep.subr.mxu0 0.0
    %2649 = vmatpush1.xpose.msra.mxu0 0.0
    %2650 = vmatprep.subr.mxu0 0.0
    %2651 = vmatpush1.xpose.msra.mxu0 0.0
    %2652 = vmatprep.subr.mxu0 0.0
    %2653 = vmatpush1.xpose.msra.mxu0 0.0
    %2654 = vmatprep.mubr.f32.mxu0 0.0
    %2655 = vmatmul.mubr.f32.gmra.mrb[0].mxu0 %v2586
    %v2656 = vpop.f32.mrb[0].mxu0
    %v2657 = vadd.f32 %v35, %v2656
    %v2658 = vpop.f32.mrb[0].mxu0
    %2659 = vdwg.mxu0
    %v2660 = vsel %vm375, %v2423, -inf
    %2661 = vmax.xlane.f32.xlu0 %v2660
    %v2662 = vpop.xlane.xlu0 %2661
    %v2663 = vsel %vm375, %v2501, -inf
    %2664 = vmax.xlane.f32.xlu0 %v2663
    %v2665 = vpop.xlane.xlu0 %2664
    %v2666 = vsel %vm375, %v2579, -inf
    %2667 = vmax.xlane.f32.xlu0 %v2666
    %v2668 = vpop.xlane.xlu0 %2667
    %v2669 = vsel %vm375, %v2657, -inf
    %2670 = vmax.xlane.f32.xlu0 %v2669
    %v2671 = vpop.xlane.xlu0 %2670
    %v2672 = vsub.f32 %v2423, %v2662
    %v2673 = vsub.f32 %v2501, %v2665
    %v2674 = vsub.f32 %v2579, %v2668
    %v2675 = vsub.f32 %v2657, %v2671
    %v2676 = vmul.f32 %v2672, 1.442695
    %v2677 = vpow.pop %v2676
    %v2678 = vmul.f32 %v2673, 1.442695
    %v2679 = vpow.pop %v2678
    %v2680 = vmul.f32 %v2674, 1.442695
    %v2681 = vpow.pop %v2680
    %v2682 = vmul.f32 %v2675, 1.442695
    %v2683 = vpow.pop %v2682
    %v2684 = vsel %vm375, %v2677, 0.0
    %2685 = vadd.xlane.f32.xlu0 %v2684
    %v2686 = vpop.xlane.xlu0 %2685
    %v2687 = vsel %vm375, %v2679, 0.0
    %2688 = vadd.xlane.f32.xlu0 %v2687
    %v2689 = vpop.xlane.xlu0 %2688
    %v2690 = vsel %vm375, %v2681, 0.0
    %2691 = vadd.xlane.f32.xlu0 %v2690
    %v2692 = vpop.xlane.xlu0 %2691
    %v2693 = vsel %vm375, %v2683, 0.0
    %2694 = vadd.xlane.f32.xlu0 %v2693
    %v2695 = vpop.xlane.xlu0 %2694
    %v2696 = vrcp.pop %v2686
    %v2697 = vrcp.pop %v2689
    %v2698 = vrcp.pop %v2692
    %v2699 = vrcp.pop %v2695
    %v2700 = vmul.f32 %v2677, %v2696
    %v2701 = vmul.f32 %v2679, %v2697
    %v2702 = vmul.f32 %v2681, %v2698
    %v2703 = vmul.f32 %v2683, %v2699
    %2704 = vrot.lane.b32.xlu0 %v357, 72
    %v2705 = vpop.permute.xlu0 %2704
    %v2708 = vsel %vm375, %v2700, 0
    %2710 = vmatprep.subr.mxu0 0.0
    %2711 = vmatpush1.msra.mxu0 %v2705
    %2712 = vmatprep.subr.mxu0 0.0
    %2713 = vmatpush1.msra.mxu0 0.0
    %2714 = vmatprep.subr.mxu0 0.0
    %2715 = vmatpush1.msra.mxu0 0.0
    %2716 = vmatprep.subr.mxu0 0.0
    %2717 = vmatpush1.msra.mxu0 0.0
    %2718 = vmatprep.subr.mxu0 0.0
    %2719 = vmatpush1.msra.mxu0 0.0
    %2720 = vmatprep.subr.mxu0 0.0
    %2721 = vmatpush1.msra.mxu0 0.0
    %2722 = vmatprep.subr.mxu0 0.0
    %2723 = vmatpush1.msra.mxu0 0.0
    %2724 = vmatprep.subr.mxu0 0.0
    %2725 = vmatpush1.msra.mxu0 0.0
    %2726 = vmatprep.subr.mxu0 0.0
    %2727 = vmatpush1.msra.mxu0 0.0
    %2728 = vmatprep.subr.mxu0 0.0
    %2729 = vmatpush1.msra.mxu0 0.0
    %2730 = vmatprep.subr.mxu0 0.0
    %2731 = vmatpush1.msra.mxu0 0.0
    %2732 = vmatprep.subr.mxu0 0.0
    %2733 = vmatpush1.msra.mxu0 0.0
    %2734 = vmatprep.subr.mxu0 0.0
    %2735 = vmatpush1.msra.mxu0 0.0
    %2736 = vmatprep.subr.mxu0 0.0
    %2737 = vmatpush1.msra.mxu0 0.0
    %2738 = vmatprep.subr.mxu0 0.0
    %2739 = vmatpush1.msra.mxu0 0.0
    %2740 = vmatprep.subr.mxu0 0.0
    %2741 = vmatpush1.msra.mxu0 0.0
    %2742 = vmatprep.subr.mxu0 0.0
    %2743 = vmatpush1.msra.mxu0 0.0
    %2744 = vmatprep.subr.mxu0 0.0
    %2745 = vmatpush1.msra.mxu0 0.0
    %2746 = vmatprep.subr.mxu0 0.0
    %2747 = vmatpush1.msra.mxu0 0.0
    %2748 = vmatprep.subr.mxu0 0.0
    %2749 = vmatpush1.msra.mxu0 0.0
    %2750 = vmatprep.subr.mxu0 0.0
    %2751 = vmatpush1.msra.mxu0 0.0
    %2752 = vmatprep.subr.mxu0 0.0
    %2753 = vmatpush1.msra.mxu0 0.0
    %2754 = vmatprep.subr.mxu0 0.0
    %2755 = vmatpush1.msra.mxu0 0.0
    %2756 = vmatprep.subr.mxu0 0.0
    %2757 = vmatpush1.msra.mxu0 0.0
    %2758 = vmatprep.subr.mxu0 0.0
    %2759 = vmatpush1.msra.mxu0 0.0
    %2760 = vmatprep.subr.mxu0 0.0
    %2761 = vmatpush1.msra.mxu0 0.0
    %2762 = vmatprep.subr.mxu0 0.0
    %2763 = vmatpush1.msra.mxu0 0.0
    %2764 = vmatprep.subr.mxu0 0.0
    %2765 = vmatpush1.msra.mxu0 0.0
    %2766 = vmatprep.subr.mxu0 0.0
    %2767 = vmatpush1.msra.mxu0 0.0
    %2768 = vmatprep.subr.mxu0 0.0
    %2769 = vmatpush1.msra.mxu0 0.0
    %2770 = vmatprep.subr.mxu0 0.0
    %2771 = vmatpush1.msra.mxu0 0.0
    %2772 = vmatprep.subr.mxu0 0.0
    %2773 = vmatpush1.msra.mxu0 0.0
    %2774 = vmatprep.mubr.f32.mxu0 0.0
    %2775 = vmatmul.mubr.f32.gmra.mrb[0].mxu0 %v2708
    %v2776 = vpop.f32.mrb[0].mxu0
    %v2777 = vadd.f32 0.0, %v2776
    %v2778 = vpop.f32.mrb[0].mxu0
    %2779 = vdwg.mxu0
    %2780 = vrot.lane.b32.xlu0 %v362, 72
    %v2781 = vpop.permute.xlu0 %2780
    %v2784 = vsel %vm375, %v2701, 0
    %2786 = vmatprep.subr.mxu0 0.0
    %2787 = vmatpush1.msra.mxu0 %v2781
    %2788 = vmatprep.subr.mxu0 0.0
    %2789 = vmatpush1.msra.mxu0 0.0
    %2790 = vmatprep.subr.mxu0 0.0
    %2791 = vmatpush1.msra.mxu0 0.0
    %2792 = vmatprep.subr.mxu0 0.0
    %2793 = vmatpush1.msra.mxu0 0.0
    %2794 = vmatprep.subr.mxu0 0.0
    %2795 = vmatpush1.msra.mxu0 0.0
    %2796 = vmatprep.subr.mxu0 0.0
    %2797 = vmatpush1.msra.mxu0 0.0
    %2798 = vmatprep.subr.mxu0 0.0
    %2799 = vmatpush1.msra.mxu0 0.0
    %2800 = vmatprep.subr.mxu0 0.0
    %2801 = vmatpush1.msra.mxu0 0.0
    %2802 = vmatprep.subr.mxu0 0.0
    %2803 = vmatpush1.msra.mxu0 0.0
    %2804 = vmatprep.subr.mxu0 0.0
    %2805 = vmatpush1.msra.mxu0 0.0
    %2806 = vmatprep.subr.mxu0 0.0
    %2807 = vmatpush1.msra.mxu0 0.0
    %2808 = vmatprep.subr.mxu0 0.0
    %2809 = vmatpush1.msra.mxu0 0.0
    %2810 = vmatprep.subr.mxu0 0.0
    %2811 = vmatpush1.msra.mxu0 0.0
    %2812 = vmatprep.subr.mxu0 0.0
    %2813 = vmatpush1.msra.mxu0 0.0
    %2814 = vmatprep.subr.mxu0 0.0
    %2815 = vmatpush1.msra.mxu0 0.0
    %2816 = vmatprep.subr.mxu0 0.0
    %2817 = vmatpush1.msra.mxu0 0.0
    %2818 = vmatprep.subr.mxu0 0.0
    %2819 = vmatpush1.msra.mxu0 0.0
    %2820 = vmatprep.subr.mxu0 0.0
    %2821 = vmatpush1.msra.mxu0 0.0
    %2822 = vmatprep.subr.mxu0 0.0
    %2823 = vmatpush1.msra.mxu0 0.0
    %2824 = vmatprep.subr.mxu0 0.0
    %2825 = vmatpush1.msra.mxu0 0.0
    %2826 = vmatprep.subr.mxu0 0.0
    %2827 = vmatpush1.msra.mxu0 0.0
    %2828 = vmatprep.subr.mxu0 0.0
    %2829 = vmatpush1.msra.mxu0 0.0
    %2830 = vmatprep.subr.mxu0 0.0
    %2831 = vmatpush1.msra.mxu0 0.0
    %2832 = vmatprep.subr.mxu0 0.0
    %2833 = vmatpush1.msra.mxu0 0.0
    %2834 = vmatprep.subr.mxu0 0.0
    %2835 = vmatpush1.msra.mxu0 0.0
    %2836 = vmatprep.subr.mxu0 0.0
    %2837 = vmatpush1.msra.mxu0 0.0
    %2838 = vmatprep.subr.mxu0 0.0
    %2839 = vmatpush1.msra.mxu0 0.0
    %2840 = vmatprep.subr.mxu0 0.0
    %2841 = vmatpush1.msra.mxu0 0.0
    %2842 = vmatprep.subr.mxu0 0.0
    %2843 = vmatpush1.msra.mxu0 0.0
    %2844 = vmatprep.subr.mxu0 0.0
    %2845 = vmatpush1.msra.mxu0 0.0
    %2846 = vmatprep.subr.mxu0 0.0
    %2847 = vmatpush1.msra.mxu0 0.0
    %2848 = vmatprep.subr.mxu0 0.0
    %2849 = vmatpush1.msra.mxu0 0.0
    %2850 = vmatprep.mubr.f32.mxu0 0.0
    %2851 = vmatmul.mubr.f32.gmra.mrb[0].mxu0 %v2784
    %v2852 = vpop.f32.mrb[0].mxu0
    %v2853 = vadd.f32 0.0, %v2852
    %v2854 = vpop.f32.mrb[0].mxu0
    %2855 = vdwg.mxu0
    %2856 = vrot.lane.b32.xlu0 %v367, 72
    %v2857 = vpop.permute.xlu0 %2856
    %v2860 = vsel %vm375, %v2702, 0
    %2862 = vmatprep.subr.mxu0 0.0
    %2863 = vmatpush1.msra.mxu0 %v2857
    %2864 = vmatprep.subr.mxu0 0.0
    %2865 = vmatpush1.msra.mxu0 0.0
    %2866 = vmatprep.subr.mxu0 0.0
    %2867 = vmatpush1.msra.mxu0 0.0
    %2868 = vmatprep.subr.mxu0 0.0
    %2869 = vmatpush1.msra.mxu0 0.0
    %2870 = vmatprep.subr.mxu0 0.0
    %2871 = vmatpush1.msra.mxu0 0.0
    %2872 = vmatprep.subr.mxu0 0.0
    %2873 = vmatpush1.msra.mxu0 0.0
    %2874 = vmatprep.subr.mxu0 0.0
    %2875 = vmatpush1.msra.mxu0 0.0
    %2876 = vmatprep.subr.mxu0 0.0
    %2877 = vmatpush1.msra.mxu0 0.0
    %2878 = vmatprep.subr.mxu0 0.0
    %2879 = vmatpush1.msra.mxu0 0.0
    %2880 = vmatprep.subr.mxu0 0.0
    %2881 = vmatpush1.msra.mxu0 0.0
    %2882 = vmatprep.subr.mxu0 0.0
    %2883 = vmatpush1.msra.mxu0 0.0
    %2884 = vmatprep.subr.mxu0 0.0
    %2885 = vmatpush1.msra.mxu0 0.0
    %2886 = vmatprep.subr.mxu0 0.0
    %2887 = vmatpush1.msra.mxu0 0.0
    %2888 = vmatprep.subr.mxu0 0.0
    %2889 = vmatpush1.msra.mxu0 0.0
    %2890 = vmatprep.subr.mxu0 0.0
    %2891 = vmatpush1.msra.mxu0 0.0
    %2892 = vmatprep.subr.mxu0 0.0
    %2893 = vmatpush1.msra.mxu0 0.0
    %2894 = vmatprep.subr.mxu0 0.0
    %2895 = vmatpush1.msra.mxu0 0.0
    %2896 = vmatprep.subr.mxu0 0.0
    %2897 = vmatpush1.msra.mxu0 0.0
    %2898 = vmatprep.subr.mxu0 0.0
    %2899 = vmatpush1.msra.mxu0 0.0
    %2900 = vmatprep.subr.mxu0 0.0
    %2901 = vmatpush1.msra.mxu0 0.0
    %2902 = vmatprep.subr.mxu0 0.0
    %2903 = vmatpush1.msra.mxu0 0.0
    %2904 = vmatprep.subr.mxu0 0.0
    %2905 = vmatpush1.msra.mxu0 0.0
    %2906 = vmatprep.subr.mxu0 0.0
    %2907 = vmatpush1.msra.mxu0 0.0
    %2908 = vmatprep.subr.mxu0 0.0
    %2909 = vmatpush1.msra.mxu0 0.0
    %2910 = vmatprep.subr.mxu0 0.0
    %2911 = vmatpush1.msra.mxu0 0.0
    %2912 = vmatprep.subr.mxu0 0.0
    %2913 = vmatpush1.msra.mxu0 0.0
    %2914 = vmatprep.subr.mxu0 0.0
    %2915 = vmatpush1.msra.mxu0 0.0
    %2916 = vmatprep.subr.mxu0 0.0
    %2917 = vmatpush1.msra.mxu0 0.0
    %2918 = vmatprep.subr.mxu0 0.0
    %2919 = vmatpush1.msra.mxu0 0.0
    %2920 = vmatprep.subr.mxu0 0.0
    %2921 = vmatpush1.msra.mxu0 0.0
    %2922 = vmatprep.subr.mxu0 0.0
    %2923 = vmatpush1.msra.mxu0 0.0
    %2924 = vmatprep.subr.mxu0 0.0
    %2925 = vmatpush1.msra.mxu0 0.0
    %2926 = vmatprep.mubr.f32.mxu0 0.0
    %2927 = vmatmul.mubr.f32.gmra.mrb[0].mxu0 %v2860
    %v2928 = vpop.f32.mrb[0].mxu0
    %v2929 = vadd.f32 0.0, %v2928
    %v2930 = vpop.f32.mrb[0].mxu0
    %2931 = vdwg.mxu0
    %2932 = vrot.lane.b32.xlu0 %v372, 72
    %v2933 = vpop.permute.xlu0 %2932
    %v2936 = vsel %vm375, %v2703, 0
    %2938 = vmatprep.subr.mxu0 0.0
    %2939 = vmatpush1.msra.mxu0 %v2933
    %2940 = vmatprep.subr.mxu0 0.0
    %2941 = vmatpush1.msra.mxu0 0.0
    %2942 = vmatprep.subr.mxu0 0.0
    %2943 = vmatpush1.msra.mxu0 0.0
    %2944 = vmatprep.subr.mxu0 0.0
    %2945 = vmatpush1.msra.mxu0 0.0
    %2946 = vmatprep.subr.mxu0 0.0
    %2947 = vmatpush1.msra.mxu0 0.0
    %2948 = vmatprep.subr.mxu0 0.0
    %2949 = vmatpush1.msra.mxu0 0.0
    %2950 = vmatprep.subr.mxu0 0.0
    %2951 = vmatpush1.msra.mxu0 0.0
    %2952 = vmatprep.subr.mxu0 0.0
    %2953 = vmatpush1.msra.mxu0 0.0
    %2954 = vmatprep.subr.mxu0 0.0
    %2955 = vmatpush1.msra.mxu0 0.0
    %2956 = vmatprep.subr.mxu0 0.0
    %2957 = vmatpush1.msra.mxu0 0.0
    %2958 = vmatprep.subr.mxu0 0.0
    %2959 = vmatpush1.msra.mxu0 0.0
    %2960 = vmatprep.subr.mxu0 0.0
    %2961 = vmatpush1.msra.mxu0 0.0
    %2962 = vmatprep.subr.mxu0 0.0
    %2963 = vmatpush1.msra.mxu0 0.0
    %2964 = vmatprep.subr.mxu0 0.0
    %2965 = vmatpush1.msra.mxu0 0.0
    %2966 = vmatprep.subr.mxu0 0.0
    %2967 = vmatpush1.msra.mxu0 0.0
    %2968 = vmatprep.subr.mxu0 0.0
    %2969 = vmatpush1.msra.mxu0 0.0
    %2970 = vmatprep.subr.mxu0 0.0
    %2971 = vmatpush1.msra.mxu0 0.0
    %2972 = vmatprep.subr.mxu0 0.0
    %2973 = vmatpush1.msra.mxu0 0.0
    %2974 = vmatprep.subr.mxu0 0.0
    %2975 = vmatpush1.msra.mxu0 0.0
    %2976 = vmatprep.subr.mxu0 0.0
    %2977 = vmatpush1.msra.mxu0 0.0
    %2978 = vmatprep.subr.mxu0 0.0
    %2979 = vmatpush1.msra.mxu0 0.0
    %2980 = vmatprep.subr.mxu0 0.0
    %2981 = vmatpush1.msra.mxu0 0.0
    %2982 = vmatprep.subr.mxu0 0.0
    %2983 = vmatpush1.msra.mxu0 0.0
    %2984 = vmatprep.subr.mxu0 0.0
    %2985 = vmatpush1.msra.mxu0 0.0
    %2986 = vmatprep.subr.mxu0 0.0
    %2987 = vmatpush1.msra.mxu0 0.0
    %2988 = vmatprep.subr.mxu0 0.0
    %2989 = vmatpush1.msra.mxu0 0.0
    %2990 = vmatprep.subr.mxu0 0.0
    %2991 = vmatpush1.msra.mxu0 0.0
    %2992 = vmatprep.subr.mxu0 0.0
    %2993 = vmatpush1.msra.mxu0 0.0
    %2994 = vmatprep.subr.mxu0 0.0
    %2995 = vmatpush1.msra.mxu0 0.0
    %2996 = vmatprep.subr.mxu0 0.0
    %2997 = vmatpush1.msra.mxu0 0.0
    %2998 = vmatprep.subr.mxu0 0.0
    %2999 = vmatpush1.msra.mxu0 0.0
    %3000 = vmatprep.subr.mxu0 0.0
    %3001 = vmatpush1.msra.mxu0 0.0
    %3002 = vmatprep.mubr.f32.mxu0 0.0
    %3003 = vmatmul.mubr.f32.gmra.mrb[0].mxu0 %v2936
    %v3004 = vpop.f32.mrb[0].mxu0
    %v3005 = vadd.f32 0.0, %v3004
    %v3006 = vpop.f32.mrb[0].mxu0
    %3007 = vdwg.mxu0
    %3012 = vrot.lane.b32.xlu0 %v1457, 8
    %v3013 = vpop.permute.xlu0 %3012
    %3014 = vrot.lane.b32.xlu0 %v1533, 8
    %v3015 = vpop.permute.xlu0 %3014
    %3016 = vrot.lane.b32.xlu0 %v1609, 8
    %v3017 = vpop.permute.xlu0 %3016
    %3018 = vrot.lane.b32.xlu0 %v1685, 8
    %v3019 = vpop.permute.xlu0 %3018
    %3028 = vrot.lane.b32.xlu0 %v2117, 16
    %v3029 = vpop.permute.xlu0 %3028
    %3030 = vrot.lane.b32.xlu0 %v2193, 16
    %v3031 = vpop.permute.xlu0 %3030
    %3032 = vrot.lane.b32.xlu0 %v2269, 16
    %v3033 = vpop.permute.xlu0 %3032
    %3034 = vrot.lane.b32.xlu0 %v2345, 16
    %v3035 = vpop.permute.xlu0 %3034
    %3044 = vrot.lane.b32.xlu0 %v2777, 24
    %v3045 = vpop.permute.xlu0 %3044
    %3046 = vrot.lane.b32.xlu0 %v2853, 24
    %v3047 = vpop.permute.xlu0 %3046
    %3048 = vrot.lane.b32.xlu0 %v2929, 24
    %v3049 = vpop.permute.xlu0 %3048
    %3050 = vrot.lane.b32.xlu0 %v3005, 24
    %v3051 = vpop.permute.xlu0 %3050
    %v3056 = vsel %vm375, %v797, %v3013
    %v3057 = vsel %vm375, %v873, %v3015
    %v3058 = vsel %vm375, %v949, %v3017
    %v3059 = vsel %vm375, %v1025, %v3019
    %vm3060 = vcmask 130048
    %v3061 = vsel %vm3060, %v3056, %v3029
    %v3062 = vsel %vm3060, %v3057, %v3031
    %v3063 = vsel %vm3060, %v3058, %v3033
    %v3064 = vsel %vm3060, %v3059, %v3035
    %vm3065 = vcmask 195584
    %v3066 = vsel %vm3065, %v3061, %v3045
    %v3067 = vsel %vm3065, %v3062, %v3047
    %v3068 = vsel %vm3065, %v3063, %v3049
    %v3069 = vsel %vm3065, %v3064, %v3051
    %v3070 = vlaneseq
    %v3071 = vshrl.u32 %v3070, 7
    %v3072 = vsub.s32 2, %v3071
    %v3073 = vrot.slane %v68, %v3072
    %v3075 = vsel %vm70, %v3066, 0
    %v3078 = vsel %vm70, %v3067, 0
    %v3081 = vsel %vm70, %v3068, 0
    %v3084 = vsel %vm70, %v3069, 0
    %3086 = vmatprep.subr.mxu0 0.0
    %3087 = vmatpush1.msra.mxu0 %v48
    %3088 = vmatprep.subr.mxu0 0.0
    %3089 = vmatpush1.msra.mxu0 %v49
    %3090 = vmatprep.subr.mxu0 0.0
    %3091 = vmatpush1.msra.mxu0 %v50
    %3092 = vmatprep.subr.mxu0 0.0
    %3093 = vmatpush1.msra.mxu0 %v51
    %3094 = vmatprep.subr.mxu0 0.0
    %3095 = vmatpush1.msra.mxu0 0.0
    %3096 = vmatprep.subr.mxu0 0.0
    %3097 = vmatpush1.msra.mxu0 0.0
    %3098 = vmatprep.subr.mxu0 0.0
    %3099 = vmatpush1.msra.mxu0 0.0
    %3100 = vmatprep.subr.mxu0 0.0
    %3101 = vmatpush1.msra.mxu0 0.0
    %3102 = vmatprep.subr.mxu0 0.0
    %3103 = vmatpush1.msra.mxu0 0.0
    %3104 = vmatprep.subr.mxu0 0.0
    %3105 = vmatpush1.msra.mxu0 0.0
    %3106 = vmatprep.subr.mxu0 0.0
    %3107 = vmatpush1.msra.mxu0 0.0
    %3108 = vmatprep.subr.mxu0 0.0
    %3109 = vmatpush1.msra.mxu0 0.0
    %3110 = vmatprep.subr.mxu0 0.0
    %3111 = vmatpush1.msra.mxu0 0.0
    %3112 = vmatprep.subr.mxu0 0.0
    %3113 = vmatpush1.msra.mxu0 0.0
    %3114 = vmatprep.subr.mxu0 0.0
    %3115 = vmatpush1.msra.mxu0 0.0
    %3116 = vmatprep.subr.mxu0 0.0
    %3117 = vmatpush1.msra.mxu0 0.0
    %3118 = vmatprep.subr.mxu0 0.0
    %3119 = vmatpush1.msra.mxu0 0.0
    %3120 = vmatprep.subr.mxu0 0.0
    %3121 = vmatpush1.msra.mxu0 0.0
    %3122 = vmatprep.subr.mxu0 0.0
    %3123 = vmatpush1.msra.mxu0 0.0
    %3124 = vmatprep.subr.mxu0 0.0
    %3125 = vmatpush1.msra.mxu0 0.0
    %3126 = vmatprep.subr.mxu0 0.0
    %3127 = vmatpush1.msra.mxu0 0.0
    %3128 = vmatprep.subr.mxu0 0.0
    %3129 = vmatpush1.msra.mxu0 0.0
    %3130 = vmatprep.subr.mxu0 0.0
    %3131 = vmatpush1.msra.mxu0 0.0
    %3132 = vmatprep.subr.mxu0 0.0
    %3133 = vmatpush1.msra.mxu0 0.0
    %3134 = vmatprep.subr.mxu0 0.0
    %3135 = vmatpush1.msra.mxu0 0.0
    %3136 = vmatprep.subr.mxu0 0.0
    %3137 = vmatpush1.msra.mxu0 0.0
    %3138 = vmatprep.subr.mxu0 0.0
    %3139 = vmatpush1.msra.mxu0 0.0
    %3140 = vmatprep.subr.mxu0 0.0
    %3141 = vmatpush1.msra.mxu0 0.0
    %3142 = vmatprep.subr.mxu0 0.0
    %3143 = vmatpush1.msra.mxu0 0.0
    %3144 = vmatprep.subr.mxu0 0.0
    %3145 = vmatpush1.msra.mxu0 0.0
    %3146 = vmatprep.subr.mxu0 0.0
    %3147 = vmatpush1.msra.mxu0 0.0
    %3148 = vmatprep.subr.mxu0 0.0
    %3149 = vmatpush1.msra.mxu0 0.0
    %3150 = vmatprep.mubr.f32.mxu0 0.0
    %3151 = vmatmul.mubr.f32.gmra.mrb[0].mxu0 %v3075
    %v3152 = vpop.f32.mrb[0].mxu0
    %v3153 = vadd.f32 %v3073, %v3152
    %v3154 = vpop.f32.mrb[0].mxu0
    %3155 = vmatprep.mubr.f32.mxu0 0.0
    %3156 = vmatmul.mubr.f32.gmra.mrb[0].mxu0 %v3078
    %v3157 = vpop.f32.mrb[0].mxu0
    %v3158 = vadd.f32 %v3073, %v3157
    %v3159 = vpop.f32.mrb[0].mxu0
    %3160 = vmatprep.mubr.f32.mxu0 0.0
    %3161 = vmatmul.mubr.f32.gmra.mrb[0].mxu0 %v3081
    %v3162 = vpop.f32.mrb[0].mxu0
    %v3163 = vadd.f32 %v3073, %v3162
    %v3164 = vpop.f32.mrb[0].mxu0
    %3165 = vmatprep.mubr.f32.mxu0 0.0
    %3166 = vmatmul.mubr.f32.gmra.mrb[0].mxu0 %v3084
    %v3167 = vpop.f32.mrb[0].mxu0
    %v3168 = vadd.f32 %v3073, %v3167
    %v3169 = vpop.f32.mrb[0].mxu0
    %3170 = vdwg.mxu0
    %v3171 = vadd.f32 %v24, %v3153
    %v3172 = vadd.f32 %v25, %v3158
    %v3173 = vadd.f32 %v26, %v3163
    %v3174 = vadd.f32 %v27, %v3168
    %v3175 = vsel %vm70, %v3171, 0.0
    %3176 = vadd.xlane.f32.xlu0 %v3175
    %v3177 = vpop.xlane.xlu0 %3176
    %v3178 = vsel %vm70, %v3172, 0.0
    %3179 = vadd.xlane.f32.xlu0 %v3178
    %v3180 = vpop.xlane.xlu0 %3179
    %v3181 = vsel %vm70, %v3173, 0.0
    %3182 = vadd.xlane.f32.xlu0 %v3181
    %v3183 = vpop.xlane.xlu0 %3182
    %v3184 = vsel %vm70, %v3174, 0.0
    %3185 = vadd.xlane.f32.xlu0 %v3184
    %v3186 = vpop.xlane.xlu0 %3185
    %v3187 = vmul.f32 %v3177, %v83
    %v3188 = vmul.f32 %v3180, %v83
    %v3189 = vmul.f32 %v3183, %v83
    %v3190 = vmul.f32 %v3186, %v83
    %v3191 = vsub.f32 %v3171, %v3187
    %v3192 = vsub.f32 %v3172, %v3188
    %v3193 = vsub.f32 %v3173, %v3189
    %v3194 = vsub.f32 %v3174, %v3190
    %v3195 = vmul.f32 %v3191, %v3191
    %v3196 = vmul.f32 %v3192, %v3192
    %v3197 = vmul.f32 %v3193, %v3193
    %v3198 = vmul.f32 %v3194, %v3194
    %v3199 = vsel %vm70, %v3195, 0.0
    %3200 = vadd.xlane.f32.xlu0 %v3199
    %v3201 = vpop.xlane.xlu0 %3200
    %v3202 = vsel %vm70, %v3196, 0.0
    %3203 = vadd.xlane.f32.xlu0 %v3202
    %v3204 = vpop.xlane.xlu0 %3203
    %v3205 = vsel %vm70, %v3197, 0.0
    %3206 = vadd.xlane.f32.xlu0 %v3205
    %v3207 = vpop.xlane.xlu0 %3206
    %v3208 = vsel %vm70, %v3198, 0.0
    %3209 = vadd.xlane.f32.xlu0 %v3208
    %v3210 = vpop.xlane.xlu0 %3209
    %v3211 = vmul.f32 %v3201, %v108
    %v3212 = vmul.f32 %v3204, %v108
    %v3213 = vmul.f32 %v3207, %v108
    %v3214 = vmul.f32 %v3210, %v108
    %v3215 = vrsqrt.pop %v3211
    %v3216 = vmul.f32 %v3211, %v3215
    %vm3217 = vcmp.eq.f32.partialorder %v3211, inf
    %v3218 = vsel %vm3217, %v3211, %v3216
    %vm3219 = vcmp.eq.f32.partialorder %v3211, 0.0
    %v3220 = vand.u32 %v3211, 2147483648
    %v3221 = vsel %vm3219, %v3220, %v3218
    %v3222 = vrsqrt.pop %v3212
    %v3223 = vmul.f32 %v3212, %v3222
    %vm3224 = vcmp.eq.f32.partialorder %v3212, inf
    %v3225 = vsel %vm3224, %v3212, %v3223
    %vm3226 = vcmp.eq.f32.partialorder %v3212, 0.0
    %v3227 = vand.u32 %v3212, 2147483648
    %v3228 = vsel %vm3226, %v3227, %v3225
    %v3229 = vrsqrt.pop %v3213
    %v3230 = vmul.f32 %v3213, %v3229
    %vm3231 = vcmp.eq.f32.partialorder %v3213, inf
    %v3232 = vsel %vm3231, %v3213, %v3230
    %vm3233 = vcmp.eq.f32.partialorder %v3213, 0.0
    %v3234 = vand.u32 %v3213, 2147483648
    %v3235 = vsel %vm3233, %v3234, %v3232
    %v3236 = vrsqrt.pop %v3214
    %v3237 = vmul.f32 %v3214, %v3236
    %vm3238 = vcmp.eq.f32.partialorder %v3214, inf
    %v3239 = vsel %vm3238, %v3214, %v3237
    %vm3240 = vcmp.eq.f32.partialorder %v3214, 0.0
    %v3241 = vand.u32 %v3214, 2147483648
    %v3242 = vsel %vm3240, %v3241, %v3239
    %v3243 = vadd.f32 %v3221, 1e-06
    %v3244 = vadd.f32 %v3228, 1e-06
    %v3245 = vadd.f32 %v3235, 1e-06
    %v3246 = vadd.f32 %v3242, 1e-06
    %v3247 = vrcp.pop %v3243
    %v3248 = vrcp.pop %v3244
    %v3249 = vrcp.pop %v3245
    %v3250 = vrcp.pop %v3246
    %v3251 = vlaneseq
    %v3252 = vshrl.u32 %v3251, 7
    %v3253 = vsub.s32 7, %v3252
    %v3254 = vrot.slane %v68, %v3253
    %v3255 = vmul.f32 %v3254, %v3191
    %v3256 = vmul.f32 %v3254, %v3192
    %v3257 = vmul.f32 %v3254, %v3193
    %v3258 = vmul.f32 %v3254, %v3194
    %v3259 = vmul.f32 %v3255, %v3247
    %v3260 = vmul.f32 %v3256, %v3248
    %v3261 = vmul.f32 %v3257, %v3249
    %v3262 = vmul.f32 %v3258, %v3250
    %v3263 = vlaneseq
    %v3264 = vshrl.u32 %v3263, 7
    %v3265 = vsub.s32 2, %v3264
    %v3266 = vrot.slane %v69, %v3265
    %v3267 = vadd.f32 %v3259, %v3266
    %v3268 = vadd.f32 %v3260, %v3266
    %v3269 = vadd.f32 %v3261, %v3266
    %v3270 = vadd.f32 %v3262, %v3266
    %v3271 = vlaneseq
    %v3272 = vshrl.u32 %v3271, 7
    %v3273 = vsub.s32 1, %v3272
    %v3274 = vrot.slane %v68, %v3273
    %v3276 = vsel %vm70, %v3267, 0
    %v3279 = vsel %vm70, %v3268, 0
    %v3282 = vsel %vm70, %v3269, 0
    %v3285 = vsel %vm70, %v3270, 0
    %3287 = vmatprep.subr.mxu0 0.0
    %3288 = vmatpush1.msra.mxu0 %v44
    %3289 = vmatprep.subr.mxu0 0.0
    %3290 = vmatpush1.msra.mxu0 %v45
    %3291 = vmatprep.subr.mxu0 0.0
    %3292 = vmatpush1.msra.mxu0 %v46
    %3293 = vmatprep.subr.mxu0 0.0
    %3294 = vmatpush1.msra.mxu0 %v47
    %3295 = vmatprep.subr.mxu0 0.0
    %3296 = vmatpush1.msra.mxu0 0.0
    %3297 = vmatprep.subr.mxu0 0.0
    %3298 = vmatpush1.msra.mxu0 0.0
    %3299 = vmatprep.subr.mxu0 0.0
    %3300 = vmatpush1.msra.mxu0 0.0
    %3301 = vmatprep.subr.mxu0 0.0
    %3302 = vmatpush1.msra.mxu0 0.0
    %3303 = vmatprep.subr.mxu0 0.0
    %3304 = vmatpush1.msra.mxu0 0.0
    %3305 = vmatprep.subr.mxu0 0.0
    %3306 = vmatpush1.msra.mxu0 0.0
    %3307 = vmatprep.subr.mxu0 0.0
    %3308 = vmatpush1.msra.mxu0 0.0
    %3309 = vmatprep.subr.mxu0 0.0
    %3310 = vmatpush1.msra.mxu0 0.0
    %3311 = vmatprep.subr.mxu0 0.0
    %3312 = vmatpush1.msra.mxu0 0.0
    %3313 = vmatprep.subr.mxu0 0.0
    %3314 = vmatpush1.msra.mxu0 0.0
    %3315 = vmatprep.subr.mxu0 0.0
    %3316 = vmatpush1.msra.mxu0 0.0
    %3317 = vmatprep.subr.mxu0 0.0
    %3318 = vmatpush1.msra.mxu0 0.0
    %3319 = vmatprep.subr.mxu0 0.0
    %3320 = vmatpush1.msra.mxu0 0.0
    %3321 = vmatprep.subr.mxu0 0.0
    %3322 = vmatpush1.msra.mxu0 0.0
    %3323 = vmatprep.subr.mxu0 0.0
    %3324 = vmatpush1.msra.mxu0 0.0
    %3325 = vmatprep.subr.mxu0 0.0
    %3326 = vmatpush1.msra.mxu0 0.0
    %3327 = vmatprep.subr.mxu0 0.0
    %3328 = vmatpush1.msra.mxu0 0.0
    %3329 = vmatprep.subr.mxu0 0.0
    %3330 = vmatpush1.msra.mxu0 0.0
    %3331 = vmatprep.subr.mxu0 0.0
    %3332 = vmatpush1.msra.mxu0 0.0
    %3333 = vmatprep.subr.mxu0 0.0
    %3334 = vmatpush1.msra.mxu0 0.0
    %3335 = vmatprep.subr.mxu0 0.0
    %3336 = vmatpush1.msra.mxu0 0.0
    %3337 = vmatprep.subr.mxu0 0.0
    %3338 = vmatpush1.msra.mxu0 0.0
    %3339 = vmatprep.subr.mxu0 0.0
    %3340 = vmatpush1.msra.mxu0 0.0
    %3341 = vmatprep.subr.mxu0 0.0
    %3342 = vmatpush1.msra.mxu0 0.0
    %3343 = vmatprep.subr.mxu0 0.0
    %3344 = vmatpush1.msra.mxu0 0.0
    %3345 = vmatprep.subr.mxu0 0.0
    %3346 = vmatpush1.msra.mxu0 0.0
    %3347 = vmatprep.subr.mxu0 0.0
    %3348 = vmatpush1.msra.mxu0 0.0
    %3349 = vmatprep.subr.mxu0 0.0
    %3350 = vmatpush1.msra.mxu0 0.0
    %3351 = vmatprep.mubr.f32.mxu0 0.0
    %3352 = vmatmul.mubr.f32.gmra.mrb[0].mxu0 %v3276
    %v3353 = vpop.f32.mrb[0].mxu0
    %v3354 = vadd.f32 %v3274, %v3353
    %v3355 = vpop.f32.mrb[0].mxu0
    %3356 = vmatprep.mubr.f32.mxu0 0.0
    %3357 = vmatmul.mubr.f32.gmra.mrb[0].mxu0 %v3279
    %v3358 = vpop.f32.mrb[0].mxu0
    %v3359 = vadd.f32 %v3274, %v3358
    %v3360 = vpop.f32.mrb[0].mxu0
    %3361 = vmatprep.mubr.f32.mxu0 0.0
    %3362 = vmatmul.mubr.f32.gmra.mrb[0].mxu0 %v3282
    %v3363 = vpop.f32.mrb[0].mxu0
    %v3364 = vadd.f32 %v3274, %v3363
    %v3365 = vpop.f32.mrb[0].mxu0
    %3366 = vmatprep.mubr.f32.mxu0 0.0
    %3367 = vmatmul.mubr.f32.gmra.mrb[0].mxu0 %v3285
    %v3368 = vpop.f32.mrb[0].mxu0
    %v3369 = vadd.f32 %v3274, %v3368
    %v3370 = vpop.f32.mrb[0].mxu0
    %3371 = vdwg.mxu0
    %3376 = vrot.lane.b32.xlu0 %v44, 96
    %v3377 = vpop.permute.xlu0 %3376
    %3378 = vrot.lane.b32.xlu0 %v45, 96
    %v3379 = vpop.permute.xlu0 %3378
    %3380 = vrot.lane.b32.xlu0 %v46, 96
    %v3381 = vpop.permute.xlu0 %3380
    %3382 = vrot.lane.b32.xlu0 %v47, 96
    %v3383 = vpop.permute.xlu0 %3382
    %3389 = vrot.lane.b32.xlu0 %v3274, 96
    %v3390 = vpop.permute.xlu0 %3389
    %v3393 = vsel %vm70, %v28, 0
    %v3396 = vsel %vm70, %v29, 0
    %v3399 = vsel %vm70, %v30, 0
    %v3402 = vsel %vm70, %v31, 0
    %3404 = vmatprep.subr.mxu0 0.0
    %3405 = vmatpush1.msra.mxu0 %v3377
    %3406 = vmatprep.subr.mxu0 0.0
    %3407 = vmatpush1.msra.mxu0 %v3379
    %3408 = vmatprep.subr.mxu0 0.0
    %3409 = vmatpush1.msra.mxu0 %v3381
    %3410 = vmatprep.subr.mxu0 0.0
    %3411 = vmatpush1.msra.mxu0 %v3383
    %3412 = vmatprep.subr.mxu0 0.0
    %3413 = vmatpush1.msra.mxu0 0.0
    %3414 = vmatprep.subr.mxu0 0.0
    %3415 = vmatpush1.msra.mxu0 0.0
    %3416 = vmatprep.subr.mxu0 0.0
    %3417 = vmatpush1.msra.mxu0 0.0
    %3418 = vmatprep.subr.mxu0 0.0
    %3419 = vmatpush1.msra.mxu0 0.0
    %3420 = vmatprep.subr.mxu0 0.0
    %3421 = vmatpush1.msra.mxu0 0.0
    %3422 = vmatprep.subr.mxu0 0.0
    %3423 = vmatpush1.msra.mxu0 0.0
    %3424 = vmatprep.subr.mxu0 0.0
    %3425 = vmatpush1.msra.mxu0 0.0
    %3426 = vmatprep.subr.mxu0 0.0
    %3427 = vmatpush1.msra.mxu0 0.0
    %3428 = vmatprep.subr.mxu0 0.0
    %3429 = vmatpush1.msra.mxu0 0.0
    %3430 = vmatprep.subr.mxu0 0.0
    %3431 = vmatpush1.msra.mxu0 0.0
    %3432 = vmatprep.subr.mxu0 0.0
    %3433 = vmatpush1.msra.mxu0 0.0
    %3434 = vmatprep.subr.mxu0 0.0
    %3435 = vmatpush1.msra.mxu0 0.0
    %3436 = vmatprep.subr.mxu0 0.0
    %3437 = vmatpush1.msra.mxu0 0.0
    %3438 = vmatprep.subr.mxu0 0.0
    %3439 = vmatpush1.msra.mxu0 0.0
    %3440 = vmatprep.subr.mxu0 0.0
    %3441 = vmatpush1.msra.mxu0 0.0
    %3442 = vmatprep.subr.mxu0 0.0
    %3443 = vmatpush1.msra.mxu0 0.0
    %3444 = vmatprep.subr.mxu0 0.0
    %3445 = vmatpush1.msra.mxu0 0.0
    %3446 = vmatprep.subr.mxu0 0.0
    %3447 = vmatpush1.msra.mxu0 0.0
    %3448 = vmatprep.subr.mxu0 0.0
    %3449 = vmatpush1.msra.mxu0 0.0
    %3450 = vmatprep.subr.mxu0 0.0
    %3451 = vmatpush1.msra.mxu0 0.0
    %3452 = vmatprep.subr.mxu0 0.0
    %3453 = vmatpush1.msra.mxu0 0.0
    %3454 = vmatprep.subr.mxu0 0.0
    %3455 = vmatpush1.msra.mxu0 0.0
    %3456 = vmatprep.subr.mxu0 0.0
    %3457 = vmatpush1.msra.mxu0 0.0
    %3458 = vmatprep.subr.mxu0 0.0
    %3459 = vmatpush1.msra.mxu0 0.0
    %3460 = vmatprep.subr.mxu0 0.0
    %3461 = vmatpush1.msra.mxu0 0.0
    %3462 = vmatprep.subr.mxu0 0.0
    %3463 = vmatpush1.msra.mxu0 0.0
    %3464 = vmatprep.subr.mxu0 0.0
    %3465 = vmatpush1.msra.mxu0 0.0
    %3466 = vmatprep.subr.mxu0 0.0
    %3467 = vmatpush1.msra.mxu0 0.0
    %3468 = vmatprep.mubr.f32.mxu0 0.0
    %3469 = vmatmul.mubr.f32.gmra.mrb[0].mxu0 %v3393
    %v3470 = vpop.f32.mrb[0].mxu0
    %v3471 = vadd.f32 %v3390, %v3470
    %v3472 = vpop.f32.mrb[0].mxu0
    %3473 = vmatprep.mubr.f32.mxu0 0.0
    %3474 = vmatmul.mubr.f32.gmra.mrb[0].mxu0 %v3396
    %v3475 = vpop.f32.mrb[0].mxu0
    %v3476 = vadd.f32 %v3390, %v3475
    %v3477 = vpop.f32.mrb[0].mxu0
    %3478 = vmatprep.mubr.f32.mxu0 0.0
    %3479 = vmatmul.mubr.f32.gmra.mrb[0].mxu0 %v3399
    %v3480 = vpop.f32.mrb[0].mxu0
    %v3481 = vadd.f32 %v3390, %v3480
    %v3482 = vpop.f32.mrb[0].mxu0
    %3483 = vmatprep.mubr.f32.mxu0 0.0
    %3484 = vmatmul.mubr.f32.gmra.mrb[0].mxu0 %v3402
    %v3485 = vpop.f32.mrb[0].mxu0
    %v3486 = vadd.f32 %v3390, %v3485
    %v3487 = vpop.f32.mrb[0].mxu0
    %3488 = vdwg.mxu0
    %v3493 = vlaneseq
    %v3494 = vshrl.u32 %v3493, 7
    %v3495 = vsub.s32 0, %v3494
    %v3496 = vrot.slane %v36, %v3495
    %v3497 = vlaneseq
    %v3498 = vshrl.u32 %v3497, 7
    %v3499 = vsub.s32 0, %v3498
    %v3500 = vrot.slane %v37, %v3499
    %v3501 = vlaneseq
    %v3502 = vshrl.u32 %v3501, 7
    %v3503 = vsub.s32 0, %v3502
    %v3504 = vrot.slane %v38, %v3503
    %v3505 = vlaneseq
    %v3506 = vshrl.u32 %v3505, 7
    %v3507 = vsub.s32 0, %v3506
    %v3508 = vrot.slane %v39, %v3507
    %v3514 = vsel %vm375, %v3354, 0
    %v3517 = vsel %vm375, %v3471, 0
    %3519 = vmatprep.subr.mxu0 0.0
    %3520 = vmatpush1.xpose.msra.mxu0 %v3517
    %3521 = vmatprep.subr.mxu0 0.0
    %3522 = vmatpush1.xpose.msra.mxu0 0.0
    %3523 = vmatprep.subr.mxu0 0.0
    %3524 = vmatpush1.xpose.msra.mxu0 0.0
    %3525 = vmatprep.subr.mxu0 0.0
    %3526 = vmatpush1.xpose.msra.mxu0 0.0
    %3527 = vmatprep.subr.mxu0 0.0
    %3528 = vmatpush1.xpose.msra.mxu0 0.0
    %3529 = vmatprep.subr.mxu0 0.0
    %3530 = vmatpush1.xpose.msra.mxu0 0.0
    %3531 = vmatprep.subr.mxu0 0.0
    %3532 = vmatpush1.xpose.msra.mxu0 0.0
    %3533 = vmatprep.subr.mxu0 0.0
    %3534 = vmatpush1.xpose.msra.mxu0 0.0
    %3535 = vmatprep.subr.mxu0 0.0
    %3536 = vmatpush1.xpose.msra.mxu0 0.0
    %3537 = vmatprep.subr.mxu0 0.0
    %3538 = vmatpush1.xpose.msra.mxu0 0.0
    %3539 = vmatprep.subr.mxu0 0.0
    %3540 = vmatpush1.xpose.msra.mxu0 0.0
    %3541 = vmatprep.subr.mxu0 0.0
    %3542 = vmatpush1.xpose.msra.mxu0 0.0
    %3543 = vmatprep.subr.mxu0 0.0
    %3544 = vmatpush1.xpose.msra.mxu0 0.0
    %3545 = vmatprep.subr.mxu0 0.0
    %3546 = vmatpush1.xpose.msra.mxu0 0.0
    %3547 = vmatprep.subr.mxu0 0.0
    %3548 = vmatpush1.xpose.msra.mxu0 0.0
    %3549 = vmatprep.subr.mxu0 0.0
    %3550 = vmatpush1.xpose.msra.mxu0 0.0
    %3551 = vmatprep.subr.mxu0 0.0
    %3552 = vmatpush1.xpose.msra.mxu0 0.0
    %3553 = vmatprep.subr.mxu0 0.0
    %3554 = vmatpush1.xpose.msra.mxu0 0.0
    %3555 = vmatprep.subr.mxu0 0.0
    %3556 = vmatpush1.xpose.msra.mxu0 0.0
    %3557 = vmatprep.subr.mxu0 0.0
    %3558 = vmatpush1.xpose.msra.mxu0 0.0
    %3559 = vmatprep.subr.mxu0 0.0
    %3560 = vmatpush1.xpose.msra.mxu0 0.0
    %3561 = vmatprep.subr.mxu0 0.0
    %3562 = vmatpush1.xpose.msra.mxu0 0.0
    %3563 = vmatprep.subr.mxu0 0.0
    %3564 = vmatpush1.xpose.msra.mxu0 0.0
    %3565 = vmatprep.subr.mxu0 0.0
    %3566 = vmatpush1.xpose.msra.mxu0 0.0
    %3567 = vmatprep.subr.mxu0 0.0
    %3568 = vmatpush1.xpose.msra.mxu0 0.0
    %3569 = vmatprep.subr.mxu0 0.0
    %3570 = vmatpush1.xpose.msra.mxu0 0.0
    %3571 = vmatprep.subr.mxu0 0.0
    %3572 = vmatpush1.xpose.msra.mxu0 0.0
    %3573 = vmatprep.subr.mxu0 0.0
    %3574 = vmatpush1.xpose.msra.mxu0 0.0
    %3575 = vmatprep.subr.mxu0 0.0
    %3576 = vmatpush1.xpose.msra.mxu0 0.0
    %3577 = vmatprep.subr.mxu0 0.0
    %3578 = vmatpush1.xpose.msra.mxu0 0.0
    %3579 = vmatprep.subr.mxu0 0.0
    %3580 = vmatpush1.xpose.msra.mxu0 0.0
    %3581 = vmatprep.subr.mxu0 0.0
    %3582 = vmatpush1.xpose.msra.mxu0 0.0
    %3583 = vmatprep.mubr.f32.mxu0 0.0
    %3584 = vmatmul.mubr.f32.gmra.mrb[0].mxu0 %v3514
    %v3585 = vpop.f32.mrb[0].mxu0
    %v3586 = vadd.f32 %v3496, %v3585
    %v3587 = vpop.f32.mrb[0].mxu0
    %3588 = vdwg.mxu0
    %v3590 = vsel %vm375, %v3359, 0
    %v3593 = vsel %vm375, %v3476, 0
    %3595 = vmatprep.subr.mxu0 0.0
    %3596 = vmatpush1.xpose.msra.mxu0 %v3593
    %3597 = vmatprep.subr.mxu0 0.0
    %3598 = vmatpush1.xpose.msra.mxu0 0.0
    %3599 = vmatprep.subr.mxu0 0.0
    %3600 = vmatpush1.xpose.msra.mxu0 0.0
    %3601 = vmatprep.subr.mxu0 0.0
    %3602 = vmatpush1.xpose.msra.mxu0 0.0
    %3603 = vmatprep.subr.mxu0 0.0
    %3604 = vmatpush1.xpose.msra.mxu0 0.0
    %3605 = vmatprep.subr.mxu0 0.0
    %3606 = vmatpush1.xpose.msra.mxu0 0.0
    %3607 = vmatprep.subr.mxu0 0.0
    %3608 = vmatpush1.xpose.msra.mxu0 0.0
    %3609 = vmatprep.subr.mxu0 0.0
    %3610 = vmatpush1.xpose.msra.mxu0 0.0
    %3611 = vmatprep.subr.mxu0 0.0
    %3612 = vmatpush1.xpose.msra.mxu0 0.0
    %3613 = vmatprep.subr.mxu0 0.0
    %3614 = vmatpush1.xpose.msra.mxu0 0.0
    %3615 = vmatprep.subr.mxu0 0.0
    %3616 = vmatpush1.xpose.msra.mxu0 0.0
    %3617 = vmatprep.subr.mxu0 0.0
    %3618 = vmatpush1.xpose.msra.mxu0 0.0
    %3619 = vmatprep.subr.mxu0 0.0
    %3620 = vmatpush1.xpose.msra.mxu0 0.0
    %3621 = vmatprep.subr.mxu0 0.0
    %3622 = vmatpush1.xpose.msra.mxu0 0.0
    %3623 = vmatprep.subr.mxu0 0.0
    %3624 = vmatpush1.xpose.msra.mxu0 0.0
    %3625 = vmatprep.subr.mxu0 0.0
    %3626 = vmatpush1.xpose.msra.mxu0 0.0
    %3627 = vmatprep.subr.mxu0 0.0
    %3628 = vmatpush1.xpose.msra.mxu0 0.0
    %3629 = vmatprep.subr.mxu0 0.0
    %3630 = vmatpush1.xpose.msra.mxu0 0.0
    %3631 = vmatprep.subr.mxu0 0.0
    %3632 = vmatpush1.xpose.msra.mxu0 0.0
    %3633 = vmatprep.subr.mxu0 0.0
    %3634 = vmatpush1.xpose.msra.mxu0 0.0
    %3635 = vmatprep.subr.mxu0 0.0
    %3636 = vmatpush1.xpose.msra.mxu0 0.0
    %3637 = vmatprep.subr.mxu0 0.0
    %3638 = vmatpush1.xpose.msra.mxu0 0.0
    %3639 = vmatprep.subr.mxu0 0.0
    %3640 = vmatpush1.xpose.msra.mxu0 0.0
    %3641 = vmatprep.subr.mxu0 0.0
    %3642 = vmatpush1.xpose.msra.mxu0 0.0
    %3643 = vmatprep.subr.mxu0 0.0
    %3644 = vmatpush1.xpose.msra.mxu0 0.0
    %3645 = vmatprep.subr.mxu0 0.0
    %3646 = vmatpush1.xpose.msra.mxu0 0.0
    %3647 = vmatprep.subr.mxu0 0.0
    %3648 = vmatpush1.xpose.msra.mxu0 0.0
    %3649 = vmatprep.subr.mxu0 0.0
    %3650 = vmatpush1.xpose.msra.mxu0 0.0
    %3651 = vmatprep.subr.mxu0 0.0
    %3652 = vmatpush1.xpose.msra.mxu0 0.0
    %3653 = vmatprep.subr.mxu0 0.0
    %3654 = vmatpush1.xpose.msra.mxu0 0.0
    %3655 = vmatprep.subr.mxu0 0.0
    %3656 = vmatpush1.xpose.msra.mxu0 0.0
    %3657 = vmatprep.subr.mxu0 0.0
    %3658 = vmatpush1.xpose.msra.mxu0 0.0
    %3659 = vmatprep.mubr.f32.mxu0 0.0
    %3660 = vmatmul.mubr.f32.gmra.mrb[0].mxu0 %v3590
    %v3661 = vpop.f32.mrb[0].mxu0
    %v3662 = vadd.f32 %v3500, %v3661
    %v3663 = vpop.f32.mrb[0].mxu0
    %3664 = vdwg.mxu0
    %v3666 = vsel %vm375, %v3364, 0
    %v3669 = vsel %vm375, %v3481, 0
    %3671 = vmatprep.subr.mxu0 0.0
    %3672 = vmatpush1.xpose.msra.mxu0 %v3669
    %3673 = vmatprep.subr.mxu0 0.0
    %3674 = vmatpush1.xpose.msra.mxu0 0.0
    %3675 = vmatprep.subr.mxu0 0.0
    %3676 = vmatpush1.xpose.msra.mxu0 0.0
    %3677 = vmatprep.subr.mxu0 0.0
    %3678 = vmatpush1.xpose.msra.mxu0 0.0
    %3679 = vmatprep.subr.mxu0 0.0
    %3680 = vmatpush1.xpose.msra.mxu0 0.0
    %3681 = vmatprep.subr.mxu0 0.0
    %3682 = vmatpush1.xpose.msra.mxu0 0.0
    %3683 = vmatprep.subr.mxu0 0.0
    %3684 = vmatpush1.xpose.msra.mxu0 0.0
    %3685 = vmatprep.subr.mxu0 0.0
    %3686 = vmatpush1.xpose.msra.mxu0 0.0
    %3687 = vmatprep.subr.mxu0 0.0
    %3688 = vmatpush1.xpose.msra.mxu0 0.0
    %3689 = vmatprep.subr.mxu0 0.0
    %3690 = vmatpush1.xpose.msra.mxu0 0.0
    %3691 = vmatprep.subr.mxu0 0.0
    %3692 = vmatpush1.xpose.msra.mxu0 0.0
    %3693 = vmatprep.subr.mxu0 0.0
    %3694 = vmatpush1.xpose.msra.mxu0 0.0
    %3695 = vmatprep.subr.mxu0 0.0
    %3696 = vmatpush1.xpose.msra.mxu0 0.0
    %3697 = vmatprep.subr.mxu0 0.0
    %3698 = vmatpush1.xpose.msra.mxu0 0.0
    %3699 = vmatprep.subr.mxu0 0.0
    %3700 = vmatpush1.xpose.msra.mxu0 0.0
    %3701 = vmatprep.subr.mxu0 0.0
    %3702 = vmatpush1.xpose.msra.mxu0 0.0
    %3703 = vmatprep.subr.mxu0 0.0
    %3704 = vmatpush1.xpose.msra.mxu0 0.0
    %3705 = vmatprep.subr.mxu0 0.0
    %3706 = vmatpush1.xpose.msra.mxu0 0.0
    %3707 = vmatprep.subr.mxu0 0.0
    %3708 = vmatpush1.xpose.msra.mxu0 0.0
    %3709 = vmatprep.subr.mxu0 0.0
    %3710 = vmatpush1.xpose.msra.mxu0 0.0
    %3711 = vmatprep.subr.mxu0 0.0
    %3712 = vmatpush1.xpose.msra.mxu0 0.0
    %3713 = vmatprep.subr.mxu0 0.0
    %3714 = vmatpush1.xpose.msra.mxu0 0.0
    %3715 = vmatprep.subr.mxu0 0.0
    %3716 = vmatpush1.xpose.msra.mxu0 0.0
    %3717 = vmatprep.subr.mxu0 0.0
    %3718 = vmatpush1.xpose.msra.mxu0 0.0
    %3719 = vmatprep.subr.mxu0 0.0
    %3720 = vmatpush1.xpose.msra.mxu0 0.0
    %3721 = vmatprep.subr.mxu0 0.0
    %3722 = vmatpush1.xpose.msra.mxu0 0.0
    %3723 = vmatprep.subr.mxu0 0.0
    %3724 = vmatpush1.xpose.msra.mxu0 0.0
    %3725 = vmatprep.subr.mxu0 0.0
    %3726 = vmatpush1.xpose.msra.mxu0 0.0
    %3727 = vmatprep.subr.mxu0 0.0
    %3728 = vmatpush1.xpose.msra.mxu0 0.0
    %3729 = vmatprep.subr.mxu0 0.0
    %3730 = vmatpush1.xpose.msra.mxu0 0.0
    %3731 = vmatprep.subr.mxu0 0.0
    %3732 = vmatpush1.xpose.msra.mxu0 0.0
    %3733 = vmatprep.subr.mxu0 0.0
    %3734 = vmatpush1.xpose.msra.mxu0 0.0
    %3735 = vmatprep.mubr.f32.mxu0 0.0
    %3736 = vmatmul.mubr.f32.gmra.mrb[0].mxu0 %v3666
    %v3737 = vpop.f32.mrb[0].mxu0
    %v3738 = vadd.f32 %v3504, %v3737
    %v3739 = vpop.f32.mrb[0].mxu0
    %3740 = vdwg.mxu0
    %v3742 = vsel %vm375, %v3369, 0
    %v3745 = vsel %vm375, %v3486, 0
    %3747 = vmatprep.subr.mxu0 0.0
    %3748 = vmatpush1.xpose.msra.mxu0 %v3745
    %3749 = vmatprep.subr.mxu0 0.0
    %3750 = vmatpush1.xpose.msra.mxu0 0.0
    %3751 = vmatprep.subr.mxu0 0.0
    %3752 = vmatpush1.xpose.msra.mxu0 0.0
    %3753 = vmatprep.subr.mxu0 0.0
    %3754 = vmatpush1.xpose.msra.mxu0 0.0
    %3755 = vmatprep.subr.mxu0 0.0
    %3756 = vmatpush1.xpose.msra.mxu0 0.0
    %3757 = vmatprep.subr.mxu0 0.0
    %3758 = vmatpush1.xpose.msra.mxu0 0.0
    %3759 = vmatprep.subr.mxu0 0.0
    %3760 = vmatpush1.xpose.msra.mxu0 0.0
    %3761 = vmatprep.subr.mxu0 0.0
    %3762 = vmatpush1.xpose.msra.mxu0 0.0
    %3763 = vmatprep.subr.mxu0 0.0
    %3764 = vmatpush1.xpose.msra.mxu0 0.0
    %3765 = vmatprep.subr.mxu0 0.0
    %3766 = vmatpush1.xpose.msra.mxu0 0.0
    %3767 = vmatprep.subr.mxu0 0.0
    %3768 = vmatpush1.xpose.msra.mxu0 0.0
    %3769 = vmatprep.subr.mxu0 0.0
    %3770 = vmatpush1.xpose.msra.mxu0 0.0
    %3771 = vmatprep.subr.mxu0 0.0
    %3772 = vmatpush1.xpose.msra.mxu0 0.0
    %3773 = vmatprep.subr.mxu0 0.0
    %3774 = vmatpush1.xpose.msra.mxu0 0.0
    %3775 = vmatprep.subr.mxu0 0.0
    %3776 = vmatpush1.xpose.msra.mxu0 0.0
    %3777 = vmatprep.subr.mxu0 0.0
    %3778 = vmatpush1.xpose.msra.mxu0 0.0
    %3779 = vmatprep.subr.mxu0 0.0
    %3780 = vmatpush1.xpose.msra.mxu0 0.0
    %3781 = vmatprep.subr.mxu0 0.0
    %3782 = vmatpush1.xpose.msra.mxu0 0.0
    %3783 = vmatprep.subr.mxu0 0.0
    %3784 = vmatpush1.xpose.msra.mxu0 0.0
    %3785 = vmatprep.subr.mxu0 0.0
    %3786 = vmatpush1.xpose.msra.mxu0 0.0
    %3787 = vmatprep.subr.mxu0 0.0
    %3788 = vmatpush1.xpose.msra.mxu0 0.0
    %3789 = vmatprep.subr.mxu0 0.0
    %3790 = vmatpush1.xpose.msra.mxu0 0.0
    %3791 = vmatprep.subr.mxu0 0.0
    %3792 = vmatpush1.xpose.msra.mxu0 0.0
    %3793 = vmatprep.subr.mxu0 0.0
    %3794 = vmatpush1.xpose.msra.mxu0 0.0
    %3795 = vmatprep.subr.mxu0 0.0
    %3796 = vmatpush1.xpose.msra.mxu0 0.0
    %3797 = vmatprep.subr.mxu0 0.0
    %3798 = vmatpush1.xpose.msra.mxu0 0.0
    %3799 = vmatprep.subr.mxu0 0.0
    %3800 = vmatpush1.xpose.msra.mxu0 0.0
    %3801 = vmatprep.subr.mxu0 0.0
    %3802 = vmatpush1.xpose.msra.mxu0 0.0
    %3803 = vmatprep.subr.mxu0 0.0
    %3804 = vmatpush1.xpose.msra.mxu0 0.0
    %3805 = vmatprep.subr.mxu0 0.0
    %3806 = vmatpush1.xpose.msra.mxu0 0.0
    %3807 = vmatprep.subr.mxu0 0.0
    %3808 = vmatpush1.xpose.msra.mxu0 0.0
    %3809 = vmatprep.subr.mxu0 0.0
    %3810 = vmatpush1.xpose.msra.mxu0 0.0
    %3811 = vmatprep.mubr.f32.mxu0 0.0
    %3812 = vmatmul.mubr.f32.gmra.mrb[0].mxu0 %v3742
    %v3813 = vpop.f32.mrb[0].mxu0
    %v3814 = vadd.f32 %v3508, %v3813
    %v3815 = vpop.f32.mrb[0].mxu0
    %3816 = vdwg.mxu0
    %v3817 = vsel %vm375, %v3586, -inf
    %3818 = vmax.xlane.f32.xlu0 %v3817
    %v3819 = vpop.xlane.xlu0 %3818
    %v3820 = vsel %vm375, %v3662, -inf
    %3821 = vmax.xlane.f32.xlu0 %v3820
    %v3822 = vpop.xlane.xlu0 %3821
    %v3823 = vsel %vm375, %v3738, -inf
    %3824 = vmax.xlane.f32.xlu0 %v3823
    %v3825 = vpop.xlane.xlu0 %3824
    %v3826 = vsel %vm375, %v3814, -inf
    %3827 = vmax.xlane.f32.xlu0 %v3826
    %v3828 = vpop.xlane.xlu0 %3827
    %v3829 = vsub.f32 %v3586, %v3819
    %v3830 = vsub.f32 %v3662, %v3822
    %v3831 = vsub.f32 %v3738, %v3825
    %v3832 = vsub.f32 %v3814, %v3828
    %v3833 = vmul.f32 %v3829, 1.442695
    %v3834 = vpow.pop %v3833
    %v3835 = vmul.f32 %v3830, 1.442695
    %v3836 = vpow.pop %v3835
    %v3837 = vmul.f32 %v3831, 1.442695
    %v3838 = vpow.pop %v3837
    %v3839 = vmul.f32 %v3832, 1.442695
    %v3840 = vpow.pop %v3839
    %v3841 = vsel %vm375, %v3834, 0.0
    %3842 = vadd.xlane.f32.xlu0 %v3841
    %v3843 = vpop.xlane.xlu0 %3842
    %v3844 = vsel %vm375, %v3836, 0.0
    %3845 = vadd.xlane.f32.xlu0 %v3844
    %v3846 = vpop.xlane.xlu0 %3845
    %v3847 = vsel %vm375, %v3838, 0.0
    %3848 = vadd.xlane.f32.xlu0 %v3847
    %v3849 = vpop.xlane.xlu0 %3848
    %v3850 = vsel %vm375, %v3840, 0.0
    %3851 = vadd.xlane.f32.xlu0 %v3850
    %v3852 = vpop.xlane.xlu0 %3851
    %v3853 = vrcp.pop %v3843
    %v3854 = vrcp.pop %v3846
    %v3855 = vrcp.pop %v3849
    %v3856 = vrcp.pop %v3852
    %v3857 = vmul.f32 %v3834, %v3853
    %v3858 = vmul.f32 %v3836, %v3854
    %v3859 = vmul.f32 %v3838, %v3855
    %v3860 = vmul.f32 %v3840, %v3856
    %3861 = vrot.lane.b32.xlu0 %v3471, 96
    %v3862 = vpop.permute.xlu0 %3861
    %v3865 = vsel %vm375, %v3857, 0
    %3867 = vmatprep.subr.mxu0 0.0
    %3868 = vmatpush1.msra.mxu0 %v3862
    %3869 = vmatprep.subr.mxu0 0.0
    %3870 = vmatpush1.msra.mxu0 0.0
    %3871 = vmatprep.subr.mxu0 0.0
    %3872 = vmatpush1.msra.mxu0 0.0
    %3873 = vmatprep.subr.mxu0 0.0
    %3874 = vmatpush1.msra.mxu0 0.0
    %3875 = vmatprep.subr.mxu0 0.0
    %3876 = vmatpush1.msra.mxu0 0.0
    %3877 = vmatprep.subr.mxu0 0.0
    %3878 = vmatpush1.msra.mxu0 0.0
    %3879 = vmatprep.subr.mxu0 0.0
    %3880 = vmatpush1.msra.mxu0 0.0
    %3881 = vmatprep.subr.mxu0 0.0
    %3882 = vmatpush1.msra.mxu0 0.0
    %3883 = vmatprep.subr.mxu0 0.0
    %3884 = vmatpush1.msra.mxu0 0.0
    %3885 = vmatprep.subr.mxu0 0.0
    %3886 = vmatpush1.msra.mxu0 0.0
    %3887 = vmatprep.subr.mxu0 0.0
    %3888 = vmatpush1.msra.mxu0 0.0
    %3889 = vmatprep.subr.mxu0 0.0
    %3890 = vmatpush1.msra.mxu0 0.0
    %3891 = vmatprep.subr.mxu0 0.0
    %3892 = vmatpush1.msra.mxu0 0.0
    %3893 = vmatprep.subr.mxu0 0.0
    %3894 = vmatpush1.msra.mxu0 0.0
    %3895 = vmatprep.subr.mxu0 0.0
    %3896 = vmatpush1.msra.mxu0 0.0
    %3897 = vmatprep.subr.mxu0 0.0
    %3898 = vmatpush1.msra.mxu0 0.0
    %3899 = vmatprep.subr.mxu0 0.0
    %3900 = vmatpush1.msra.mxu0 0.0
    %3901 = vmatprep.subr.mxu0 0.0
    %3902 = vmatpush1.msra.mxu0 0.0
    %3903 = vmatprep.subr.mxu0 0.0
    %3904 = vmatpush1.msra.mxu0 0.0
    %3905 = vmatprep.subr.mxu0 0.0
    %3906 = vmatpush1.msra.mxu0 0.0
    %3907 = vmatprep.subr.mxu0 0.0
    %3908 = vmatpush1.msra.mxu0 0.0
    %3909 = vmatprep.subr.mxu0 0.0
    %3910 = vmatpush1.msra.mxu0 0.0
    %3911 = vmatprep.subr.mxu0 0.0
    %3912 = vmatpush1.msra.mxu0 0.0
    %3913 = vmatprep.subr.mxu0 0.0
    %3914 = vmatpush1.msra.mxu0 0.0
    %3915 = vmatprep.subr.mxu0 0.0
    %3916 = vmatpush1.msra.mxu0 0.0
    %3917 = vmatprep.subr.mxu0 0.0
    %3918 = vmatpush1.msra.mxu0 0.0
    %3919 = vmatprep.subr.mxu0 0.0
    %3920 = vmatpush1.msra.mxu0 0.0
    %3921 = vmatprep.subr.mxu0 0.0
    %3922 = vmatpush1.msra.mxu0 0.0
    %3923 = vmatprep.subr.mxu0 0.0
    %3924 = vmatpush1.msra.mxu0 0.0
    %3925 = vmatprep.subr.mxu0 0.0
    %3926 = vmatpush1.msra.mxu0 0.0
    %3927 = vmatprep.subr.mxu0 0.0
    %3928 = vmatpush1.msra.mxu0 0.0
    %3929 = vmatprep.subr.mxu0 0.0
    %3930 = vmatpush1.msra.mxu0 0.0
    %3931 = vmatprep.mubr.f32.mxu0 0.0
    %3932 = vmatmul.mubr.f32.gmra.mrb[0].mxu0 %v3865
    %v3933 = vpop.f32.mrb[0].mxu0
    %v3934 = vadd.f32 0.0, %v3933
    %v3935 = vpop.f32.mrb[0].mxu0
    %3936 = vdwg.mxu0
    %3937 = vrot.lane.b32.xlu0 %v3476, 96
    %v3938 = vpop.permute.xlu0 %3937
    %v3941 = vsel %vm375, %v3858, 0
    %3943 = vmatprep.subr.mxu0 0.0
    %3944 = vmatpush1.msra.mxu0 %v3938
    %3945 = vmatprep.subr.mxu0 0.0
    %3946 = vmatpush1.msra.mxu0 0.0
    %3947 = vmatprep.subr.mxu0 0.0
    %3948 = vmatpush1.msra.mxu0 0.0
    %3949 = vmatprep.subr.mxu0 0.0
    %3950 = vmatpush1.msra.mxu0 0.0
    %3951 = vmatprep.subr.mxu0 0.0
    %3952 = vmatpush1.msra.mxu0 0.0
    %3953 = vmatprep.subr.mxu0 0.0
    %3954 = vmatpush1.msra.mxu0 0.0
    %3955 = vmatprep.subr.mxu0 0.0
    %3956 = vmatpush1.msra.mxu0 0.0
    %3957 = vmatprep.subr.mxu0 0.0
    %3958 = vmatpush1.msra.mxu0 0.0
    %3959 = vmatprep.subr.mxu0 0.0
    %3960 = vmatpush1.msra.mxu0 0.0
    %3961 = vmatprep.subr.mxu0 0.0
    %3962 = vmatpush1.msra.mxu0 0.0
    %3963 = vmatprep.subr.mxu0 0.0
    %3964 = vmatpush1.msra.mxu0 0.0
    %3965 = vmatprep.subr.mxu0 0.0
    %3966 = vmatpush1.msra.mxu0 0.0
    %3967 = vmatprep.subr.mxu0 0.0
    %3968 = vmatpush1.msra.mxu0 0.0
    %3969 = vmatprep.subr.mxu0 0.0
    %3970 = vmatpush1.msra.mxu0 0.0
    %3971 = vmatprep.subr.mxu0 0.0
    %3972 = vmatpush1.msra.mxu0 0.0
    %3973 = vmatprep.subr.mxu0 0.0
    %3974 = vmatpush1.msra.mxu0 0.0
    %3975 = vmatprep.subr.mxu0 0.0
    %3976 = vmatpush1.msra.mxu0 0.0
    %3977 = vmatprep.subr.mxu0 0.0
    %3978 = vmatpush1.msra.mxu0 0.0
    %3979 = vmatprep.subr.mxu0 0.0
    %3980 = vmatpush1.msra.mxu0 0.0
    %3981 = vmatprep.subr.mxu0 0.0
    %3982 = vmatpush1.msra.mxu0 0.0
    %3983 = vmatprep.subr.mxu0 0.0
    %3984 = vmatpush1.msra.mxu0 0.0
    %3985 = vmatprep.subr.mxu0 0.0
    %3986 = vmatpush1.msra.mxu0 0.0
    %3987 = vmatprep.subr.mxu0 0.0
    %3988 = vmatpush1.msra.mxu0 0.0
    %3989 = vmatprep.subr.mxu0 0.0
    %3990 = vmatpush1.msra.mxu0 0.0
    %3991 = vmatprep.subr.mxu0 0.0
    %3992 = vmatpush1.msra.mxu0 0.0
    %3993 = vmatprep.subr.mxu0 0.0
    %3994 = vmatpush1.msra.mxu0 0.0
    %3995 = vmatprep.subr.mxu0 0.0
    %3996 = vmatpush1.msra.mxu0 0.0
    %3997 = vmatprep.subr.mxu0 0.0
    %3998 = vmatpush1.msra.mxu0 0.0
    %3999 = vmatprep.subr.mxu0 0.0
    %4000 = vmatpush1.msra.mxu0 0.0
    %4001 = vmatprep.subr.mxu0 0.0
    %4002 = vmatpush1.msra.mxu0 0.0
    %4003 = vmatprep.subr.mxu0 0.0
    %4004 = vmatpush1.msra.mxu0 0.0
    %4005 = vmatprep.subr.mxu0 0.0
    %4006 = vmatpush1.msra.mxu0 0.0
    %4007 = vmatprep.mubr.f32.mxu0 0.0
    %4008 = vmatmul.mubr.f32.gmra.mrb[0].mxu0 %v3941
    %v4009 = vpop.f32.mrb[0].mxu0
    %v4010 = vadd.f32 0.0, %v4009
    %v4011 = vpop.f32.mrb[0].mxu0
    %4012 = vdwg.mxu0
    %4013 = vrot.lane.b32.xlu0 %v3481, 96
    %v4014 = vpop.permute.xlu0 %4013
    %v4017 = vsel %vm375, %v3859, 0
    %4019 = vmatprep.subr.mxu0 0.0
    %4020 = vmatpush1.msra.mxu0 %v4014
    %4021 = vmatprep.subr.mxu0 0.0
    %4022 = vmatpush1.msra.mxu0 0.0
    %4023 = vmatprep.subr.mxu0 0.0
    %4024 = vmatpush1.msra.mxu0 0.0
    %4025 = vmatprep.subr.mxu0 0.0
    %4026 = vmatpush1.msra.mxu0 0.0
    %4027 = vmatprep.subr.mxu0 0.0
    %4028 = vmatpush1.msra.mxu0 0.0
    %4029 = vmatprep.subr.mxu0 0.0
    %4030 = vmatpush1.msra.mxu0 0.0
    %4031 = vmatprep.subr.mxu0 0.0
    %4032 = vmatpush1.msra.mxu0 0.0
    %4033 = vmatprep.subr.mxu0 0.0
    %4034 = vmatpush1.msra.mxu0 0.0
    %4035 = vmatprep.subr.mxu0 0.0
    %4036 = vmatpush1.msra.mxu0 0.0
    %4037 = vmatprep.subr.mxu0 0.0
    %4038 = vmatpush1.msra.mxu0 0.0
    %4039 = vmatprep.subr.mxu0 0.0
    %4040 = vmatpush1.msra.mxu0 0.0
    %4041 = vmatprep.subr.mxu0 0.0
    %4042 = vmatpush1.msra.mxu0 0.0
    %4043 = vmatprep.subr.mxu0 0.0
    %4044 = vmatpush1.msra.mxu0 0.0
    %4045 = vmatprep.subr.mxu0 0.0
    %4046 = vmatpush1.msra.mxu0 0.0
    %4047 = vmatprep.subr.mxu0 0.0
    %4048 = vmatpush1.msra.mxu0 0.0
    %4049 = vmatprep.subr.mxu0 0.0
    %4050 = vmatpush1.msra.mxu0 0.0
    %4051 = vmatprep.subr.mxu0 0.0
    %4052 = vmatpush1.msra.mxu0 0.0
    %4053 = vmatprep.subr.mxu0 0.0
    %4054 = vmatpush1.msra.mxu0 0.0
    %4055 = vmatprep.subr.mxu0 0.0
    %4056 = vmatpush1.msra.mxu0 0.0
    %4057 = vmatprep.subr.mxu0 0.0
    %4058 = vmatpush1.msra.mxu0 0.0
    %4059 = vmatprep.subr.mxu0 0.0
    %4060 = vmatpush1.msra.mxu0 0.0
    %4061 = vmatprep.subr.mxu0 0.0
    %4062 = vmatpush1.msra.mxu0 0.0
    %4063 = vmatprep.subr.mxu0 0.0
    %4064 = vmatpush1.msra.mxu0 0.0
    %4065 = vmatprep.subr.mxu0 0.0
    %4066 = vmatpush1.msra.mxu0 0.0
    %4067 = vmatprep.subr.mxu0 0.0
    %4068 = vmatpush1.msra.mxu0 0.0
    %4069 = vmatprep.subr.mxu0 0.0
    %4070 = vmatpush1.msra.mxu0 0.0
    %4071 = vmatprep.subr.mxu0 0.0
    %4072 = vmatpush1.msra.mxu0 0.0
    %4073 = vmatprep.subr.mxu0 0.0
    %4074 = vmatpush1.msra.mxu0 0.0
    %4075 = vmatprep.subr.mxu0 0.0
    %4076 = vmatpush1.msra.mxu0 0.0
    %4077 = vmatprep.subr.mxu0 0.0
    %4078 = vmatpush1.msra.mxu0 0.0
    %4079 = vmatprep.subr.mxu0 0.0
    %4080 = vmatpush1.msra.mxu0 0.0
    %4081 = vmatprep.subr.mxu0 0.0
    %4082 = vmatpush1.msra.mxu0 0.0
    %4083 = vmatprep.mubr.f32.mxu0 0.0
    %4084 = vmatmul.mubr.f32.gmra.mrb[0].mxu0 %v4017
    %v4085 = vpop.f32.mrb[0].mxu0
    %v4086 = vadd.f32 0.0, %v4085
    %v4087 = vpop.f32.mrb[0].mxu0
    %4088 = vdwg.mxu0
    %4089 = vrot.lane.b32.xlu0 %v3486, 96
    %v4090 = vpop.permute.xlu0 %4089
    %v4093 = vsel %vm375, %v3860, 0
    %4095 = vmatprep.subr.mxu0 0.0
    %4096 = vmatpush1.msra.mxu0 %v4090
    %4097 = vmatprep.subr.mxu0 0.0
    %4098 = vmatpush1.msra.mxu0 0.0
    %4099 = vmatprep.subr.mxu0 0.0
    %4100 = vmatpush1.msra.mxu0 0.0
    %4101 = vmatprep.subr.mxu0 0.0
    %4102 = vmatpush1.msra.mxu0 0.0
    %4103 = vmatprep.subr.mxu0 0.0
    %4104 = vmatpush1.msra.mxu0 0.0
    %4105 = vmatprep.subr.mxu0 0.0
    %4106 = vmatpush1.msra.mxu0 0.0
    %4107 = vmatprep.subr.mxu0 0.0
    %4108 = vmatpush1.msra.mxu0 0.0
    %4109 = vmatprep.subr.mxu0 0.0
    %4110 = vmatpush1.msra.mxu0 0.0
    %4111 = vmatprep.subr.mxu0 0.0
    %4112 = vmatpush1.msra.mxu0 0.0
    %4113 = vmatprep.subr.mxu0 0.0
    %4114 = vmatpush1.msra.mxu0 0.0
    %4115 = vmatprep.subr.mxu0 0.0
    %4116 = vmatpush1.msra.mxu0 0.0
    %4117 = vmatprep.subr.mxu0 0.0
    %4118 = vmatpush1.msra.mxu0 0.0
    %4119 = vmatprep.subr.mxu0 0.0
    %4120 = vmatpush1.msra.mxu0 0.0
    %4121 = vmatprep.subr.mxu0 0.0
    %4122 = vmatpush1.msra.mxu0 0.0
    %4123 = vmatprep.subr.mxu0 0.0
    %4124 = vmatpush1.msra.mxu0 0.0
    %4125 = vmatprep.subr.mxu0 0.0
    %4126 = vmatpush1.msra.mxu0 0.0
    %4127 = vmatprep.subr.mxu0 0.0
    %4128 = vmatpush1.msra.mxu0 0.0
    %4129 = vmatprep.subr.mxu0 0.0
    %4130 = vmatpush1.msra.mxu0 0.0
    %4131 = vmatprep.subr.mxu0 0.0
    %4132 = vmatpush1.msra.mxu0 0.0
    %4133 = vmatprep.subr.mxu0 0.0
    %4134 = vmatpush1.msra.mxu0 0.0
    %4135 = vmatprep.subr.mxu0 0.0
    %4136 = vmatpush1.msra.mxu0 0.0
    %4137 = vmatprep.subr.mxu0 0.0
    %4138 = vmatpush1.msra.mxu0 0.0
    %4139 = vmatprep.subr.mxu0 0.0
    %4140 = vmatpush1.msra.mxu0 0.0
    %4141 = vmatprep.subr.mxu0 0.0
    %4142 = vmatpush1.msra.mxu0 0.0
    %4143 = vmatprep.subr.mxu0 0.0
    %4144 = vmatpush1.msra.mxu0 0.0
    %4145 = vmatprep.subr.mxu0 0.0
    %4146 = vmatpush1.msra.mxu0 0.0
    %4147 = vmatprep.subr.mxu0 0.0
    %4148 = vmatpush1.msra.mxu0 0.0
    %4149 = vmatprep.subr.mxu0 0.0
    %4150 = vmatpush1.msra.mxu0 0.0
    %4151 = vmatprep.subr.mxu0 0.0
    %4152 = vmatpush1.msra.mxu0 0.0
    %4153 = vmatprep.subr.mxu0 0.0
    %4154 = vmatpush1.msra.mxu0 0.0
    %4155 = vmatprep.subr.mxu0 0.0
    %4156 = vmatpush1.msra.mxu0 0.0
    %4157 = vmatprep.subr.mxu0 0.0
    %4158 = vmatpush1.msra.mxu0 0.0
    %4159 = vmatprep.mubr.f32.mxu0 0.0
    %4160 = vmatmul.mubr.f32.gmra.mrb[0].mxu0 %v4093
    %v4161 = vpop.f32.mrb[0].mxu0
    %v4162 = vadd.f32 0.0, %v4161
    %v4163 = vpop.f32.mrb[0].mxu0
    %4164 = vdwg.mxu0
    %4165 = vrot.lane.b32.xlu0 %v3354, 120
    %v4166 = vpop.permute.xlu0 %4165
    %4167 = vrot.lane.b32.xlu0 %v3471, 120
    %v4168 = vpop.permute.xlu0 %4167
    %v4169 = vsel %vm375, %v4166, 0
    %v4171 = vsel %vm375, %v4168, 0
    %4173 = vmatprep.subr.mxu0 0.0
    %4174 = vmatpush1.xpose.msra.mxu0 %v4171
    %4175 = vmatprep.subr.mxu0 0.0
    %4176 = vmatpush1.xpose.msra.mxu0 0.0
    %4177 = vmatprep.subr.mxu0 0.0
    %4178 = vmatpush1.xpose.msra.mxu0 0.0
    %4179 = vmatprep.subr.mxu0 0.0
    %4180 = vmatpush1.xpose.msra.mxu0 0.0
    %4181 = vmatprep.subr.mxu0 0.0
    %4182 = vmatpush1.xpose.msra.mxu0 0.0
    %4183 = vmatprep.subr.mxu0 0.0
    %4184 = vmatpush1.xpose.msra.mxu0 0.0
    %4185 = vmatprep.subr.mxu0 0.0
    %4186 = vmatpush1.xpose.msra.mxu0 0.0
    %4187 = vmatprep.subr.mxu0 0.0
    %4188 = vmatpush1.xpose.msra.mxu0 0.0
    %4189 = vmatprep.subr.mxu0 0.0
    %4190 = vmatpush1.xpose.msra.mxu0 0.0
    %4191 = vmatprep.subr.mxu0 0.0
    %4192 = vmatpush1.xpose.msra.mxu0 0.0
    %4193 = vmatprep.subr.mxu0 0.0
    %4194 = vmatpush1.xpose.msra.mxu0 0.0
    %4195 = vmatprep.subr.mxu0 0.0
    %4196 = vmatpush1.xpose.msra.mxu0 0.0
    %4197 = vmatprep.subr.mxu0 0.0
    %4198 = vmatpush1.xpose.msra.mxu0 0.0
    %4199 = vmatprep.subr.mxu0 0.0
    %4200 = vmatpush1.xpose.msra.mxu0 0.0
    %4201 = vmatprep.subr.mxu0 0.0
    %4202 = vmatpush1.xpose.msra.mxu0 0.0
    %4203 = vmatprep.subr.mxu0 0.0
    %4204 = vmatpush1.xpose.msra.mxu0 0.0
    %4205 = vmatprep.subr.mxu0 0.0
    %4206 = vmatpush1.xpose.msra.mxu0 0.0
    %4207 = vmatprep.subr.mxu0 0.0
    %4208 = vmatpush1.xpose.msra.mxu0 0.0
    %4209 = vmatprep.subr.mxu0 0.0
    %4210 = vmatpush1.xpose.msra.mxu0 0.0
    %4211 = vmatprep.subr.mxu0 0.0
    %4212 = vmatpush1.xpose.msra.mxu0 0.0
    %4213 = vmatprep.subr.mxu0 0.0
    %4214 = vmatpush1.xpose.msra.mxu0 0.0
    %4215 = vmatprep.subr.mxu0 0.0
    %4216 = vmatpush1.xpose.msra.mxu0 0.0
    %4217 = vmatprep.subr.mxu0 0.0
    %4218 = vmatpush1.xpose.msra.mxu0 0.0
    %4219 = vmatprep.subr.mxu0 0.0
    %4220 = vmatpush1.xpose.msra.mxu0 0.0
    %4221 = vmatprep.subr.mxu0 0.0
    %4222 = vmatpush1.xpose.msra.mxu0 0.0
    %4223 = vmatprep.subr.mxu0 0.0
    %4224 = vmatpush1.xpose.msra.mxu0 0.0
    %4225 = vmatprep.subr.mxu0 0.0
    %4226 = vmatpush1.xpose.msra.mxu0 0.0
    %4227 = vmatprep.subr.mxu0 0.0
    %4228 = vmatpush1.xpose.msra.mxu0 0.0
    %4229 = vmatprep.subr.mxu0 0.0
    %4230 = vmatpush1.xpose.msra.mxu0 0.0
    %4231 = vmatprep.subr.mxu0 0.0
    %4232 = vmatpush1.xpose.msra.mxu0 0.0
    %4233 = vmatprep.subr.mxu0 0.0
    %4234 = vmatpush1.xpose.msra.mxu0 0.0
    %4235 = vmatprep.subr.mxu0 0.0
    %4236 = vmatpush1.xpose.msra.mxu0 0.0
    %4237 = vmatprep.mubr.f32.mxu0 0.0
    %4238 = vmatmul.mubr.f32.gmra.mrb[0].mxu0 %v4169
    %v4239 = vpop.f32.mrb[0].mxu0
    %v4240 = vadd.f32 %v3496, %v4239
    %v4241 = vpop.f32.mrb[0].mxu0
    %4242 = vdwg.mxu0
    %4243 = vrot.lane.b32.xlu0 %v3359, 120
    %v4244 = vpop.permute.xlu0 %4243
    %4245 = vrot.lane.b32.xlu0 %v3476, 120
    %v4246 = vpop.permute.xlu0 %4245
    %v4247 = vsel %vm375, %v4244, 0
    %v4249 = vsel %vm375, %v4246, 0
    %4251 = vmatprep.subr.mxu0 0.0
    %4252 = vmatpush1.xpose.msra.mxu0 %v4249
    %4253 = vmatprep.subr.mxu0 0.0
    %4254 = vmatpush1.xpose.msra.mxu0 0.0
    %4255 = vmatprep.subr.mxu0 0.0
    %4256 = vmatpush1.xpose.msra.mxu0 0.0
    %4257 = vmatprep.subr.mxu0 0.0
    %4258 = vmatpush1.xpose.msra.mxu0 0.0
    %4259 = vmatprep.subr.mxu0 0.0
    %4260 = vmatpush1.xpose.msra.mxu0 0.0
    %4261 = vmatprep.subr.mxu0 0.0
    %4262 = vmatpush1.xpose.msra.mxu0 0.0
    %4263 = vmatprep.subr.mxu0 0.0
    %4264 = vmatpush1.xpose.msra.mxu0 0.0
    %4265 = vmatprep.subr.mxu0 0.0
    %4266 = vmatpush1.xpose.msra.mxu0 0.0
    %4267 = vmatprep.subr.mxu0 0.0
    %4268 = vmatpush1.xpose.msra.mxu0 0.0
    %4269 = vmatprep.subr.mxu0 0.0
    %4270 = vmatpush1.xpose.msra.mxu0 0.0
    %4271 = vmatprep.subr.mxu0 0.0
    %4272 = vmatpush1.xpose.msra.mxu0 0.0
    %4273 = vmatprep.subr.mxu0 0.0
    %4274 = vmatpush1.xpose.msra.mxu0 0.0
    %4275 = vmatprep.subr.mxu0 0.0
    %4276 = vmatpush1.xpose.msra.mxu0 0.0
    %4277 = vmatprep.subr.mxu0 0.0
    %4278 = vmatpush1.xpose.msra.mxu0 0.0
    %4279 = vmatprep.subr.mxu0 0.0
    %4280 = vmatpush1.xpose.msra.mxu0 0.0
    %4281 = vmatprep.subr.mxu0 0.0
    %4282 = vmatpush1.xpose.msra.mxu0 0.0
    %4283 = vmatprep.subr.mxu0 0.0
    %4284 = vmatpush1.xpose.msra.mxu0 0.0
    %4285 = vmatprep.subr.mxu0 0.0
    %4286 = vmatpush1.xpose.msra.mxu0 0.0
    %4287 = vmatprep.subr.mxu0 0.0
    %4288 = vmatpush1.xpose.msra.mxu0 0.0
    %4289 = vmatprep.subr.mxu0 0.0
    %4290 = vmatpush1.xpose.msra.mxu0 0.0
    %4291 = vmatprep.subr.mxu0 0.0
    %4292 = vmatpush1.xpose.msra.mxu0 0.0
    %4293 = vmatprep.subr.mxu0 0.0
    %4294 = vmatpush1.xpose.msra.mxu0 0.0
    %4295 = vmatprep.subr.mxu0 0.0
    %4296 = vmatpush1.xpose.msra.mxu0 0.0
    %4297 = vmatprep.subr.mxu0 0.0
    %4298 = vmatpush1.xpose.msra.mxu0 0.0
    %4299 = vmatprep.subr.mxu0 0.0
    %4300 = vmatpush1.xpose.msra.mxu0 0.0
    %4301 = vmatprep.subr.mxu0 0.0
    %4302 = vmatpush1.xpose.msra.mxu0 0.0
    %4303 = vmatprep.subr.mxu0 0.0
    %4304 = vmatpush1.xpose.msra.mxu0 0.0
    %4305 = vmatprep.subr.mxu0 0.0
    %4306 = vmatpush1.xpose.msra.mxu0 0.0
    %4307 = vmatprep.subr.mxu0 0.0
    %4308 = vmatpush1.xpose.msra.mxu0 0.0
    %4309 = vmatprep.subr.mxu0 0.0
    %4310 = vmatpush1.xpose.msra.mxu0 0.0
    %4311 = vmatprep.subr.mxu0 0.0
    %4312 = vmatpush1.xpose.msra.mxu0 0.0
    %4313 = vmatprep.subr.mxu0 0.0
    %4314 = vmatpush1.xpose.msra.mxu0 0.0
    %4315 = vmatprep.mubr.f32.mxu0 0.0
    %4316 = vmatmul.mubr.f32.gmra.mrb[0].mxu0 %v4247
    %v4317 = vpop.f32.mrb[0].mxu0
    %v4318 = vadd.f32 %v3500, %v4317
    %v4319 = vpop.f32.mrb[0].mxu0
    %4320 = vdwg.mxu0
    %4321 = vrot.lane.b32.xlu0 %v3364, 120
    %v4322 = vpop.permute.xlu0 %4321
    %4323 = vrot.lane.b32.xlu0 %v3481, 120
    %v4324 = vpop.permute.xlu0 %4323
    %v4325 = vsel %vm375, %v4322, 0
    %v4327 = vsel %vm375, %v4324, 0
    %4329 = vmatprep.subr.mxu0 0.0
    %4330 = vmatpush1.xpose.msra.mxu0 %v4327
    %4331 = vmatprep.subr.mxu0 0.0
    %4332 = vmatpush1.xpose.msra.mxu0 0.0
    %4333 = vmatprep.subr.mxu0 0.0
    %4334 = vmatpush1.xpose.msra.mxu0 0.0
    %4335 = vmatprep.subr.mxu0 0.0
    %4336 = vmatpush1.xpose.msra.mxu0 0.0
    %4337 = vmatprep.subr.mxu0 0.0
    %4338 = vmatpush1.xpose.msra.mxu0 0.0
    %4339 = vmatprep.subr.mxu0 0.0
    %4340 = vmatpush1.xpose.msra.mxu0 0.0
    %4341 = vmatprep.subr.mxu0 0.0
    %4342 = vmatpush1.xpose.msra.mxu0 0.0
    %4343 = vmatprep.subr.mxu0 0.0
    %4344 = vmatpush1.xpose.msra.mxu0 0.0
    %4345 = vmatprep.subr.mxu0 0.0
    %4346 = vmatpush1.xpose.msra.mxu0 0.0
    %4347 = vmatprep.subr.mxu0 0.0
    %4348 = vmatpush1.xpose.msra.mxu0 0.0
    %4349 = vmatprep.subr.mxu0 0.0
    %4350 = vmatpush1.xpose.msra.mxu0 0.0
    %4351 = vmatprep.subr.mxu0 0.0
    %4352 = vmatpush1.xpose.msra.mxu0 0.0
    %4353 = vmatprep.subr.mxu0 0.0
    %4354 = vmatpush1.xpose.msra.mxu0 0.0
    %4355 = vmatprep.subr.mxu0 0.0
    %4356 = vmatpush1.xpose.msra.mxu0 0.0
    %4357 = vmatprep.subr.mxu0 0.0
    %4358 = vmatpush1.xpose.msra.mxu0 0.0
    %4359 = vmatprep.subr.mxu0 0.0
    %4360 = vmatpush1.xpose.msra.mxu0 0.0
    %4361 = vmatprep.subr.mxu0 0.0
    %4362 = vmatpush1.xpose.msra.mxu0 0.0
    %4363 = vmatprep.subr.mxu0 0.0
    %4364 = vmatpush1.xpose.msra.mxu0 0.0
    %4365 = vmatprep.subr.mxu0 0.0
    %4366 = vmatpush1.xpose.msra.mxu0 0.0
    %4367 = vmatprep.subr.mxu0 0.0
    %4368 = vmatpush1.xpose.msra.mxu0 0.0
    %4369 = vmatprep.subr.mxu0 0.0
    %4370 = vmatpush1.xpose.msra.mxu0 0.0
    %4371 = vmatprep.subr.mxu0 0.0
    %4372 = vmatpush1.xpose.msra.mxu0 0.0
    %4373 = vmatprep.subr.mxu0 0.0
    %4374 = vmatpush1.xpose.msra.mxu0 0.0
    %4375 = vmatprep.subr.mxu0 0.0
    %4376 = vmatpush1.xpose.msra.mxu0 0.0
    %4377 = vmatprep.subr.mxu0 0.0
    %4378 = vmatpush1.xpose.msra.mxu0 0.0
    %4379 = vmatprep.subr.mxu0 0.0
    %4380 = vmatpush1.xpose.msra.mxu0 0.0
    %4381 = vmatprep.subr.mxu0 0.0
    %4382 = vmatpush1.xpose.msra.mxu0 0.0
    %4383 = vmatprep.subr.mxu0 0.0
    %4384 = vmatpush1.xpose.msra.mxu0 0.0
    %4385 = vmatprep.subr.mxu0 0.0
    %4386 = vmatpush1.xpose.msra.mxu0 0.0
    %4387 = vmatprep.subr.mxu0 0.0
    %4388 = vmatpush1.xpose.msra.mxu0 0.0
    %4389 = vmatprep.subr.mxu0 0.0
    %4390 = vmatpush1.xpose.msra.mxu0 0.0
    %4391 = vmatprep.subr.mxu0 0.0
    %4392 = vmatpush1.xpose.msra.mxu0 0.0
    %4393 = vmatprep.mubr.f32.mxu0 0.0
    %4394 = vmatmul.mubr.f32.gmra.mrb[0].mxu0 %v4325
    %v4395 = vpop.f32.mrb[0].mxu0
    %v4396 = vadd.f32 %v3504, %v4395
    %v4397 = vpop.f32.mrb[0].mxu0
    %4398 = vdwg.mxu0
    %4399 = vrot.lane.b32.xlu0 %v3369, 120
    %v4400 = vpop.permute.xlu0 %4399
    %4401 = vrot.lane.b32.xlu0 %v3486, 120
    %v4402 = vpop.permute.xlu0 %4401
    %v4403 = vsel %vm375, %v4400, 0
    %v4405 = vsel %vm375, %v4402, 0
    %4407 = vmatprep.subr.mxu0 0.0
    %4408 = vmatpush1.xpose.msra.mxu0 %v4405
    %4409 = vmatprep.subr.mxu0 0.0
    %4410 = vmatpush1.xpose.msra.mxu0 0.0
    %4411 = vmatprep.subr.mxu0 0.0
    %4412 = vmatpush1.xpose.msra.mxu0 0.0
    %4413 = vmatprep.subr.mxu0 0.0
    %4414 = vmatpush1.xpose.msra.mxu0 0.0
    %4415 = vmatprep.subr.mxu0 0.0
    %4416 = vmatpush1.xpose.msra.mxu0 0.0
    %4417 = vmatprep.subr.mxu0 0.0
    %4418 = vmatpush1.xpose.msra.mxu0 0.0
    %4419 = vmatprep.subr.mxu0 0.0
    %4420 = vmatpush1.xpose.msra.mxu0 0.0
    %4421 = vmatprep.subr.mxu0 0.0
    %4422 = vmatpush1.xpose.msra.mxu0 0.0
    %4423 = vmatprep.subr.mxu0 0.0
    %4424 = vmatpush1.xpose.msra.mxu0 0.0
    %4425 = vmatprep.subr.mxu0 0.0
    %4426 = vmatpush1.xpose.msra.mxu0 0.0
    %4427 = vmatprep.subr.mxu0 0.0
    %4428 = vmatpush1.xpose.msra.mxu0 0.0
    %4429 = vmatprep.subr.mxu0 0.0
    %4430 = vmatpush1.xpose.msra.mxu0 0.0
    %4431 = vmatprep.subr.mxu0 0.0
    %4432 = vmatpush1.xpose.msra.mxu0 0.0
    %4433 = vmatprep.subr.mxu0 0.0
    %4434 = vmatpush1.xpose.msra.mxu0 0.0
    %4435 = vmatprep.subr.mxu0 0.0
    %4436 = vmatpush1.xpose.msra.mxu0 0.0
    %4437 = vmatprep.subr.mxu0 0.0
    %4438 = vmatpush1.xpose.msra.mxu0 0.0
    %4439 = vmatprep.subr.mxu0 0.0
    %4440 = vmatpush1.xpose.msra.mxu0 0.0
    %4441 = vmatprep.subr.mxu0 0.0
    %4442 = vmatpush1.xpose.msra.mxu0 0.0
    %4443 = vmatprep.subr.mxu0 0.0
    %4444 = vmatpush1.xpose.msra.mxu0 0.0
    %4445 = vmatprep.subr.mxu0 0.0
    %4446 = vmatpush1.xpose.msra.mxu0 0.0
    %4447 = vmatprep.subr.mxu0 0.0
    %4448 = vmatpush1.xpose.msra.mxu0 0.0
    %4449 = vmatprep.subr.mxu0 0.0
    %4450 = vmatpush1.xpose.msra.mxu0 0.0
    %4451 = vmatprep.subr.mxu0 0.0
    %4452 = vmatpush1.xpose.msra.mxu0 0.0
    %4453 = vmatprep.subr.mxu0 0.0
    %4454 = vmatpush1.xpose.msra.mxu0 0.0
    %4455 = vmatprep.subr.mxu0 0.0
    %4456 = vmatpush1.xpose.msra.mxu0 0.0
    %4457 = vmatprep.subr.mxu0 0.0
    %4458 = vmatpush1.xpose.msra.mxu0 0.0
    %4459 = vmatprep.subr.mxu0 0.0
    %4460 = vmatpush1.xpose.msra.mxu0 0.0
    %4461 = vmatprep.subr.mxu0 0.0
    %4462 = vmatpush1.xpose.msra.mxu0 0.0
    %4463 = vmatprep.subr.mxu0 0.0
    %4464 = vmatpush1.xpose.msra.mxu0 0.0
    %4465 = vmatprep.subr.mxu0 0.0
    %4466 = vmatpush1.xpose.msra.mxu0 0.0
    %4467 = vmatprep.subr.mxu0 0.0
    %4468 = vmatpush1.xpose.msra.mxu0 0.0
    %4469 = vmatprep.subr.mxu0 0.0
    %4470 = vmatpush1.xpose.msra.mxu0 0.0
    %4471 = vmatprep.mubr.f32.mxu0 0.0
    %4472 = vmatmul.mubr.f32.gmra.mrb[0].mxu0 %v4403
    %v4473 = vpop.f32.mrb[0].mxu0
    %v4474 = vadd.f32 %v3508, %v4473
    %v4475 = vpop.f32.mrb[0].mxu0
    %4476 = vdwg.mxu0
    %v4477 = vsel %vm375, %v4240, -inf
    %4478 = vmax.xlane.f32.xlu0 %v4477
    %v4479 = vpop.xlane.xlu0 %4478
    %v4480 = vsel %vm375, %v4318, -inf
    %4481 = vmax.xlane.f32.xlu0 %v4480
    %v4482 = vpop.xlane.xlu0 %4481
    %v4483 = vsel %vm375, %v4396, -inf
    %4484 = vmax.xlane.f32.xlu0 %v4483
    %v4485 = vpop.xlane.xlu0 %4484
    %v4486 = vsel %vm375, %v4474, -inf
    %4487 = vmax.xlane.f32.xlu0 %v4486
    %v4488 = vpop.xlane.xlu0 %4487
    %v4489 = vsub.f32 %v4240, %v4479
    %v4490 = vsub.f32 %v4318, %v4482
    %v4491 = vsub.f32 %v4396, %v4485
    %v4492 = vsub.f32 %v4474, %v4488
    %v4493 = vmul.f32 %v4489, 1.442695
    %v4494 = vpow.pop %v4493
    %v4495 = vmul.f32 %v4490, 1.442695
    %v4496 = vpow.pop %v4495
    %v4497 = vmul.f32 %v4491, 1.442695
    %v4498 = vpow.pop %v4497
    %v4499 = vmul.f32 %v4492, 1.442695
    %v4500 = vpow.pop %v4499
    %v4501 = vsel %vm375, %v4494, 0.0
    %4502 = vadd.xlane.f32.xlu0 %v4501
    %v4503 = vpop.xlane.xlu0 %4502
    %v4504 = vsel %vm375, %v4496, 0.0
    %4505 = vadd.xlane.f32.xlu0 %v4504
    %v4506 = vpop.xlane.xlu0 %4505
    %v4507 = vsel %vm375, %v4498, 0.0
    %4508 = vadd.xlane.f32.xlu0 %v4507
    %v4509 = vpop.xlane.xlu0 %4508
    %v4510 = vsel %vm375, %v4500, 0.0
    %4511 = vadd.xlane.f32.xlu0 %v4510
    %v4512 = vpop.xlane.xlu0 %4511
    %v4513 = vrcp.pop %v4503
    %v4514 = vrcp.pop %v4506
    %v4515 = vrcp.pop %v4509
    %v4516 = vrcp.pop %v4512
    %v4517 = vmul.f32 %v4494, %v4513
    %v4518 = vmul.f32 %v4496, %v4514
    %v4519 = vmul.f32 %v4498, %v4515
    %v4520 = vmul.f32 %v4500, %v4516
    %4521 = vrot.lane.b32.xlu0 %v3471, 88
    %v4522 = vpop.permute.xlu0 %4521
    %v4525 = vsel %vm375, %v4517, 0
    %4527 = vmatprep.subr.mxu0 0.0
    %4528 = vmatpush1.msra.mxu0 %v4522
    %4529 = vmatprep.subr.mxu0 0.0
    %4530 = vmatpush1.msra.mxu0 0.0
    %4531 = vmatprep.subr.mxu0 0.0
    %4532 = vmatpush1.msra.mxu0 0.0
    %4533 = vmatprep.subr.mxu0 0.0
    %4534 = vmatpush1.msra.mxu0 0.0
    %4535 = vmatprep.subr.mxu0 0.0
    %4536 = vmatpush1.msra.mxu0 0.0
    %4537 = vmatprep.subr.mxu0 0.0
    %4538 = vmatpush1.msra.mxu0 0.0
    %4539 = vmatprep.subr.mxu0 0.0
    %4540 = vmatpush1.msra.mxu0 0.0
    %4541 = vmatprep.subr.mxu0 0.0
    %4542 = vmatpush1.msra.mxu0 0.0
    %4543 = vmatprep.subr.mxu0 0.0
    %4544 = vmatpush1.msra.mxu0 0.0
    %4545 = vmatprep.subr.mxu0 0.0
    %4546 = vmatpush1.msra.mxu0 0.0
    %4547 = vmatprep.subr.mxu0 0.0
    %4548 = vmatpush1.msra.mxu0 0.0
    %4549 = vmatprep.subr.mxu0 0.0
    %4550 = vmatpush1.msra.mxu0 0.0
    %4551 = vmatprep.subr.mxu0 0.0
    %4552 = vmatpush1.msra.mxu0 0.0
    %4553 = vmatprep.subr.mxu0 0.0
    %4554 = vmatpush1.msra.mxu0 0.0
    %4555 = vmatprep.subr.mxu0 0.0
    %4556 = vmatpush1.msra.mxu0 0.0
    %4557 = vmatprep.subr.mxu0 0.0
    %4558 = vmatpush1.msra.mxu0 0.0
    %4559 = vmatprep.subr.mxu0 0.0
    %4560 = vmatpush1.msra.mxu0 0.0
    %4561 = vmatprep.subr.mxu0 0.0
    %4562 = vmatpush1.msra.mxu0 0.0
    %4563 = vmatprep.subr.mxu0 0.0
    %4564 = vmatpush1.msra.mxu0 0.0
    %4565 = vmatprep.subr.mxu0 0.0
    %4566 = vmatpush1.msra.mxu0 0.0
    %4567 = vmatprep.subr.mxu0 0.0
    %4568 = vmatpush1.msra.mxu0 0.0
    %4569 = vmatprep.subr.mxu0 0.0
    %4570 = vmatpush1.msra.mxu0 0.0
    %4571 = vmatprep.subr.mxu0 0.0
    %4572 = vmatpush1.msra.mxu0 0.0
    %4573 = vmatprep.subr.mxu0 0.0
    %4574 = vmatpush1.msra.mxu0 0.0
    %4575 = vmatprep.subr.mxu0 0.0
    %4576 = vmatpush1.msra.mxu0 0.0
    %4577 = vmatprep.subr.mxu0 0.0
    %4578 = vmatpush1.msra.mxu0 0.0
    %4579 = vmatprep.subr.mxu0 0.0
    %4580 = vmatpush1.msra.mxu0 0.0
    %4581 = vmatprep.subr.mxu0 0.0
    %4582 = vmatpush1.msra.mxu0 0.0
    %4583 = vmatprep.subr.mxu0 0.0
    %4584 = vmatpush1.msra.mxu0 0.0
    %4585 = vmatprep.subr.mxu0 0.0
    %4586 = vmatpush1.msra.mxu0 0.0
    %4587 = vmatprep.subr.mxu0 0.0
    %4588 = vmatpush1.msra.mxu0 0.0
    %4589 = vmatprep.subr.mxu0 0.0
    %4590 = vmatpush1.msra.mxu0 0.0
    %4591 = vmatprep.mubr.f32.mxu0 0.0
    %4592 = vmatmul.mubr.f32.gmra.mrb[0].mxu0 %v4525
    %v4593 = vpop.f32.mrb[0].mxu0
    %v4594 = vadd.f32 0.0, %v4593
    %v4595 = vpop.f32.mrb[0].mxu0
    %4596 = vdwg.mxu0
    %4597 = vrot.lane.b32.xlu0 %v3476, 88
    %v4598 = vpop.permute.xlu0 %4597
    %v4601 = vsel %vm375, %v4518, 0
    %4603 = vmatprep.subr.mxu0 0.0
    %4604 = vmatpush1.msra.mxu0 %v4598
    %4605 = vmatprep.subr.mxu0 0.0
    %4606 = vmatpush1.msra.mxu0 0.0
    %4607 = vmatprep.subr.mxu0 0.0
    %4608 = vmatpush1.msra.mxu0 0.0
    %4609 = vmatprep.subr.mxu0 0.0
    %4610 = vmatpush1.msra.mxu0 0.0
    %4611 = vmatprep.subr.mxu0 0.0
    %4612 = vmatpush1.msra.mxu0 0.0
    %4613 = vmatprep.subr.mxu0 0.0
    %4614 = vmatpush1.msra.mxu0 0.0
    %4615 = vmatprep.subr.mxu0 0.0
    %4616 = vmatpush1.msra.mxu0 0.0
    %4617 = vmatprep.subr.mxu0 0.0
    %4618 = vmatpush1.msra.mxu0 0.0
    %4619 = vmatprep.subr.mxu0 0.0
    %4620 = vmatpush1.msra.mxu0 0.0
    %4621 = vmatprep.subr.mxu0 0.0
    %4622 = vmatpush1.msra.mxu0 0.0
    %4623 = vmatprep.subr.mxu0 0.0
    %4624 = vmatpush1.msra.mxu0 0.0
    %4625 = vmatprep.subr.mxu0 0.0
    %4626 = vmatpush1.msra.mxu0 0.0
    %4627 = vmatprep.subr.mxu0 0.0
    %4628 = vmatpush1.msra.mxu0 0.0
    %4629 = vmatprep.subr.mxu0 0.0
    %4630 = vmatpush1.msra.mxu0 0.0
    %4631 = vmatprep.subr.mxu0 0.0
    %4632 = vmatpush1.msra.mxu0 0.0
    %4633 = vmatprep.subr.mxu0 0.0
    %4634 = vmatpush1.msra.mxu0 0.0
    %4635 = vmatprep.subr.mxu0 0.0
    %4636 = vmatpush1.msra.mxu0 0.0
    %4637 = vmatprep.subr.mxu0 0.0
    %4638 = vmatpush1.msra.mxu0 0.0
    %4639 = vmatprep.subr.mxu0 0.0
    %4640 = vmatpush1.msra.mxu0 0.0
    %4641 = vmatprep.subr.mxu0 0.0
    %4642 = vmatpush1.msra.mxu0 0.0
    %4643 = vmatprep.subr.mxu0 0.0
    %4644 = vmatpush1.msra.mxu0 0.0
    %4645 = vmatprep.subr.mxu0 0.0
    %4646 = vmatpush1.msra.mxu0 0.0
    %4647 = vmatprep.subr.mxu0 0.0
    %4648 = vmatpush1.msra.mxu0 0.0
    %4649 = vmatprep.subr.mxu0 0.0
    %4650 = vmatpush1.msra.mxu0 0.0
    %4651 = vmatprep.subr.mxu0 0.0
    %4652 = vmatpush1.msra.mxu0 0.0
    %4653 = vmatprep.subr.mxu0 0.0
    %4654 = vmatpush1.msra.mxu0 0.0
    %4655 = vmatprep.subr.mxu0 0.0
    %4656 = vmatpush1.msra.mxu0 0.0
    %4657 = vmatprep.subr.mxu0 0.0
    %4658 = vmatpush1.msra.mxu0 0.0
    %4659 = vmatprep.subr.mxu0 0.0
    %4660 = vmatpush1.msra.mxu0 0.0
    %4661 = vmatprep.subr.mxu0 0.0
    %4662 = vmatpush1.msra.mxu0 0.0
    %4663 = vmatprep.subr.mxu0 0.0
    %4664 = vmatpush1.msra.mxu0 0.0
    %4665 = vmatprep.subr.mxu0 0.0
    %4666 = vmatpush1.msra.mxu0 0.0
    %4667 = vmatprep.mubr.f32.mxu0 0.0
    %4668 = vmatmul.mubr.f32.gmra.mrb[0].mxu0 %v4601
    %v4669 = vpop.f32.mrb[0].mxu0
    %v4670 = vadd.f32 0.0, %v4669
    %v4671 = vpop.f32.mrb[0].mxu0
    %4672 = vdwg.mxu0
    %4673 = vrot.lane.b32.xlu0 %v3481, 88
    %v4674 = vpop.permute.xlu0 %4673
    %v4677 = vsel %vm375, %v4519, 0
    %4679 = vmatprep.subr.mxu0 0.0
    %4680 = vmatpush1.msra.mxu0 %v4674
    %4681 = vmatprep.subr.mxu0 0.0
    %4682 = vmatpush1.msra.mxu0 0.0
    %4683 = vmatprep.subr.mxu0 0.0
    %4684 = vmatpush1.msra.mxu0 0.0
    %4685 = vmatprep.subr.mxu0 0.0
    %4686 = vmatpush1.msra.mxu0 0.0
    %4687 = vmatprep.subr.mxu0 0.0
    %4688 = vmatpush1.msra.mxu0 0.0
    %4689 = vmatprep.subr.mxu0 0.0
    %4690 = vmatpush1.msra.mxu0 0.0
    %4691 = vmatprep.subr.mxu0 0.0
    %4692 = vmatpush1.msra.mxu0 0.0
    %4693 = vmatprep.subr.mxu0 0.0
    %4694 = vmatpush1.msra.mxu0 0.0
    %4695 = vmatprep.subr.mxu0 0.0
    %4696 = vmatpush1.msra.mxu0 0.0
    %4697 = vmatprep.subr.mxu0 0.0
    %4698 = vmatpush1.msra.mxu0 0.0
    %4699 = vmatprep.subr.mxu0 0.0
    %4700 = vmatpush1.msra.mxu0 0.0
    %4701 = vmatprep.subr.mxu0 0.0
    %4702 = vmatpush1.msra.mxu0 0.0
    %4703 = vmatprep.subr.mxu0 0.0
    %4704 = vmatpush1.msra.mxu0 0.0
    %4705 = vmatprep.subr.mxu0 0.0
    %4706 = vmatpush1.msra.mxu0 0.0
    %4707 = vmatprep.subr.mxu0 0.0
    %4708 = vmatpush1.msra.mxu0 0.0
    %4709 = vmatprep.subr.mxu0 0.0
    %4710 = vmatpush1.msra.mxu0 0.0
    %4711 = vmatprep.subr.mxu0 0.0
    %4712 = vmatpush1.msra.mxu0 0.0
    %4713 = vmatprep.subr.mxu0 0.0
    %4714 = vmatpush1.msra.mxu0 0.0
    %4715 = vmatprep.subr.mxu0 0.0
    %4716 = vmatpush1.msra.mxu0 0.0
    %4717 = vmatprep.subr.mxu0 0.0
    %4718 = vmatpush1.msra.mxu0 0.0
    %4719 = vmatprep.subr.mxu0 0.0
    %4720 = vmatpush1.msra.mxu0 0.0
    %4721 = vmatprep.subr.mxu0 0.0
    %4722 = vmatpush1.msra.mxu0 0.0
    %4723 = vmatprep.subr.mxu0 0.0
    %4724 = vmatpush1.msra.mxu0 0.0
    %4725 = vmatprep.subr.mxu0 0.0
    %4726 = vmatpush1.msra.mxu0 0.0
    %4727 = vmatprep.subr.mxu0 0.0
    %4728 = vmatpush1.msra.mxu0 0.0
    %4729 = vmatprep.subr.mxu0 0.0
    %4730 = vmatpush1.msra.mxu0 0.0
    %4731 = vmatprep.subr.mxu0 0.0
    %4732 = vmatpush1.msra.mxu0 0.0
    %4733 = vmatprep.subr.mxu0 0.0
    %4734 = vmatpush1.msra.mxu0 0.0
    %4735 = vmatprep.subr.mxu0 0.0
    %4736 = vmatpush1.msra.mxu0 0.0
    %4737 = vmatprep.subr.mxu0 0.0
    %4738 = vmatpush1.msra.mxu0 0.0
    %4739 = vmatprep.subr.mxu0 0.0
    %4740 = vmatpush1.msra.mxu0 0.0
    %4741 = vmatprep.subr.mxu0 0.0
    %4742 = vmatpush1.msra.mxu0 0.0
    %4743 = vmatprep.mubr.f32.mxu0 0.0
    %4744 = vmatmul.mubr.f32.gmra.mrb[0].mxu0 %v4677
    %v4745 = vpop.f32.mrb[0].mxu0
    %v4746 = vadd.f32 0.0, %v4745
    %v4747 = vpop.f32.mrb[0].mxu0
    %4748 = vdwg.mxu0
    %4749 = vrot.lane.b32.xlu0 %v3486, 88
    %v4750 = vpop.permute.xlu0 %4749
    %v4753 = vsel %vm375, %v4520, 0
    %4755 = vmatprep.subr.mxu0 0.0
    %4756 = vmatpush1.msra.mxu0 %v4750
    %4757 = vmatprep.subr.mxu0 0.0
    %4758 = vmatpush1.msra.mxu0 0.0
    %4759 = vmatprep.subr.mxu0 0.0
    %4760 = vmatpush1.msra.mxu0 0.0
    %4761 = vmatprep.subr.mxu0 0.0
    %4762 = vmatpush1.msra.mxu0 0.0
    %4763 = vmatprep.subr.mxu0 0.0
    %4764 = vmatpush1.msra.mxu0 0.0
    %4765 = vmatprep.subr.mxu0 0.0
    %4766 = vmatpush1.msra.mxu0 0.0
    %4767 = vmatprep.subr.mxu0 0.0
    %4768 = vmatpush1.msra.mxu0 0.0
    %4769 = vmatprep.subr.mxu0 0.0
    %4770 = vmatpush1.msra.mxu0 0.0
    %4771 = vmatprep.subr.mxu0 0.0
    %4772 = vmatpush1.msra.mxu0 0.0
    %4773 = vmatprep.subr.mxu0 0.0
    %4774 = vmatpush1.msra.mxu0 0.0
    %4775 = vmatprep.subr.mxu0 0.0
    %4776 = vmatpush1.msra.mxu0 0.0
    %4777 = vmatprep.subr.mxu0 0.0
    %4778 = vmatpush1.msra.mxu0 0.0
    %4779 = vmatprep.subr.mxu0 0.0
    %4780 = vmatpush1.msra.mxu0 0.0
    %4781 = vmatprep.subr.mxu0 0.0
    %4782 = vmatpush1.msra.mxu0 0.0
    %4783 = vmatprep.subr.mxu0 0.0
    %4784 = vmatpush1.msra.mxu0 0.0
    %4785 = vmatprep.subr.mxu0 0.0
    %4786 = vmatpush1.msra.mxu0 0.0
    %4787 = vmatprep.subr.mxu0 0.0
    %4788 = vmatpush1.msra.mxu0 0.0
    %4789 = vmatprep.subr.mxu0 0.0
    %4790 = vmatpush1.msra.mxu0 0.0
    %4791 = vmatprep.subr.mxu0 0.0
    %4792 = vmatpush1.msra.mxu0 0.0
    %4793 = vmatprep.subr.mxu0 0.0
    %4794 = vmatpush1.msra.mxu0 0.0
    %4795 = vmatprep.subr.mxu0 0.0
    %4796 = vmatpush1.msra.mxu0 0.0
    %4797 = vmatprep.subr.mxu0 0.0
    %4798 = vmatpush1.msra.mxu0 0.0
    %4799 = vmatprep.subr.mxu0 0.0
    %4800 = vmatpush1.msra.mxu0 0.0
    %4801 = vmatprep.subr.mxu0 0.0
    %4802 = vmatpush1.msra.mxu0 0.0
    %4803 = vmatprep.subr.mxu0 0.0
    %4804 = vmatpush1.msra.mxu0 0.0
    %4805 = vmatprep.subr.mxu0 0.0
    %4806 = vmatpush1.msra.mxu0 0.0
    %4807 = vmatprep.subr.mxu0 0.0
    %4808 = vmatpush1.msra.mxu0 0.0
    %4809 = vmatprep.subr.mxu0 0.0
    %4810 = vmatpush1.msra.mxu0 0.0
    %4811 = vmatprep.subr.mxu0 0.0
    %4812 = vmatpush1.msra.mxu0 0.0
    %4813 = vmatprep.subr.mxu0 0.0
    %4814 = vmatpush1.msra.mxu0 0.0
    %4815 = vmatprep.subr.mxu0 0.0
    %4816 = vmatpush1.msra.mxu0 0.0
    %4817 = vmatprep.subr.mxu0 0.0
    %4818 = vmatpush1.msra.mxu0 0.0
    %4819 = vmatprep.mubr.f32.mxu0 0.0
    %4820 = vmatmul.mubr.f32.gmra.mrb[0].mxu0 %v4753
    %v4821 = vpop.f32.mrb[0].mxu0
    %v4822 = vadd.f32 0.0, %v4821
    %v4823 = vpop.f32.mrb[0].mxu0
    %4824 = vdwg.mxu0
    %4825 = vrot.lane.b32.xlu0 %v3354, 112
    %v4826 = vpop.permute.xlu0 %4825
    %4827 = vrot.lane.b32.xlu0 %v3471, 112
    %v4828 = vpop.permute.xlu0 %4827
    %v4829 = vsel %vm375, %v4826, 0
    %v4831 = vsel %vm375, %v4828, 0
    %4833 = vmatprep.subr.mxu0 0.0
    %4834 = vmatpush1.xpose.msra.mxu0 %v4831
    %4835 = vmatprep.subr.mxu0 0.0
    %4836 = vmatpush1.xpose.msra.mxu0 0.0
    %4837 = vmatprep.subr.mxu0 0.0
    %4838 = vmatpush1.xpose.msra.mxu0 0.0
    %4839 = vmatprep.subr.mxu0 0.0
    %4840 = vmatpush1.xpose.msra.mxu0 0.0
    %4841 = vmatprep.subr.mxu0 0.0
    %4842 = vmatpush1.xpose.msra.mxu0 0.0
    %4843 = vmatprep.subr.mxu0 0.0
    %4844 = vmatpush1.xpose.msra.mxu0 0.0
    %4845 = vmatprep.subr.mxu0 0.0
    %4846 = vmatpush1.xpose.msra.mxu0 0.0
    %4847 = vmatprep.subr.mxu0 0.0
    %4848 = vmatpush1.xpose.msra.mxu0 0.0
    %4849 = vmatprep.subr.mxu0 0.0
    %4850 = vmatpush1.xpose.msra.mxu0 0.0
    %4851 = vmatprep.subr.mxu0 0.0
    %4852 = vmatpush1.xpose.msra.mxu0 0.0
    %4853 = vmatprep.subr.mxu0 0.0
    %4854 = vmatpush1.xpose.msra.mxu0 0.0
    %4855 = vmatprep.subr.mxu0 0.0
    %4856 = vmatpush1.xpose.msra.mxu0 0.0
    %4857 = vmatprep.subr.mxu0 0.0
    %4858 = vmatpush1.xpose.msra.mxu0 0.0
    %4859 = vmatprep.subr.mxu0 0.0
    %4860 = vmatpush1.xpose.msra.mxu0 0.0
    %4861 = vmatprep.subr.mxu0 0.0
    %4862 = vmatpush1.xpose.msra.mxu0 0.0
    %4863 = vmatprep.subr.mxu0 0.0
    %4864 = vmatpush1.xpose.msra.mxu0 0.0
    %4865 = vmatprep.subr.mxu0 0.0
    %4866 = vmatpush1.xpose.msra.mxu0 0.0
    %4867 = vmatprep.subr.mxu0 0.0
    %4868 = vmatpush1.xpose.msra.mxu0 0.0
    %4869 = vmatprep.subr.mxu0 0.0
    %4870 = vmatpush1.xpose.msra.mxu0 0.0
    %4871 = vmatprep.subr.mxu0 0.0
    %4872 = vmatpush1.xpose.msra.mxu0 0.0
    %4873 = vmatprep.subr.mxu0 0.0
    %4874 = vmatpush1.xpose.msra.mxu0 0.0
    %4875 = vmatprep.subr.mxu0 0.0
    %4876 = vmatpush1.xpose.msra.mxu0 0.0
    %4877 = vmatprep.subr.mxu0 0.0
    %4878 = vmatpush1.xpose.msra.mxu0 0.0
    %4879 = vmatprep.subr.mxu0 0.0
    %4880 = vmatpush1.xpose.msra.mxu0 0.0
    %4881 = vmatprep.subr.mxu0 0.0
    %4882 = vmatpush1.xpose.msra.mxu0 0.0
    %4883 = vmatprep.subr.mxu0 0.0
    %4884 = vmatpush1.xpose.msra.mxu0 0.0
    %4885 = vmatprep.subr.mxu0 0.0
    %4886 = vmatpush1.xpose.msra.mxu0 0.0
    %4887 = vmatprep.subr.mxu0 0.0
    %4888 = vmatpush1.xpose.msra.mxu0 0.0
    %4889 = vmatprep.subr.mxu0 0.0
    %4890 = vmatpush1.xpose.msra.mxu0 0.0
    %4891 = vmatprep.subr.mxu0 0.0
    %4892 = vmatpush1.xpose.msra.mxu0 0.0
    %4893 = vmatprep.subr.mxu0 0.0
    %4894 = vmatpush1.xpose.msra.mxu0 0.0
    %4895 = vmatprep.subr.mxu0 0.0
    %4896 = vmatpush1.xpose.msra.mxu0 0.0
    %4897 = vmatprep.mubr.f32.mxu0 0.0
    %4898 = vmatmul.mubr.f32.gmra.mrb[0].mxu0 %v4829
    %v4899 = vpop.f32.mrb[0].mxu0
    %v4900 = vadd.f32 %v3496, %v4899
    %v4901 = vpop.f32.mrb[0].mxu0
    %4902 = vdwg.mxu0
    %4903 = vrot.lane.b32.xlu0 %v3359, 112
    %v4904 = vpop.permute.xlu0 %4903
    %4905 = vrot.lane.b32.xlu0 %v3476, 112
    %v4906 = vpop.permute.xlu0 %4905
    %v4907 = vsel %vm375, %v4904, 0
    %v4909 = vsel %vm375, %v4906, 0
    %4911 = vmatprep.subr.mxu0 0.0
    %4912 = vmatpush1.xpose.msra.mxu0 %v4909
    %4913 = vmatprep.subr.mxu0 0.0
    %4914 = vmatpush1.xpose.msra.mxu0 0.0
    %4915 = vmatprep.subr.mxu0 0.0
    %4916 = vmatpush1.xpose.msra.mxu0 0.0
    %4917 = vmatprep.subr.mxu0 0.0
    %4918 = vmatpush1.xpose.msra.mxu0 0.0
    %4919 = vmatprep.subr.mxu0 0.0
    %4920 = vmatpush1.xpose.msra.mxu0 0.0
    %4921 = vmatprep.subr.mxu0 0.0
    %4922 = vmatpush1.xpose.msra.mxu0 0.0
    %4923 = vmatprep.subr.mxu0 0.0
    %4924 = vmatpush1.xpose.msra.mxu0 0.0
    %4925 = vmatprep.subr.mxu0 0.0
    %4926 = vmatpush1.xpose.msra.mxu0 0.0
    %4927 = vmatprep.subr.mxu0 0.0
    %4928 = vmatpush1.xpose.msra.mxu0 0.0
    %4929 = vmatprep.subr.mxu0 0.0
    %4930 = vmatpush1.xpose.msra.mxu0 0.0
    %4931 = vmatprep.subr.mxu0 0.0
    %4932 = vmatpush1.xpose.msra.mxu0 0.0
    %4933 = vmatprep.subr.mxu0 0.0
    %4934 = vmatpush1.xpose.msra.mxu0 0.0
    %4935 = vmatprep.subr.mxu0 0.0
    %4936 = vmatpush1.xpose.msra.mxu0 0.0
    %4937 = vmatprep.subr.mxu0 0.0
    %4938 = vmatpush1.xpose.msra.mxu0 0.0
    %4939 = vmatprep.subr.mxu0 0.0
    %4940 = vmatpush1.xpose.msra.mxu0 0.0
    %4941 = vmatprep.subr.mxu0 0.0
    %4942 = vmatpush1.xpose.msra.mxu0 0.0
    %4943 = vmatprep.subr.mxu0 0.0
    %4944 = vmatpush1.xpose.msra.mxu0 0.0
    %4945 = vmatprep.subr.mxu0 0.0
    %4946 = vmatpush1.xpose.msra.mxu0 0.0
    %4947 = vmatprep.subr.mxu0 0.0
    %4948 = vmatpush1.xpose.msra.mxu0 0.0
    %4949 = vmatprep.subr.mxu0 0.0
    %4950 = vmatpush1.xpose.msra.mxu0 0.0
    %4951 = vmatprep.subr.mxu0 0.0
    %4952 = vmatpush1.xpose.msra.mxu0 0.0
    %4953 = vmatprep.subr.mxu0 0.0
    %4954 = vmatpush1.xpose.msra.mxu0 0.0
    %4955 = vmatprep.subr.mxu0 0.0
    %4956 = vmatpush1.xpose.msra.mxu0 0.0
    %4957 = vmatprep.subr.mxu0 0.0
    %4958 = vmatpush1.xpose.msra.mxu0 0.0
    %4959 = vmatprep.subr.mxu0 0.0
    %4960 = vmatpush1.xpose.msra.mxu0 0.0
    %4961 = vmatprep.subr.mxu0 0.0
    %4962 = vmatpush1.xpose.msra.mxu0 0.0
    %4963 = vmatprep.subr.mxu0 0.0
    %4964 = vmatpush1.xpose.msra.mxu0 0.0
    %4965 = vmatprep.subr.mxu0 0.0
    %4966 = vmatpush1.xpose.msra.mxu0 0.0
    %4967 = vmatprep.subr.mxu0 0.0
    %4968 = vmatpush1.xpose.msra.mxu0 0.0
    %4969 = vmatprep.subr.mxu0 0.0
    %4970 = vmatpush1.xpose.msra.mxu0 0.0
    %4971 = vmatprep.subr.mxu0 0.0
    %4972 = vmatpush1.xpose.msra.mxu0 0.0
    %4973 = vmatprep.subr.mxu0 0.0
    %4974 = vmatpush1.xpose.msra.mxu0 0.0
    %4975 = vmatprep.mubr.f32.mxu0 0.0
    %4976 = vmatmul.mubr.f32.gmra.mrb[0].mxu0 %v4907
    %v4977 = vpop.f32.mrb[0].mxu0
    %v4978 = vadd.f32 %v3500, %v4977
    %v4979 = vpop.f32.mrb[0].mxu0
    %4980 = vdwg.mxu0
    %4981 = vrot.lane.b32.xlu0 %v3364, 112
    %v4982 = vpop.permute.xlu0 %4981
    %4983 = vrot.lane.b32.xlu0 %v3481, 112
    %v4984 = vpop.permute.xlu0 %4983
    %v4985 = vsel %vm375, %v4982, 0
    %v4987 = vsel %vm375, %v4984, 0
    %4989 = vmatprep.subr.mxu0 0.0
    %4990 = vmatpush1.xpose.msra.mxu0 %v4987
    %4991 = vmatprep.subr.mxu0 0.0
    %4992 = vmatpush1.xpose.msra.mxu0 0.0
    %4993 = vmatprep.subr.mxu0 0.0
    %4994 = vmatpush1.xpose.msra.mxu0 0.0
    %4995 = vmatprep.subr.mxu0 0.0
    %4996 = vmatpush1.xpose.msra.mxu0 0.0
    %4997 = vmatprep.subr.mxu0 0.0
    %4998 = vmatpush1.xpose.msra.mxu0 0.0
    %4999 = vmatprep.subr.mxu0 0.0
    %5000 = vmatpush1.xpose.msra.mxu0 0.0
    %5001 = vmatprep.subr.mxu0 0.0
    %5002 = vmatpush1.xpose.msra.mxu0 0.0
    %5003 = vmatprep.subr.mxu0 0.0
    %5004 = vmatpush1.xpose.msra.mxu0 0.0
    %5005 = vmatprep.subr.mxu0 0.0
    %5006 = vmatpush1.xpose.msra.mxu0 0.0
    %5007 = vmatprep.subr.mxu0 0.0
    %5008 = vmatpush1.xpose.msra.mxu0 0.0
    %5009 = vmatprep.subr.mxu0 0.0
    %5010 = vmatpush1.xpose.msra.mxu0 0.0
    %5011 = vmatprep.subr.mxu0 0.0
    %5012 = vmatpush1.xpose.msra.mxu0 0.0
    %5013 = vmatprep.subr.mxu0 0.0
    %5014 = vmatpush1.xpose.msra.mxu0 0.0
    %5015 = vmatprep.subr.mxu0 0.0
    %5016 = vmatpush1.xpose.msra.mxu0 0.0
    %5017 = vmatprep.subr.mxu0 0.0
    %5018 = vmatpush1.xpose.msra.mxu0 0.0
    %5019 = vmatprep.subr.mxu0 0.0
    %5020 = vmatpush1.xpose.msra.mxu0 0.0
    %5021 = vmatprep.subr.mxu0 0.0
    %5022 = vmatpush1.xpose.msra.mxu0 0.0
    %5023 = vmatprep.subr.mxu0 0.0
    %5024 = vmatpush1.xpose.msra.mxu0 0.0
    %5025 = vmatprep.subr.mxu0 0.0
    %5026 = vmatpush1.xpose.msra.mxu0 0.0
    %5027 = vmatprep.subr.mxu0 0.0
    %5028 = vmatpush1.xpose.msra.mxu0 0.0
    %5029 = vmatprep.subr.mxu0 0.0
    %5030 = vmatpush1.xpose.msra.mxu0 0.0
    %5031 = vmatprep.subr.mxu0 0.0
    %5032 = vmatpush1.xpose.msra.mxu0 0.0
    %5033 = vmatprep.subr.mxu0 0.0
    %5034 = vmatpush1.xpose.msra.mxu0 0.0
    %5035 = vmatprep.subr.mxu0 0.0
    %5036 = vmatpush1.xpose.msra.mxu0 0.0
    %5037 = vmatprep.subr.mxu0 0.0
    %5038 = vmatpush1.xpose.msra.mxu0 0.0
    %5039 = vmatprep.subr.mxu0 0.0
    %5040 = vmatpush1.xpose.msra.mxu0 0.0
    %5041 = vmatprep.subr.mxu0 0.0
    %5042 = vmatpush1.xpose.msra.mxu0 0.0
    %5043 = vmatprep.subr.mxu0 0.0
    %5044 = vmatpush1.xpose.msra.mxu0 0.0
    %5045 = vmatprep.subr.mxu0 0.0
    %5046 = vmatpush1.xpose.msra.mxu0 0.0
    %5047 = vmatprep.subr.mxu0 0.0
    %5048 = vmatpush1.xpose.msra.mxu0 0.0
    %5049 = vmatprep.subr.mxu0 0.0
    %5050 = vmatpush1.xpose.msra.mxu0 0.0
    %5051 = vmatprep.subr.mxu0 0.0
    %5052 = vmatpush1.xpose.msra.mxu0 0.0
    %5053 = vmatprep.mubr.f32.mxu0 0.0
    %5054 = vmatmul.mubr.f32.gmra.mrb[0].mxu0 %v4985
    %v5055 = vpop.f32.mrb[0].mxu0
    %v5056 = vadd.f32 %v3504, %v5055
    %v5057 = vpop.f32.mrb[0].mxu0
    %5058 = vdwg.mxu0
    %5059 = vrot.lane.b32.xlu0 %v3369, 112
    %v5060 = vpop.permute.xlu0 %5059
    %5061 = vrot.lane.b32.xlu0 %v3486, 112
    %v5062 = vpop.permute.xlu0 %5061
    %v5063 = vsel %vm375, %v5060, 0
    %v5065 = vsel %vm375, %v5062, 0
    %5067 = vmatprep.subr.mxu0 0.0
    %5068 = vmatpush1.xpose.msra.mxu0 %v5065
    %5069 = vmatprep.subr.mxu0 0.0
    %5070 = vmatpush1.xpose.msra.mxu0 0.0
    %5071 = vmatprep.subr.mxu0 0.0
    %5072 = vmatpush1.xpose.msra.mxu0 0.0
    %5073 = vmatprep.subr.mxu0 0.0
    %5074 = vmatpush1.xpose.msra.mxu0 0.0
    %5075 = vmatprep.subr.mxu0 0.0
    %5076 = vmatpush1.xpose.msra.mxu0 0.0
    %5077 = vmatprep.subr.mxu0 0.0
    %5078 = vmatpush1.xpose.msra.mxu0 0.0
    %5079 = vmatprep.subr.mxu0 0.0
    %5080 = vmatpush1.xpose.msra.mxu0 0.0
    %5081 = vmatprep.subr.mxu0 0.0
    %5082 = vmatpush1.xpose.msra.mxu0 0.0
    %5083 = vmatprep.subr.mxu0 0.0
    %5084 = vmatpush1.xpose.msra.mxu0 0.0
    %5085 = vmatprep.subr.mxu0 0.0
    %5086 = vmatpush1.xpose.msra.mxu0 0.0
    %5087 = vmatprep.subr.mxu0 0.0
    %5088 = vmatpush1.xpose.msra.mxu0 0.0
    %5089 = vmatprep.subr.mxu0 0.0
    %5090 = vmatpush1.xpose.msra.mxu0 0.0
    %5091 = vmatprep.subr.mxu0 0.0
    %5092 = vmatpush1.xpose.msra.mxu0 0.0
    %5093 = vmatprep.subr.mxu0 0.0
    %5094 = vmatpush1.xpose.msra.mxu0 0.0
    %5095 = vmatprep.subr.mxu0 0.0
    %5096 = vmatpush1.xpose.msra.mxu0 0.0
    %5097 = vmatprep.subr.mxu0 0.0
    %5098 = vmatpush1.xpose.msra.mxu0 0.0
    %5099 = vmatprep.subr.mxu0 0.0
    %5100 = vmatpush1.xpose.msra.mxu0 0.0
    %5101 = vmatprep.subr.mxu0 0.0
    %5102 = vmatpush1.xpose.msra.mxu0 0.0
    %5103 = vmatprep.subr.mxu0 0.0
    %5104 = vmatpush1.xpose.msra.mxu0 0.0
    %5105 = vmatprep.subr.mxu0 0.0
    %5106 = vmatpush1.xpose.msra.mxu0 0.0
    %5107 = vmatprep.subr.mxu0 0.0
    %5108 = vmatpush1.xpose.msra.mxu0 0.0
    %5109 = vmatprep.subr.mxu0 0.0
    %5110 = vmatpush1.xpose.msra.mxu0 0.0
    %5111 = vmatprep.subr.mxu0 0.0
    %5112 = vmatpush1.xpose.msra.mxu0 0.0
    %5113 = vmatprep.subr.mxu0 0.0
    %5114 = vmatpush1.xpose.msra.mxu0 0.0
    %5115 = vmatprep.subr.mxu0 0.0
    %5116 = vmatpush1.xpose.msra.mxu0 0.0
    %5117 = vmatprep.subr.mxu0 0.0
    %5118 = vmatpush1.xpose.msra.mxu0 0.0
    %5119 = vmatprep.subr.mxu0 0.0
    %5120 = vmatpush1.xpose.msra.mxu0 0.0
    %5121 = vmatprep.subr.mxu0 0.0
    %5122 = vmatpush1.xpose.msra.mxu0 0.0
    %5123 = vmatprep.subr.mxu0 0.0
    %5124 = vmatpush1.xpose.msra.mxu0 0.0
    %5125 = vmatprep.subr.mxu0 0.0
    %5126 = vmatpush1.xpose.msra.mxu0 0.0
    %5127 = vmatprep.subr.mxu0 0.0
    %5128 = vmatpush1.xpose.msra.mxu0 0.0
    %5129 = vmatprep.subr.mxu0 0.0
    %5130 = vmatpush1.xpose.msra.mxu0 0.0
    %5131 = vmatprep.mubr.f32.mxu0 0.0
    %5132 = vmatmul.mubr.f32.gmra.mrb[0].mxu0 %v5063
    %v5133 = vpop.f32.mrb[0].mxu0
    %v5134 = vadd.f32 %v3508, %v5133
    %v5135 = vpop.f32.mrb[0].mxu0
    %5136 = vdwg.mxu0
    %v5137 = vsel %vm375, %v4900, -inf
    %5138 = vmax.xlane.f32.xlu0 %v5137
    %v5139 = vpop.xlane.xlu0 %5138
    %v5140 = vsel %vm375, %v4978, -inf
    %5141 = vmax.xlane.f32.xlu0 %v5140
    %v5142 = vpop.xlane.xlu0 %5141
    %v5143 = vsel %vm375, %v5056, -inf
    %5144 = vmax.xlane.f32.xlu0 %v5143
    %v5145 = vpop.xlane.xlu0 %5144
    %v5146 = vsel %vm375, %v5134, -inf
    %5147 = vmax.xlane.f32.xlu0 %v5146
    %v5148 = vpop.xlane.xlu0 %5147
    %v5149 = vsub.f32 %v4900, %v5139
    %v5150 = vsub.f32 %v4978, %v5142
    %v5151 = vsub.f32 %v5056, %v5145
    %v5152 = vsub.f32 %v5134, %v5148
    %v5153 = vmul.f32 %v5149, 1.442695
    %v5154 = vpow.pop %v5153
    %v5155 = vmul.f32 %v5150, 1.442695
    %v5156 = vpow.pop %v5155
    %v5157 = vmul.f32 %v5151, 1.442695
    %v5158 = vpow.pop %v5157
    %v5159 = vmul.f32 %v5152, 1.442695
    %v5160 = vpow.pop %v5159
    %v5161 = vsel %vm375, %v5154, 0.0
    %5162 = vadd.xlane.f32.xlu0 %v5161
    %v5163 = vpop.xlane.xlu0 %5162
    %v5164 = vsel %vm375, %v5156, 0.0
    %5165 = vadd.xlane.f32.xlu0 %v5164
    %v5166 = vpop.xlane.xlu0 %5165
    %v5167 = vsel %vm375, %v5158, 0.0
    %5168 = vadd.xlane.f32.xlu0 %v5167
    %v5169 = vpop.xlane.xlu0 %5168
    %v5170 = vsel %vm375, %v5160, 0.0
    %5171 = vadd.xlane.f32.xlu0 %v5170
    %v5172 = vpop.xlane.xlu0 %5171
    %v5173 = vrcp.pop %v5163
    %v5174 = vrcp.pop %v5166
    %v5175 = vrcp.pop %v5169
    %v5176 = vrcp.pop %v5172
    %v5177 = vmul.f32 %v5154, %v5173
    %v5178 = vmul.f32 %v5156, %v5174
    %v5179 = vmul.f32 %v5158, %v5175
    %v5180 = vmul.f32 %v5160, %v5176
    %5181 = vrot.lane.b32.xlu0 %v3471, 80
    %v5182 = vpop.permute.xlu0 %5181
    %v5185 = vsel %vm375, %v5177, 0
    %5187 = vmatprep.subr.mxu0 0.0
    %5188 = vmatpush1.msra.mxu0 %v5182
    %5189 = vmatprep.subr.mxu0 0.0
    %5190 = vmatpush1.msra.mxu0 0.0
    %5191 = vmatprep.subr.mxu0 0.0
    %5192 = vmatpush1.msra.mxu0 0.0
    %5193 = vmatprep.subr.mxu0 0.0
    %5194 = vmatpush1.msra.mxu0 0.0
    %5195 = vmatprep.subr.mxu0 0.0
    %5196 = vmatpush1.msra.mxu0 0.0
    %5197 = vmatprep.subr.mxu0 0.0
    %5198 = vmatpush1.msra.mxu0 0.0
    %5199 = vmatprep.subr.mxu0 0.0
    %5200 = vmatpush1.msra.mxu0 0.0
    %5201 = vmatprep.subr.mxu0 0.0
    %5202 = vmatpush1.msra.mxu0 0.0
    %5203 = vmatprep.subr.mxu0 0.0
    %5204 = vmatpush1.msra.mxu0 0.0
    %5205 = vmatprep.subr.mxu0 0.0
    %5206 = vmatpush1.msra.mxu0 0.0
    %5207 = vmatprep.subr.mxu0 0.0
    %5208 = vmatpush1.msra.mxu0 0.0
    %5209 = vmatprep.subr.mxu0 0.0
    %5210 = vmatpush1.msra.mxu0 0.0
    %5211 = vmatprep.subr.mxu0 0.0
    %5212 = vmatpush1.msra.mxu0 0.0
    %5213 = vmatprep.subr.mxu0 0.0
    %5214 = vmatpush1.msra.mxu0 0.0
    %5215 = vmatprep.subr.mxu0 0.0
    %5216 = vmatpush1.msra.mxu0 0.0
    %5217 = vmatprep.subr.mxu0 0.0
    %5218 = vmatpush1.msra.mxu0 0.0
    %5219 = vmatprep.subr.mxu0 0.0
    %5220 = vmatpush1.msra.mxu0 0.0
    %5221 = vmatprep.subr.mxu0 0.0
    %5222 = vmatpush1.msra.mxu0 0.0
    %5223 = vmatprep.subr.mxu0 0.0
    %5224 = vmatpush1.msra.mxu0 0.0
    %5225 = vmatprep.subr.mxu0 0.0
    %5226 = vmatpush1.msra.mxu0 0.0
    %5227 = vmatprep.subr.mxu0 0.0
    %5228 = vmatpush1.msra.mxu0 0.0
    %5229 = vmatprep.subr.mxu0 0.0
    %5230 = vmatpush1.msra.mxu0 0.0
    %5231 = vmatprep.subr.mxu0 0.0
    %5232 = vmatpush1.msra.mxu0 0.0
    %5233 = vmatprep.subr.mxu0 0.0
    %5234 = vmatpush1.msra.mxu0 0.0
    %5235 = vmatprep.subr.mxu0 0.0
    %5236 = vmatpush1.msra.mxu0 0.0
    %5237 = vmatprep.subr.mxu0 0.0
    %5238 = vmatpush1.msra.mxu0 0.0
    %5239 = vmatprep.subr.mxu0 0.0
    %5240 = vmatpush1.msra.mxu0 0.0
    %5241 = vmatprep.subr.mxu0 0.0
    %5242 = vmatpush1.msra.mxu0 0.0
    %5243 = vmatprep.subr.mxu0 0.0
    %5244 = vmatpush1.msra.mxu0 0.0
    %5245 = vmatprep.subr.mxu0 0.0
    %5246 = vmatpush1.msra.mxu0 0.0
    %5247 = vmatprep.subr.mxu0 0.0
    %5248 = vmatpush1.msra.mxu0 0.0
    %5249 = vmatprep.subr.mxu0 0.0
    %5250 = vmatpush1.msra.mxu0 0.0
    %5251 = vmatprep.mubr.f32.mxu0 0.0
    %5252 = vmatmul.mubr.f32.gmra.mrb[0].mxu0 %v5185
    %v5253 = vpop.f32.mrb[0].mxu0
    %v5254 = vadd.f32 0.0, %v5253
    %v5255 = vpop.f32.mrb[0].mxu0
    %5256 = vdwg.mxu0
    %5257 = vrot.lane.b32.xlu0 %v3476, 80
    %v5258 = vpop.permute.xlu0 %5257
    %v5261 = vsel %vm375, %v5178, 0
    %5263 = vmatprep.subr.mxu0 0.0
    %5264 = vmatpush1.msra.mxu0 %v5258
    %5265 = vmatprep.subr.mxu0 0.0
    %5266 = vmatpush1.msra.mxu0 0.0
    %5267 = vmatprep.subr.mxu0 0.0
    %5268 = vmatpush1.msra.mxu0 0.0
    %5269 = vmatprep.subr.mxu0 0.0
    %5270 = vmatpush1.msra.mxu0 0.0
    %5271 = vmatprep.subr.mxu0 0.0
    %5272 = vmatpush1.msra.mxu0 0.0
    %5273 = vmatprep.subr.mxu0 0.0
    %5274 = vmatpush1.msra.mxu0 0.0
    %5275 = vmatprep.subr.mxu0 0.0
    %5276 = vmatpush1.msra.mxu0 0.0
    %5277 = vmatprep.subr.mxu0 0.0
    %5278 = vmatpush1.msra.mxu0 0.0
    %5279 = vmatprep.subr.mxu0 0.0
    %5280 = vmatpush1.msra.mxu0 0.0
    %5281 = vmatprep.subr.mxu0 0.0
    %5282 = vmatpush1.msra.mxu0 0.0
    %5283 = vmatprep.subr.mxu0 0.0
    %5284 = vmatpush1.msra.mxu0 0.0
    %5285 = vmatprep.subr.mxu0 0.0
    %5286 = vmatpush1.msra.mxu0 0.0
    %5287 = vmatprep.subr.mxu0 0.0
    %5288 = vmatpush1.msra.mxu0 0.0
    %5289 = vmatprep.subr.mxu0 0.0
    %5290 = vmatpush1.msra.mxu0 0.0
    %5291 = vmatprep.subr.mxu0 0.0
    %5292 = vmatpush1.msra.mxu0 0.0
    %5293 = vmatprep.subr.mxu0 0.0
    %5294 = vmatpush1.msra.mxu0 0.0
    %5295 = vmatprep.subr.mxu0 0.0
    %5296 = vmatpush1.msra.mxu0 0.0
    %5297 = vmatprep.subr.mxu0 0.0
    %5298 = vmatpush1.msra.mxu0 0.0
    %5299 = vmatprep.subr.mxu0 0.0
    %5300 = vmatpush1.msra.mxu0 0.0
    %5301 = vmatprep.subr.mxu0 0.0
    %5302 = vmatpush1.msra.mxu0 0.0
    %5303 = vmatprep.subr.mxu0 0.0
    %5304 = vmatpush1.msra.mxu0 0.0
    %5305 = vmatprep.subr.mxu0 0.0
    %5306 = vmatpush1.msra.mxu0 0.0
    %5307 = vmatprep.subr.mxu0 0.0
    %5308 = vmatpush1.msra.mxu0 0.0
    %5309 = vmatprep.subr.mxu0 0.0
    %5310 = vmatpush1.msra.mxu0 0.0
    %5311 = vmatprep.subr.mxu0 0.0
    %5312 = vmatpush1.msra.mxu0 0.0
    %5313 = vmatprep.subr.mxu0 0.0
    %5314 = vmatpush1.msra.mxu0 0.0
    %5315 = vmatprep.subr.mxu0 0.0
    %5316 = vmatpush1.msra.mxu0 0.0
    %5317 = vmatprep.subr.mxu0 0.0
    %5318 = vmatpush1.msra.mxu0 0.0
    %5319 = vmatprep.subr.mxu0 0.0
    %5320 = vmatpush1.msra.mxu0 0.0
    %5321 = vmatprep.subr.mxu0 0.0
    %5322 = vmatpush1.msra.mxu0 0.0
    %5323 = vmatprep.subr.mxu0 0.0
    %5324 = vmatpush1.msra.mxu0 0.0
    %5325 = vmatprep.subr.mxu0 0.0
    %5326 = vmatpush1.msra.mxu0 0.0
    %5327 = vmatprep.mubr.f32.mxu0 0.0
    %5328 = vmatmul.mubr.f32.gmra.mrb[0].mxu0 %v5261
    %v5329 = vpop.f32.mrb[0].mxu0
    %v5330 = vadd.f32 0.0, %v5329
    %v5331 = vpop.f32.mrb[0].mxu0
    %5332 = vdwg.mxu0
    %5333 = vrot.lane.b32.xlu0 %v3481, 80
    %v5334 = vpop.permute.xlu0 %5333
    %v5337 = vsel %vm375, %v5179, 0
    %5339 = vmatprep.subr.mxu0 0.0
    %5340 = vmatpush1.msra.mxu0 %v5334
    %5341 = vmatprep.subr.mxu0 0.0
    %5342 = vmatpush1.msra.mxu0 0.0
    %5343 = vmatprep.subr.mxu0 0.0
    %5344 = vmatpush1.msra.mxu0 0.0
    %5345 = vmatprep.subr.mxu0 0.0
    %5346 = vmatpush1.msra.mxu0 0.0
    %5347 = vmatprep.subr.mxu0 0.0
    %5348 = vmatpush1.msra.mxu0 0.0
    %5349 = vmatprep.subr.mxu0 0.0
    %5350 = vmatpush1.msra.mxu0 0.0
    %5351 = vmatprep.subr.mxu0 0.0
    %5352 = vmatpush1.msra.mxu0 0.0
    %5353 = vmatprep.subr.mxu0 0.0
    %5354 = vmatpush1.msra.mxu0 0.0
    %5355 = vmatprep.subr.mxu0 0.0
    %5356 = vmatpush1.msra.mxu0 0.0
    %5357 = vmatprep.subr.mxu0 0.0
    %5358 = vmatpush1.msra.mxu0 0.0
    %5359 = vmatprep.subr.mxu0 0.0
    %5360 = vmatpush1.msra.mxu0 0.0
    %5361 = vmatprep.subr.mxu0 0.0
    %5362 = vmatpush1.msra.mxu0 0.0
    %5363 = vmatprep.subr.mxu0 0.0
    %5364 = vmatpush1.msra.mxu0 0.0
    %5365 = vmatprep.subr.mxu0 0.0
    %5366 = vmatpush1.msra.mxu0 0.0
    %5367 = vmatprep.subr.mxu0 0.0
    %5368 = vmatpush1.msra.mxu0 0.0
    %5369 = vmatprep.subr.mxu0 0.0
    %5370 = vmatpush1.msra.mxu0 0.0
    %5371 = vmatprep.subr.mxu0 0.0
    %5372 = vmatpush1.msra.mxu0 0.0
    %5373 = vmatprep.subr.mxu0 0.0
    %5374 = vmatpush1.msra.mxu0 0.0
    %5375 = vmatprep.subr.mxu0 0.0
    %5376 = vmatpush1.msra.mxu0 0.0
    %5377 = vmatprep.subr.mxu0 0.0
    %5378 = vmatpush1.msra.mxu0 0.0
    %5379 = vmatprep.subr.mxu0 0.0
    %5380 = vmatpush1.msra.mxu0 0.0
    %5381 = vmatprep.subr.mxu0 0.0
    %5382 = vmatpush1.msra.mxu0 0.0
    %5383 = vmatprep.subr.mxu0 0.0
    %5384 = vmatpush1.msra.mxu0 0.0
    %5385 = vmatprep.subr.mxu0 0.0
    %5386 = vmatpush1.msra.mxu0 0.0
    %5387 = vmatprep.subr.mxu0 0.0
    %5388 = vmatpush1.msra.mxu0 0.0
    %5389 = vmatprep.subr.mxu0 0.0
    %5390 = vmatpush1.msra.mxu0 0.0
    %5391 = vmatprep.subr.mxu0 0.0
    %5392 = vmatpush1.msra.mxu0 0.0
    %5393 = vmatprep.subr.mxu0 0.0
    %5394 = vmatpush1.msra.mxu0 0.0
    %5395 = vmatprep.subr.mxu0 0.0
    %5396 = vmatpush1.msra.mxu0 0.0
    %5397 = vmatprep.subr.mxu0 0.0
    %5398 = vmatpush1.msra.mxu0 0.0
    %5399 = vmatprep.subr.mxu0 0.0
    %5400 = vmatpush1.msra.mxu0 0.0
    %5401 = vmatprep.subr.mxu0 0.0
    %5402 = vmatpush1.msra.mxu0 0.0
    %5403 = vmatprep.mubr.f32.mxu0 0.0
    %5404 = vmatmul.mubr.f32.gmra.mrb[0].mxu0 %v5337
    %v5405 = vpop.f32.mrb[0].mxu0
    %v5406 = vadd.f32 0.0, %v5405
    %v5407 = vpop.f32.mrb[0].mxu0
    %5408 = vdwg.mxu0
    %5409 = vrot.lane.b32.xlu0 %v3486, 80
    %v5410 = vpop.permute.xlu0 %5409
    %v5413 = vsel %vm375, %v5180, 0
    %5415 = vmatprep.subr.mxu0 0.0
    %5416 = vmatpush1.msra.mxu0 %v5410
    %5417 = vmatprep.subr.mxu0 0.0
    %5418 = vmatpush1.msra.mxu0 0.0
    %5419 = vmatprep.subr.mxu0 0.0
    %5420 = vmatpush1.msra.mxu0 0.0
    %5421 = vmatprep.subr.mxu0 0.0
    %5422 = vmatpush1.msra.mxu0 0.0
    %5423 = vmatprep.subr.mxu0 0.0
    %5424 = vmatpush1.msra.mxu0 0.0
    %5425 = vmatprep.subr.mxu0 0.0
    %5426 = vmatpush1.msra.mxu0 0.0
    %5427 = vmatprep.subr.mxu0 0.0
    %5428 = vmatpush1.msra.mxu0 0.0
    %5429 = vmatprep.subr.mxu0 0.0
    %5430 = vmatpush1.msra.mxu0 0.0
    %5431 = vmatprep.subr.mxu0 0.0
    %5432 = vmatpush1.msra.mxu0 0.0
    %5433 = vmatprep.subr.mxu0 0.0
    %5434 = vmatpush1.msra.mxu0 0.0
    %5435 = vmatprep.subr.mxu0 0.0
    %5436 = vmatpush1.msra.mxu0 0.0
    %5437 = vmatprep.subr.mxu0 0.0
    %5438 = vmatpush1.msra.mxu0 0.0
    %5439 = vmatprep.subr.mxu0 0.0
    %5440 = vmatpush1.msra.mxu0 0.0
    %5441 = vmatprep.subr.mxu0 0.0
    %5442 = vmatpush1.msra.mxu0 0.0
    %5443 = vmatprep.subr.mxu0 0.0
    %5444 = vmatpush1.msra.mxu0 0.0
    %5445 = vmatprep.subr.mxu0 0.0
    %5446 = vmatpush1.msra.mxu0 0.0
    %5447 = vmatprep.subr.mxu0 0.0
    %5448 = vmatpush1.msra.mxu0 0.0
    %5449 = vmatprep.subr.mxu0 0.0
    %5450 = vmatpush1.msra.mxu0 0.0
    %5451 = vmatprep.subr.mxu0 0.0
    %5452 = vmatpush1.msra.mxu0 0.0
    %5453 = vmatprep.subr.mxu0 0.0
    %5454 = vmatpush1.msra.mxu0 0.0
    %5455 = vmatprep.subr.mxu0 0.0
    %5456 = vmatpush1.msra.mxu0 0.0
    %5457 = vmatprep.subr.mxu0 0.0
    %5458 = vmatpush1.msra.mxu0 0.0
    %5459 = vmatprep.subr.mxu0 0.0
    %5460 = vmatpush1.msra.mxu0 0.0
    %5461 = vmatprep.subr.mxu0 0.0
    %5462 = vmatpush1.msra.mxu0 0.0
    %5463 = vmatprep.subr.mxu0 0.0
    %5464 = vmatpush1.msra.mxu0 0.0
    %5465 = vmatprep.subr.mxu0 0.0
    %5466 = vmatpush1.msra.mxu0 0.0
    %5467 = vmatprep.subr.mxu0 0.0
    %5468 = vmatpush1.msra.mxu0 0.0
    %5469 = vmatprep.subr.mxu0 0.0
    %5470 = vmatpush1.msra.mxu0 0.0
    %5471 = vmatprep.subr.mxu0 0.0
    %5472 = vmatpush1.msra.mxu0 0.0
    %5473 = vmatprep.subr.mxu0 0.0
    %5474 = vmatpush1.msra.mxu0 0.0
    %5475 = vmatprep.subr.mxu0 0.0
    %5476 = vmatpush1.msra.mxu0 0.0
    %5477 = vmatprep.subr.mxu0 0.0
    %5478 = vmatpush1.msra.mxu0 0.0
    %5479 = vmatprep.mubr.f32.mxu0 0.0
    %5480 = vmatmul.mubr.f32.gmra.mrb[0].mxu0 %v5413
    %v5481 = vpop.f32.mrb[0].mxu0
    %v5482 = vadd.f32 0.0, %v5481
    %v5483 = vpop.f32.mrb[0].mxu0
    %5484 = vdwg.mxu0
    %5485 = vrot.lane.b32.xlu0 %v3354, 104
    %v5486 = vpop.permute.xlu0 %5485
    %5487 = vrot.lane.b32.xlu0 %v3471, 104
    %v5488 = vpop.permute.xlu0 %5487
    %v5489 = vsel %vm375, %v5486, 0
    %v5491 = vsel %vm375, %v5488, 0
    %5493 = vmatprep.subr.mxu0 0.0
    %5494 = vmatpush1.xpose.msra.mxu0 %v5491
    %5495 = vmatprep.subr.mxu0 0.0
    %5496 = vmatpush1.xpose.msra.mxu0 0.0
    %5497 = vmatprep.subr.mxu0 0.0
    %5498 = vmatpush1.xpose.msra.mxu0 0.0
    %5499 = vmatprep.subr.mxu0 0.0
    %5500 = vmatpush1.xpose.msra.mxu0 0.0
    %5501 = vmatprep.subr.mxu0 0.0
    %5502 = vmatpush1.xpose.msra.mxu0 0.0
    %5503 = vmatprep.subr.mxu0 0.0
    %5504 = vmatpush1.xpose.msra.mxu0 0.0
    %5505 = vmatprep.subr.mxu0 0.0
    %5506 = vmatpush1.xpose.msra.mxu0 0.0
    %5507 = vmatprep.subr.mxu0 0.0
    %5508 = vmatpush1.xpose.msra.mxu0 0.0
    %5509 = vmatprep.subr.mxu0 0.0
    %5510 = vmatpush1.xpose.msra.mxu0 0.0
    %5511 = vmatprep.subr.mxu0 0.0
    %5512 = vmatpush1.xpose.msra.mxu0 0.0
    %5513 = vmatprep.subr.mxu0 0.0
    %5514 = vmatpush1.xpose.msra.mxu0 0.0
    %5515 = vmatprep.subr.mxu0 0.0
    %5516 = vmatpush1.xpose.msra.mxu0 0.0
    %5517 = vmatprep.subr.mxu0 0.0
    %5518 = vmatpush1.xpose.msra.mxu0 0.0
    %5519 = vmatprep.subr.mxu0 0.0
    %5520 = vmatpush1.xpose.msra.mxu0 0.0
    %5521 = vmatprep.subr.mxu0 0.0
    %5522 = vmatpush1.xpose.msra.mxu0 0.0
    %5523 = vmatprep.subr.mxu0 0.0
    %5524 = vmatpush1.xpose.msra.mxu0 0.0
    %5525 = vmatprep.subr.mxu0 0.0
    %5526 = vmatpush1.xpose.msra.mxu0 0.0
    %5527 = vmatprep.subr.mxu0 0.0
    %5528 = vmatpush1.xpose.msra.mxu0 0.0
    %5529 = vmatprep.subr.mxu0 0.0
    %5530 = vmatpush1.xpose.msra.mxu0 0.0
    %5531 = vmatprep.subr.mxu0 0.0
    %5532 = vmatpush1.xpose.msra.mxu0 0.0
    %5533 = vmatprep.subr.mxu0 0.0
    %5534 = vmatpush1.xpose.msra.mxu0 0.0
    %5535 = vmatprep.subr.mxu0 0.0
    %5536 = vmatpush1.xpose.msra.mxu0 0.0
    %5537 = vmatprep.subr.mxu0 0.0
    %5538 = vmatpush1.xpose.msra.mxu0 0.0
    %5539 = vmatprep.subr.mxu0 0.0
    %5540 = vmatpush1.xpose.msra.mxu0 0.0
    %5541 = vmatprep.subr.mxu0 0.0
    %5542 = vmatpush1.xpose.msra.mxu0 0.0
    %5543 = vmatprep.subr.mxu0 0.0
    %5544 = vmatpush1.xpose.msra.mxu0 0.0
    %5545 = vmatprep.subr.mxu0 0.0
    %5546 = vmatpush1.xpose.msra.mxu0 0.0
    %5547 = vmatprep.subr.mxu0 0.0
    %5548 = vmatpush1.xpose.msra.mxu0 0.0
    %5549 = vmatprep.subr.mxu0 0.0
    %5550 = vmatpush1.xpose.msra.mxu0 0.0
    %5551 = vmatprep.subr.mxu0 0.0
    %5552 = vmatpush1.xpose.msra.mxu0 0.0
    %5553 = vmatprep.subr.mxu0 0.0
    %5554 = vmatpush1.xpose.msra.mxu0 0.0
    %5555 = vmatprep.subr.mxu0 0.0
    %5556 = vmatpush1.xpose.msra.mxu0 0.0
    %5557 = vmatprep.mubr.f32.mxu0 0.0
    %5558 = vmatmul.mubr.f32.gmra.mrb[0].mxu0 %v5489
    %v5559 = vpop.f32.mrb[0].mxu0
    %v5560 = vadd.f32 %v3496, %v5559
    %v5561 = vpop.f32.mrb[0].mxu0
    %5562 = vdwg.mxu0
    %5563 = vrot.lane.b32.xlu0 %v3359, 104
    %v5564 = vpop.permute.xlu0 %5563
    %5565 = vrot.lane.b32.xlu0 %v3476, 104
    %v5566 = vpop.permute.xlu0 %5565
    %v5567 = vsel %vm375, %v5564, 0
    %v5569 = vsel %vm375, %v5566, 0
    %5571 = vmatprep.subr.mxu0 0.0
    %5572 = vmatpush1.xpose.msra.mxu0 %v5569
    %5573 = vmatprep.subr.mxu0 0.0
    %5574 = vmatpush1.xpose.msra.mxu0 0.0
    %5575 = vmatprep.subr.mxu0 0.0
    %5576 = vmatpush1.xpose.msra.mxu0 0.0
    %5577 = vmatprep.subr.mxu0 0.0
    %5578 = vmatpush1.xpose.msra.mxu0 0.0
    %5579 = vmatprep.subr.mxu0 0.0
    %5580 = vmatpush1.xpose.msra.mxu0 0.0
    %5581 = vmatprep.subr.mxu0 0.0
    %5582 = vmatpush1.xpose.msra.mxu0 0.0
    %5583 = vmatprep.subr.mxu0 0.0
    %5584 = vmatpush1.xpose.msra.mxu0 0.0
    %5585 = vmatprep.subr.mxu0 0.0
    %5586 = vmatpush1.xpose.msra.mxu0 0.0
    %5587 = vmatprep.subr.mxu0 0.0
    %5588 = vmatpush1.xpose.msra.mxu0 0.0
    %5589 = vmatprep.subr.mxu0 0.0
    %5590 = vmatpush1.xpose.msra.mxu0 0.0
    %5591 = vmatprep.subr.mxu0 0.0
    %5592 = vmatpush1.xpose.msra.mxu0 0.0
    %5593 = vmatprep.subr.mxu0 0.0
    %5594 = vmatpush1.xpose.msra.mxu0 0.0
    %5595 = vmatprep.subr.mxu0 0.0
    %5596 = vmatpush1.xpose.msra.mxu0 0.0
    %5597 = vmatprep.subr.mxu0 0.0
    %5598 = vmatpush1.xpose.msra.mxu0 0.0
    %5599 = vmatprep.subr.mxu0 0.0
    %5600 = vmatpush1.xpose.msra.mxu0 0.0
    %5601 = vmatprep.subr.mxu0 0.0
    %5602 = vmatpush1.xpose.msra.mxu0 0.0
    %5603 = vmatprep.subr.mxu0 0.0
    %5604 = vmatpush1.xpose.msra.mxu0 0.0
    %5605 = vmatprep.subr.mxu0 0.0
    %5606 = vmatpush1.xpose.msra.mxu0 0.0
    %5607 = vmatprep.subr.mxu0 0.0
    %5608 = vmatpush1.xpose.msra.mxu0 0.0
    %5609 = vmatprep.subr.mxu0 0.0
    %5610 = vmatpush1.xpose.msra.mxu0 0.0
    %5611 = vmatprep.subr.mxu0 0.0
    %5612 = vmatpush1.xpose.msra.mxu0 0.0
    %5613 = vmatprep.subr.mxu0 0.0
    %5614 = vmatpush1.xpose.msra.mxu0 0.0
    %5615 = vmatprep.subr.mxu0 0.0
    %5616 = vmatpush1.xpose.msra.mxu0 0.0
    %5617 = vmatprep.subr.mxu0 0.0
    %5618 = vmatpush1.xpose.msra.mxu0 0.0
    %5619 = vmatprep.subr.mxu0 0.0
    %5620 = vmatpush1.xpose.msra.mxu0 0.0
    %5621 = vmatprep.subr.mxu0 0.0
    %5622 = vmatpush1.xpose.msra.mxu0 0.0
    %5623 = vmatprep.subr.mxu0 0.0
    %5624 = vmatpush1.xpose.msra.mxu0 0.0
    %5625 = vmatprep.subr.mxu0 0.0
    %5626 = vmatpush1.xpose.msra.mxu0 0.0
    %5627 = vmatprep.subr.mxu0 0.0
    %5628 = vmatpush1.xpose.msra.mxu0 0.0
    %5629 = vmatprep.subr.mxu0 0.0
    %5630 = vmatpush1.xpose.msra.mxu0 0.0
    %5631 = vmatprep.subr.mxu0 0.0
    %5632 = vmatpush1.xpose.msra.mxu0 0.0
    %5633 = vmatprep.subr.mxu0 0.0
    %5634 = vmatpush1.xpose.msra.mxu0 0.0
    %5635 = vmatprep.mubr.f32.mxu0 0.0
    %5636 = vmatmul.mubr.f32.gmra.mrb[0].mxu0 %v5567
    %v5637 = vpop.f32.mrb[0].mxu0
    %v5638 = vadd.f32 %v3500, %v5637
    %v5639 = vpop.f32.mrb[0].mxu0
    %5640 = vdwg.mxu0
    %5641 = vrot.lane.b32.xlu0 %v3364, 104
    %v5642 = vpop.permute.xlu0 %5641
    %5643 = vrot.lane.b32.xlu0 %v3481, 104
    %v5644 = vpop.permute.xlu0 %5643
    %v5645 = vsel %vm375, %v5642, 0
    %v5647 = vsel %vm375, %v5644, 0
    %5649 = vmatprep.subr.mxu0 0.0
    %5650 = vmatpush1.xpose.msra.mxu0 %v5647
    %5651 = vmatprep.subr.mxu0 0.0
    %5652 = vmatpush1.xpose.msra.mxu0 0.0
    %5653 = vmatprep.subr.mxu0 0.0
    %5654 = vmatpush1.xpose.msra.mxu0 0.0
    %5655 = vmatprep.subr.mxu0 0.0
    %5656 = vmatpush1.xpose.msra.mxu0 0.0
    %5657 = vmatprep.subr.mxu0 0.0
    %5658 = vmatpush1.xpose.msra.mxu0 0.0
    %5659 = vmatprep.subr.mxu0 0.0
    %5660 = vmatpush1.xpose.msra.mxu0 0.0
    %5661 = vmatprep.subr.mxu0 0.0
    %5662 = vmatpush1.xpose.msra.mxu0 0.0
    %5663 = vmatprep.subr.mxu0 0.0
    %5664 = vmatpush1.xpose.msra.mxu0 0.0
    %5665 = vmatprep.subr.mxu0 0.0
    %5666 = vmatpush1.xpose.msra.mxu0 0.0
    %5667 = vmatprep.subr.mxu0 0.0
    %5668 = vmatpush1.xpose.msra.mxu0 0.0
    %5669 = vmatprep.subr.mxu0 0.0
    %5670 = vmatpush1.xpose.msra.mxu0 0.0
    %5671 = vmatprep.subr.mxu0 0.0
    %5672 = vmatpush1.xpose.msra.mxu0 0.0
    %5673 = vmatprep.subr.mxu0 0.0
    %5674 = vmatpush1.xpose.msra.mxu0 0.0
    %5675 = vmatprep.subr.mxu0 0.0
    %5676 = vmatpush1.xpose.msra.mxu0 0.0
    %5677 = vmatprep.subr.mxu0 0.0
    %5678 = vmatpush1.xpose.msra.mxu0 0.0
    %5679 = vmatprep.subr.mxu0 0.0
    %5680 = vmatpush1.xpose.msra.mxu0 0.0
    %5681 = vmatprep.subr.mxu0 0.0
    %5682 = vmatpush1.xpose.msra.mxu0 0.0
    %5683 = vmatprep.subr.mxu0 0.0
    %5684 = vmatpush1.xpose.msra.mxu0 0.0
    %5685 = vmatprep.subr.mxu0 0.0
    %5686 = vmatpush1.xpose.msra.mxu0 0.0
    %5687 = vmatprep.subr.mxu0 0.0
    %5688 = vmatpush1.xpose.msra.mxu0 0.0
    %5689 = vmatprep.subr.mxu0 0.0
    %5690 = vmatpush1.xpose.msra.mxu0 0.0
    %5691 = vmatprep.subr.mxu0 0.0
    %5692 = vmatpush1.xpose.msra.mxu0 0.0
    %5693 = vmatprep.subr.mxu0 0.0
    %5694 = vmatpush1.xpose.msra.mxu0 0.0
    %5695 = vmatprep.subr.mxu0 0.0
    %5696 = vmatpush1.xpose.msra.mxu0 0.0
    %5697 = vmatprep.subr.mxu0 0.0
    %5698 = vmatpush1.xpose.msra.mxu0 0.0
    %5699 = vmatprep.subr.mxu0 0.0
    %5700 = vmatpush1.xpose.msra.mxu0 0.0
    %5701 = vmatprep.subr.mxu0 0.0
    %5702 = vmatpush1.xpose.msra.mxu0 0.0
    %5703 = vmatprep.subr.mxu0 0.0
    %5704 = vmatpush1.xpose.msra.mxu0 0.0
    %5705 = vmatprep.subr.mxu0 0.0
    %5706 = vmatpush1.xpose.msra.mxu0 0.0
    %5707 = vmatprep.subr.mxu0 0.0
    %5708 = vmatpush1.xpose.msra.mxu0 0.0
    %5709 = vmatprep.subr.mxu0 0.0
    %5710 = vmatpush1.xpose.msra.mxu0 0.0
    %5711 = vmatprep.subr.mxu0 0.0
    %5712 = vmatpush1.xpose.msra.mxu0 0.0
    %5713 = vmatprep.mubr.f32.mxu0 0.0
    %5714 = vmatmul.mubr.f32.gmra.mrb[0].mxu0 %v5645
    %v5715 = vpop.f32.mrb[0].mxu0
    %v5716 = vadd.f32 %v3504, %v5715
    %v5717 = vpop.f32.mrb[0].mxu0
    %5718 = vdwg.mxu0
    %5719 = vrot.lane.b32.xlu0 %v3369, 104
    %v5720 = vpop.permute.xlu0 %5719
    %5721 = vrot.lane.b32.xlu0 %v3486, 104
    %v5722 = vpop.permute.xlu0 %5721
    %v5723 = vsel %vm375, %v5720, 0
    %v5725 = vsel %vm375, %v5722, 0
    %5727 = vmatprep.subr.mxu0 0.0
    %5728 = vmatpush1.xpose.msra.mxu0 %v5725
    %5729 = vmatprep.subr.mxu0 0.0
    %5730 = vmatpush1.xpose.msra.mxu0 0.0
    %5731 = vmatprep.subr.mxu0 0.0
    %5732 = vmatpush1.xpose.msra.mxu0 0.0
    %5733 = vmatprep.subr.mxu0 0.0
    %5734 = vmatpush1.xpose.msra.mxu0 0.0
    %5735 = vmatprep.subr.mxu0 0.0
    %5736 = vmatpush1.xpose.msra.mxu0 0.0
    %5737 = vmatprep.subr.mxu0 0.0
    %5738 = vmatpush1.xpose.msra.mxu0 0.0
    %5739 = vmatprep.subr.mxu0 0.0
    %5740 = vmatpush1.xpose.msra.mxu0 0.0
    %5741 = vmatprep.subr.mxu0 0.0
    %5742 = vmatpush1.xpose.msra.mxu0 0.0
    %5743 = vmatprep.subr.mxu0 0.0
    %5744 = vmatpush1.xpose.msra.mxu0 0.0
    %5745 = vmatprep.subr.mxu0 0.0
    %5746 = vmatpush1.xpose.msra.mxu0 0.0
    %5747 = vmatprep.subr.mxu0 0.0
    %5748 = vmatpush1.xpose.msra.mxu0 0.0
    %5749 = vmatprep.subr.mxu0 0.0
    %5750 = vmatpush1.xpose.msra.mxu0 0.0
    %5751 = vmatprep.subr.mxu0 0.0
    %5752 = vmatpush1.xpose.msra.mxu0 0.0
    %5753 = vmatprep.subr.mxu0 0.0
    %5754 = vmatpush1.xpose.msra.mxu0 0.0
    %5755 = vmatprep.subr.mxu0 0.0
    %5756 = vmatpush1.xpose.msra.mxu0 0.0
    %5757 = vmatprep.subr.mxu0 0.0
    %5758 = vmatpush1.xpose.msra.mxu0 0.0
    %5759 = vmatprep.subr.mxu0 0.0
    %5760 = vmatpush1.xpose.msra.mxu0 0.0
    %5761 = vmatprep.subr.mxu0 0.0
    %5762 = vmatpush1.xpose.msra.mxu0 0.0
    %5763 = vmatprep.subr.mxu0 0.0
    %5764 = vmatpush1.xpose.msra.mxu0 0.0
    %5765 = vmatprep.subr.mxu0 0.0
    %5766 = vmatpush1.xpose.msra.mxu0 0.0
    %5767 = vmatprep.subr.mxu0 0.0
    %5768 = vmatpush1.xpose.msra.mxu0 0.0
    %5769 = vmatprep.subr.mxu0 0.0
    %5770 = vmatpush1.xpose.msra.mxu0 0.0
    %5771 = vmatprep.subr.mxu0 0.0
    %5772 = vmatpush1.xpose.msra.mxu0 0.0
    %5773 = vmatprep.subr.mxu0 0.0
    %5774 = vmatpush1.xpose.msra.mxu0 0.0
    %5775 = vmatprep.subr.mxu0 0.0
    %5776 = vmatpush1.xpose.msra.mxu0 0.0
    %5777 = vmatprep.subr.mxu0 0.0
    %5778 = vmatpush1.xpose.msra.mxu0 0.0
    %5779 = vmatprep.subr.mxu0 0.0
    %5780 = vmatpush1.xpose.msra.mxu0 0.0
    %5781 = vmatprep.subr.mxu0 0.0
    %5782 = vmatpush1.xpose.msra.mxu0 0.0
    %5783 = vmatprep.subr.mxu0 0.0
    %5784 = vmatpush1.xpose.msra.mxu0 0.0
    %5785 = vmatprep.subr.mxu0 0.0
    %5786 = vmatpush1.xpose.msra.mxu0 0.0
    %5787 = vmatprep.subr.mxu0 0.0
    %5788 = vmatpush1.xpose.msra.mxu0 0.0
    %5789 = vmatprep.subr.mxu0 0.0
    %5790 = vmatpush1.xpose.msra.mxu0 0.0
    %5791 = vmatprep.mubr.f32.mxu0 0.0
    %5792 = vmatmul.mubr.f32.gmra.mrb[0].mxu0 %v5723
    %v5793 = vpop.f32.mrb[0].mxu0
    %v5794 = vadd.f32 %v3508, %v5793
    %v5795 = vpop.f32.mrb[0].mxu0
    %5796 = vdwg.mxu0
    %v5797 = vsel %vm375, %v5560, -inf
    %5798 = vmax.xlane.f32.xlu0 %v5797
    %v5799 = vpop.xlane.xlu0 %5798
    %v5800 = vsel %vm375, %v5638, -inf
    %5801 = vmax.xlane.f32.xlu0 %v5800
    %v5802 = vpop.xlane.xlu0 %5801
    %v5803 = vsel %vm375, %v5716, -inf
    %5804 = vmax.xlane.f32.xlu0 %v5803
    %v5805 = vpop.xlane.xlu0 %5804
    %v5806 = vsel %vm375, %v5794, -inf
    %5807 = vmax.xlane.f32.xlu0 %v5806
    %v5808 = vpop.xlane.xlu0 %5807
    %v5809 = vsub.f32 %v5560, %v5799
    %v5810 = vsub.f32 %v5638, %v5802
    %v5811 = vsub.f32 %v5716, %v5805
    %v5812 = vsub.f32 %v5794, %v5808
    %v5813 = vmul.f32 %v5809, 1.442695
    %v5814 = vpow.pop %v5813
    %v5815 = vmul.f32 %v5810, 1.442695
    %v5816 = vpow.pop %v5815
    %v5817 = vmul.f32 %v5811, 1.442695
    %v5818 = vpow.pop %v5817
    %v5819 = vmul.f32 %v5812, 1.442695
    %v5820 = vpow.pop %v5819
    %v5821 = vsel %vm375, %v5814, 0.0
    %5822 = vadd.xlane.f32.xlu0 %v5821
    %v5823 = vpop.xlane.xlu0 %5822
    %v5824 = vsel %vm375, %v5816, 0.0
    %5825 = vadd.xlane.f32.xlu0 %v5824
    %v5826 = vpop.xlane.xlu0 %5825
    %v5827 = vsel %vm375, %v5818, 0.0
    %5828 = vadd.xlane.f32.xlu0 %v5827
    %v5829 = vpop.xlane.xlu0 %5828
    %v5830 = vsel %vm375, %v5820, 0.0
    %5831 = vadd.xlane.f32.xlu0 %v5830
    %v5832 = vpop.xlane.xlu0 %5831
    %v5833 = vrcp.pop %v5823
    %v5834 = vrcp.pop %v5826
    %v5835 = vrcp.pop %v5829
    %v5836 = vrcp.pop %v5832
    %v5837 = vmul.f32 %v5814, %v5833
    %v5838 = vmul.f32 %v5816, %v5834
    %v5839 = vmul.f32 %v5818, %v5835
    %v5840 = vmul.f32 %v5820, %v5836
    %5841 = vrot.lane.b32.xlu0 %v3471, 72
    %v5842 = vpop.permute.xlu0 %5841
    %v5845 = vsel %vm375, %v5837, 0
    %5847 = vmatprep.subr.mxu0 0.0
    %5848 = vmatpush1.msra.mxu0 %v5842
    %5849 = vmatprep.subr.mxu0 0.0
    %5850 = vmatpush1.msra.mxu0 0.0
    %5851 = vmatprep.subr.mxu0 0.0
    %5852 = vmatpush1.msra.mxu0 0.0
    %5853 = vmatprep.subr.mxu0 0.0
    %5854 = vmatpush1.msra.mxu0 0.0
    %5855 = vmatprep.subr.mxu0 0.0
    %5856 = vmatpush1.msra.mxu0 0.0
    %5857 = vmatprep.subr.mxu0 0.0
    %5858 = vmatpush1.msra.mxu0 0.0
    %5859 = vmatprep.subr.mxu0 0.0
    %5860 = vmatpush1.msra.mxu0 0.0
    %5861 = vmatprep.subr.mxu0 0.0
    %5862 = vmatpush1.msra.mxu0 0.0
    %5863 = vmatprep.subr.mxu0 0.0
    %5864 = vmatpush1.msra.mxu0 0.0
    %5865 = vmatprep.subr.mxu0 0.0
    %5866 = vmatpush1.msra.mxu0 0.0
    %5867 = vmatprep.subr.mxu0 0.0
    %5868 = vmatpush1.msra.mxu0 0.0
    %5869 = vmatprep.subr.mxu0 0.0
    %5870 = vmatpush1.msra.mxu0 0.0
    %5871 = vmatprep.subr.mxu0 0.0
    %5872 = vmatpush1.msra.mxu0 0.0
    %5873 = vmatprep.subr.mxu0 0.0
    %5874 = vmatpush1.msra.mxu0 0.0
    %5875 = vmatprep.subr.mxu0 0.0
    %5876 = vmatpush1.msra.mxu0 0.0
    %5877 = vmatprep.subr.mxu0 0.0
    %5878 = vmatpush1.msra.mxu0 0.0
    %5879 = vmatprep.subr.mxu0 0.0
    %5880 = vmatpush1.msra.mxu0 0.0
    %5881 = vmatprep.subr.mxu0 0.0
    %5882 = vmatpush1.msra.mxu0 0.0
    %5883 = vmatprep.subr.mxu0 0.0
    %5884 = vmatpush1.msra.mxu0 0.0
    %5885 = vmatprep.subr.mxu0 0.0
    %5886 = vmatpush1.msra.mxu0 0.0
    %5887 = vmatprep.subr.mxu0 0.0
    %5888 = vmatpush1.msra.mxu0 0.0
    %5889 = vmatprep.subr.mxu0 0.0
    %5890 = vmatpush1.msra.mxu0 0.0
    %5891 = vmatprep.subr.mxu0 0.0
    %5892 = vmatpush1.msra.mxu0 0.0
    %5893 = vmatprep.subr.mxu0 0.0
    %5894 = vmatpush1.msra.mxu0 0.0
    %5895 = vmatprep.subr.mxu0 0.0
    %5896 = vmatpush1.msra.mxu0 0.0
    %5897 = vmatprep.subr.mxu0 0.0
    %5898 = vmatpush1.msra.mxu0 0.0
    %5899 = vmatprep.subr.mxu0 0.0
    %5900 = vmatpush1.msra.mxu0 0.0
    %5901 = vmatprep.subr.mxu0 0.0
    %5902 = vmatpush1.msra.mxu0 0.0
    %5903 = vmatprep.subr.mxu0 0.0
    %5904 = vmatpush1.msra.mxu0 0.0
    %5905 = vmatprep.subr.mxu0 0.0
    %5906 = vmatpush1.msra.mxu0 0.0
    %5907 = vmatprep.subr.mxu0 0.0
    %5908 = vmatpush1.msra.mxu0 0.0
    %5909 = vmatprep.subr.mxu0 0.0
    %5910 = vmatpush1.msra.mxu0 0.0
    %5911 = vmatprep.mubr.f32.mxu0 0.0
    %5912 = vmatmul.mubr.f32.gmra.mrb[0].mxu0 %v5845
    %v5913 = vpop.f32.mrb[0].mxu0
    %v5914 = vadd.f32 0.0, %v5913
    %v5915 = vpop.f32.mrb[0].mxu0
    %5916 = vdwg.mxu0
    %5917 = vrot.lane.b32.xlu0 %v3476, 72
    %v5918 = vpop.permute.xlu0 %5917
    %v5921 = vsel %vm375, %v5838, 0
    %5923 = vmatprep.subr.mxu0 0.0
    %5924 = vmatpush1.msra.mxu0 %v5918
    %5925 = vmatprep.subr.mxu0 0.0
    %5926 = vmatpush1.msra.mxu0 0.0
    %5927 = vmatprep.subr.mxu0 0.0
    %5928 = vmatpush1.msra.mxu0 0.0
    %5929 = vmatprep.subr.mxu0 0.0
    %5930 = vmatpush1.msra.mxu0 0.0
    %5931 = vmatprep.subr.mxu0 0.0
    %5932 = vmatpush1.msra.mxu0 0.0
    %5933 = vmatprep.subr.mxu0 0.0
    %5934 = vmatpush1.msra.mxu0 0.0
    %5935 = vmatprep.subr.mxu0 0.0
    %5936 = vmatpush1.msra.mxu0 0.0
    %5937 = vmatprep.subr.mxu0 0.0
    %5938 = vmatpush1.msra.mxu0 0.0
    %5939 = vmatprep.subr.mxu0 0.0
    %5940 = vmatpush1.msra.mxu0 0.0
    %5941 = vmatprep.subr.mxu0 0.0
    %5942 = vmatpush1.msra.mxu0 0.0
    %5943 = vmatprep.subr.mxu0 0.0
    %5944 = vmatpush1.msra.mxu0 0.0
    %5945 = vmatprep.subr.mxu0 0.0
    %5946 = vmatpush1.msra.mxu0 0.0
    %5947 = vmatprep.subr.mxu0 0.0
    %5948 = vmatpush1.msra.mxu0 0.0
    %5949 = vmatprep.subr.mxu0 0.0
    %5950 = vmatpush1.msra.mxu0 0.0
    %5951 = vmatprep.subr.mxu0 0.0
    %5952 = vmatpush1.msra.mxu0 0.0
    %5953 = vmatprep.subr.mxu0 0.0
    %5954 = vmatpush1.msra.mxu0 0.0
    %5955 = vmatprep.subr.mxu0 0.0
    %5956 = vmatpush1.msra.mxu0 0.0
    %5957 = vmatprep.subr.mxu0 0.0
    %5958 = vmatpush1.msra.mxu0 0.0
    %5959 = vmatprep.subr.mxu0 0.0
    %5960 = vmatpush1.msra.mxu0 0.0
    %5961 = vmatprep.subr.mxu0 0.0
    %5962 = vmatpush1.msra.mxu0 0.0
    %5963 = vmatprep.subr.mxu0 0.0
    %5964 = vmatpush1.msra.mxu0 0.0
    %5965 = vmatprep.subr.mxu0 0.0
    %5966 = vmatpush1.msra.mxu0 0.0
    %5967 = vmatprep.subr.mxu0 0.0
    %5968 = vmatpush1.msra.mxu0 0.0
    %5969 = vmatprep.subr.mxu0 0.0
    %5970 = vmatpush1.msra.mxu0 0.0
    %5971 = vmatprep.subr.mxu0 0.0
    %5972 = vmatpush1.msra.mxu0 0.0
    %5973 = vmatprep.subr.mxu0 0.0
    %5974 = vmatpush1.msra.mxu0 0.0
    %5975 = vmatprep.subr.mxu0 0.0
    %5976 = vmatpush1.msra.mxu0 0.0
    %5977 = vmatprep.subr.mxu0 0.0
    %5978 = vmatpush1.msra.mxu0 0.0
    %5979 = vmatprep.subr.mxu0 0.0
    %5980 = vmatpush1.msra.mxu0 0.0
    %5981 = vmatprep.subr.mxu0 0.0
    %5982 = vmatpush1.msra.mxu0 0.0
    %5983 = vmatprep.subr.mxu0 0.0
    %5984 = vmatpush1.msra.mxu0 0.0
    %5985 = vmatprep.subr.mxu0 0.0
    %5986 = vmatpush1.msra.mxu0 0.0
    %5987 = vmatprep.mubr.f32.mxu0 0.0
    %5988 = vmatmul.mubr.f32.gmra.mrb[0].mxu0 %v5921
    %v5989 = vpop.f32.mrb[0].mxu0
    %v5990 = vadd.f32 0.0, %v5989
    %v5991 = vpop.f32.mrb[0].mxu0
    %5992 = vdwg.mxu0
    %5993 = vrot.lane.b32.xlu0 %v3481, 72
    %v5994 = vpop.permute.xlu0 %5993
    %v5997 = vsel %vm375, %v5839, 0
    %5999 = vmatprep.subr.mxu0 0.0
    %6000 = vmatpush1.msra.mxu0 %v5994
    %6001 = vmatprep.subr.mxu0 0.0
    %6002 = vmatpush1.msra.mxu0 0.0
    %6003 = vmatprep.subr.mxu0 0.0
    %6004 = vmatpush1.msra.mxu0 0.0
    %6005 = vmatprep.subr.mxu0 0.0
    %6006 = vmatpush1.msra.mxu0 0.0
    %6007 = vmatprep.subr.mxu0 0.0
    %6008 = vmatpush1.msra.mxu0 0.0
    %6009 = vmatprep.subr.mxu0 0.0
    %6010 = vmatpush1.msra.mxu0 0.0
    %6011 = vmatprep.subr.mxu0 0.0
    %6012 = vmatpush1.msra.mxu0 0.0
    %6013 = vmatprep.subr.mxu0 0.0
    %6014 = vmatpush1.msra.mxu0 0.0
    %6015 = vmatprep.subr.mxu0 0.0
    %6016 = vmatpush1.msra.mxu0 0.0
    %6017 = vmatprep.subr.mxu0 0.0
    %6018 = vmatpush1.msra.mxu0 0.0
    %6019 = vmatprep.subr.mxu0 0.0
    %6020 = vmatpush1.msra.mxu0 0.0
    %6021 = vmatprep.subr.mxu0 0.0
    %6022 = vmatpush1.msra.mxu0 0.0
    %6023 = vmatprep.subr.mxu0 0.0
    %6024 = vmatpush1.msra.mxu0 0.0
    %6025 = vmatprep.subr.mxu0 0.0
    %6026 = vmatpush1.msra.mxu0 0.0
    %6027 = vmatprep.subr.mxu0 0.0
    %6028 = vmatpush1.msra.mxu0 0.0
    %6029 = vmatprep.subr.mxu0 0.0
    %6030 = vmatpush1.msra.mxu0 0.0
    %6031 = vmatprep.subr.mxu0 0.0
    %6032 = vmatpush1.msra.mxu0 0.0
    %6033 = vmatprep.subr.mxu0 0.0
    %6034 = vmatpush1.msra.mxu0 0.0
    %6035 = vmatprep.subr.mxu0 0.0
    %6036 = vmatpush1.msra.mxu0 0.0
    %6037 = vmatprep.subr.mxu0 0.0
    %6038 = vmatpush1.msra.mxu0 0.0
    %6039 = vmatprep.subr.mxu0 0.0
    %6040 = vmatpush1.msra.mxu0 0.0
    %6041 = vmatprep.subr.mxu0 0.0
    %6042 = vmatpush1.msra.mxu0 0.0
    %6043 = vmatprep.subr.mxu0 0.0
    %6044 = vmatpush1.msra.mxu0 0.0
    %6045 = vmatprep.subr.mxu0 0.0
    %6046 = vmatpush1.msra.mxu0 0.0
    %6047 = vmatprep.subr.mxu0 0.0
    %6048 = vmatpush1.msra.mxu0 0.0
    %6049 = vmatprep.subr.mxu0 0.0
    %6050 = vmatpush1.msra.mxu0 0.0
    %6051 = vmatprep.subr.mxu0 0.0
    %6052 = vmatpush1.msra.mxu0 0.0
    %6053 = vmatprep.subr.mxu0 0.0
    %6054 = vmatpush1.msra.mxu0 0.0
    %6055 = vmatprep.subr.mxu0 0.0
    %6056 = vmatpush1.msra.mxu0 0.0
    %6057 = vmatprep.subr.mxu0 0.0
    %6058 = vmatpush1.msra.mxu0 0.0
    %6059 = vmatprep.subr.mxu0 0.0
    %6060 = vmatpush1.msra.mxu0 0.0
    %6061 = vmatprep.subr.mxu0 0.0
    %6062 = vmatpush1.msra.mxu0 0.0
    %6063 = vmatprep.mubr.f32.mxu0 0.0
    %6064 = vmatmul.mubr.f32.gmra.mrb[0].mxu0 %v5997
    %v6065 = vpop.f32.mrb[0].mxu0
    %v6066 = vadd.f32 0.0, %v6065
    %v6067 = vpop.f32.mrb[0].mxu0
    %6068 = vdwg.mxu0
    %6069 = vrot.lane.b32.xlu0 %v3486, 72
    %v6070 = vpop.permute.xlu0 %6069
    %v6073 = vsel %vm375, %v5840, 0
    %6075 = vmatprep.subr.mxu0 0.0
    %6076 = vmatpush1.msra.mxu0 %v6070
    %6077 = vmatprep.subr.mxu0 0.0
    %6078 = vmatpush1.msra.mxu0 0.0
    %6079 = vmatprep.subr.mxu0 0.0
    %6080 = vmatpush1.msra.mxu0 0.0
    %6081 = vmatprep.subr.mxu0 0.0
    %6082 = vmatpush1.msra.mxu0 0.0
    %6083 = vmatprep.subr.mxu0 0.0
    %6084 = vmatpush1.msra.mxu0 0.0
    %6085 = vmatprep.subr.mxu0 0.0
    %6086 = vmatpush1.msra.mxu0 0.0
    %6087 = vmatprep.subr.mxu0 0.0
    %6088 = vmatpush1.msra.mxu0 0.0
    %6089 = vmatprep.subr.mxu0 0.0
    %6090 = vmatpush1.msra.mxu0 0.0
    %6091 = vmatprep.subr.mxu0 0.0
    %6092 = vmatpush1.msra.mxu0 0.0
    %6093 = vmatprep.subr.mxu0 0.0
    %6094 = vmatpush1.msra.mxu0 0.0
    %6095 = vmatprep.subr.mxu0 0.0
    %6096 = vmatpush1.msra.mxu0 0.0
    %6097 = vmatprep.subr.mxu0 0.0
    %6098 = vmatpush1.msra.mxu0 0.0
    %6099 = vmatprep.subr.mxu0 0.0
    %6100 = vmatpush1.msra.mxu0 0.0
    %6101 = vmatprep.subr.mxu0 0.0
    %6102 = vmatpush1.msra.mxu0 0.0
    %6103 = vmatprep.subr.mxu0 0.0
    %6104 = vmatpush1.msra.mxu0 0.0
    %6105 = vmatprep.subr.mxu0 0.0
    %6106 = vmatpush1.msra.mxu0 0.0
    %6107 = vmatprep.subr.mxu0 0.0
    %6108 = vmatpush1.msra.mxu0 0.0
    %6109 = vmatprep.subr.mxu0 0.0
    %6110 = vmatpush1.msra.mxu0 0.0
    %6111 = vmatprep.subr.mxu0 0.0
    %6112 = vmatpush1.msra.mxu0 0.0
    %6113 = vmatprep.subr.mxu0 0.0
    %6114 = vmatpush1.msra.mxu0 0.0
    %6115 = vmatprep.subr.mxu0 0.0
    %6116 = vmatpush1.msra.mxu0 0.0
    %6117 = vmatprep.subr.mxu0 0.0
    %6118 = vmatpush1.msra.mxu0 0.0
    %6119 = vmatprep.subr.mxu0 0.0
    %6120 = vmatpush1.msra.mxu0 0.0
    %6121 = vmatprep.subr.mxu0 0.0
    %6122 = vmatpush1.msra.mxu0 0.0
    %6123 = vmatprep.subr.mxu0 0.0
    %6124 = vmatpush1.msra.mxu0 0.0
    %6125 = vmatprep.subr.mxu0 0.0
    %6126 = vmatpush1.msra.mxu0 0.0
    %6127 = vmatprep.subr.mxu0 0.0
    %6128 = vmatpush1.msra.mxu0 0.0
    %6129 = vmatprep.subr.mxu0 0.0
    %6130 = vmatpush1.msra.mxu0 0.0
    %6131 = vmatprep.subr.mxu0 0.0
    %6132 = vmatpush1.msra.mxu0 0.0
    %6133 = vmatprep.subr.mxu0 0.0
    %6134 = vmatpush1.msra.mxu0 0.0
    %6135 = vmatprep.subr.mxu0 0.0
    %6136 = vmatpush1.msra.mxu0 0.0
    %6137 = vmatprep.subr.mxu0 0.0
    %6138 = vmatpush1.msra.mxu0 0.0
    %6139 = vmatprep.mubr.f32.mxu0 0.0
    %6140 = vmatmul.mubr.f32.gmra.mrb[0].mxu0 %v6073
    %v6141 = vpop.f32.mrb[0].mxu0
    %v6142 = vadd.f32 0.0, %v6141
    %v6143 = vpop.f32.mrb[0].mxu0
    %6144 = vdwg.mxu0
    %6149 = vrot.lane.b32.xlu0 %v4594, 8
    %v6150 = vpop.permute.xlu0 %6149
    %6151 = vrot.lane.b32.xlu0 %v4670, 8
    %v6152 = vpop.permute.xlu0 %6151
    %6153 = vrot.lane.b32.xlu0 %v4746, 8
    %v6154 = vpop.permute.xlu0 %6153
    %6155 = vrot.lane.b32.xlu0 %v4822, 8
    %v6156 = vpop.permute.xlu0 %6155
    %6165 = vrot.lane.b32.xlu0 %v5254, 16
    %v6166 = vpop.permute.xlu0 %6165
    %6167 = vrot.lane.b32.xlu0 %v5330, 16
    %v6168 = vpop.permute.xlu0 %6167
    %6169 = vrot.lane.b32.xlu0 %v5406, 16
    %v6170 = vpop.permute.xlu0 %6169
    %6171 = vrot.lane.b32.xlu0 %v5482, 16
    %v6172 = vpop.permute.xlu0 %6171
    %6181 = vrot.lane.b32.xlu0 %v5914, 24
    %v6182 = vpop.permute.xlu0 %6181
    %6183 = vrot.lane.b32.xlu0 %v5990, 24
    %v6184 = vpop.permute.xlu0 %6183
    %6185 = vrot.lane.b32.xlu0 %v6066, 24
    %v6186 = vpop.permute.xlu0 %6185
    %6187 = vrot.lane.b32.xlu0 %v6142, 24
    %v6188 = vpop.permute.xlu0 %6187
    %v6193 = vsel %vm375, %v3934, %v6150
    %v6194 = vsel %vm375, %v4010, %v6152
    %v6195 = vsel %vm375, %v4086, %v6154
    %v6196 = vsel %vm375, %v4162, %v6156
    %v6197 = vsel %vm3060, %v6193, %v6166
    %v6198 = vsel %vm3060, %v6194, %v6168
    %v6199 = vsel %vm3060, %v6195, %v6170
    %v6200 = vsel %vm3060, %v6196, %v6172
    %v6201 = vsel %vm3065, %v6197, %v6182
    %v6202 = vsel %vm3065, %v6198, %v6184
    %v6203 = vsel %vm3065, %v6199, %v6186
    %v6204 = vsel %vm3065, %v6200, %v6188
    %v6205 = vlaneseq
    %v6206 = vshrl.u32 %v6205, 7
    %v6207 = vsub.s32 3, %v6206
    %v6208 = vrot.slane %v68, %v6207
    %v6210 = vsel %vm70, %v6201, 0
    %v6213 = vsel %vm70, %v6202, 0
    %v6216 = vsel %vm70, %v6203, 0
    %v6219 = vsel %vm70, %v6204, 0
    %6221 = vmatprep.subr.mxu0 0.0
    %6222 = vmatpush1.msra.mxu0 %v52
    %6223 = vmatprep.subr.mxu0 0.0
    %6224 = vmatpush1.msra.mxu0 %v53
    %6225 = vmatprep.subr.mxu0 0.0
    %6226 = vmatpush1.msra.mxu0 %v54
    %6227 = vmatprep.subr.mxu0 0.0
    %6228 = vmatpush1.msra.mxu0 %v55
    %6229 = vmatprep.subr.mxu0 0.0
    %6230 = vmatpush1.msra.mxu0 0.0
    %6231 = vmatprep.subr.mxu0 0.0
    %6232 = vmatpush1.msra.mxu0 0.0
    %6233 = vmatprep.subr.mxu0 0.0
    %6234 = vmatpush1.msra.mxu0 0.0
    %6235 = vmatprep.subr.mxu0 0.0
    %6236 = vmatpush1.msra.mxu0 0.0
    %6237 = vmatprep.subr.mxu0 0.0
    %6238 = vmatpush1.msra.mxu0 0.0
    %6239 = vmatprep.subr.mxu0 0.0
    %6240 = vmatpush1.msra.mxu0 0.0
    %6241 = vmatprep.subr.mxu0 0.0
    %6242 = vmatpush1.msra.mxu0 0.0
    %6243 = vmatprep.subr.mxu0 0.0
    %6244 = vmatpush1.msra.mxu0 0.0
    %6245 = vmatprep.subr.mxu0 0.0
    %6246 = vmatpush1.msra.mxu0 0.0
    %6247 = vmatprep.subr.mxu0 0.0
    %6248 = vmatpush1.msra.mxu0 0.0
    %6249 = vmatprep.subr.mxu0 0.0
    %6250 = vmatpush1.msra.mxu0 0.0
    %6251 = vmatprep.subr.mxu0 0.0
    %6252 = vmatpush1.msra.mxu0 0.0
    %6253 = vmatprep.subr.mxu0 0.0
    %6254 = vmatpush1.msra.mxu0 0.0
    %6255 = vmatprep.subr.mxu0 0.0
    %6256 = vmatpush1.msra.mxu0 0.0
    %6257 = vmatprep.subr.mxu0 0.0
    %6258 = vmatpush1.msra.mxu0 0.0
    %6259 = vmatprep.subr.mxu0 0.0
    %6260 = vmatpush1.msra.mxu0 0.0
    %6261 = vmatprep.subr.mxu0 0.0
    %6262 = vmatpush1.msra.mxu0 0.0
    %6263 = vmatprep.subr.mxu0 0.0
    %6264 = vmatpush1.msra.mxu0 0.0
    %6265 = vmatprep.subr.mxu0 0.0
    %6266 = vmatpush1.msra.mxu0 0.0
    %6267 = vmatprep.subr.mxu0 0.0
    %6268 = vmatpush1.msra.mxu0 0.0
    %6269 = vmatprep.subr.mxu0 0.0
    %6270 = vmatpush1.msra.mxu0 0.0
    %6271 = vmatprep.subr.mxu0 0.0
    %6272 = vmatpush1.msra.mxu0 0.0
    %6273 = vmatprep.subr.mxu0 0.0
    %6274 = vmatpush1.msra.mxu0 0.0
    %6275 = vmatprep.subr.mxu0 0.0
    %6276 = vmatpush1.msra.mxu0 0.0
    %6277 = vmatprep.subr.mxu0 0.0
    %6278 = vmatpush1.msra.mxu0 0.0
    %6279 = vmatprep.subr.mxu0 0.0
    %6280 = vmatpush1.msra.mxu0 0.0
    %6281 = vmatprep.subr.mxu0 0.0
    %6282 = vmatpush1.msra.mxu0 0.0
    %6283 = vmatprep.subr.mxu0 0.0
    %6284 = vmatpush1.msra.mxu0 0.0
    %6285 = vmatprep.mubr.f32.mxu0 0.0
    %6286 = vmatmul.mubr.f32.gmra.mrb[0].mxu0 %v6210
    %v6287 = vpop.f32.mrb[0].mxu0
    %v6288 = vadd.f32 %v6208, %v6287
    %v6289 = vpop.f32.mrb[0].mxu0
    %6290 = vmatprep.mubr.f32.mxu0 0.0
    %6291 = vmatmul.mubr.f32.gmra.mrb[0].mxu0 %v6213
    %v6292 = vpop.f32.mrb[0].mxu0
    %v6293 = vadd.f32 %v6208, %v6292
    %v6294 = vpop.f32.mrb[0].mxu0
    %6295 = vmatprep.mubr.f32.mxu0 0.0
    %6296 = vmatmul.mubr.f32.gmra.mrb[0].mxu0 %v6216
    %v6297 = vpop.f32.mrb[0].mxu0
    %v6298 = vadd.f32 %v6208, %v6297
    %v6299 = vpop.f32.mrb[0].mxu0
    %6300 = vmatprep.mubr.f32.mxu0 0.0
    %6301 = vmatmul.mubr.f32.gmra.mrb[0].mxu0 %v6219
    %v6302 = vpop.f32.mrb[0].mxu0
    %v6303 = vadd.f32 %v6208, %v6302
    %v6304 = vpop.f32.mrb[0].mxu0
    %6305 = vdwg.mxu0
    %v6306 = vadd.f32 %v3171, %v6288
    %v6307 = vadd.f32 %v3172, %v6293
    %v6308 = vadd.f32 %v3173, %v6298
    %v6309 = vadd.f32 %v3174, %v6303
    %v6310 = vsel %vm70, %v6306, 0.0
    %6311 = vadd.xlane.f32.xlu0 %v6310
    %v6312 = vpop.xlane.xlu0 %6311
    %v6313 = vsel %vm70, %v6307, 0.0
    %6314 = vadd.xlane.f32.xlu0 %v6313
    %v6315 = vpop.xlane.xlu0 %6314
    %v6316 = vsel %vm70, %v6308, 0.0
    %6317 = vadd.xlane.f32.xlu0 %v6316
    %v6318 = vpop.xlane.xlu0 %6317
    %v6319 = vsel %vm70, %v6309, 0.0
    %6320 = vadd.xlane.f32.xlu0 %v6319
    %v6321 = vpop.xlane.xlu0 %6320
    %v6322 = vmul.f32 %v6312, %v83
    %v6323 = vmul.f32 %v6315, %v83
    %v6324 = vmul.f32 %v6318, %v83
    %v6325 = vmul.f32 %v6321, %v83
    %v6326 = vsub.f32 %v6306, %v6322
    %v6327 = vsub.f32 %v6307, %v6323
    %v6328 = vsub.f32 %v6308, %v6324
    %v6329 = vsub.f32 %v6309, %v6325
    %v6330 = vmul.f32 %v6326, %v6326
    %v6331 = vmul.f32 %v6327, %v6327
    %v6332 = vmul.f32 %v6328, %v6328
    %v6333 = vmul.f32 %v6329, %v6329
    %v6334 = vsel %vm70, %v6330, 0.0
    %6335 = vadd.xlane.f32.xlu0 %v6334
    %v6336 = vpop.xlane.xlu0 %6335
    %v6337 = vsel %vm70, %v6331, 0.0
    %6338 = vadd.xlane.f32.xlu0 %v6337
    %v6339 = vpop.xlane.xlu0 %6338
    %v6340 = vsel %vm70, %v6332, 0.0
    %6341 = vadd.xlane.f32.xlu0 %v6340
    %v6342 = vpop.xlane.xlu0 %6341
    %v6343 = vsel %vm70, %v6333, 0.0
    %6344 = vadd.xlane.f32.xlu0 %v6343
    %v6345 = vpop.xlane.xlu0 %6344
    %v6346 = vmul.f32 %v6336, %v108
    %v6347 = vmul.f32 %v6339, %v108
    %v6348 = vmul.f32 %v6342, %v108
    %v6349 = vmul.f32 %v6345, %v108
    %v6350 = vrsqrt.pop %v6346
    %v6351 = vmul.f32 %v6346, %v6350
    %vm6352 = vcmp.eq.f32.partialorder %v6346, inf
    %v6353 = vsel %vm6352, %v6346, %v6351
    %vm6354 = vcmp.eq.f32.partialorder %v6346, 0.0
    %v6355 = vand.u32 %v6346, 2147483648
    %v6356 = vsel %vm6354, %v6355, %v6353
    %v6357 = vrsqrt.pop %v6347
    %v6358 = vmul.f32 %v6347, %v6357
    %vm6359 = vcmp.eq.f32.partialorder %v6347, inf
    %v6360 = vsel %vm6359, %v6347, %v6358
    %vm6361 = vcmp.eq.f32.partialorder %v6347, 0.0
    %v6362 = vand.u32 %v6347, 2147483648
    %v6363 = vsel %vm6361, %v6362, %v6360
    %v6364 = vrsqrt.pop %v6348
    %v6365 = vmul.f32 %v6348, %v6364
    %vm6366 = vcmp.eq.f32.partialorder %v6348, inf
    %v6367 = vsel %vm6366, %v6348, %v6365
    %vm6368 = vcmp.eq.f32.partialorder %v6348, 0.0
    %v6369 = vand.u32 %v6348, 2147483648
    %v6370 = vsel %vm6368, %v6369, %v6367
    %v6371 = vrsqrt.pop %v6349
    %v6372 = vmul.f32 %v6349, %v6371
    %vm6373 = vcmp.eq.f32.partialorder %v6349, inf
    %v6374 = vsel %vm6373, %v6349, %v6372
    %vm6375 = vcmp.eq.f32.partialorder %v6349, 0.0
    %v6376 = vand.u32 %v6349, 2147483648
    %v6377 = vsel %vm6375, %v6376, %v6374
    %v6378 = vadd.f32 %v6356, 1e-06
    %v6379 = vadd.f32 %v6363, 1e-06
    %v6380 = vadd.f32 %v6370, 1e-06
    %v6381 = vadd.f32 %v6377, 1e-06
    %v6382 = vrcp.pop %v6378
    %v6383 = vrcp.pop %v6379
    %v6384 = vrcp.pop %v6380
    %v6385 = vrcp.pop %v6381
    %v6386 = vlaneseq
    %v6387 = vshrl.u32 %v6386, 7
    %v6388 = vsub.s32 0, %v6387
    %v6389 = vrot.slane %v69, %v6388
    %v6390 = vmul.f32 %v6389, %v6326
    %v6391 = vmul.f32 %v6389, %v6327
    %v6392 = vmul.f32 %v6389, %v6328
    %v6393 = vmul.f32 %v6389, %v6329
    %v6394 = vmul.f32 %v6390, %v6382
    %v6395 = vmul.f32 %v6391, %v6383
    %v6396 = vmul.f32 %v6392, %v6384
    %v6397 = vmul.f32 %v6393, %v6385
    %v6398 = vlaneseq
    %v6399 = vshrl.u32 %v6398, 7
    %v6400 = vsub.s32 3, %v6399
    %v6401 = vrot.slane %v69, %v6400
    %v6402 = vadd.f32 %v6394, %v6401
    %v6403 = vadd.f32 %v6395, %v6401
    %v6404 = vadd.f32 %v6396, %v6401
    %v6405 = vadd.f32 %v6397, %v6401
    %v6406 = vlaneseq
    %v6407 = vshrl.u32 %v6406, 7
    %v6408 = vsub.s32 4, %v6407
    %v6409 = vrot.slane %v68, %v6408
    %v6411 = vsel %vm70, %v6402, 0
    %v6414 = vsel %vm70, %v6403, 0
    %v6417 = vsel %vm70, %v6404, 0
    %v6420 = vsel %vm70, %v6405, 0
    %6422 = vmatprep.subr.mxu0 0.0
    %6423 = vmatpush1.msra.mxu0 %v56
    %6424 = vmatprep.subr.mxu0 0.0
    %6425 = vmatpush1.msra.mxu0 %v57
    %6426 = vmatprep.subr.mxu0 0.0
    %6427 = vmatpush1.msra.mxu0 %v58
    %6428 = vmatprep.subr.mxu0 0.0
    %6429 = vmatpush1.msra.mxu0 %v59
    %6430 = vmatprep.subr.mxu0 0.0
    %6431 = vmatpush1.msra.mxu0 0.0
    %6432 = vmatprep.subr.mxu0 0.0
    %6433 = vmatpush1.msra.mxu0 0.0
    %6434 = vmatprep.subr.mxu0 0.0
    %6435 = vmatpush1.msra.mxu0 0.0
    %6436 = vmatprep.subr.mxu0 0.0
    %6437 = vmatpush1.msra.mxu0 0.0
    %6438 = vmatprep.subr.mxu0 0.0
    %6439 = vmatpush1.msra.mxu0 0.0
    %6440 = vmatprep.subr.mxu0 0.0
    %6441 = vmatpush1.msra.mxu0 0.0
    %6442 = vmatprep.subr.mxu0 0.0
    %6443 = vmatpush1.msra.mxu0 0.0
    %6444 = vmatprep.subr.mxu0 0.0
    %6445 = vmatpush1.msra.mxu0 0.0
    %6446 = vmatprep.subr.mxu0 0.0
    %6447 = vmatpush1.msra.mxu0 0.0
    %6448 = vmatprep.subr.mxu0 0.0
    %6449 = vmatpush1.msra.mxu0 0.0
    %6450 = vmatprep.subr.mxu0 0.0
    %6451 = vmatpush1.msra.mxu0 0.0
    %6452 = vmatprep.subr.mxu0 0.0
    %6453 = vmatpush1.msra.mxu0 0.0
    %6454 = vmatprep.subr.mxu0 0.0
    %6455 = vmatpush1.msra.mxu0 0.0
    %6456 = vmatprep.subr.mxu0 0.0
    %6457 = vmatpush1.msra.mxu0 0.0
    %6458 = vmatprep.subr.mxu0 0.0
    %6459 = vmatpush1.msra.mxu0 0.0
    %6460 = vmatprep.subr.mxu0 0.0
    %6461 = vmatpush1.msra.mxu0 0.0
    %6462 = vmatprep.subr.mxu0 0.0
    %6463 = vmatpush1.msra.mxu0 0.0
    %6464 = vmatprep.subr.mxu0 0.0
    %6465 = vmatpush1.msra.mxu0 0.0
    %6466 = vmatprep.subr.mxu0 0.0
    %6467 = vmatpush1.msra.mxu0 0.0
    %6468 = vmatprep.subr.mxu0 0.0
    %6469 = vmatpush1.msra.mxu0 0.0
    %6470 = vmatprep.subr.mxu0 0.0
    %6471 = vmatpush1.msra.mxu0 0.0
    %6472 = vmatprep.subr.mxu0 0.0
    %6473 = vmatpush1.msra.mxu0 0.0
    %6474 = vmatprep.subr.mxu0 0.0
    %6475 = vmatpush1.msra.mxu0 0.0
    %6476 = vmatprep.subr.mxu0 0.0
    %6477 = vmatpush1.msra.mxu0 0.0
    %6478 = vmatprep.subr.mxu0 0.0
    %6479 = vmatpush1.msra.mxu0 0.0
    %6480 = vmatprep.subr.mxu0 0.0
    %6481 = vmatpush1.msra.mxu0 0.0
    %6482 = vmatprep.subr.mxu0 0.0
    %6483 = vmatpush1.msra.mxu0 0.0
    %6484 = vmatprep.subr.mxu0 0.0
    %6485 = vmatpush1.msra.mxu0 0.0
    %6486 = vmatprep.mubr.f32.mxu0 0.0
    %6487 = vmatmul.mubr.f32.gmra.mrb[0].mxu0 %v6411
    %v6488 = vpop.f32.mrb[0].mxu0
    %v6489 = vadd.f32 %v6409, %v6488
    %v6490 = vpop.f32.mrb[0].mxu0
    %6491 = vmatprep.mubr.f32.mxu0 0.0
    %6492 = vmatmul.mubr.f32.gmra.mrb[0].mxu0 %v6414
    %v6493 = vpop.f32.mrb[0].mxu0
    %v6494 = vadd.f32 %v6409, %v6493
    %v6495 = vpop.f32.mrb[0].mxu0
    %6496 = vmatprep.mubr.f32.mxu0 0.0
    %6497 = vmatmul.mubr.f32.gmra.mrb[0].mxu0 %v6417
    %v6498 = vpop.f32.mrb[0].mxu0
    %v6499 = vadd.f32 %v6409, %v6498
    %v6500 = vpop.f32.mrb[0].mxu0
    %6501 = vmatprep.mubr.f32.mxu0 0.0
    %6502 = vmatmul.mubr.f32.gmra.mrb[0].mxu0 %v6420
    %v6503 = vpop.f32.mrb[0].mxu0
    %v6504 = vadd.f32 %v6409, %v6503
    %v6505 = vpop.f32.mrb[0].mxu0
    %6506 = vdwg.mxu0
    %v6507 = vmax.f32 %v6489, 0.0
    %v6508 = vmax.f32 %v6494, 0.0
    %v6509 = vmax.f32 %v6499, 0.0
    %v6510 = vmax.f32 %v6504, 0.0
    %vm6511 = vcmask 523264
    %v6513 = vsel %vm6511, %v6507, 0
    %v6516 = vsel %vm6511, %v6508, 0
    %v6519 = vsel %vm6511, %v6509, 0
    %v6522 = vsel %vm6511, %v6510, 0
    %6524 = vmatprep.subr.mxu0 0.0
    %6525 = vmatpush1.msra.mxu0 %v60
    %6526 = vmatprep.subr.mxu0 0.0
    %6527 = vmatpush1.msra.mxu0 %v61
    %6528 = vmatprep.subr.mxu0 0.0
    %6529 = vmatpush1.msra.mxu0 %v62
    %6530 = vmatprep.subr.mxu0 0.0
    %6531 = vmatpush1.msra.mxu0 %v63
    %6532 = vmatprep.subr.mxu0 0.0
    %6533 = vmatpush1.msra.mxu0 %v64
    %6534 = vmatprep.subr.mxu0 0.0
    %6535 = vmatpush1.msra.mxu0 %v65
    %6536 = vmatprep.subr.mxu0 0.0
    %6537 = vmatpush1.msra.mxu0 %v66
    %6538 = vmatprep.subr.mxu0 0.0
    %6539 = vmatpush1.msra.mxu0 %v67
    %6540 = vmatprep.subr.mxu0 0.0
    %6541 = vmatpush1.msra.mxu0 0.0
    %6542 = vmatprep.subr.mxu0 0.0
    %6543 = vmatpush1.msra.mxu0 0.0
    %6544 = vmatprep.subr.mxu0 0.0
    %6545 = vmatpush1.msra.mxu0 0.0
    %6546 = vmatprep.subr.mxu0 0.0
    %6547 = vmatpush1.msra.mxu0 0.0
    %6548 = vmatprep.subr.mxu0 0.0
    %6549 = vmatpush1.msra.mxu0 0.0
    %6550 = vmatprep.subr.mxu0 0.0
    %6551 = vmatpush1.msra.mxu0 0.0
    %6552 = vmatprep.subr.mxu0 0.0
    %6553 = vmatpush1.msra.mxu0 0.0
    %6554 = vmatprep.subr.mxu0 0.0
    %6555 = vmatpush1.msra.mxu0 0.0
    %6556 = vmatprep.subr.mxu0 0.0
    %6557 = vmatpush1.msra.mxu0 0.0
    %6558 = vmatprep.subr.mxu0 0.0
    %6559 = vmatpush1.msra.mxu0 0.0
    %6560 = vmatprep.subr.mxu0 0.0
    %6561 = vmatpush1.msra.mxu0 0.0
    %6562 = vmatprep.subr.mxu0 0.0
    %6563 = vmatpush1.msra.mxu0 0.0
    %6564 = vmatprep.subr.mxu0 0.0
    %6565 = vmatpush1.msra.mxu0 0.0
    %6566 = vmatprep.subr.mxu0 0.0
    %6567 = vmatpush1.msra.mxu0 0.0
    %6568 = vmatprep.subr.mxu0 0.0
    %6569 = vmatpush1.msra.mxu0 0.0
    %6570 = vmatprep.subr.mxu0 0.0
    %6571 = vmatpush1.msra.mxu0 0.0
    %6572 = vmatprep.subr.mxu0 0.0
    %6573 = vmatpush1.msra.mxu0 0.0
    %6574 = vmatprep.subr.mxu0 0.0
    %6575 = vmatpush1.msra.mxu0 0.0
    %6576 = vmatprep.subr.mxu0 0.0
    %6577 = vmatpush1.msra.mxu0 0.0
    %6578 = vmatprep.subr.mxu0 0.0
    %6579 = vmatpush1.msra.mxu0 0.0
    %6580 = vmatprep.subr.mxu0 0.0
    %6581 = vmatpush1.msra.mxu0 0.0
    %6582 = vmatprep.subr.mxu0 0.0
    %6583 = vmatpush1.msra.mxu0 0.0
    %6584 = vmatprep.subr.mxu0 0.0
    %6585 = vmatpush1.msra.mxu0 0.0
    %6586 = vmatprep.subr.mxu0 0.0
    %6587 = vmatpush1.msra.mxu0 0.0
    %6588 = vmatprep.mubr.f32.mxu0 0.0
    %6589 = vmatmul.mubr.f32.gmra.mrb[0].mxu0 %v6513
    %v6590 = vpop.f32.mrb[0].mxu0
    %v6591 = vadd.f32 0.0, %v6590
    %v6592 = vpop.f32.mrb[0].mxu0
    %6593 = vmatprep.mubr.f32.mxu0 0.0
    %6594 = vmatmul.mubr.f32.gmra.mrb[0].mxu0 %v6516
    %v6595 = vpop.f32.mrb[0].mxu0
    %v6596 = vadd.f32 0.0, %v6595
    %v6597 = vpop.f32.mrb[0].mxu0
    %6598 = vmatprep.mubr.f32.mxu0 0.0
    %6599 = vmatmul.mubr.f32.gmra.mrb[0].mxu0 %v6519
    %v6600 = vpop.f32.mrb[0].mxu0
    %v6601 = vadd.f32 0.0, %v6600
    %v6602 = vpop.f32.mrb[0].mxu0
    %6603 = vmatprep.mubr.f32.mxu0 0.0
    %6604 = vmatmul.mubr.f32.gmra.mrb[0].mxu0 %v6522
    %v6605 = vpop.f32.mrb[0].mxu0
    %v6606 = vadd.f32 0.0, %v6605
    %v6607 = vpop.f32.mrb[0].mxu0
    %6608 = vdwg.mxu0
    %v6609 = vadd.f32 %v6306, %v6591
    %v6610 = vadd.f32 %v6307, %v6596
    %v6611 = vadd.f32 %v6308, %v6601
    %v6612 = vadd.f32 %v6309, %v6606
    %v6613 = vlaneseq
    %v6614 = vshrl.u32 %v6613, 7
    %v6615 = vsub.s32 5, %v6614
    %v6616 = vrot.slane %v68, %v6615
    %v6617 = vadd.f32 %v6609, %v6616
    %v6618 = vadd.f32 %v6610, %v6616
    %v6619 = vadd.f32 %v6611, %v6616
    %v6620 = vadd.f32 %v6612, %v6616
    %6621 = vst.msk [vmem:[#allocation2] sm:$0xff] %vm70, %v6617
    %6622 = vst.msk [vmem:[#allocation2 + $0x8] sm:$0xff] %vm70, %v6618
    %6623 = vst.msk [vmem:[#allocation2 + $0x10] sm:$0xff] %vm70, %v6619
    %6624 = vst.msk [vmem:[#allocation2 + $0x18] sm:$0xff] %vm70, %v6620
    // Predicated region
    $region26: #{tpu_custom_call.1} parent=1 // pred_check
      _
    $region27: #{tpu_custom_call.1} parent=1 // pred_check_branch
      %6626 = sbr.rel (0) target = $region29
    $region28: #{tpu_custom_call.1} parent=1 // pred_region
      %s6628 = ssub.s32 512, 512
      %6629 = vsyncadd [#allocation3], %s6628
      %s6630 = sshll.u32 [#allocation2], 4
      %s6631 = int_to_ptr.vmem [resolvable:$true] %s6630
      %6636 = dma.vmem_to_hbm [thread:$0]  %s6631, 512, %s6, [#allocation3], 128, 128, 8
    $region29: #{tpu_custom_call.1} parent=1 // pred_fallthru
      _
    // Predicated region
    $region30: #{tpu_custom_call.1} parent=1 // pred_check
      _
    $region31: #{tpu_custom_call.1} parent=1 // pred_check_branch
      %6638 = sbr.rel (0) target = $region33
    $region32: #{tpu_custom_call.1} parent=1 // pred_region
      %6639 = dma.done [#allocation3], 512
    $region33: #{tpu_custom_call.1} parent=1 // pred_fallthru
      _
    %6640 = vsyncpa [#allocation3], 1

</llo_original>
